<compile_context>
chip_gen: v6e
topology: v6e:2x2x1
jax: 0.10.0
libtpu: 0.0.40
codegen_flags: <defaults>
</compile_context>

<pallas_src>
import functools
import math

import jax
import jax.numpy as jnp
from jax import lax
from jax.experimental import pallas as pl
from jax.experimental.pallas import tpu as pltpu


# -----------------------------------------------------------------------------
# Fused BasicBlock Pallas kernel (one batch element per grid step)
# -----------------------------------------------------------------------------
def _block_kernel(xph_ref, mph_ref, w1_ref, s1_ref, b1_ref,
                  s2_ref, b2_ref, mask2_ref, w2_ref, *rest,
                  stride, equal):
    if equal:
        xres_ref, o_ref, aph_ref, a2p_ref = rest
    else:
        xsc_ref, wsc_ref, o_ref, aph_ref, a2p_ref = rest

    s = stride
    n_ph = s * s
    Cin = w1_ref.shape[1]
    Cout = w1_ref.shape[2]
    Ho, Wo = o_ref.shape[1], o_ref.shape[2]
    He, We = Ho + 2, Wo + 2   # conv1 halo grid == conv2 padded input extent

    s1 = s1_ref[...].reshape(1, 1, Cin)
    b1 = b1_ref[...].reshape(1, 1, Cin)
    s2 = s2_ref[...].reshape(1, 1, Cout)
    b2 = b2_ref[...].reshape(1, 1, Cout)

    # ---- pre-activation a = relu(bn1(x)); mask forces the padding ring to 0
    for p in range(n_ph):
        xp = xph_ref[p].astype(jnp.float32)                 # (R, C, Cin)
        ap = jnp.maximum(xp * s1 + b1, 0.0) * mph_ref[p]
        aph_ref[p] = ap.astype(jnp.bfloat16)

    def tap_dot(tap, w_tap, batch):
        # tap: (batch, M, K) bf16, w_tap: (K, N) bf16 -> (batch, M, N) f32
        wb = jnp.broadcast_to(w_tap, (batch,) + w_tap.shape)
        return lax.dot_general(
            tap, wb,
            dimension_numbers=(((2,), (1,)), ((0,), (0,))),
            preferred_element_type=jnp.float32)

    # ---- conv1 (3x3, stride s) on the extended (He, We) output grid.
    # The border ring is garbage that is masked to zero below and thereby
    # acts as conv2's zero padding.
    acc1 = jnp.zeros((He, We, Cout), jnp.float32)
    for dy in range(3):
        for dx in range(3):
            p = (dy % s) * s + (dx % s)
            r0, c0 = dy // s, dx // s
            tap = aph_ref[p, r0:r0 + He, c0:c0 + We, :]      # (He, We, Cin) bf16
            acc1 = acc1 + tap_dot(tap, w1_ref[dy * 3 + dx], He)

    a2p = jnp.maximum(acc1 * s2 + b2, 0.0) * mask2_ref[...]
    a2p_ref[...] = a2p.astype(jnp.bfloat16)                  # padded conv2 input

    # ---- conv2 (3x3, stride 1)
    acc2 = jnp.zeros((Ho, Wo, Cout), jnp.float32)
    for dy in range(3):
        for dx in range(3):
            tap = a2p_ref[dy:dy + Ho, dx:dx + Wo, :]          # (Ho, Wo, Cout) bf16
            acc2 = acc2 + tap_dot(tap, w2_ref[dy * 3 + dx], Ho)

    # ---- residual: identity or fused 1x1 projection of the pre-activation
    if equal:
        res = xres_ref[0].astype(jnp.float32)                 # (Ho, Wo, Cout)
    else:
        xsc = xsc_ref[0].astype(jnp.float32)                  # (Ho, Wo, Cin)
        asc = jnp.maximum(xsc * s1 + b1, 0.0).astype(jnp.bfloat16)
        res = tap_dot(asc, wsc_ref[...], Ho)

    o_ref[0] = (acc2 + res).astype(o_ref.dtype)


# -----------------------------------------------------------------------------
# Wrapper: layout prep (NCHW->NHWC, zero-pad + phase split, BN folding) + call
# -----------------------------------------------------------------------------
def _fold_bn(bn):
    gamma, beta, mean, var = bn
    sc = gamma / jnp.sqrt(var + 1e-5)
    return sc.astype(jnp.float32), (beta - mean * sc).astype(jnp.float32)


@functools.partial(jax.jit, static_argnames=("stride",))
def basic_block(x_nchw, params, stride):
    """Forward of the PyTorch BasicBlock (inference BN, dropRate=0)."""
    w1 = params["conv1"]            # (Cout, Cin, 3, 3)
    w2 = params["conv2"]            # (Cout, Cout, 3, 3)
    Cout, Cin = w1.shape[0], w1.shape[1]
    equal = (Cin == Cout)           # equalInOut => identity shortcut
    if equal:
        assert stride == 1, "equalInOut path requires stride 1 (as in PyTorch)"
    s = stride
    N, _, H, W = x_nchw.shape
    Ho = (H + 2 - 3) // s + 1
    Wo = (W + 2 - 3) // s + 1
    He, We = Ho + 2, Wo + 2
    R = He + 2 // s                 # rows per phase of the padded input
    C_ = We + 2 // s

    x = jnp.transpose(x_nchw, (0, 2, 3, 1)).astype(jnp.float32)   # NHWC

    # zero-pad + phase-split (no im2col expansion: total bytes == input bytes)
    pad_hb, pad_wb = s + 1, s + 1
    pad_ha = s * R - pad_hb - H
    pad_wa = s * C_ - pad_wb - W
    x_pad = jnp.pad(x.astype(jnp.bfloat16),
                    ((0, 0), (pad_hb, pad_ha), (pad_wb, pad_wa), (0, 0)))
    phases = [x_pad[:, py::s, px::s, :] for py in range(s) for px in range(s)]
    xph = jnp.stack(phases, axis=1).reshape(N * s * s, R, C_, Cin)

    # masks: 1 on real pixels / interior, 0 on padding rings
    m_pad = jnp.pad(jnp.ones((H, W), jnp.float32),
                    ((pad_hb, pad_ha), (pad_wb, pad_wa)))
    mph = jnp.stack([m_pad[py::s, px::s] for py in range(s) for px in range(s)],
                    axis=0)[..., None]                             # (s*s,R,C,1)
    mask2 = jnp.pad(jnp.ones((Ho, Wo), jnp.float32), ((1, 1), (1, 1)))[..., None]

    # bf16 matmul operands, f32 folded-BN scale/bias
    w1m = jnp.transpose(w1, (2, 3, 1, 0)).reshape(9, Cin, Cout).astype(jnp.bfloat16)
    w2m = jnp.transpose(w2, (2, 3, 1, 0)).reshape(9, Cout, Cout).astype(jnp.bfloat16)
    s1, b1 = _fold_bn(params["bn1"])
    s2, b2 = _fold_bn(params["bn2"])
    s1, b1 = s1.reshape(1, Cin), b1.reshape(1, Cin)
    s2, b2 = s2.reshape(1, Cout), b2.reshape(1, Cout)

    in_specs = [
        pl.BlockSpec((s * s, R, C_, Cin), lambda n: (n, 0, 0, 0)),
        pl.BlockSpec((s * s, R, C_, 1), lambda n: (0, 0, 0, 0)),
        pl.BlockSpec((9, Cin, Cout), lambda n: (0, 0, 0)),
        pl.BlockSpec((1, Cin), lambda n: (0, 0)),
        pl.BlockSpec((1, Cin), lambda n: (0, 0)),
        pl.BlockSpec((1, Cout), lambda n: (0, 0)),
        pl.BlockSpec((1, Cout), lambda n: (0, 0)),
        pl.BlockSpec((He, We, 1), lambda n: (0, 0, 0)),
        pl.BlockSpec((9, Cout, Cout), lambda n: (0, 0, 0)),
    ]
    args = [xph, mph, w1m, s1, b1, s2, b2, mask2, w2m]

    if equal:
        in_specs.append(pl.BlockSpec((1, H, W, Cin), lambda n: (n, 0, 0, 0)))
        args.append(x)                                             # f32 identity
    else:
        xsc = x[:, 0:s * (Ho - 1) + 1:s, 0:s * (Wo - 1) + 1:s, :].astype(jnp.bfloat16)
        wsc = params["conv_sc"].reshape(Cout, Cin).T.astype(jnp.bfloat16)
        in_specs.append(pl.BlockSpec((1, Ho, Wo, Cin), lambda n: (n, 0, 0, 0)))
        in_specs.append(pl.BlockSpec((Cin, Cout), lambda n: (0, 0)))
        args += [xsc, wsc]

    kernel = functools.partial(_block_kernel, stride=s, equal=equal)
    out = pl.pallas_call(
        kernel,
        out_shape=jax.ShapeDtypeStruct((N, Ho, Wo, Cout), jnp.float32),
        grid=(N,),
        in_specs=in_specs,
        out_specs=pl.BlockSpec((1, Ho, Wo, Cout), lambda n: (n, 0, 0, 0)),
        scratch_shapes=[
            pltpu.VMEM((s * s, R, C_, Cin), jnp.bfloat16),   # pre-activated phases
            pltpu.VMEM((He, We, Cout), jnp.bfloat16),        # padded conv2 input
        ],
        compiler_params=pltpu.CompilerParams(
            dimension_semantics=("parallel",),
            vmem_limit_bytes=32 * 1024 * 1024,
        ),
    )(*args)
    return jnp.transpose(out, (0, 3, 1, 2))                        # NHWC -> NCHW


# -----------------------------------------------------------------------------
# Pure-XLA f32 reference (for a loose correctness check) and param builder
# -----------------------------------------------------------------------------
def _ref_basic_block(x, params, stride):
    def bn(y, p):
        g, b, m, v = p
        sc = g / jnp.sqrt(v + 1e-5)
        return y * sc[None, :, None, None] + (b - m * sc)[None, :, None, None]
    w1, w2 = params["conv1"], params["conv2"]
    equal = w1.shape[0] == w1.shape[1]
    a = jax.nn.relu(bn(x, params["bn1"]))
    out = lax.conv_general_dilated(a, w1, (stride, stride), ((1, 1), (1, 1)),
                                   dimension_numbers=("NCHW", "OIHW", "NCHW"))
    out = jax.nn.relu(bn(out, params["bn2"]))
    out = lax.conv_general_dilated(out, w2, (1, 1), ((1, 1), (1, 1)),
                                   dimension_numbers=("NCHW", "OIHW", "NCHW"))
    if equal:
        res = x
    else:
        res = lax.conv_general_dilated(a, params["conv_sc"], (stride, stride),
                                       ((0, 0), (0, 0)),
                                       dimension_numbers=("NCHW", "OIHW", "NCHW"))
    return out + res


def make_block_params(key, in_planes, out_planes):
    ks = jax.random.split(key, 5)

    def conv(k, co, ci, kh, kw):
        return jax.random.normal(k, (co, ci, kh, kw), jnp.float32) / math.sqrt(ci * kh * kw)

    def bn(k, c):
        k1, k2, k3, k4 = jax.random.split(k, 4)
        return (1.0 + 0.1 * jax.random.normal(k1, (c,), jnp.float32),
                0.1 * jax.random.normal(k2, (c,), jnp.float32),
                0.1 * jax.random.normal(k3, (c,), jnp.float32),
                1.0 + 0.1 * jax.random.uniform(k4, (c,), jnp.float32))

    p = {"bn1": bn(ks[0], in_planes),
         "conv1": conv(ks[1], out_planes, in_planes, 3, 3),
         "bn2": bn(ks[2], out_planes),
         "conv2": conv(ks[3], out_planes, out_planes, 3, 3)}
    if in_planes != out_planes:
        p["conv_sc"] = conv(ks[4], out_planes, in_planes, 1, 1)
    return p


if __name__ == "__main__":
    key = jax.random.PRNGKey(0)
    kx, k1, k2 = jax.random.split(key, 3)
    # NCHW input, CIFAR-ish small shapes
    x = jax.random.normal(kx, (2, 16, 16, 16), jnp.float32)

    # block A: 16 -> 32 channels, stride 2 (projection-shortcut path)
    pA = make_block_params(k1, 16, 32)
    yA = basic_block(x, pA, stride=2)
    # block B: 32 -> 32 channels, stride 1 (identity / equalInOut path)
    pB = make_block_params(k2, 32, 32)
    yB = basic_block(yA, pB, stride=1)
    jax.block_until_ready(yB)
    assert yA.shape == (2, 32, 8, 8) and yB.shape == (2, 32, 8, 8)

    # loose check vs pure-XLA f32 reference (kernel uses bf16 MXU operands)
    refA = _ref_basic_block(x, pA, 2)
    refB = _ref_basic_block(refA, pB, 1)
    errA = float(jnp.max(jnp.abs(yA - refA)) / (jnp.max(jnp.abs(refA)) + 1e-6))
    errB = float(jnp.max(jnp.abs(yB - refB)) / (jnp.max(jnp.abs(refB)) + 1e-6))
    assert errA < 0.1 and errB < 0.1, f"mismatch vs reference: {errA}, {errB}"

    print("KERNEL_OK")
</pallas_src>

<mosaic_0001>
module attributes {stable_mosaic.version = 11 : i64} {
  func.func @_block_kernel(%arg0: i32, %arg1: memref<4x11x11x16xbf16, #tpu.memory_space<vmem>>, %arg2: memref<4x11x11x1xf32, #tpu.memory_space<vmem>>, %arg3: memref<9x16x32xbf16, #tpu.memory_space<vmem>>, %arg4: memref<1x16xf32, #tpu.memory_space<vmem>>, %arg5: memref<1x16xf32, #tpu.memory_space<vmem>>, %arg6: memref<1x32xf32, #tpu.memory_space<vmem>>, %arg7: memref<1x32xf32, #tpu.memory_space<vmem>>, %arg8: memref<10x10x1xf32, #tpu.memory_space<vmem>>, %arg9: memref<9x32x32xbf16, #tpu.memory_space<vmem>>, %arg10: memref<1x8x8x16xbf16, #tpu.memory_space<vmem>>, %arg11: memref<16x32xbf16, #tpu.memory_space<vmem>>, %arg12: memref<1x8x8x32xf32, #tpu.memory_space<vmem>>, %arg13: memref<4x11x11x16xbf16, #tpu.memory_space<vmem>>, %arg14: memref<10x10x32xbf16, #tpu.memory_space<vmem>>) attributes {dimension_semantics = [#tpu.dimension_semantics<parallel>], iteration_bounds = array<i64: 2>, scalar_prefetch = 0 : i64, scratch_operands = 2 : i64, tpu.core_type = #tpu.core_type<tc>, window_params = [{transform_indices = @transform_0, window_bounds = array<i64: 4, 11, 11, 16>}, {pipeline_mode = #tpu.pipeline_mode<synchronous>, transform_indices = @transform_1, window_bounds = array<i64: 4, 11, 11, 1>}, {pipeline_mode = #tpu.pipeline_mode<synchronous>, transform_indices = @transform_2, window_bounds = array<i64: 9, 16, 32>}, {pipeline_mode = #tpu.pipeline_mode<synchronous>, transform_indices = @transform_3, window_bounds = array<i64: 1, 16>}, {pipeline_mode = #tpu.pipeline_mode<synchronous>, transform_indices = @transform_4, window_bounds = array<i64: 1, 16>}, {pipeline_mode = #tpu.pipeline_mode<synchronous>, transform_indices = @transform_5, window_bounds = array<i64: 1, 32>}, {pipeline_mode = #tpu.pipeline_mode<synchronous>, transform_indices = @transform_6, window_bounds = array<i64: 1, 32>}, {pipeline_mode = #tpu.pipeline_mode<synchronous>, transform_indices = @transform_7, window_bounds = array<i64: 10, 10, 1>}, {pipeline_mode = #tpu.pipeline_mode<synchronous>, transform_indices = @transform_8, window_bounds = array<i64: 9, 32, 32>}, {transform_indices = @transform_9, window_bounds = array<i64: 1, 8, 8, 16>}, {pipeline_mode = #tpu.pipeline_mode<synchronous>, transform_indices = @transform_10, window_bounds = array<i64: 16, 32>}, {transform_indices = @transform_11, window_bounds = array<i64: 1, 8, 8, 32>}]} {
    %c0 = arith.constant 0 : index
    %c0_0 = arith.constant 0 : index
    %0 = vector.load %arg4[%c0, %c0_0] : memref<1x16xf32, #tpu.memory_space<vmem>>, vector<1x16xf32>
    %1 = vector.shape_cast %0 : vector<1x16xf32> to vector<1x1x16xf32>
    %c0_1 = arith.constant 0 : index
    %c0_2 = arith.constant 0 : index
    %2 = vector.load %arg5[%c0_1, %c0_2] : memref<1x16xf32, #tpu.memory_space<vmem>>, vector<1x16xf32>
    %3 = vector.shape_cast %2 : vector<1x16xf32> to vector<1x1x16xf32>
    %c0_3 = arith.constant 0 : index
    %c0_4 = arith.constant 0 : index
    %4 = vector.load %arg6[%c0_3, %c0_4] : memref<1x32xf32, #tpu.memory_space<vmem>>, vector<1x32xf32>
    %5 = vector.shape_cast %4 : vector<1x32xf32> to vector<1x1x32xf32>
    %c0_5 = arith.constant 0 : index
    %c0_6 = arith.constant 0 : index
    %6 = vector.load %arg7[%c0_5, %c0_6] : memref<1x32xf32, #tpu.memory_space<vmem>>, vector<1x32xf32>
    %7 = vector.shape_cast %6 : vector<1x32xf32> to vector<1x1x32xf32>
    %c0_7 = arith.constant 0 : index
    %c0_8 = arith.constant 0 : index
    %c0_9 = arith.constant 0 : index
    %c0_10 = arith.constant 0 : index
    %8 = vector.load %arg1[%c0_7, %c0_8, %c0_9, %c0_10] : memref<4x11x11x16xbf16, #tpu.memory_space<vmem>>, vector<1x11x11x16xbf16>
    %9 = vector.shape_cast %8 : vector<1x11x11x16xbf16> to vector<11x11x16xbf16>
    %10 = arith.extf %9 : vector<11x11x16xbf16> to vector<11x11x16xf32>
    %11 = vector.broadcast %1 : vector<1x1x16xf32> to vector<11x11x16xf32>
    %12 = arith.mulf %10, %11 : vector<11x11x16xf32>
    %13 = vector.broadcast %3 : vector<1x1x16xf32> to vector<11x11x16xf32>
    %14 = arith.addf %12, %13 : vector<11x11x16xf32>
    %cst = arith.constant 0.000000e+00 : f32
    %15 = vector.broadcast %cst : f32 to vector<11x11x16xf32>
    %16 = arith.maximumf %14, %15 : vector<11x11x16xf32>
    %c0_11 = arith.constant 0 : index
    %c0_12 = arith.constant 0 : index
    %c0_13 = arith.constant 0 : index
    %c0_14 = arith.constant 0 : index
    %17 = vector.load %arg2[%c0_11, %c0_12, %c0_13, %c0_14] : memref<4x11x11x1xf32, #tpu.memory_space<vmem>>, vector<1x11x11x1xf32>
    %18 = vector.shape_cast %17 : vector<1x11x11x1xf32> to vector<11x11x1xf32>
    %19 = vector.broadcast %18 : vector<11x11x1xf32> to vector<11x11x16xf32>
    %20 = arith.mulf %16, %19 : vector<11x11x16xf32>
    %21 = arith.truncf %20 : vector<11x11x16xf32> to vector<11x11x16xbf16>
    %c0_15 = arith.constant 0 : index
    %c0_16 = arith.constant 0 : index
    %c0_17 = arith.constant 0 : index
    %c0_18 = arith.constant 0 : index
    %22 = vector.load %arg13[%c0_15, %c0_16, %c0_17, %c0_18] : memref<4x11x11x16xbf16, #tpu.memory_space<vmem>>, vector<1x11x11x16xbf16>
    %23 = vector.shape_cast %22 : vector<1x11x11x16xbf16> to vector<11x11x16xbf16>
    %24 = vector.shape_cast %21 : vector<11x11x16xbf16> to vector<1x11x11x16xbf16>
    tpu.vector_store %arg13[%c0_15, %c0_16, %c0_17, %c0_18], %24 {strides = array<i32>} : memref<4x11x11x16xbf16, #tpu.memory_space<vmem>>, vector<1x11x11x16xbf16>,
    %c1 = arith.constant 1 : index
    %c0_19 = arith.constant 0 : index
    %c0_20 = arith.constant 0 : index
    %c0_21 = arith.constant 0 : index
    %25 = vector.load %arg1[%c1, %c0_19, %c0_20, %c0_21] : memref<4x11x11x16xbf16, #tpu.memory_space<vmem>>, vector<1x11x11x16xbf16>
    %26 = vector.shape_cast %25 : vector<1x11x11x16xbf16> to vector<11x11x16xbf16>
    %27 = arith.extf %26 : vector<11x11x16xbf16> to vector<11x11x16xf32>
    %28 = vector.broadcast %1 : vector<1x1x16xf32> to vector<11x11x16xf32>
    %29 = arith.mulf %27, %28 : vector<11x11x16xf32>
    %30 = vector.broadcast %3 : vector<1x1x16xf32> to vector<11x11x16xf32>
    %31 = arith.addf %29, %30 : vector<11x11x16xf32>
    %cst_22 = arith.constant 0.000000e+00 : f32
    %32 = vector.broadcast %cst_22 : f32 to vector<11x11x16xf32>
    %33 = arith.maximumf %31, %32 : vector<11x11x16xf32>
    %c1_23 = arith.constant 1 : index
    %c0_24 = arith.constant 0 : index
    %c0_25 = arith.constant 0 : index
    %c0_26 = arith.constant 0 : index
    %34 = vector.load %arg2[%c1_23, %c0_24, %c0_25, %c0_26] : memref<4x11x11x1xf32, #tpu.memory_space<vmem>>, vector<1x11x11x1xf32>
    %35 = vector.shape_cast %34 : vector<1x11x11x1xf32> to vector<11x11x1xf32>
    %36 = vector.broadcast %35 : vector<11x11x1xf32> to vector<11x11x16xf32>
    %37 = arith.mulf %33, %36 : vector<11x11x16xf32>
    %38 = arith.truncf %37 : vector<11x11x16xf32> to vector<11x11x16xbf16>
    %c1_27 = arith.constant 1 : index
    %c0_28 = arith.constant 0 : index
    %c0_29 = arith.constant 0 : index
    %c0_30 = arith.constant 0 : index
    %39 = vector.load %arg13[%c1_27, %c0_28, %c0_29, %c0_30] : memref<4x11x11x16xbf16, #tpu.memory_space<vmem>>, vector<1x11x11x16xbf16>
    %40 = vector.shape_cast %39 : vector<1x11x11x16xbf16> to vector<11x11x16xbf16>
    %41 = vector.shape_cast %38 : vector<11x11x16xbf16> to vector<1x11x11x16xbf16>
    tpu.vector_store %arg13[%c1_27, %c0_28, %c0_29, %c0_30], %41 {strides = array<i32>} : memref<4x11x11x16xbf16, #tpu.memory_space<vmem>>, vector<1x11x11x16xbf16>,
    %c2 = arith.constant 2 : index
    %c0_31 = arith.constant 0 : index
    %c0_32 = arith.constant 0 : index
    %c0_33 = arith.constant 0 : index
    %42 = vector.load %arg1[%c2, %c0_31, %c0_32, %c0_33] : memref<4x11x11x16xbf16, #tpu.memory_space<vmem>>, vector<1x11x11x16xbf16>
    %43 = vector.shape_cast %42 : vector<1x11x11x16xbf16> to vector<11x11x16xbf16>
    %44 = arith.extf %43 : vector<11x11x16xbf16> to vector<11x11x16xf32>
    %45 = vector.broadcast %1 : vector<1x1x16xf32> to vector<11x11x16xf32>
    %46 = arith.mulf %44, %45 : vector<11x11x16xf32>
    %47 = vector.broadcast %3 : vector<1x1x16xf32> to vector<11x11x16xf32>
    %48 = arith.addf %46, %47 : vector<11x11x16xf32>
    %cst_34 = arith.constant 0.000000e+00 : f32
    %49 = vector.broadcast %cst_34 : f32 to vector<11x11x16xf32>
    %50 = arith.maximumf %48, %49 : vector<11x11x16xf32>
    %c2_35 = arith.constant 2 : index
    %c0_36 = arith.constant 0 : index
    %c0_37 = arith.constant 0 : index
    %c0_38 = arith.constant 0 : index
    %51 = vector.load %arg2[%c2_35, %c0_36, %c0_37, %c0_38] : memref<4x11x11x1xf32, #tpu.memory_space<vmem>>, vector<1x11x11x1xf32>
    %52 = vector.shape_cast %51 : vector<1x11x11x1xf32> to vector<11x11x1xf32>
    %53 = vector.broadcast %52 : vector<11x11x1xf32> to vector<11x11x16xf32>
    %54 = arith.mulf %50, %53 : vector<11x11x16xf32>
    %55 = arith.truncf %54 : vector<11x11x16xf32> to vector<11x11x16xbf16>
    %c2_39 = arith.constant 2 : index
    %c0_40 = arith.constant 0 : index
    %c0_41 = arith.constant 0 : index
    %c0_42 = arith.constant 0 : index
    %56 = vector.load %arg13[%c2_39, %c0_40, %c0_41, %c0_42] : memref<4x11x11x16xbf16, #tpu.memory_space<vmem>>, vector<1x11x11x16xbf16>
    %57 = vector.shape_cast %56 : vector<1x11x11x16xbf16> to vector<11x11x16xbf16>
    %58 = vector.shape_cast %55 : vector<11x11x16xbf16> to vector<1x11x11x16xbf16>
    tpu.vector_store %arg13[%c2_39, %c0_40, %c0_41, %c0_42], %58 {strides = array<i32>} : memref<4x11x11x16xbf16, #tpu.memory_space<vmem>>, vector<1x11x11x16xbf16>,
    %c3 = arith.constant 3 : index
    %c0_43 = arith.constant 0 : index
    %c0_44 = arith.constant 0 : index
    %c0_45 = arith.constant 0 : index
    %59 = vector.load %arg1[%c3, %c0_43, %c0_44, %c0_45] : memref<4x11x11x16xbf16, #tpu.memory_space<vmem>>, vector<1x11x11x16xbf16>
    %60 = vector.shape_cast %59 : vector<1x11x11x16xbf16> to vector<11x11x16xbf16>
    %61 = arith.extf %60 : vector<11x11x16xbf16> to vector<11x11x16xf32>
    %62 = vector.broadcast %1 : vector<1x1x16xf32> to vector<11x11x16xf32>
    %63 = arith.mulf %61, %62 : vector<11x11x16xf32>
    %64 = vector.broadcast %3 : vector<1x1x16xf32> to vector<11x11x16xf32>
    %65 = arith.addf %63, %64 : vector<11x11x16xf32>
    %cst_46 = arith.constant 0.000000e+00 : f32
    %66 = vector.broadcast %cst_46 : f32 to vector<11x11x16xf32>
    %67 = arith.maximumf %65, %66 : vector<11x11x16xf32>
    %c3_47 = arith.constant 3 : index
    %c0_48 = arith.constant 0 : index
    %c0_49 = arith.constant 0 : index
    %c0_50 = arith.constant 0 : index
    %68 = vector.load %arg2[%c3_47, %c0_48, %c0_49, %c0_50] : memref<4x11x11x1xf32, #tpu.memory_space<vmem>>, vector<1x11x11x1xf32>
    %69 = vector.shape_cast %68 : vector<1x11x11x1xf32> to vector<11x11x1xf32>
    %70 = vector.broadcast %69 : vector<11x11x1xf32> to vector<11x11x16xf32>
    %71 = arith.mulf %67, %70 : vector<11x11x16xf32>
    %72 = arith.truncf %71 : vector<11x11x16xf32> to vector<11x11x16xbf16>
    %c3_51 = arith.constant 3 : index
    %c0_52 = arith.constant 0 : index
    %c0_53 = arith.constant 0 : index
    %c0_54 = arith.constant 0 : index
    %73 = vector.load %arg13[%c3_51, %c0_52, %c0_53, %c0_54] : memref<4x11x11x16xbf16, #tpu.memory_space<vmem>>, vector<1x11x11x16xbf16>
    %74 = vector.shape_cast %73 : vector<1x11x11x16xbf16> to vector<11x11x16xbf16>
    %75 = vector.shape_cast %72 : vector<11x11x16xbf16> to vector<1x11x11x16xbf16>
    tpu.vector_store %arg13[%c3_51, %c0_52, %c0_53, %c0_54], %75 {strides = array<i32>} : memref<4x11x11x16xbf16, #tpu.memory_space<vmem>>, vector<1x11x11x16xbf16>,
    %cst_55 = arith.constant 0.000000e+00 : f32
    %76 = vector.broadcast %cst_55 : f32 to vector<10x10x32xf32>
    %c0_56 = arith.constant 0 : index
    %c0_57 = arith.constant 0 : index
    %c0_58 = arith.constant 0 : index
    %c0_59 = arith.constant 0 : index
    %77 = vector.load %arg13[%c0_56, %c0_57, %c0_58, %c0_59] : memref<4x11x11x16xbf16, #tpu.memory_space<vmem>>, vector<1x10x10x16xbf16>
    %78 = vector.shape_cast %77 : vector<1x10x10x16xbf16> to vector<10x10x16xbf16>
    %c0_60 = arith.constant 0 : index
    %c0_61 = arith.constant 0 : index
    %c0_62 = arith.constant 0 : index
    %79 = vector.load %arg3[%c0_60, %c0_61, %c0_62] : memref<9x16x32xbf16, #tpu.memory_space<vmem>>, vector<1x16x32xbf16>
    %80 = vector.shape_cast %79 : vector<1x16x32xbf16> to vector<16x32xbf16>
    %81 = vector.shape_cast %80 : vector<16x32xbf16> to vector<1x16x32xbf16>
    %82 = vector.broadcast %81 : vector<1x16x32xbf16> to vector<10x16x32xbf16>
    %cst_63 = arith.constant dense<0.000000e+00> : vector<10x10x32xf32>
    %83 = tpu.matmul %78, %82, %cst_63 {dimension_numbers = #tpu.dot_dimension_numbers<[2], [1], [1], [2], [0, 0, 0, 1, 1, 2], [0], [0]>} : vector<10x10x16xbf16>, vector<10x16x32xbf16>, vector<10x10x32xf32> -> vector<10x10x32xf32>
    %84 = arith.addf %76, %83 : vector<10x10x32xf32>
    %c1_64 = arith.constant 1 : index
    %c0_65 = arith.constant 0 : index
    %c0_66 = arith.constant 0 : index
    %c0_67 = arith.constant 0 : index
    %85 = vector.load %arg13[%c1_64, %c0_65, %c0_66, %c0_67] : memref<4x11x11x16xbf16, #tpu.memory_space<vmem>>, vector<1x10x10x16xbf16>
    %86 = vector.shape_cast %85 : vector<1x10x10x16xbf16> to vector<10x10x16xbf16>
    %c1_68 = arith.constant 1 : index
    %c0_69 = arith.constant 0 : index
    %c0_70 = arith.constant 0 : index
    %87 = vector.load %arg3[%c1_68, %c0_69, %c0_70] : memref<9x16x32xbf16, #tpu.memory_space<vmem>>, vector<1x16x32xbf16>
    %88 = vector.shape_cast %87 : vector<1x16x32xbf16> to vector<16x32xbf16>
    %89 = vector.shape_cast %88 : vector<16x32xbf16> to vector<1x16x32xbf16>
    %90 = vector.broadcast %89 : vector<1x16x32xbf16> to vector<10x16x32xbf16>
    %cst_71 = arith.constant dense<0.000000e+00> : vector<10x10x32xf32>
    %91 = tpu.matmul %86, %90, %cst_71 {dimension_numbers = #tpu.dot_dimension_numbers<[2], [1], [1], [2], [0, 0, 0, 1, 1, 2], [0], [0]>} : vector<10x10x16xbf16>, vector<10x16x32xbf16>, vector<10x10x32xf32> -> vector<10x10x32xf32>
    %92 = arith.addf %84, %91 : vector<10x10x32xf32>
    %c0_72 = arith.constant 0 : index
    %c0_73 = arith.constant 0 : index
    %c1_74 = arith.constant 1 : index
    %c0_75 = arith.constant 0 : index
    %93 = vector.load %arg13[%c0_72, %c0_73, %c1_74, %c0_75] : memref<4x11x11x16xbf16, #tpu.memory_space<vmem>>, vector<1x10x10x16xbf16>
    %94 = vector.shape_cast %93 : vector<1x10x10x16xbf16> to vector<10x10x16xbf16>
    %c2_76 = arith.constant 2 : index
    %c0_77 = arith.constant 0 : index
    %c0_78 = arith.constant 0 : index
    %95 = vector.load %arg3[%c2_76, %c0_77, %c0_78] : memref<9x16x32xbf16, #tpu.memory_space<vmem>>, vector<1x16x32xbf16>
    %96 = vector.shape_cast %95 : vector<1x16x32xbf16> to vector<16x32xbf16>
    %97 = vector.shape_cast %96 : vector<16x32xbf16> to vector<1x16x32xbf16>
    %98 = vector.broadcast %97 : vector<1x16x32xbf16> to vector<10x16x32xbf16>
    %cst_79 = arith.constant dense<0.000000e+00> : vector<10x10x32xf32>
    %99 = tpu.matmul %94, %98, %cst_79 {dimension_numbers = #tpu.dot_dimension_numbers<[2], [1], [1], [2], [0, 0, 0, 1, 1, 2], [0], [0]>} : vector<10x10x16xbf16>, vector<10x16x32xbf16>, vector<10x10x32xf32> -> vector<10x10x32xf32>
    %100 = arith.addf %92, %99 : vector<10x10x32xf32>
    %c2_80 = arith.constant 2 : index
    %c0_81 = arith.constant 0 : index
    %c0_82 = arith.constant 0 : index
    %c0_83 = arith.constant 0 : index
    %101 = vector.load %arg13[%c2_80, %c0_81, %c0_82, %c0_83] : memref<4x11x11x16xbf16, #tpu.memory_space<vmem>>, vector<1x10x10x16xbf16>
    %102 = vector.shape_cast %101 : vector<1x10x10x16xbf16> to vector<10x10x16xbf16>
    %c3_84 = arith.constant 3 : index
    %c0_85 = arith.constant 0 : index
    %c0_86 = arith.constant 0 : index
    %103 = vector.load %arg3[%c3_84, %c0_85, %c0_86] : memref<9x16x32xbf16, #tpu.memory_space<vmem>>, vector<1x16x32xbf16>
    %104 = vector.shape_cast %103 : vector<1x16x32xbf16> to vector<16x32xbf16>
    %105 = vector.shape_cast %104 : vector<16x32xbf16> to vector<1x16x32xbf16>
    %106 = vector.broadcast %105 : vector<1x16x32xbf16> to vector<10x16x32xbf16>
    %cst_87 = arith.constant dense<0.000000e+00> : vector<10x10x32xf32>
    %107 = tpu.matmul %102, %106, %cst_87 {dimension_numbers = #tpu.dot_dimension_numbers<[2], [1], [1], [2], [0, 0, 0, 1, 1, 2], [0], [0]>} : vector<10x10x16xbf16>, vector<10x16x32xbf16>, vector<10x10x32xf32> -> vector<10x10x32xf32>
    %108 = arith.addf %100, %107 : vector<10x10x32xf32>
    %c3_88 = arith.constant 3 : index
    %c0_89 = arith.constant 0 : index
    %c0_90 = arith.constant 0 : index
    %c0_91 = arith.constant 0 : index
    %109 = vector.load %arg13[%c3_88, %c0_89, %c0_90, %c0_91] : memref<4x11x11x16xbf16, #tpu.memory_space<vmem>>, vector<1x10x10x16xbf16>
    %110 = vector.shape_cast %109 : vector<1x10x10x16xbf16> to vector<10x10x16xbf16>
    %c4 = arith.constant 4 : index
    %c0_92 = arith.constant 0 : index
    %c0_93 = arith.constant 0 : index
    %111 = vector.load %arg3[%c4, %c0_92, %c0_93] : memref<9x16x32xbf16, #tpu.memory_space<vmem>>, vector<1x16x32xbf16>
    %112 = vector.shape_cast %111 : vector<1x16x32xbf16> to vector<16x32xbf16>
    %113 = vector.shape_cast %112 : vector<16x32xbf16> to vector<1x16x32xbf16>
    %114 = vector.broadcast %113 : vector<1x16x32xbf16> to vector<10x16x32xbf16>
    %cst_94 = arith.constant dense<0.000000e+00> : vector<10x10x32xf32>
    %115 = tpu.matmul %110, %114, %cst_94 {dimension_numbers = #tpu.dot_dimension_numbers<[2], [1], [1], [2], [0, 0, 0, 1, 1, 2], [0], [0]>} : vector<10x10x16xbf16>, vector<10x16x32xbf16>, vector<10x10x32xf32> -> vector<10x10x32xf32>
    %116 = arith.addf %108, %115 : vector<10x10x32xf32>
    %c2_95 = arith.constant 2 : index
    %c0_96 = arith.constant 0 : index
    %c1_97 = arith.constant 1 : index
    %c0_98 = arith.constant 0 : index
    %117 = vector.load %arg13[%c2_95, %c0_96, %c1_97, %c0_98] : memref<4x11x11x16xbf16, #tpu.memory_space<vmem>>, vector<1x10x10x16xbf16>
    %118 = vector.shape_cast %117 : vector<1x10x10x16xbf16> to vector<10x10x16xbf16>
    %c5 = arith.constant 5 : index
    %c0_99 = arith.constant 0 : index
    %c0_100 = arith.constant 0 : index
    %119 = vector.load %arg3[%c5, %c0_99, %c0_100] : memref<9x16x32xbf16, #tpu.memory_space<vmem>>, vector<1x16x32xbf16>
    %120 = vector.shape_cast %119 : vector<1x16x32xbf16> to vector<16x32xbf16>
    %121 = vector.shape_cast %120 : vector<16x32xbf16> to vector<1x16x32xbf16>
    %122 = vector.broadcast %121 : vector<1x16x32xbf16> to vector<10x16x32xbf16>
    %cst_101 = arith.constant dense<0.000000e+00> : vector<10x10x32xf32>
    %123 = tpu.matmul %118, %122, %cst_101 {dimension_numbers = #tpu.dot_dimension_numbers<[2], [1], [1], [2], [0, 0, 0, 1, 1, 2], [0], [0]>} : vector<10x10x16xbf16>, vector<10x16x32xbf16>, vector<10x10x32xf32> -> vector<10x10x32xf32>
    %124 = arith.addf %116, %123 : vector<10x10x32xf32>
    %c0_102 = arith.constant 0 : index
    %c1_103 = arith.constant 1 : index
    %c0_104 = arith.constant 0 : index
    %c0_105 = arith.constant 0 : index
    %125 = vector.load %arg13[%c0_102, %c1_103, %c0_104, %c0_105] : memref<4x11x11x16xbf16, #tpu.memory_space<vmem>>, vector<1x10x10x16xbf16>
    %126 = vector.shape_cast %125 : vector<1x10x10x16xbf16> to vector<10x10x16xbf16>
    %c6 = arith.constant 6 : index
    %c0_106 = arith.constant 0 : index
    %c0_107 = arith.constant 0 : index
    %127 = vector.load %arg3[%c6, %c0_106, %c0_107] : memref<9x16x32xbf16, #tpu.memory_space<vmem>>, vector<1x16x32xbf16>
    %128 = vector.shape_cast %127 : vector<1x16x32xbf16> to vector<16x32xbf16>
    %129 = vector.shape_cast %128 : vector<16x32xbf16> to vector<1x16x32xbf16>
    %130 = vector.broadcast %129 : vector<1x16x32xbf16> to vector<10x16x32xbf16>
    %cst_108 = arith.constant dense<0.000000e+00> : vector<10x10x32xf32>
    %131 = tpu.matmul %126, %130, %cst_108 {dimension_numbers = #tpu.dot_dimension_numbers<[2], [1], [1], [2], [0, 0, 0, 1, 1, 2], [0], [0]>} : vector<10x10x16xbf16>, vector<10x16x32xbf16>, vector<10x10x32xf32> -> vector<10x10x32xf32>
    %132 = arith.addf %124, %131 : vector<10x10x32xf32>
    %c1_109 = arith.constant 1 : index
    %c1_110 = arith.constant 1 : index
    %c0_111 = arith.constant 0 : index
    %c0_112 = arith.constant 0 : index
    %133 = vector.load %arg13[%c1_109, %c1_110, %c0_111, %c0_112] : memref<4x11x11x16xbf16, #tpu.memory_space<vmem>>, vector<1x10x10x16xbf16>
    %134 = vector.shape_cast %133 : vector<1x10x10x16xbf16> to vector<10x10x16xbf16>
    %c7 = arith.constant 7 : index
    %c0_113 = arith.constant 0 : index
    %c0_114 = arith.constant 0 : index
    %135 = vector.load %arg3[%c7, %c0_113, %c0_114] : memref<9x16x32xbf16, #tpu.memory_space<vmem>>, vector<1x16x32xbf16>
    %136 = vector.shape_cast %135 : vector<1x16x32xbf16> to vector<16x32xbf16>
    %137 = vector.shape_cast %136 : vector<16x32xbf16> to vector<1x16x32xbf16>
    %138 = vector.broadcast %137 : vector<1x16x32xbf16> to vector<10x16x32xbf16>
    %cst_115 = arith.constant dense<0.000000e+00> : vector<10x10x32xf32>
    %139 = tpu.matmul %134, %138, %cst_115 {dimension_numbers = #tpu.dot_dimension_numbers<[2], [1], [1], [2], [0, 0, 0, 1, 1, 2], [0], [0]>} : vector<10x10x16xbf16>, vector<10x16x32xbf16>, vector<10x10x32xf32> -> vector<10x10x32xf32>
    %140 = arith.addf %132, %139 : vector<10x10x32xf32>
    %c0_116 = arith.constant 0 : index
    %c1_117 = arith.constant 1 : index
    %c1_118 = arith.constant 1 : index
    %c0_119 = arith.constant 0 : index
    %141 = vector.load %arg13[%c0_116, %c1_117, %c1_118, %c0_119] : memref<4x11x11x16xbf16, #tpu.memory_space<vmem>>, vector<1x10x10x16xbf16>
    %142 = vector.shape_cast %141 : vector<1x10x10x16xbf16> to vector<10x10x16xbf16>
    %c8 = arith.constant 8 : index
    %c0_120 = arith.constant 0 : index
    %c0_121 = arith.constant 0 : index
    %143 = vector.load %arg3[%c8, %c0_120, %c0_121] : memref<9x16x32xbf16, #tpu.memory_space<vmem>>, vector<1x16x32xbf16>
    %144 = vector.shape_cast %143 : vector<1x16x32xbf16> to vector<16x32xbf16>
    %145 = vector.shape_cast %144 : vector<16x32xbf16> to vector<1x16x32xbf16>
    %146 = vector.broadcast %145 : vector<1x16x32xbf16> to vector<10x16x32xbf16>
    %cst_122 = arith.constant dense<0.000000e+00> : vector<10x10x32xf32>
    %147 = tpu.matmul %142, %146, %cst_122 {dimension_numbers = #tpu.dot_dimension_numbers<[2], [1], [1], [2], [0, 0, 0, 1, 1, 2], [0], [0]>} : vector<10x10x16xbf16>, vector<10x16x32xbf16>, vector<10x10x32xf32> -> vector<10x10x32xf32>
    %148 = arith.addf %140, %147 : vector<10x10x32xf32>
    %149 = vector.broadcast %5 : vector<1x1x32xf32> to vector<10x10x32xf32>
    %150 = arith.mulf %148, %149 : vector<10x10x32xf32>
    %151 = vector.broadcast %7 : vector<1x1x32xf32> to vector<10x10x32xf32>
    %152 = arith.addf %150, %151 : vector<10x10x32xf32>
    %cst_123 = arith.constant 0.000000e+00 : f32
    %153 = vector.broadcast %cst_123 : f32 to vector<10x10x32xf32>
    %154 = arith.maximumf %152, %153 : vector<10x10x32xf32>
    %c0_124 = arith.constant 0 : index
    %c0_125 = arith.constant 0 : index
    %c0_126 = arith.constant 0 : index
    %155 = vector.load %arg8[%c0_124, %c0_125, %c0_126] : memref<10x10x1xf32, #tpu.memory_space<vmem>>, vector<10x10x1xf32>
    %156 = vector.broadcast %155 : vector<10x10x1xf32> to vector<10x10x32xf32>
    %157 = arith.mulf %154, %156 : vector<10x10x32xf32>
    %158 = arith.truncf %157 : vector<10x10x32xf32> to vector<10x10x32xbf16>
    %c0_127 = arith.constant 0 : index
    %c0_128 = arith.constant 0 : index
    %c0_129 = arith.constant 0 : index
    %159 = vector.load %arg14[%c0_127, %c0_128, %c0_129] : memref<10x10x32xbf16, #tpu.memory_space<vmem>>, vector<10x10x32xbf16>
    tpu.vector_store %arg14[%c0_127, %c0_128, %c0_129], %158 {strides = array<i32>} : memref<10x10x32xbf16, #tpu.memory_space<vmem>>, vector<10x10x32xbf16>,
    %cst_130 = arith.constant 0.000000e+00 : f32
    %160 = vector.broadcast %cst_130 : f32 to vector<8x8x32xf32>
    %c0_131 = arith.constant 0 : index
    %c0_132 = arith.constant 0 : index
    %c0_133 = arith.constant 0 : index
    %161 = vector.load %arg14[%c0_131, %c0_132, %c0_133] : memref<10x10x32xbf16, #tpu.memory_space<vmem>>, vector<8x8x32xbf16>
    %c0_134 = arith.constant 0 : index
    %c0_135 = arith.constant 0 : index
    %c0_136 = arith.constant 0 : index
    %162 = vector.load %arg9[%c0_134, %c0_135, %c0_136] : memref<9x32x32xbf16, #tpu.memory_space<vmem>>, vector<1x32x32xbf16>
    %163 = vector.shape_cast %162 : vector<1x32x32xbf16> to vector<32x32xbf16>
    %164 = vector.shape_cast %163 : vector<32x32xbf16> to vector<1x32x32xbf16>
    %165 = vector.broadcast %164 : vector<1x32x32xbf16> to vector<8x32x32xbf16>
    %cst_137 = arith.constant dense<0.000000e+00> : vector<8x8x32xf32>
    %166 = tpu.matmul %161, %165, %cst_137 {dimension_numbers = #tpu.dot_dimension_numbers<[2], [1], [1], [2], [0, 0, 0, 1, 1, 2], [0], [0]>} : vector<8x8x32xbf16>, vector<8x32x32xbf16>, vector<8x8x32xf32> -> vector<8x8x32xf32>
    %167 = arith.addf %160, %166 : vector<8x8x32xf32>
    %c0_138 = arith.constant 0 : index
    %c1_139 = arith.constant 1 : index
    %c0_140 = arith.constant 0 : index
    %168 = vector.load %arg14[%c0_138, %c1_139, %c0_140] : memref<10x10x32xbf16, #tpu.memory_space<vmem>>, vector<8x8x32xbf16>
    %c1_141 = arith.constant 1 : index
    %c0_142 = arith.constant 0 : index
    %c0_143 = arith.constant 0 : index
    %169 = vector.load %arg9[%c1_141, %c0_142, %c0_143] : memref<9x32x32xbf16, #tpu.memory_space<vmem>>, vector<1x32x32xbf16>
    %170 = vector.shape_cast %169 : vector<1x32x32xbf16> to vector<32x32xbf16>
    %171 = vector.shape_cast %170 : vector<32x32xbf16> to vector<1x32x32xbf16>
    %172 = vector.broadcast %171 : vector<1x32x32xbf16> to vector<8x32x32xbf16>
    %cst_144 = arith.constant dense<0.000000e+00> : vector<8x8x32xf32>
    %173 = tpu.matmul %168, %172, %cst_144 {dimension_numbers = #tpu.dot_dimension_numbers<[2], [1], [1], [2], [0, 0, 0, 1, 1, 2], [0], [0]>} : vector<8x8x32xbf16>, vector<8x32x32xbf16>, vector<8x8x32xf32> -> vector<8x8x32xf32>
    %174 = arith.addf %167, %173 : vector<8x8x32xf32>
    %c0_145 = arith.constant 0 : index
    %c2_146 = arith.constant 2 : index
    %c0_147 = arith.constant 0 : index
    %175 = vector.load %arg14[%c0_145, %c2_146, %c0_147] : memref<10x10x32xbf16, #tpu.memory_space<vmem>>, vector<8x8x32xbf16>
    %c2_148 = arith.constant 2 : index
    %c0_149 = arith.constant 0 : index
    %c0_150 = arith.constant 0 : index
    %176 = vector.load %arg9[%c2_148, %c0_149, %c0_150] : memref<9x32x32xbf16, #tpu.memory_space<vmem>>, vector<1x32x32xbf16>
    %177 = vector.shape_cast %176 : vector<1x32x32xbf16> to vector<32x32xbf16>
    %178 = vector.shape_cast %177 : vector<32x32xbf16> to vector<1x32x32xbf16>
    %179 = vector.broadcast %178 : vector<1x32x32xbf16> to vector<8x32x32xbf16>
    %cst_151 = arith.constant dense<0.000000e+00> : vector<8x8x32xf32>
    %180 = tpu.matmul %175, %179, %cst_151 {dimension_numbers = #tpu.dot_dimension_numbers<[2], [1], [1], [2], [0, 0, 0, 1, 1, 2], [0], [0]>} : vector<8x8x32xbf16>, vector<8x32x32xbf16>, vector<8x8x32xf32> -> vector<8x8x32xf32>
    %181 = arith.addf %174, %180 : vector<8x8x32xf32>
    %c1_152 = arith.constant 1 : index
    %c0_153 = arith.constant 0 : index
    %c0_154 = arith.constant 0 : index
    %182 = vector.load %arg14[%c1_152, %c0_153, %c0_154] : memref<10x10x32xbf16, #tpu.memory_space<vmem>>, vector<8x8x32xbf16>
    %c3_155 = arith.constant 3 : index
    %c0_156 = arith.constant 0 : index
    %c0_157 = arith.constant 0 : index
    %183 = vector.load %arg9[%c3_155, %c0_156, %c0_157] : memref<9x32x32xbf16, #tpu.memory_space<vmem>>, vector<1x32x32xbf16>
    %184 = vector.shape_cast %183 : vector<1x32x32xbf16> to vector<32x32xbf16>
    %185 = vector.shape_cast %184 : vector<32x32xbf16> to vector<1x32x32xbf16>
    %186 = vector.broadcast %185 : vector<1x32x32xbf16> to vector<8x32x32xbf16>
    %cst_158 = arith.constant dense<0.000000e+00> : vector<8x8x32xf32>
    %187 = tpu.matmul %182, %186, %cst_158 {dimension_numbers = #tpu.dot_dimension_numbers<[2], [1], [1], [2], [0, 0, 0, 1, 1, 2], [0], [0]>} : vector<8x8x32xbf16>, vector<8x32x32xbf16>, vector<8x8x32xf32> -> vector<8x8x32xf32>
    %188 = arith.addf %181, %187 : vector<8x8x32xf32>
    %c1_159 = arith.constant 1 : index
    %c1_160 = arith.constant 1 : index
    %c0_161 = arith.constant 0 : index
    %189 = vector.load %arg14[%c1_159, %c1_160, %c0_161] : memref<10x10x32xbf16, #tpu.memory_space<vmem>>, vector<8x8x32xbf16>
    %c4_162 = arith.constant 4 : index
    %c0_163 = arith.constant 0 : index
    %c0_164 = arith.constant 0 : index
    %190 = vector.load %arg9[%c4_162, %c0_163, %c0_164] : memref<9x32x32xbf16, #tpu.memory_space<vmem>>, vector<1x32x32xbf16>
    %191 = vector.shape_cast %190 : vector<1x32x32xbf16> to vector<32x32xbf16>
    %192 = vector.shape_cast %191 : vector<32x32xbf16> to vector<1x32x32xbf16>
    %193 = vector.broadcast %192 : vector<1x32x32xbf16> to vector<8x32x32xbf16>
    %cst_165 = arith.constant dense<0.000000e+00> : vector<8x8x32xf32>
    %194 = tpu.matmul %189, %193, %cst_165 {dimension_numbers = #tpu.dot_dimension_numbers<[2], [1], [1], [2], [0, 0, 0, 1, 1, 2], [0], [0]>} : vector<8x8x32xbf16>, vector<8x32x32xbf16>, vector<8x8x32xf32> -> vector<8x8x32xf32>
    %195 = arith.addf %188, %194 : vector<8x8x32xf32>
    %c1_166 = arith.constant 1 : index
    %c2_167 = arith.constant 2 : index
    %c0_168 = arith.constant 0 : index
    %196 = vector.load %arg14[%c1_166, %c2_167, %c0_168] : memref<10x10x32xbf16, #tpu.memory_space<vmem>>, vector<8x8x32xbf16>
    %c5_169 = arith.constant 5 : index
    %c0_170 = arith.constant 0 : index
    %c0_171 = arith.constant 0 : index
    %197 = vector.load %arg9[%c5_169, %c0_170, %c0_171] : memref<9x32x32xbf16, #tpu.memory_space<vmem>>, vector<1x32x32xbf16>
    %198 = vector.shape_cast %197 : vector<1x32x32xbf16> to vector<32x32xbf16>
    %199 = vector.shape_cast %198 : vector<32x32xbf16> to vector<1x32x32xbf16>
    %200 = vector.broadcast %199 : vector<1x32x32xbf16> to vector<8x32x32xbf16>
    %cst_172 = arith.constant dense<0.000000e+00> : vector<8x8x32xf32>
    %201 = tpu.matmul %196, %200, %cst_172 {dimension_numbers = #tpu.dot_dimension_numbers<[2], [1], [1], [2], [0, 0, 0, 1, 1, 2], [0], [0]>} : vector<8x8x32xbf16>, vector<8x32x32xbf16>, vector<8x8x32xf32> -> vector<8x8x32xf32>
    %202 = arith.addf %195, %201 : vector<8x8x32xf32>
    %c2_173 = arith.constant 2 : index
    %c0_174 = arith.constant 0 : index
    %c0_175 = arith.constant 0 : index
    %203 = vector.load %arg14[%c2_173, %c0_174, %c0_175] : memref<10x10x32xbf16, #tpu.memory_space<vmem>>, vector<8x8x32xbf16>
    %c6_176 = arith.constant 6 : index
    %c0_177 = arith.constant 0 : index
    %c0_178 = arith.constant 0 : index
    %204 = vector.load %arg9[%c6_176, %c0_177, %c0_178] : memref<9x32x32xbf16, #tpu.memory_space<vmem>>, vector<1x32x32xbf16>
    %205 = vector.shape_cast %204 : vector<1x32x32xbf16> to vector<32x32xbf16>
    %206 = vector.shape_cast %205 : vector<32x32xbf16> to vector<1x32x32xbf16>
    %207 = vector.broadcast %206 : vector<1x32x32xbf16> to vector<8x32x32xbf16>
    %cst_179 = arith.constant dense<0.000000e+00> : vector<8x8x32xf32>
    %208 = tpu.matmul %203, %207, %cst_179 {dimension_numbers = #tpu.dot_dimension_numbers<[2], [1], [1], [2], [0, 0, 0, 1, 1, 2], [0], [0]>} : vector<8x8x32xbf16>, vector<8x32x32xbf16>, vector<8x8x32xf32> -> vector<8x8x32xf32>
    %209 = arith.addf %202, %208 : vector<8x8x32xf32>
    %c2_180 = arith.constant 2 : index
    %c1_181 = arith.constant 1 : index
    %c0_182 = arith.constant 0 : index
    %210 = vector.load %arg14[%c2_180, %c1_181, %c0_182] : memref<10x10x32xbf16, #tpu.memory_space<vmem>>, vector<8x8x32xbf16>
    %c7_183 = arith.constant 7 : index
    %c0_184 = arith.constant 0 : index
    %c0_185 = arith.constant 0 : index
    %211 = vector.load %arg9[%c7_183, %c0_184, %c0_185] : memref<9x32x32xbf16, #tpu.memory_space<vmem>>, vector<1x32x32xbf16>
    %212 = vector.shape_cast %211 : vector<1x32x32xbf16> to vector<32x32xbf16>
    %213 = vector.shape_cast %212 : vector<32x32xbf16> to vector<1x32x32xbf16>
    %214 = vector.broadcast %213 : vector<1x32x32xbf16> to vector<8x32x32xbf16>
    %cst_186 = arith.constant dense<0.000000e+00> : vector<8x8x32xf32>
    %215 = tpu.matmul %210, %214, %cst_186 {dimension_numbers = #tpu.dot_dimension_numbers<[2], [1], [1], [2], [0, 0, 0, 1, 1, 2], [0], [0]>} : vector<8x8x32xbf16>, vector<8x32x32xbf16>, vector<8x8x32xf32> -> vector<8x8x32xf32>
    %216 = arith.addf %209, %215 : vector<8x8x32xf32>
    %c2_187 = arith.constant 2 : index
    %c2_188 = arith.constant 2 : index
    %c0_189 = arith.constant 0 : index
    %217 = vector.load %arg14[%c2_187, %c2_188, %c0_189] : memref<10x10x32xbf16, #tpu.memory_space<vmem>>, vector<8x8x32xbf16>
    %c8_190 = arith.constant 8 : index
    %c0_191 = arith.constant 0 : index
    %c0_192 = arith.constant 0 : index
    %218 = vector.load %arg9[%c8_190, %c0_191, %c0_192] : memref<9x32x32xbf16, #tpu.memory_space<vmem>>, vector<1x32x32xbf16>
    %219 = vector.shape_cast %218 : vector<1x32x32xbf16> to vector<32x32xbf16>
    %220 = vector.shape_cast %219 : vector<32x32xbf16> to vector<1x32x32xbf16>
    %221 = vector.broadcast %220 : vector<1x32x32xbf16> to vector<8x32x32xbf16>
    %cst_193 = arith.constant dense<0.000000e+00> : vector<8x8x32xf32>
    %222 = tpu.matmul %217, %221, %cst_193 {dimension_numbers = #tpu.dot_dimension_numbers<[2], [1], [1], [2], [0, 0, 0, 1, 1, 2], [0], [0]>} : vector<8x8x32xbf16>, vector<8x32x32xbf16>, vector<8x8x32xf32> -> vector<8x8x32xf32>
    %223 = arith.addf %216, %222 : vector<8x8x32xf32>
    %c0_194 = arith.constant 0 : index
    %c0_195 = arith.constant 0 : index
    %c0_196 = arith.constant 0 : index
    %c0_197 = arith.constant 0 : index
    %224 = vector.load %arg10[%c0_194, %c0_195, %c0_196, %c0_197] : memref<1x8x8x16xbf16, #tpu.memory_space<vmem>>, vector<1x8x8x16xbf16>
    %225 = vector.shape_cast %224 : vector<1x8x8x16xbf16> to vector<8x8x16xbf16>
    %226 = arith.extf %225 : vector<8x8x16xbf16> to vector<8x8x16xf32>
    %227 = vector.broadcast %1 : vector<1x1x16xf32> to vector<8x8x16xf32>
    %228 = arith.mulf %226, %227 : vector<8x8x16xf32>
    %229 = vector.broadcast %3 : vector<1x1x16xf32> to vector<8x8x16xf32>
    %230 = arith.addf %228, %229 : vector<8x8x16xf32>
    %cst_198 = arith.constant 0.000000e+00 : f32
    %231 = vector.broadcast %cst_198 : f32 to vector<8x8x16xf32>
    %232 = arith.maximumf %230, %231 : vector<8x8x16xf32>
    %233 = arith.truncf %232 : vector<8x8x16xf32> to vector<8x8x16xbf16>
    %c0_199 = arith.constant 0 : index
    %c0_200 = arith.constant 0 : index
    %234 = vector.load %arg11[%c0_199, %c0_200] : memref<16x32xbf16, #tpu.memory_space<vmem>>, vector<16x32xbf16>
    %235 = vector.shape_cast %234 : vector<16x32xbf16> to vector<1x16x32xbf16>
    %236 = vector.broadcast %235 : vector<1x16x32xbf16> to vector<8x16x32xbf16>
    %cst_201 = arith.constant dense<0.000000e+00> : vector<8x8x32xf32>
    %237 = tpu.matmul %233, %236, %cst_201 {dimension_numbers = #tpu.dot_dimension_numbers<[2], [1], [1], [2], [0, 0, 0, 1, 1, 2], [0], [0]>} : vector<8x8x16xbf16>, vector<8x16x32xbf16>, vector<8x8x32xf32> -> vector<8x8x32xf32>
    %238 = arith.addf %223, %237 : vector<8x8x32xf32>
    %c0_202 = arith.constant 0 : index
    %c0_203 = arith.constant 0 : index
    %c0_204 = arith.constant 0 : index
    %c0_205 = arith.constant 0 : index
    %239 = vector.load %arg12[%c0_202, %c0_203, %c0_204, %c0_205] : memref<1x8x8x32xf32, #tpu.memory_space<vmem>>, vector<1x8x8x32xf32>
    %240 = vector.shape_cast %239 : vector<1x8x8x32xf32> to vector<8x8x32xf32>
    %241 = vector.shape_cast %238 : vector<8x8x32xf32> to vector<1x8x8x32xf32>
    tpu.vector_store %arg12[%c0_202, %c0_203, %c0_204, %c0_205], %241 {strides = array<i32>} : memref<1x8x8x32xf32, #tpu.memory_space<vmem>>, vector<1x8x8x32xf32>,
    return
  }
  func.func @transform_0(%arg0: i32) -> (i32, i32, i32, i32) {
    %c0_i32 = arith.constant 0 : i32
    %c0_i32_0 = arith.constant 0 : i32
    %c0_i32_1 = arith.constant 0 : i32
    %c0_i32_2 = arith.constant 0 : i32
    return %arg0, %c0_i32, %c0_i32_0, %c0_i32_1 : i32, i32, i32, i32
  }
  func.func @transform_1(%arg0: i32) -> (i32, i32, i32, i32) {
    %c0_i32 = arith.constant 0 : i32
    %c0_i32_0 = arith.constant 0 : i32
    %c0_i32_1 = arith.constant 0 : i32
    %c0_i32_2 = arith.constant 0 : i32
    %c0_i32_3 = arith.constant 0 : i32
    return %c0_i32, %c0_i32_0, %c0_i32_1, %c0_i32_2 : i32, i32, i32, i32
  }
  func.func @transform_2(%arg0: i32) -> (i32, i32, i32) {
    %c0_i32 = arith.constant 0 : i32
    %c0_i32_0 = arith.constant 0 : i32
    %c0_i32_1 = arith.constant 0 : i32
    %c0_i32_2 = arith.constant 0 : i32
    return %c0_i32, %c0_i32_0, %c0_i32_1 : i32, i32, i32
  }
  func.func @transform_3(%arg0: i32) -> (i32, i32) {
    %c0_i32 = arith.constant 0 : i32
    %c0_i32_0 = arith.constant 0 : i32
    %c0_i32_1 = arith.constant 0 : i32
    return %c0_i32, %c0_i32_0 : i32, i32
  }
  func.func @transform_4(%arg0: i32) -> (i32, i32) {
    %c0_i32 = arith.constant 0 : i32
    %c0_i32_0 = arith.constant 0 : i32
    %c0_i32_1 = arith.constant 0 : i32
    return %c0_i32, %c0_i32_0 : i32, i32
  }
  func.func @transform_5(%arg0: i32) -> (i32, i32) {
    %c0_i32 = arith.constant 0 : i32
    %c0_i32_0 = arith.constant 0 : i32
    %c0_i32_1 = arith.constant 0 : i32
    return %c0_i32, %c0_i32_0 : i32, i32
  }
  func.func @transform_6(%arg0: i32) -> (i32, i32) {
    %c0_i32 = arith.constant 0 : i32
    %c0_i32_0 = arith.constant 0 : i32
    %c0_i32_1 = arith.constant 0 : i32
    return %c0_i32, %c0_i32_0 : i32, i32
  }
  func.func @transform_7(%arg0: i32) -> (i32, i32, i32) {
    %c0_i32 = arith.constant 0 : i32
    %c0_i32_0 = arith.constant 0 : i32
    %c0_i32_1 = arith.constant 0 : i32
    %c0_i32_2 = arith.constant 0 : i32
    return %c0_i32, %c0_i32_0, %c0_i32_1 : i32, i32, i32
  }
  func.func @transform_8(%arg0: i32) -> (i32, i32, i32) {
    %c0_i32 = arith.constant 0 : i32
    %c0_i32_0 = arith.constant 0 : i32
    %c0_i32_1 = arith.constant 0 : i32
    %c0_i32_2 = arith.constant 0 : i32
    return %c0_i32, %c0_i32_0, %c0_i32_1 : i32, i32, i32
  }
  func.func @transform_9(%arg0: i32) -> (i32, i32, i32, i32) {
    %c0_i32 = arith.constant 0 : i32
    %c0_i32_0 = arith.constant 0 : i32
    %c0_i32_1 = arith.constant 0 : i32
    %c0_i32_2 = arith.constant 0 : i32
    return %arg0, %c0_i32, %c0_i32_0, %c0_i32_1 : i32, i32, i32, i32
  }
  func.func @transform_10(%arg0: i32) -> (i32, i32) {
    %c0_i32 = arith.constant 0 : i32
    %c0_i32_0 = arith.constant 0 : i32
    %c0_i32_1 = arith.constant 0 : i32
    return %c0_i32, %c0_i32_0 : i32, i32
  }
  func.func @transform_11(%arg0: i32) -> (i32, i32, i32, i32) {
    %c0_i32 = arith.constant 0 : i32
    %c0_i32_0 = arith.constant 0 : i32
    %c0_i32_1 = arith.constant 0 : i32
    %c0_i32_2 = arith.constant 0 : i32
    return %arg0, %c0_i32, %c0_i32_0, %c0_i32_1 : i32, i32, i32, i32
  }
}

</mosaic_0001>

<llo_original>
// kernel: basic_block.1
$region0: #{basic_block.1}
  #allocation0 [shape = 'u32[]', space=smem, size = 0x4, offset = 0x4, fixed_abs, tag = 'smem constant byte address 0x4 - core index']
  #allocation1 [shape = 'u32[144,128]{1,0:T(1,128)}', space=vmem, size = 0x12000, scoped, tag = 'internal scratch']
  #allocation2 [shape = 'bf16[4,11,11,16]{3,2,1,0:T(8,128)(2,1)}', space=vmem, size = 0x2c000, scoped, tag = 'scratch operand']
  #allocation3 [shape = 'bf16[10,10,32]{2,1,0:T(8,128)(2,1)}', space=vmem, size = 0xa000, scoped, tag = 'scratch operand']
  %s0 = inlined_call_operand.vmem [shape: bf16[8,11,11,16], index: 0, kind: input, shape index: {}]
  %s1 = inlined_call_operand.vmem [shape: f32[4,11,11,1], index: 1, kind: input, shape index: {}]
  %s2 = inlined_call_operand.vmem [shape: bf16[9,16,32], index: 2, kind: input, shape index: {}]
  %s3 = inlined_call_operand.vmem [shape: f32[1,16], index: 3, kind: input, shape index: {}]
  %s4 = inlined_call_operand.vmem [shape: f32[1,16], index: 4, kind: input, shape index: {}]
  %s5 = inlined_call_operand.vmem [shape: f32[1,32], index: 5, kind: input, shape index: {}]
  %s6 = inlined_call_operand.vmem [shape: f32[1,32], index: 6, kind: input, shape index: {}]
  %s7 = inlined_call_operand.vmem [shape: f32[10,10,1], index: 7, kind: input, shape index: {}]
  %s8 = inlined_call_operand.vmem [shape: bf16[9,32,32], index: 8, kind: input, shape index: {}]
  %s9 = inlined_call_operand.vmem [shape: bf16[2,8,8,16], index: 9, kind: input, shape index: {}]
  %s10 = inlined_call_operand.vmem [shape: bf16[16,32], index: 10, kind: input, shape index: {}]
  %s11 = inlined_call_operand.hbm [shape: f32[2,8,8,32], index: 11, kind: output, shape index: {}]
  %s12 = sld [smem:[#allocation0]]
  $region77: #{basic_block.1} parent=0
    _
  %s14 = ssub.s32 1, %s12
  %s15 = scalar_select 0, %s14, %s12
  $region1: #{basic_block.1} parent=0
    #allocation4 [shape = 'u8[65536]{0}', space=vmem, size = 0x10000, scoped, tag = 'output window, operand 0']
    #allocation5 [shape = 's32[2]{0}', space=sflag, size = 0x8, scoped, tag = 'scoped memory for basic_block.1']
    %16 = vsyncpa [#allocation5], 0
    %s17 = scalar_lea.sflag [#allocation5], 1
    %18 = vsyncpa %s17, 0
    loop: start=0, step=1, limit=4
    $region2: #{basic_block.1} parent=1 // loop_pre_header
      _
    $region3: #{basic_block.1} parent=1 // loop_header
      %s20 = sphi 0, %s24
      %p21 = scmp.ge.s32.totalorder %s20, 4
      %s30 = sphi 0, %s32
      %s33 = sphi 0, %s30
      %s34 = sphi 0, %s33
      %s50 = sphi 0, %s34
      %s54 = sphi 0, %s54
      %s56 = sphi 0, %s54
      %s57 = sphi 0, %s56
      %s71 = sphi 0, %s57
      %s75 = sphi 0, %s75
      %s77 = sphi 0, %s75
      %s78 = sphi 0, %s77
      %s92 = sphi 0, %s78
      %s96 = sphi 0, %s96
      %s98 = sphi 0, %s96
      %s99 = sphi 0, %s98
      %s113 = sphi 0, %s99
      %s117 = sphi 0, %s117
      %s119 = sphi 0, %s117
      %s120 = sphi 0, %s119
      %s134 = sphi 0, %s120
      %s138 = sphi 0, %s138
      %s140 = sphi 0, %s138
      %s141 = sphi 0, %s140
      %s155 = sphi 0, %s141
      %s159 = sphi 0, %s159
      %s161 = sphi 0, %s159
      %s162 = sphi 0, %s161
      %s176 = sphi 0, %s162
      %s180 = sphi 0, %s180
      %s182 = sphi 0, %s180
      %s183 = sphi 0, %s182
      %s197 = sphi 0, %s183
      %s201 = sphi 0, %s201
      %s203 = sphi 0, %s201
      %s204 = sphi 0, %s203
      %s218 = sphi 0, %s204
      %s224 = sphi 0, %s226
      %s227 = sphi 0, %s224
      %s228 = sphi 0, %s227
      %s244 = sphi 0, %s228
      %s248 = sphi 0, %s248
      %s250 = sphi 0, %s248
      %s251 = sphi 0, %s250
      %s265 = sphi 0, %s251
      %s271 = sphi 0, %s273
      %s274 = sphi 0, %s271
      %s275 = sphi 0, %s274
      %s291 = sphi 0, %s275
    $region4: #{basic_block.1} parent=1 // loop_header_branch
      %23 = sbr.rel (%p21) target = $region8
    $region5: #{basic_block.1} parent=1 // loop_body
      %s25 = ssub.s32 %s20, 1
      %s26 = ssub.s32 %s20, 2
      %s27 = sadd.s32 %s20, 1
      %s28 = ssub.s32 %s20, %s27
      %p29 = scmp.eq.s32.totalorder %s28, 0
      %s31 = sadd.s32 %s30, 1
      %s32 = scalar_select %p29, %s30, %s31
      %p35 = pneg %p29
      %p36 = scmp.eq.s32.totalorder %s20, 1
      %p37 = por %p35, %p36
      %p38 = scmp.ne.s32.totalorder %s30, %s33
      %p39 = scmp.eq.s32.totalorder %s20, 0
      %p40 = por %p38, %p39
      %p41 = scmp.ne.s32.totalorder %s30, %s33
      %p42 = scmp.eq.s32.totalorder %s25, 1
      %p43 = por %p41, %p42
      %p44 = scmp.ne.s32.totalorder %s33, %s34
      %p45 = scmp.eq.s32.totalorder %s25, 0
      %p46 = por %p44, %p45
      %p47 = scmp.ne.s32.totalorder %s33, %s34
      %p48 = scmp.eq.s32.totalorder %s26, 1
      %p49 = por %p47, %p48
      %p51 = scmp.ne.s32.totalorder %s34, %s50
      %p52 = scmp.eq.s32.totalorder %s26, 0
      %p53 = por %p51, %p52
      %s55 = sadd.s32 %s54, 1
      %p58 = scmp.eq.s32.totalorder %s20, 1
      %p59 = scmp.ne.s32.totalorder %s54, %s56
      %p60 = scmp.eq.s32.totalorder %s20, 0
      %p61 = por %p59, %p60
      %p62 = scmp.ne.s32.totalorder %s54, %s56
      %p63 = scmp.eq.s32.totalorder %s25, 1
      %p64 = por %p62, %p63
      %p65 = scmp.ne.s32.totalorder %s56, %s57
      %p66 = scmp.eq.s32.totalorder %s25, 0
      %p67 = por %p65, %p66
      %p68 = scmp.ne.s32.totalorder %s56, %s57
      %p69 = scmp.eq.s32.totalorder %s26, 1
      %p70 = por %p68, %p69
      %p72 = scmp.ne.s32.totalorder %s57, %s71
      %p73 = scmp.eq.s32.totalorder %s26, 0
      %p74 = por %p72, %p73
      %s76 = sadd.s32 %s75, 1
      %p79 = scmp.eq.s32.totalorder %s20, 1
      %p80 = scmp.ne.s32.totalorder %s75, %s77
      %p81 = scmp.eq.s32.totalorder %s20, 0
      %p82 = por %p80, %p81
      %p83 = scmp.ne.s32.totalorder %s75, %s77
      %p84 = scmp.eq.s32.totalorder %s25, 1
      %p85 = por %p83, %p84
      %p86 = scmp.ne.s32.totalorder %s77, %s78
      %p87 = scmp.eq.s32.totalorder %s25, 0
      %p88 = por %p86, %p87
      %p89 = scmp.ne.s32.totalorder %s77, %s78
      %p90 = scmp.eq.s32.totalorder %s26, 1
      %p91 = por %p89, %p90
      %p93 = scmp.ne.s32.totalorder %s78, %s92
      %p94 = scmp.eq.s32.totalorder %s26, 0
      %p95 = por %p93, %p94
      %s97 = sadd.s32 %s96, 1
      %p100 = scmp.eq.s32.totalorder %s20, 1
      %p101 = scmp.ne.s32.totalorder %s96, %s98
      %p102 = scmp.eq.s32.totalorder %s20, 0
      %p103 = por %p101, %p102
      %p104 = scmp.ne.s32.totalorder %s96, %s98
      %p105 = scmp.eq.s32.totalorder %s25, 1
      %p106 = por %p104, %p105
      %p107 = scmp.ne.s32.totalorder %s98, %s99
      %p108 = scmp.eq.s32.totalorder %s25, 0
      %p109 = por %p107, %p108
      %p110 = scmp.ne.s32.totalorder %s98, %s99
      %p111 = scmp.eq.s32.totalorder %s26, 1
      %p112 = por %p110, %p111
      %p114 = scmp.ne.s32.totalorder %s99, %s113
      %p115 = scmp.eq.s32.totalorder %s26, 0
      %p116 = por %p114, %p115
      %s118 = sadd.s32 %s117, 1
      %p121 = scmp.eq.s32.totalorder %s20, 1
      %p122 = scmp.ne.s32.totalorder %s117, %s119
      %p123 = scmp.eq.s32.totalorder %s20, 0
      %p124 = por %p122, %p123
      %p125 = scmp.ne.s32.totalorder %s117, %s119
      %p126 = scmp.eq.s32.totalorder %s25, 1
      %p127 = por %p125, %p126
      %p128 = scmp.ne.s32.totalorder %s119, %s120
      %p129 = scmp.eq.s32.totalorder %s25, 0
      %p130 = por %p128, %p129
      %p131 = scmp.ne.s32.totalorder %s119, %s120
      %p132 = scmp.eq.s32.totalorder %s26, 1
      %p133 = por %p131, %p132
      %p135 = scmp.ne.s32.totalorder %s120, %s134
      %p136 = scmp.eq.s32.totalorder %s26, 0
      %p137 = por %p135, %p136
      %s139 = sadd.s32 %s138, 1
      %p142 = scmp.eq.s32.totalorder %s20, 1
      %p143 = scmp.ne.s32.totalorder %s138, %s140
      %p144 = scmp.eq.s32.totalorder %s20, 0
      %p145 = por %p143, %p144
      %p146 = scmp.ne.s32.totalorder %s138, %s140
      %p147 = scmp.eq.s32.totalorder %s25, 1
      %p148 = por %p146, %p147
      %p149 = scmp.ne.s32.totalorder %s140, %s141
      %p150 = scmp.eq.s32.totalorder %s25, 0
      %p151 = por %p149, %p150
      %p152 = scmp.ne.s32.totalorder %s140, %s141
      %p153 = scmp.eq.s32.totalorder %s26, 1
      %p154 = por %p152, %p153
      %p156 = scmp.ne.s32.totalorder %s141, %s155
      %p157 = scmp.eq.s32.totalorder %s26, 0
      %p158 = por %p156, %p157
      %s160 = sadd.s32 %s159, 1
      %p163 = scmp.eq.s32.totalorder %s20, 1
      %p164 = scmp.ne.s32.totalorder %s159, %s161
      %p165 = scmp.eq.s32.totalorder %s20, 0
      %p166 = por %p164, %p165
      %p167 = scmp.ne.s32.totalorder %s159, %s161
      %p168 = scmp.eq.s32.totalorder %s25, 1
      %p169 = por %p167, %p168
      %p170 = scmp.ne.s32.totalorder %s161, %s162
      %p171 = scmp.eq.s32.totalorder %s25, 0
      %p172 = por %p170, %p171
      %p173 = scmp.ne.s32.totalorder %s161, %s162
      %p174 = scmp.eq.s32.totalorder %s26, 1
      %p175 = por %p173, %p174
      %p177 = scmp.ne.s32.totalorder %s162, %s176
      %p178 = scmp.eq.s32.totalorder %s26, 0
      %p179 = por %p177, %p178
      %s181 = sadd.s32 %s180, 1
      %p184 = scmp.eq.s32.totalorder %s20, 1
      %p185 = scmp.ne.s32.totalorder %s180, %s182
      %p186 = scmp.eq.s32.totalorder %s20, 0
      %p187 = por %p185, %p186
      %p188 = scmp.ne.s32.totalorder %s180, %s182
      %p189 = scmp.eq.s32.totalorder %s25, 1
      %p190 = por %p188, %p189
      %p191 = scmp.ne.s32.totalorder %s182, %s183
      %p192 = scmp.eq.s32.totalorder %s25, 0
      %p193 = por %p191, %p192
      %p194 = scmp.ne.s32.totalorder %s182, %s183
      %p195 = scmp.eq.s32.totalorder %s26, 1
      %p196 = por %p194, %p195
      %p198 = scmp.ne.s32.totalorder %s183, %s197
      %p199 = scmp.eq.s32.totalorder %s26, 0
      %p200 = por %p198, %p199
      %s202 = sadd.s32 %s201, 1
      %p205 = scmp.eq.s32.totalorder %s20, 1
      %p206 = scmp.ne.s32.totalorder %s201, %s203
      %p207 = scmp.eq.s32.totalorder %s20, 0
      %p208 = por %p206, %p207
      %p209 = scmp.ne.s32.totalorder %s201, %s203
      %p210 = scmp.eq.s32.totalorder %s25, 1
      %p211 = por %p209, %p210
      %p212 = scmp.ne.s32.totalorder %s203, %s204
      %p213 = scmp.eq.s32.totalorder %s25, 0
      %p214 = por %p212, %p213
      %p215 = scmp.ne.s32.totalorder %s203, %s204
      %p216 = scmp.eq.s32.totalorder %s26, 1
      %p217 = por %p215, %p216
      %p219 = scmp.ne.s32.totalorder %s204, %s218
      %p220 = scmp.eq.s32.totalorder %s26, 0
      %p221 = por %p219, %p220
      %s222 = ssub.s32 %s20, %s27
      %p223 = scmp.eq.s32.totalorder %s222, 0
      %s225 = sadd.s32 %s224, 1
      %s226 = scalar_select %p223, %s224, %s225
      %p229 = pneg %p223
      %p230 = scmp.eq.s32.totalorder %s20, 1
      %p231 = por %p229, %p230
      %p232 = scmp.ne.s32.totalorder %s224, %s227
      %p233 = scmp.eq.s32.totalorder %s20, 0
      %p234 = por %p232, %p233
      %p235 = scmp.ne.s32.totalorder %s224, %s227
      %p236 = scmp.eq.s32.totalorder %s25, 1
      %p237 = por %p235, %p236
      %p238 = scmp.ne.s32.totalorder %s227, %s228
      %p239 = scmp.eq.s32.totalorder %s25, 0
      %p240 = por %p238, %p239
      %p241 = scmp.ne.s32.totalorder %s227, %s228
      %p242 = scmp.eq.s32.totalorder %s26, 1
      %p243 = por %p241, %p242
      %p245 = scmp.ne.s32.totalorder %s228, %s244
      %p246 = scmp.eq.s32.totalorder %s26, 0
      %p247 = por %p245, %p246
      %s249 = sadd.s32 %s248, 1
      %p252 = scmp.eq.s32.totalorder %s20, 1
      %p253 = scmp.ne.s32.totalorder %s248, %s250
      %p254 = scmp.eq.s32.totalorder %s20, 0
      %p255 = por %p253, %p254
      %p256 = scmp.ne.s32.totalorder %s248, %s250
      %p257 = scmp.eq.s32.totalorder %s25, 1
      %p258 = por %p256, %p257
      %p259 = scmp.ne.s32.totalorder %s250, %s251
      %p260 = scmp.eq.s32.totalorder %s25, 0
      %p261 = por %p259, %p260
      %p262 = scmp.ne.s32.totalorder %s250, %s251
      %p263 = scmp.eq.s32.totalorder %s26, 1
      %p264 = por %p262, %p263
      %p266 = scmp.ne.s32.totalorder %s251, %s265
      %p267 = scmp.eq.s32.totalorder %s26, 0
      %p268 = por %p266, %p267
      %s269 = ssub.s32 %s20, %s27
      %p270 = scmp.eq.s32.totalorder %s269, 0
      %s272 = sadd.s32 %s271, 1
      %s273 = scalar_select %p270, %s271, %s272
      %p276 = pneg %p270
      %p277 = scmp.eq.s32.totalorder %s20, 1
      %p278 = por %p276, %p277
      %p279 = scmp.ne.s32.totalorder %s271, %s274
      %p280 = scmp.eq.s32.totalorder %s20, 0
      %p281 = por %p279, %p280
      %p282 = scmp.ne.s32.totalorder %s271, %s274
      %p283 = scmp.eq.s32.totalorder %s25, 1
      %p284 = por %p282, %p283
      %p285 = scmp.ne.s32.totalorder %s274, %s275
      %p286 = scmp.eq.s32.totalorder %s25, 0
      %p287 = por %p285, %p286
      %p288 = scmp.ne.s32.totalorder %s274, %s275
      %p289 = scmp.eq.s32.totalorder %s26, 1
      %p290 = por %p288, %p289
      %p292 = scmp.ne.s32.totalorder %s275, %s291
      %p293 = scmp.eq.s32.totalorder %s26, 0
      %p294 = por %p292, %p293
      %p295 = scmp.le.s32.totalorder 1, %s20
      %p296 = scmp.lt.s32.totalorder %s20, 3
      %p297 = pnand %p295, %p296
      %p298 = pneg %p297
      // Predicated region
      $region9: #{basic_block.1} parent=5 // pred_check
        _
      $region10: #{basic_block.1} parent=5 // pred_check_branch
        %300 = sbr.rel (%p297) target = $region12
      $region11: #{basic_block.1} parent=5 // pred_region
        %s301 = ssub.s32 %s20, 1
        // Predicated region
        $region13: #{basic_block.1} parent=11 // pred_check
          %p302 = pneg %p67
        $region14: #{basic_block.1} parent=11 // pred_check_branch
          %304 = sbr.rel (%p302) target = $region16
        $region15: #{basic_block.1} parent=11 // pred_region
          _
        $region16: #{basic_block.1} parent=11 // pred_fallthru
          _
        // Predicated region
        $region17: #{basic_block.1} parent=11 // pred_check
          %p305 = pneg %p88
        $region18: #{basic_block.1} parent=11 // pred_check_branch
          %307 = sbr.rel (%p305) target = $region20
        $region19: #{basic_block.1} parent=11 // pred_region
          _
        $region20: #{basic_block.1} parent=11 // pred_fallthru
          _
        // Predicated region
        $region21: #{basic_block.1} parent=11 // pred_check
          %p308 = pneg %p109
        $region22: #{basic_block.1} parent=11 // pred_check_branch
          %310 = sbr.rel (%p308) target = $region24
        $region23: #{basic_block.1} parent=11 // pred_region
          _
        $region24: #{basic_block.1} parent=11 // pred_fallthru
          _
        // Predicated region
        $region25: #{basic_block.1} parent=11 // pred_check
          %p311 = pneg %p130
        $region26: #{basic_block.1} parent=11 // pred_check_branch
          %313 = sbr.rel (%p311) target = $region28
        $region27: #{basic_block.1} parent=11 // pred_region
          _
        $region28: #{basic_block.1} parent=11 // pred_fallthru
          _
        // Predicated region
        $region29: #{basic_block.1} parent=11 // pred_check
          %p314 = pneg %p151
        $region30: #{basic_block.1} parent=11 // pred_check_branch
          %316 = sbr.rel (%p314) target = $region32
        $region31: #{basic_block.1} parent=11 // pred_region
          _
        $region32: #{basic_block.1} parent=11 // pred_fallthru
          _
        // Predicated region
        $region33: #{basic_block.1} parent=11 // pred_check
          %p317 = pneg %p172
        $region34: #{basic_block.1} parent=11 // pred_check_branch
          %319 = sbr.rel (%p317) target = $region36
        $region35: #{basic_block.1} parent=11 // pred_region
          _
        $region36: #{basic_block.1} parent=11 // pred_fallthru
          _
        // Predicated region
        $region37: #{basic_block.1} parent=11 // pred_check
          %p320 = pneg %p193
        $region38: #{basic_block.1} parent=11 // pred_check_branch
          %322 = sbr.rel (%p320) target = $region40
        $region39: #{basic_block.1} parent=11 // pred_region
          _
        $region40: #{basic_block.1} parent=11 // pred_fallthru
          _
        // Predicated region
        $region41: #{basic_block.1} parent=11 // pred_check
          %p323 = pneg %p214
        $region42: #{basic_block.1} parent=11 // pred_check_branch
          %325 = sbr.rel (%p323) target = $region44
        $region43: #{basic_block.1} parent=11 // pred_region
          _
        $region44: #{basic_block.1} parent=11 // pred_fallthru
          _
        // Predicated region
        $region45: #{basic_block.1} parent=11 // pred_check
          %p326 = pneg %p261
        $region46: #{basic_block.1} parent=11 // pred_check_branch
          %328 = sbr.rel (%p326) target = $region48
        $region47: #{basic_block.1} parent=11 // pred_region
          _
        $region48: #{basic_block.1} parent=11 // pred_fallthru
          _
      $region12: #{basic_block.1} parent=5 // pred_fallthru
        _
      %p329 = scmp.lt.s32.totalorder %s20, 2
      // Predicated region
      $region49: #{basic_block.1} parent=5 // pred_check
        %p330 = pneg %p329
      $region50: #{basic_block.1} parent=5 // pred_check_branch
        %332 = sbr.rel (%p330) target = $region52
      $region51: #{basic_block.1} parent=5 // pred_region
        // Predicated region
        $region53: #{basic_block.1} parent=51 // pred_check
          %p333 = pneg %p40
        $region54: #{basic_block.1} parent=51 // pred_check_branch
          %335 = sbr.rel (%p333) target = $region56
        $region55: #{basic_block.1} parent=51 // pred_region
          %s336 = smul.u32 4, %s20
          %p337 = scmp.lt.s32.totalorder %s336, 7
          %s338 = scalar_select %p337, %s336, 7
          %s339 = smul.addr %s338, 22
          %s340 = smul.addr %s339, 4
          %s341 = scalar_lea.vmem %s0, %s340
          %s342 = smul.u32 4, %s20
        $region56: #{basic_block.1} parent=51 // pred_fallthru
          _
        // Predicated region
        $region57: #{basic_block.1} parent=51 // pred_check
          %p343 = pneg %p234
        $region58: #{basic_block.1} parent=51 // pred_check_branch
          %345 = sbr.rel (%p343) target = $region60
        $region59: #{basic_block.1} parent=51 // pred_region
          %p346 = scmp.lt.s32.totalorder %s20, 1
          %s347 = scalar_select %p346, %s20, 1
          %s348 = smul.addr %s347, 8
          %s349 = smul.addr %s348, 4
          %s350 = scalar_lea.vmem %s9, %s349
        $region60: #{basic_block.1} parent=51 // pred_fallthru
          _
      $region52: #{basic_block.1} parent=5 // pred_fallthru
        _
      %p351 = scmp.le.s32.totalorder 1, %s20
      %p352 = scmp.lt.s32.totalorder %s20, 3
      %p353 = pnand %p351, %p352
      %p354 = pneg %p353
      // Predicated region
      $region61: #{basic_block.1} parent=5 // pred_check
        _
      $region62: #{basic_block.1} parent=5 // pred_check_branch
        %356 = sbr.rel (%p353) target = $region64
      $region63: #{basic_block.1} parent=5 // pred_region
        %s357 = ssub.s32 %s20, 1
        %s358 = smul.u32 4, %s25
        %p359 = scmp.lt.s32.totalorder %s358, 7
        %s360 = scalar_select %p359, %s358, 7
        %s361 = smul.addr %s360, 22
        %s362 = smul.addr %s361, 4
        %s363 = scalar_lea.vmem %s0, %s362
        %p364 = pneg %p46
        %p365 = pneg %p43
        %p366 = pneg %p67
        %p367 = pneg %p64
        %p368 = pneg %p88
        %p369 = pneg %p85
        %p370 = pneg %p109
        %p371 = pneg %p106
        %p372 = pneg %p130
        %p373 = pneg %p127
        %p374 = pneg %p151
        %p375 = pneg %p148
        %p376 = pneg %p172
        %p377 = pneg %p169
        %p378 = pneg %p193
        %p379 = pneg %p190
        %p380 = pneg %p214
        %p381 = pneg %p211
        %p382 = scmp.lt.s32.totalorder %s25, 1
        %s383 = scalar_select %p382, %s25, 1
        %s384 = smul.addr %s383, 8
        %s385 = smul.addr %s384, 4
        %s386 = scalar_lea.vmem %s9, %s385
        %p387 = pneg %p240
        %p388 = pneg %p237
        %p389 = pneg %p261
        %p390 = pneg %p258
        %p391 = pneg %p287
        %p392 = pneg %p284
        %s393 = sand.u32 %s274, 1
        %s394 = scalar_lea.sflag [#allocation5], %s393
        %s395 = sand.u32 %s274, 1
        %s396 = smul.addr %s395, 64
        %s397 = scalar_lea.vmem [#allocation4], %s396
        %s398 = smul.u32 4, %s25
        %p399 = scmp.lt.s32.totalorder %s398, 7
        %s400 = scalar_select %p399, %s398, 7
        %s401 = smul.addr %s400, 22
        %s402 = smul.addr %s401, 4
        %s403 = scalar_lea.vmem %s0, %s402
        %s404 = smul.u32 4, %s25
        %p405 = scmp.lt.s32.totalorder %s25, 1
        %s406 = scalar_select %p405, %s25, 1
        %s407 = smul.addr %s406, 8
        %s408 = smul.addr %s407, 4
        %s409 = scalar_lea.vmem %s9, %s408
        %v411 = vld [vmem:[%s3] sm:$0x1]
        %v412 = vld [vmem:[%s4] sm:$0x1]
        %v413 = vld [vmem:[%s5] sm:$0x1]
        %v414 = vld [vmem:[%s6] sm:$0x1]
        %v415 = vld [vmem:[%s403] sm:$0xf]
        %v416 = vld [vmem:[%s403 + $0x4] sm:$0x3]
        %v417 = vld [vmem:[%s403 + $0x8] sm:$0xf]
        %v418 = vld [vmem:[%s403 + $0xc] sm:$0x3]
        %v419 = vld [vmem:[%s403 + $0x10] sm:$0xf]
        %v420 = vld [vmem:[%s403 + $0x14] sm:$0x3]
        %v421 = vld [vmem:[%s403 + $0x18] sm:$0xf]
        %v422 = vld [vmem:[%s403 + $0x1c] sm:$0x3]
        %v423 = vld [vmem:[%s403 + $0x20] sm:$0xf]
        %v424 = vld [vmem:[%s403 + $0x24] sm:$0x3]
        %v425 = vld [vmem:[%s403 + $0x28] sm:$0xf]
        %v426 = vld [vmem:[%s403 + $0x2c] sm:$0x3]
        %v427 = vld [vmem:[%s403 + $0x30] sm:$0xf]
        %v428 = vld [vmem:[%s403 + $0x34] sm:$0x3]
        %v429 = vld [vmem:[%s403 + $0x38] sm:$0xf]
        %v430 = vld [vmem:[%s403 + $0x3c] sm:$0x3]
        %v431 = vld [vmem:[%s403 + $0x40] sm:$0xf]
        %v432 = vld [vmem:[%s403 + $0x44] sm:$0x3]
        %v433 = vld [vmem:[%s403 + $0x48] sm:$0xf]
        %v434 = vld [vmem:[%s403 + $0x4c] sm:$0x3]
        %v435 = vld [vmem:[%s403 + $0x50] sm:$0xf]
        %v436 = vld [vmem:[%s403 + $0x54] sm:$0x3]
        %v437 = vunpack.c.l.bf16 %v415
        %v438 = vunpack.c.l.bf16 %v416
        %v439 = vunpack.c.l.bf16 %v417
        %v440 = vunpack.c.l.bf16 %v418
        %v441 = vunpack.c.l.bf16 %v419
        %v442 = vunpack.c.l.bf16 %v420
        %v443 = vunpack.c.l.bf16 %v421
        %v444 = vunpack.c.l.bf16 %v422
        %v445 = vunpack.c.l.bf16 %v423
        %v446 = vunpack.c.l.bf16 %v424
        %v447 = vunpack.c.l.bf16 %v425
        %v448 = vunpack.c.l.bf16 %v426
        %v449 = vunpack.c.l.bf16 %v427
        %v450 = vunpack.c.l.bf16 %v428
        %v451 = vunpack.c.l.bf16 %v429
        %v452 = vunpack.c.l.bf16 %v430
        %v453 = vunpack.c.l.bf16 %v431
        %v454 = vunpack.c.l.bf16 %v432
        %v455 = vunpack.c.l.bf16 %v433
        %v456 = vunpack.c.l.bf16 %v434
        %v457 = vunpack.c.l.bf16 %v435
        %v458 = vunpack.c.l.bf16 %v436
        %v460 = vlaneseq
        %v461 = vshrl.u32 %v460, 7
        %v462 = vsub.s32 0, %v461
        %v463 = vrot.slane %v411, %v462
        %v465 = vmul.f32 %v437, %v463
        %v466 = vmul.f32 %v438, %v463
        %v467 = vmul.f32 %v439, %v463
        %v468 = vmul.f32 %v440, %v463
        %v469 = vmul.f32 %v441, %v463
        %v470 = vmul.f32 %v442, %v463
        %v471 = vmul.f32 %v443, %v463
        %v472 = vmul.f32 %v444, %v463
        %v473 = vmul.f32 %v445, %v463
        %v474 = vmul.f32 %v446, %v463
        %v475 = vmul.f32 %v447, %v463
        %v476 = vmul.f32 %v448, %v463
        %v477 = vmul.f32 %v449, %v463
        %v478 = vmul.f32 %v450, %v463
        %v479 = vmul.f32 %v451, %v463
        %v480 = vmul.f32 %v452, %v463
        %v481 = vmul.f32 %v453, %v463
        %v482 = vmul.f32 %v454, %v463
        %v483 = vmul.f32 %v455, %v463
        %v484 = vmul.f32 %v456, %v463
        %v485 = vmul.f32 %v457, %v463
        %v486 = vmul.f32 %v458, %v463
        %v488 = vlaneseq
        %v489 = vshrl.u32 %v488, 7
        %v490 = vsub.s32 0, %v489
        %v491 = vrot.slane %v412, %v490
        %v493 = vadd.f32 %v465, %v491
        %v494 = vadd.f32 %v466, %v491
        %v495 = vadd.f32 %v467, %v491
        %v496 = vadd.f32 %v468, %v491
        %v497 = vadd.f32 %v469, %v491
        %v498 = vadd.f32 %v470, %v491
        %v499 = vadd.f32 %v471, %v491
        %v500 = vadd.f32 %v472, %v491
        %v501 = vadd.f32 %v473, %v491
        %v502 = vadd.f32 %v474, %v491
        %v503 = vadd.f32 %v475, %v491
        %v504 = vadd.f32 %v476, %v491
        %v505 = vadd.f32 %v477, %v491
        %v506 = vadd.f32 %v478, %v491
        %v507 = vadd.f32 %v479, %v491
        %v508 = vadd.f32 %v480, %v491
        %v509 = vadd.f32 %v481, %v491
        %v510 = vadd.f32 %v482, %v491
        %v511 = vadd.f32 %v483, %v491
        %v512 = vadd.f32 %v484, %v491
        %v513 = vadd.f32 %v485, %v491
        %v514 = vadd.f32 %v486, %v491
        %v515 = vmax.f32 %v493, 0.0
        %v516 = vmax.f32 %v494, 0.0
        %v517 = vmax.f32 %v495, 0.0
        %v518 = vmax.f32 %v496, 0.0
        %v519 = vmax.f32 %v497, 0.0
        %v520 = vmax.f32 %v498, 0.0
        %v521 = vmax.f32 %v499, 0.0
        %v522 = vmax.f32 %v500, 0.0
        %v523 = vmax.f32 %v501, 0.0
        %v524 = vmax.f32 %v502, 0.0
        %v525 = vmax.f32 %v503, 0.0
        %v526 = vmax.f32 %v504, 0.0
        %v527 = vmax.f32 %v505, 0.0
        %v528 = vmax.f32 %v506, 0.0
        %v529 = vmax.f32 %v507, 0.0
        %v530 = vmax.f32 %v508, 0.0
        %v531 = vmax.f32 %v509, 0.0
        %v532 = vmax.f32 %v510, 0.0
        %v533 = vmax.f32 %v511, 0.0
        %v534 = vmax.f32 %v512, 0.0
        %v535 = vmax.f32 %v513, 0.0
        %v536 = vmax.f32 %v514, 0.0
        %v537 = vld [vmem:[%s1] sm:$0xff]
        %v538 = vld [vmem:[%s1 + $0x8] sm:$0x7]
        %v539 = vld [vmem:[%s1 + $0x10] sm:$0xff]
        %v540 = vld [vmem:[%s1 + $0x18] sm:$0x7]
        %v541 = vld [vmem:[%s1 + $0x20] sm:$0xff]
        %v542 = vld [vmem:[%s1 + $0x28] sm:$0x7]
        %v543 = vld [vmem:[%s1 + $0x30] sm:$0xff]
        %v544 = vld [vmem:[%s1 + $0x38] sm:$0x7]
        %v545 = vld [vmem:[%s1 + $0x40] sm:$0xff]
        %v546 = vld [vmem:[%s1 + $0x48] sm:$0x7]
        %v547 = vld [vmem:[%s1 + $0x50] sm:$0xff]
        %v548 = vld [vmem:[%s1 + $0x58] sm:$0x7]
        %v549 = vld [vmem:[%s1 + $0x60] sm:$0xff]
        %v550 = vld [vmem:[%s1 + $0x68] sm:$0x7]
        %v551 = vld [vmem:[%s1 + $0x70] sm:$0xff]
        %v552 = vld [vmem:[%s1 + $0x78] sm:$0x7]
        %v553 = vld [vmem:[%s1 + $0x80] sm:$0xff]
        %v554 = vld [vmem:[%s1 + $0x88] sm:$0x7]
        %v555 = vld [vmem:[%s1 + $0x90] sm:$0xff]
        %v556 = vld [vmem:[%s1 + $0x98] sm:$0x7]
        %v557 = vld [vmem:[%s1 + $0xa0] sm:$0xff]
        %v558 = vld [vmem:[%s1 + $0xa8] sm:$0x7]
        %560 = vset.pattern.permute.xlu0 0
        %561 = vperm.xlu0 %560, %v537
        %v562 = vpop.permute.xlu0 %561
        %565 = vset.pattern.permute.xlu0 0
        %566 = vperm.xlu0 %565, %v538
        %v567 = vpop.permute.xlu0 %566
        %570 = vset.pattern.permute.xlu0 0
        %571 = vperm.xlu0 %570, %v539
        %v572 = vpop.permute.xlu0 %571
        %575 = vset.pattern.permute.xlu0 0
        %576 = vperm.xlu0 %575, %v540
        %v577 = vpop.permute.xlu0 %576
        %580 = vset.pattern.permute.xlu0 0
        %581 = vperm.xlu0 %580, %v541
        %v582 = vpop.permute.xlu0 %581
        %585 = vset.pattern.permute.xlu0 0
        %586 = vperm.xlu0 %585, %v542
        %v587 = vpop.permute.xlu0 %586
        %590 = vset.pattern.permute.xlu0 0
        %591 = vperm.xlu0 %590, %v543
        %v592 = vpop.permute.xlu0 %591
        %595 = vset.pattern.permute.xlu0 0
        %596 = vperm.xlu0 %595, %v544
        %v597 = vpop.permute.xlu0 %596
        %600 = vset.pattern.permute.xlu0 0
        %601 = vperm.xlu0 %600, %v545
        %v602 = vpop.permute.xlu0 %601
        %605 = vset.pattern.permute.xlu0 0
        %606 = vperm.xlu0 %605, %v546
        %v607 = vpop.permute.xlu0 %606
        %610 = vset.pattern.permute.xlu0 0
        %611 = vperm.xlu0 %610, %v547
        %v612 = vpop.permute.xlu0 %611
        %615 = vset.pattern.permute.xlu0 0
        %616 = vperm.xlu0 %615, %v548
        %v617 = vpop.permute.xlu0 %616
        %620 = vset.pattern.permute.xlu0 0
        %621 = vperm.xlu0 %620, %v549
        %v622 = vpop.permute.xlu0 %621
        %625 = vset.pattern.permute.xlu0 0
        %626 = vperm.xlu0 %625, %v550
        %v627 = vpop.permute.xlu0 %626
        %630 = vset.pattern.permute.xlu0 0
        %631 = vperm.xlu0 %630, %v551
        %v632 = vpop.permute.xlu0 %631
        %635 = vset.pattern.permute.xlu0 0
        %636 = vperm.xlu0 %635, %v552
        %v637 = vpop.permute.xlu0 %636
        %640 = vset.pattern.permute.xlu0 0
        %641 = vperm.xlu0 %640, %v553
        %v642 = vpop.permute.xlu0 %641
        %645 = vset.pattern.permute.xlu0 0
        %646 = vperm.xlu0 %645, %v554
        %v647 = vpop.permute.xlu0 %646
        %650 = vset.pattern.permute.xlu0 0
        %651 = vperm.xlu0 %650, %v555
        %v652 = vpop.permute.xlu0 %651
        %655 = vset.pattern.permute.xlu0 0
        %656 = vperm.xlu0 %655, %v556
        %v657 = vpop.permute.xlu0 %656
        %660 = vset.pattern.permute.xlu0 0
        %661 = vperm.xlu0 %660, %v557
        %v662 = vpop.permute.xlu0 %661
        %665 = vset.pattern.permute.xlu0 0
        %666 = vperm.xlu0 %665, %v558
        %v667 = vpop.permute.xlu0 %666
        %v669 = vmul.f32 %v515, %v562
        %v670 = vmul.f32 %v516, %v567
        %v671 = vmul.f32 %v517, %v572
        %v672 = vmul.f32 %v518, %v577
        %v673 = vmul.f32 %v519, %v582
        %v674 = vmul.f32 %v520, %v587
        %v675 = vmul.f32 %v521, %v592
        %v676 = vmul.f32 %v522, %v597
        %v677 = vmul.f32 %v523, %v602
        %v678 = vmul.f32 %v524, %v607
        %v679 = vmul.f32 %v525, %v612
        %v680 = vmul.f32 %v526, %v617
        %v681 = vmul.f32 %v527, %v622
        %v682 = vmul.f32 %v528, %v627
        %v683 = vmul.f32 %v529, %v632
        %v684 = vmul.f32 %v530, %v637
        %v685 = vmul.f32 %v531, %v642
        %v686 = vmul.f32 %v532, %v647
        %v687 = vmul.f32 %v533, %v652
        %v688 = vmul.f32 %v534, %v657
        %v689 = vmul.f32 %v535, %v662
        %v690 = vmul.f32 %v536, %v667
        %v691 = vpack.c.bf16 %v670, %v669
        %v692 = vpack.c.bf16 %v672, %v671
        %v693 = vpack.c.bf16 %v674, %v673
        %v694 = vpack.c.bf16 %v676, %v675
        %v695 = vpack.c.bf16 %v678, %v677
        %v696 = vpack.c.bf16 %v680, %v679
        %v697 = vpack.c.bf16 %v682, %v681
        %v698 = vpack.c.bf16 %v684, %v683
        %v699 = vpack.c.bf16 %v686, %v685
        %v700 = vpack.c.bf16 %v688, %v687
        %v701 = vpack.c.bf16 %v690, %v689
        %v713 = vunpack.c.l.b16 %v691
        %v714 = vunpack.c.h.b16 %v691
        %v715 = vunpack.c.l.b16 %v692
        %v716 = vunpack.c.h.b16 %v692
        %v717 = vunpack.c.l.b16 %v693
        %v718 = vunpack.c.h.b16 %v693
        %v719 = vunpack.c.l.b16 %v694
        %v720 = vunpack.c.h.b16 %v694
        %v721 = vunpack.c.l.b16 %v695
        %v722 = vunpack.c.h.b16 %v695
        %v723 = vunpack.c.l.b16 %v696
        %v724 = vunpack.c.h.b16 %v696
        %v725 = vunpack.c.l.b16 %v697
        %v726 = vunpack.c.h.b16 %v697
        %v727 = vunpack.c.l.b16 %v698
        %v728 = vunpack.c.h.b16 %v698
        %v729 = vunpack.c.l.b16 %v699
        %v730 = vunpack.c.h.b16 %v699
        %v731 = vunpack.c.l.b16 %v700
        %v732 = vunpack.c.h.b16 %v700
        %v733 = vunpack.c.l.b16 %v701
        %v734 = vunpack.c.h.b16 %v701
        %v735 = vpack.c.b16 %v713, %v713
        %v736 = vpack.c.b16 %v714, %v714
        %v737 = vpack.c.b16 %v715, %v715
        %v738 = vpack.c.b16 %v716, %v716
        %v739 = vpack.c.b16 %v717, %v717
        %v740 = vpack.c.b16 %v718, %v718
        %v741 = vpack.c.b16 %v719, %v719
        %v742 = vpack.c.b16 %v720, %v720
        %v743 = vpack.c.b16 %v721, %v721
        %v744 = vpack.c.b16 %v722, %v722
        %v745 = vpack.c.b16 %v723, %v723
        %v746 = vpack.c.b16 %v724, %v724
        %v747 = vpack.c.b16 %v725, %v725
        %v748 = vpack.c.b16 %v726, %v726
        %v749 = vpack.c.b16 %v727, %v727
        %v750 = vpack.c.b16 %v728, %v728
        %v751 = vpack.c.b16 %v729, %v729
        %v752 = vpack.c.b16 %v730, %v730
        %v753 = vpack.c.b16 %v731, %v731
        %v754 = vpack.c.b16 %v732, %v732
        %v755 = vpack.c.b16 %v733, %v733
        %v756 = vpack.c.b16 %v734, %v734
        %vm779 = vcmask 125952
        %780 = vst.msk [vmem:[#allocation2] sm:$0xf] %vm779, %v735
        %vm781 = vcmask 123904
        %vm782 = vsmask.f32 1280
        %vm783 = vmand %vm781, %vm782
        %v784 = vld [vmem:[#allocation2 + $0x4] sm:$0x3]
        %v785 = vsel %vm783, %v736, %v784
        %786 = vst [vmem:[#allocation2 + $0x4] sm:$0x3] %v785
        %787 = vst.msk [vmem:[#allocation2 + $0x8] sm:$0xf] %vm779, %v737
        %v788 = vld [vmem:[#allocation2 + $0xc] sm:$0x3]
        %v789 = vsel %vm783, %v738, %v788
        %790 = vst [vmem:[#allocation2 + $0xc] sm:$0x3] %v789
        %791 = vst.msk [vmem:[#allocation2 + $0x10] sm:$0xf] %vm779, %v739
        %v792 = vld [vmem:[#allocation2 + $0x14] sm:$0x3]
        %v793 = vsel %vm783, %v740, %v792
        %794 = vst [vmem:[#allocation2 + $0x14] sm:$0x3] %v793
        %795 = vst.msk [vmem:[#allocation2 + $0x18] sm:$0xf] %vm779, %v741
        %v796 = vld [vmem:[#allocation2 + $0x1c] sm:$0x3]
        %v797 = vsel %vm783, %v742, %v796
        %798 = vst [vmem:[#allocation2 + $0x1c] sm:$0x3] %v797
        %799 = vst.msk [vmem:[#allocation2 + $0x20] sm:$0xf] %vm779, %v743
        %v800 = vld [vmem:[#allocation2 + $0x24] sm:$0x3]
        %v801 = vsel %vm783, %v744, %v800
        %802 = vst [vmem:[#allocation2 + $0x24] sm:$0x3] %v801
        %803 = vst.msk [vmem:[#allocation2 + $0x28] sm:$0xf] %vm779, %v745
        %v804 = vld [vmem:[#allocation2 + $0x2c] sm:$0x3]
        %v805 = vsel %vm783, %v746, %v804
        %806 = vst [vmem:[#allocation2 + $0x2c] sm:$0x3] %v805
        %807 = vst.msk [vmem:[#allocation2 + $0x30] sm:$0xf] %vm779, %v747
        %v808 = vld [vmem:[#allocation2 + $0x34] sm:$0x3]
        %v809 = vsel %vm783, %v748, %v808
        %810 = vst [vmem:[#allocation2 + $0x34] sm:$0x3] %v809
        %811 = vst.msk [vmem:[#allocation2 + $0x38] sm:$0xf] %vm779, %v749
        %v812 = vld [vmem:[#allocation2 + $0x3c] sm:$0x3]
        %v813 = vsel %vm783, %v750, %v812
        %814 = vst [vmem:[#allocation2 + $0x3c] sm:$0x3] %v813
        %815 = vst.msk [vmem:[#allocation2 + $0x40] sm:$0xf] %vm779, %v751
        %v816 = vld [vmem:[#allocation2 + $0x44] sm:$0x3]
        %v817 = vsel %vm783, %v752, %v816
        %818 = vst [vmem:[#allocation2 + $0x44] sm:$0x3] %v817
        %819 = vst.msk [vmem:[#allocation2 + $0x48] sm:$0xf] %vm779, %v753
        %v820 = vld [vmem:[#allocation2 + $0x4c] sm:$0x3]
        %v821 = vsel %vm783, %v754, %v820
        %822 = vst [vmem:[#allocation2 + $0x4c] sm:$0x3] %v821
        %823 = vst.msk [vmem:[#allocation2 + $0x50] sm:$0xf] %vm779, %v755
        %v824 = vld [vmem:[#allocation2 + $0x54] sm:$0x3]
        %v825 = vsel %vm783, %v756, %v824
        %826 = vst [vmem:[#allocation2 + $0x54] sm:$0x3] %v825
        %s827 = scalar_lea.vmem %s403, 88
        %v828 = vld [vmem:[%s827] sm:$0xf]
        %v829 = vld [vmem:[%s827 + $0x4] sm:$0x3]
        %v830 = vld [vmem:[%s827 + $0x8] sm:$0xf]
        %v831 = vld [vmem:[%s827 + $0xc] sm:$0x3]
        %v832 = vld [vmem:[%s827 + $0x10] sm:$0xf]
        %v833 = vld [vmem:[%s827 + $0x14] sm:$0x3]
        %v834 = vld [vmem:[%s827 + $0x18] sm:$0xf]
        %v835 = vld [vmem:[%s827 + $0x1c] sm:$0x3]
        %v836 = vld [vmem:[%s827 + $0x20] sm:$0xf]
        %v837 = vld [vmem:[%s827 + $0x24] sm:$0x3]
        %v838 = vld [vmem:[%s827 + $0x28] sm:$0xf]
        %v839 = vld [vmem:[%s827 + $0x2c] sm:$0x3]
        %v840 = vld [vmem:[%s827 + $0x30] sm:$0xf]
        %v841 = vld [vmem:[%s827 + $0x34] sm:$0x3]
        %v842 = vld [vmem:[%s827 + $0x38] sm:$0xf]
        %v843 = vld [vmem:[%s827 + $0x3c] sm:$0x3]
        %v844 = vld [vmem:[%s827 + $0x40] sm:$0xf]
        %v845 = vld [vmem:[%s827 + $0x44] sm:$0x3]
        %v846 = vld [vmem:[%s827 + $0x48] sm:$0xf]
        %v847 = vld [vmem:[%s827 + $0x4c] sm:$0x3]
        %v848 = vld [vmem:[%s827 + $0x50] sm:$0xf]
        %v849 = vld [vmem:[%s827 + $0x54] sm:$0x3]
        %v850 = vunpack.c.l.bf16 %v828
        %v851 = vunpack.c.l.bf16 %v829
        %v852 = vunpack.c.l.bf16 %v830
        %v853 = vunpack.c.l.bf16 %v831
        %v854 = vunpack.c.l.bf16 %v832
        %v855 = vunpack.c.l.bf16 %v833
        %v856 = vunpack.c.l.bf16 %v834
        %v857 = vunpack.c.l.bf16 %v835
        %v858 = vunpack.c.l.bf16 %v836
        %v859 = vunpack.c.l.bf16 %v837
        %v860 = vunpack.c.l.bf16 %v838
        %v861 = vunpack.c.l.bf16 %v839
        %v862 = vunpack.c.l.bf16 %v840
        %v863 = vunpack.c.l.bf16 %v841
        %v864 = vunpack.c.l.bf16 %v842
        %v865 = vunpack.c.l.bf16 %v843
        %v866 = vunpack.c.l.bf16 %v844
        %v867 = vunpack.c.l.bf16 %v845
        %v868 = vunpack.c.l.bf16 %v846
        %v869 = vunpack.c.l.bf16 %v847
        %v870 = vunpack.c.l.bf16 %v848
        %v871 = vunpack.c.l.bf16 %v849
        %v872 = vmul.f32 %v850, %v463
        %v873 = vmul.f32 %v851, %v463
        %v874 = vmul.f32 %v852, %v463
        %v875 = vmul.f32 %v853, %v463
        %v876 = vmul.f32 %v854, %v463
        %v877 = vmul.f32 %v855, %v463
        %v878 = vmul.f32 %v856, %v463
        %v879 = vmul.f32 %v857, %v463
        %v880 = vmul.f32 %v858, %v463
        %v881 = vmul.f32 %v859, %v463
        %v882 = vmul.f32 %v860, %v463
        %v883 = vmul.f32 %v861, %v463
        %v884 = vmul.f32 %v862, %v463
        %v885 = vmul.f32 %v863, %v463
        %v886 = vmul.f32 %v864, %v463
        %v887 = vmul.f32 %v865, %v463
        %v888 = vmul.f32 %v866, %v463
        %v889 = vmul.f32 %v867, %v463
        %v890 = vmul.f32 %v868, %v463
        %v891 = vmul.f32 %v869, %v463
        %v892 = vmul.f32 %v870, %v463
        %v893 = vmul.f32 %v871, %v463
        %v894 = vadd.f32 %v872, %v491
        %v895 = vadd.f32 %v873, %v491
        %v896 = vadd.f32 %v874, %v491
        %v897 = vadd.f32 %v875, %v491
        %v898 = vadd.f32 %v876, %v491
        %v899 = vadd.f32 %v877, %v491
        %v900 = vadd.f32 %v878, %v491
        %v901 = vadd.f32 %v879, %v491
        %v902 = vadd.f32 %v880, %v491
        %v903 = vadd.f32 %v881, %v491
        %v904 = vadd.f32 %v882, %v491
        %v905 = vadd.f32 %v883, %v491
        %v906 = vadd.f32 %v884, %v491
        %v907 = vadd.f32 %v885, %v491
        %v908 = vadd.f32 %v886, %v491
        %v909 = vadd.f32 %v887, %v491
        %v910 = vadd.f32 %v888, %v491
        %v911 = vadd.f32 %v889, %v491
        %v912 = vadd.f32 %v890, %v491
        %v913 = vadd.f32 %v891, %v491
        %v914 = vadd.f32 %v892, %v491
        %v915 = vadd.f32 %v893, %v491
        %v916 = vmax.f32 %v894, 0.0
        %v917 = vmax.f32 %v895, 0.0
        %v918 = vmax.f32 %v896, 0.0
        %v919 = vmax.f32 %v897, 0.0
        %v920 = vmax.f32 %v898, 0.0
        %v921 = vmax.f32 %v899, 0.0
        %v922 = vmax.f32 %v900, 0.0
        %v923 = vmax.f32 %v901, 0.0
        %v924 = vmax.f32 %v902, 0.0
        %v925 = vmax.f32 %v903, 0.0
        %v926 = vmax.f32 %v904, 0.0
        %v927 = vmax.f32 %v905, 0.0
        %v928 = vmax.f32 %v906, 0.0
        %v929 = vmax.f32 %v907, 0.0
        %v930 = vmax.f32 %v908, 0.0
        %v931 = vmax.f32 %v909, 0.0
        %v932 = vmax.f32 %v910, 0.0
        %v933 = vmax.f32 %v911, 0.0
        %v934 = vmax.f32 %v912, 0.0
        %v935 = vmax.f32 %v913, 0.0
        %v936 = vmax.f32 %v914, 0.0
        %v937 = vmax.f32 %v915, 0.0
        %s938 = scalar_lea.vmem %s1, 176
        %v939 = vld [vmem:[%s938] sm:$0xff]
        %v940 = vld [vmem:[%s938 + $0x8] sm:$0x7]
        %v941 = vld [vmem:[%s938 + $0x10] sm:$0xff]
        %v942 = vld [vmem:[%s938 + $0x18] sm:$0x7]
        %v943 = vld [vmem:[%s938 + $0x20] sm:$0xff]
        %v944 = vld [vmem:[%s938 + $0x28] sm:$0x7]
        %v945 = vld [vmem:[%s938 + $0x30] sm:$0xff]
        %v946 = vld [vmem:[%s938 + $0x38] sm:$0x7]
        %v947 = vld [vmem:[%s938 + $0x40] sm:$0xff]
        %v948 = vld [vmem:[%s938 + $0x48] sm:$0x7]
        %v949 = vld [vmem:[%s938 + $0x50] sm:$0xff]
        %v950 = vld [vmem:[%s938 + $0x58] sm:$0x7]
        %v951 = vld [vmem:[%s938 + $0x60] sm:$0xff]
        %v952 = vld [vmem:[%s938 + $0x68] sm:$0x7]
        %v953 = vld [vmem:[%s938 + $0x70] sm:$0xff]
        %v954 = vld [vmem:[%s938 + $0x78] sm:$0x7]
        %v955 = vld [vmem:[%s938 + $0x80] sm:$0xff]
        %v956 = vld [vmem:[%s938 + $0x88] sm:$0x7]
        %v957 = vld [vmem:[%s938 + $0x90] sm:$0xff]
        %v958 = vld [vmem:[%s938 + $0x98] sm:$0x7]
        %v959 = vld [vmem:[%s938 + $0xa0] sm:$0xff]
        %v960 = vld [vmem:[%s938 + $0xa8] sm:$0x7]
        %962 = vset.pattern.permute.xlu0 0
        %963 = vperm.xlu0 %962, %v939
        %v964 = vpop.permute.xlu0 %963
        %967 = vset.pattern.permute.xlu0 0
        %968 = vperm.xlu0 %967, %v940
        %v969 = vpop.permute.xlu0 %968
        %972 = vset.pattern.permute.xlu0 0
        %973 = vperm.xlu0 %972, %v941
        %v974 = vpop.permute.xlu0 %973
        %977 = vset.pattern.permute.xlu0 0
        %978 = vperm.xlu0 %977, %v942
        %v979 = vpop.permute.xlu0 %978
        %982 = vset.pattern.permute.xlu0 0
        %983 = vperm.xlu0 %982, %v943
        %v984 = vpop.permute.xlu0 %983
        %987 = vset.pattern.permute.xlu0 0
        %988 = vperm.xlu0 %987, %v944
        %v989 = vpop.permute.xlu0 %988
        %992 = vset.pattern.permute.xlu0 0
        %993 = vperm.xlu0 %992, %v945
        %v994 = vpop.permute.xlu0 %993
        %997 = vset.pattern.permute.xlu0 0
        %998 = vperm.xlu0 %997, %v946
        %v999 = vpop.permute.xlu0 %998
        %1002 = vset.pattern.permute.xlu0 0
        %1003 = vperm.xlu0 %1002, %v947
        %v1004 = vpop.permute.xlu0 %1003
        %1007 = vset.pattern.permute.xlu0 0
        %1008 = vperm.xlu0 %1007, %v948
        %v1009 = vpop.permute.xlu0 %1008
        %1012 = vset.pattern.permute.xlu0 0
        %1013 = vperm.xlu0 %1012, %v949
        %v1014 = vpop.permute.xlu0 %1013
        %1017 = vset.pattern.permute.xlu0 0
        %1018 = vperm.xlu0 %1017, %v950
        %v1019 = vpop.permute.xlu0 %1018
        %1022 = vset.pattern.permute.xlu0 0
        %1023 = vperm.xlu0 %1022, %v951
        %v1024 = vpop.permute.xlu0 %1023
        %1027 = vset.pattern.permute.xlu0 0
        %1028 = vperm.xlu0 %1027, %v952
        %v1029 = vpop.permute.xlu0 %1028
        %1032 = vset.pattern.permute.xlu0 0
        %1033 = vperm.xlu0 %1032, %v953
        %v1034 = vpop.permute.xlu0 %1033
        %1037 = vset.pattern.permute.xlu0 0
        %1038 = vperm.xlu0 %1037, %v954
        %v1039 = vpop.permute.xlu0 %1038
        %1042 = vset.pattern.permute.xlu0 0
        %1043 = vperm.xlu0 %1042, %v955
        %v1044 = vpop.permute.xlu0 %1043
        %1047 = vset.pattern.permute.xlu0 0
        %1048 = vperm.xlu0 %1047, %v956
        %v1049 = vpop.permute.xlu0 %1048
        %1052 = vset.pattern.permute.xlu0 0
        %1053 = vperm.xlu0 %1052, %v957
        %v1054 = vpop.permute.xlu0 %1053
        %1057 = vset.pattern.permute.xlu0 0
        %1058 = vperm.xlu0 %1057, %v958
        %v1059 = vpop.permute.xlu0 %1058
        %1062 = vset.pattern.permute.xlu0 0
        %1063 = vperm.xlu0 %1062, %v959
        %v1064 = vpop.permute.xlu0 %1063
        %1067 = vset.pattern.permute.xlu0 0
        %1068 = vperm.xlu0 %1067, %v960
        %v1069 = vpop.permute.xlu0 %1068
        %v1071 = vmul.f32 %v916, %v964
        %v1072 = vmul.f32 %v917, %v969
        %v1073 = vmul.f32 %v918, %v974
        %v1074 = vmul.f32 %v919, %v979
        %v1075 = vmul.f32 %v920, %v984
        %v1076 = vmul.f32 %v921, %v989
        %v1077 = vmul.f32 %v922, %v994
        %v1078 = vmul.f32 %v923, %v999
        %v1079 = vmul.f32 %v924, %v1004
        %v1080 = vmul.f32 %v925, %v1009
        %v1081 = vmul.f32 %v926, %v1014
        %v1082 = vmul.f32 %v927, %v1019
        %v1083 = vmul.f32 %v928, %v1024
        %v1084 = vmul.f32 %v929, %v1029
        %v1085 = vmul.f32 %v930, %v1034
        %v1086 = vmul.f32 %v931, %v1039
        %v1087 = vmul.f32 %v932, %v1044
        %v1088 = vmul.f32 %v933, %v1049
        %v1089 = vmul.f32 %v934, %v1054
        %v1090 = vmul.f32 %v935, %v1059
        %v1091 = vmul.f32 %v936, %v1064
        %v1092 = vmul.f32 %v937, %v1069
        %v1093 = vpack.c.bf16 %v1072, %v1071
        %v1094 = vpack.c.bf16 %v1074, %v1073
        %v1095 = vpack.c.bf16 %v1076, %v1075
        %v1096 = vpack.c.bf16 %v1078, %v1077
        %v1097 = vpack.c.bf16 %v1080, %v1079
        %v1098 = vpack.c.bf16 %v1082, %v1081
        %v1099 = vpack.c.bf16 %v1084, %v1083
        %v1100 = vpack.c.bf16 %v1086, %v1085
        %v1101 = vpack.c.bf16 %v1088, %v1087
        %v1102 = vpack.c.bf16 %v1090, %v1089
        %v1103 = vpack.c.bf16 %v1092, %v1091
        %v1115 = vunpack.c.l.b16 %v1093
        %v1116 = vunpack.c.h.b16 %v1093
        %v1117 = vunpack.c.l.b16 %v1094
        %v1118 = vunpack.c.h.b16 %v1094
        %v1119 = vunpack.c.l.b16 %v1095
        %v1120 = vunpack.c.h.b16 %v1095
        %v1121 = vunpack.c.l.b16 %v1096
        %v1122 = vunpack.c.h.b16 %v1096
        %v1123 = vunpack.c.l.b16 %v1097
        %v1124 = vunpack.c.h.b16 %v1097
        %v1125 = vunpack.c.l.b16 %v1098
        %v1126 = vunpack.c.h.b16 %v1098
        %v1127 = vunpack.c.l.b16 %v1099
        %v1128 = vunpack.c.h.b16 %v1099
        %v1129 = vunpack.c.l.b16 %v1100
        %v1130 = vunpack.c.h.b16 %v1100
        %v1131 = vunpack.c.l.b16 %v1101
        %v1132 = vunpack.c.h.b16 %v1101
        %v1133 = vunpack.c.l.b16 %v1102
        %v1134 = vunpack.c.h.b16 %v1102
        %v1135 = vunpack.c.l.b16 %v1103
        %v1136 = vunpack.c.h.b16 %v1103
        %v1137 = vpack.c.b16 %v1115, %v1115
        %v1138 = vpack.c.b16 %v1116, %v1116
        %v1139 = vpack.c.b16 %v1117, %v1117
        %v1140 = vpack.c.b16 %v1118, %v1118
        %v1141 = vpack.c.b16 %v1119, %v1119
        %v1142 = vpack.c.b16 %v1120, %v1120
        %v1143 = vpack.c.b16 %v1121, %v1121
        %v1144 = vpack.c.b16 %v1122, %v1122
        %v1145 = vpack.c.b16 %v1123, %v1123
        %v1146 = vpack.c.b16 %v1124, %v1124
        %v1147 = vpack.c.b16 %v1125, %v1125
        %v1148 = vpack.c.b16 %v1126, %v1126
        %v1149 = vpack.c.b16 %v1127, %v1127
        %v1150 = vpack.c.b16 %v1128, %v1128
        %v1151 = vpack.c.b16 %v1129, %v1129
        %v1152 = vpack.c.b16 %v1130, %v1130
        %v1153 = vpack.c.b16 %v1131, %v1131
        %v1154 = vpack.c.b16 %v1132, %v1132
        %v1155 = vpack.c.b16 %v1133, %v1133
        %v1156 = vpack.c.b16 %v1134, %v1134
        %v1157 = vpack.c.b16 %v1135, %v1135
        %v1158 = vpack.c.b16 %v1136, %v1136
        %s1181 = scalar_lea.vmem [#allocation2], 88
        %1182 = vst.msk [vmem:[%s1181] sm:$0xf] %vm779, %v1137
        %v1183 = vld [vmem:[%s1181 + $0x4] sm:$0x3]
        %v1184 = vsel %vm783, %v1138, %v1183
        %1185 = vst [vmem:[%s1181 + $0x4] sm:$0x3] %v1184
        %1186 = vst.msk [vmem:[%s1181 + $0x8] sm:$0xf] %vm779, %v1139
        %v1187 = vld [vmem:[%s1181 + $0xc] sm:$0x3]
        %v1188 = vsel %vm783, %v1140, %v1187
        %1189 = vst [vmem:[%s1181 + $0xc] sm:$0x3] %v1188
        %1190 = vst.msk [vmem:[%s1181 + $0x10] sm:$0xf] %vm779, %v1141
        %v1191 = vld [vmem:[%s1181 + $0x14] sm:$0x3]
        %v1192 = vsel %vm783, %v1142, %v1191
        %1193 = vst [vmem:[%s1181 + $0x14] sm:$0x3] %v1192
        %1194 = vst.msk [vmem:[%s1181 + $0x18] sm:$0xf] %vm779, %v1143
        %v1195 = vld [vmem:[%s1181 + $0x1c] sm:$0x3]
        %v1196 = vsel %vm783, %v1144, %v1195
        %1197 = vst [vmem:[%s1181 + $0x1c] sm:$0x3] %v1196
        %1198 = vst.msk [vmem:[%s1181 + $0x20] sm:$0xf] %vm779, %v1145
        %v1199 = vld [vmem:[%s1181 + $0x24] sm:$0x3]
        %v1200 = vsel %vm783, %v1146, %v1199
        %1201 = vst [vmem:[%s1181 + $0x24] sm:$0x3] %v1200
        %1202 = vst.msk [vmem:[%s1181 + $0x28] sm:$0xf] %vm779, %v1147
        %v1203 = vld [vmem:[%s1181 + $0x2c] sm:$0x3]
        %v1204 = vsel %vm783, %v1148, %v1203
        %1205 = vst [vmem:[%s1181 + $0x2c] sm:$0x3] %v1204
        %1206 = vst.msk [vmem:[%s1181 + $0x30] sm:$0xf] %vm779, %v1149
        %v1207 = vld [vmem:[%s1181 + $0x34] sm:$0x3]
        %v1208 = vsel %vm783, %v1150, %v1207
        %1209 = vst [vmem:[%s1181 + $0x34] sm:$0x3] %v1208
        %1210 = vst.msk [vmem:[%s1181 + $0x38] sm:$0xf] %vm779, %v1151
        %v1211 = vld [vmem:[%s1181 + $0x3c] sm:$0x3]
        %v1212 = vsel %vm783, %v1152, %v1211
        %1213 = vst [vmem:[%s1181 + $0x3c] sm:$0x3] %v1212
        %1214 = vst.msk [vmem:[%s1181 + $0x40] sm:$0xf] %vm779, %v1153
        %v1215 = vld [vmem:[%s1181 + $0x44] sm:$0x3]
        %v1216 = vsel %vm783, %v1154, %v1215
        %1217 = vst [vmem:[%s1181 + $0x44] sm:$0x3] %v1216
        %1218 = vst.msk [vmem:[%s1181 + $0x48] sm:$0xf] %vm779, %v1155
        %v1219 = vld [vmem:[%s1181 + $0x4c] sm:$0x3]
        %v1220 = vsel %vm783, %v1156, %v1219
        %1221 = vst [vmem:[%s1181 + $0x4c] sm:$0x3] %v1220
        %1222 = vst.msk [vmem:[%s1181 + $0x50] sm:$0xf] %vm779, %v1157
        %v1223 = vld [vmem:[%s1181 + $0x54] sm:$0x3]
        %v1224 = vsel %vm783, %v1158, %v1223
        %1225 = vst [vmem:[%s1181 + $0x54] sm:$0x3] %v1224
        %s1226 = scalar_lea.vmem %s403, 176
        %v1227 = vld [vmem:[%s1226] sm:$0xf]
        %v1228 = vld [vmem:[%s1226 + $0x4] sm:$0x3]
        %v1229 = vld [vmem:[%s1226 + $0x8] sm:$0xf]
        %v1230 = vld [vmem:[%s1226 + $0xc] sm:$0x3]
        %v1231 = vld [vmem:[%s1226 + $0x10] sm:$0xf]
        %v1232 = vld [vmem:[%s1226 + $0x14] sm:$0x3]
        %v1233 = vld [vmem:[%s1226 + $0x18] sm:$0xf]
        %v1234 = vld [vmem:[%s1226 + $0x1c] sm:$0x3]
        %v1235 = vld [vmem:[%s1226 + $0x20] sm:$0xf]
        %v1236 = vld [vmem:[%s1226 + $0x24] sm:$0x3]
        %v1237 = vld [vmem:[%s1226 + $0x28] sm:$0xf]
        %v1238 = vld [vmem:[%s1226 + $0x2c] sm:$0x3]
        %v1239 = vld [vmem:[%s1226 + $0x30] sm:$0xf]
        %v1240 = vld [vmem:[%s1226 + $0x34] sm:$0x3]
        %v1241 = vld [vmem:[%s1226 + $0x38] sm:$0xf]
        %v1242 = vld [vmem:[%s1226 + $0x3c] sm:$0x3]
        %v1243 = vld [vmem:[%s1226 + $0x40] sm:$0xf]
        %v1244 = vld [vmem:[%s1226 + $0x44] sm:$0x3]
        %v1245 = vld [vmem:[%s1226 + $0x48] sm:$0xf]
        %v1246 = vld [vmem:[%s1226 + $0x4c] sm:$0x3]
        %v1247 = vld [vmem:[%s1226 + $0x50] sm:$0xf]
        %v1248 = vld [vmem:[%s1226 + $0x54] sm:$0x3]
        %v1249 = vunpack.c.l.bf16 %v1227
        %v1250 = vunpack.c.l.bf16 %v1228
        %v1251 = vunpack.c.l.bf16 %v1229
        %v1252 = vunpack.c.l.bf16 %v1230
        %v1253 = vunpack.c.l.bf16 %v1231
        %v1254 = vunpack.c.l.bf16 %v1232
        %v1255 = vunpack.c.l.bf16 %v1233
        %v1256 = vunpack.c.l.bf16 %v1234
        %v1257 = vunpack.c.l.bf16 %v1235
        %v1258 = vunpack.c.l.bf16 %v1236
        %v1259 = vunpack.c.l.bf16 %v1237
        %v1260 = vunpack.c.l.bf16 %v1238
        %v1261 = vunpack.c.l.bf16 %v1239
        %v1262 = vunpack.c.l.bf16 %v1240
        %v1263 = vunpack.c.l.bf16 %v1241
        %v1264 = vunpack.c.l.bf16 %v1242
        %v1265 = vunpack.c.l.bf16 %v1243
        %v1266 = vunpack.c.l.bf16 %v1244
        %v1267 = vunpack.c.l.bf16 %v1245
        %v1268 = vunpack.c.l.bf16 %v1246
        %v1269 = vunpack.c.l.bf16 %v1247
        %v1270 = vunpack.c.l.bf16 %v1248
        %v1271 = vmul.f32 %v1249, %v463
        %v1272 = vmul.f32 %v1250, %v463
        %v1273 = vmul.f32 %v1251, %v463
        %v1274 = vmul.f32 %v1252, %v463
        %v1275 = vmul.f32 %v1253, %v463
        %v1276 = vmul.f32 %v1254, %v463
        %v1277 = vmul.f32 %v1255, %v463
        %v1278 = vmul.f32 %v1256, %v463
        %v1279 = vmul.f32 %v1257, %v463
        %v1280 = vmul.f32 %v1258, %v463
        %v1281 = vmul.f32 %v1259, %v463
        %v1282 = vmul.f32 %v1260, %v463
        %v1283 = vmul.f32 %v1261, %v463
        %v1284 = vmul.f32 %v1262, %v463
        %v1285 = vmul.f32 %v1263, %v463
        %v1286 = vmul.f32 %v1264, %v463
        %v1287 = vmul.f32 %v1265, %v463
        %v1288 = vmul.f32 %v1266, %v463
        %v1289 = vmul.f32 %v1267, %v463
        %v1290 = vmul.f32 %v1268, %v463
        %v1291 = vmul.f32 %v1269, %v463
        %v1292 = vmul.f32 %v1270, %v463
        %v1293 = vadd.f32 %v1271, %v491
        %v1294 = vadd.f32 %v1272, %v491
        %v1295 = vadd.f32 %v1273, %v491
        %v1296 = vadd.f32 %v1274, %v491
        %v1297 = vadd.f32 %v1275, %v491
        %v1298 = vadd.f32 %v1276, %v491
        %v1299 = vadd.f32 %v1277, %v491
        %v1300 = vadd.f32 %v1278, %v491
        %v1301 = vadd.f32 %v1279, %v491
        %v1302 = vadd.f32 %v1280, %v491
        %v1303 = vadd.f32 %v1281, %v491
        %v1304 = vadd.f32 %v1282, %v491
        %v1305 = vadd.f32 %v1283, %v491
        %v1306 = vadd.f32 %v1284, %v491
        %v1307 = vadd.f32 %v1285, %v491
        %v1308 = vadd.f32 %v1286, %v491
        %v1309 = vadd.f32 %v1287, %v491
        %v1310 = vadd.f32 %v1288, %v491
        %v1311 = vadd.f32 %v1289, %v491
        %v1312 = vadd.f32 %v1290, %v491
        %v1313 = vadd.f32 %v1291, %v491
        %v1314 = vadd.f32 %v1292, %v491
        %v1315 = vmax.f32 %v1293, 0.0
        %v1316 = vmax.f32 %v1294, 0.0
        %v1317 = vmax.f32 %v1295, 0.0
        %v1318 = vmax.f32 %v1296, 0.0
        %v1319 = vmax.f32 %v1297, 0.0
        %v1320 = vmax.f32 %v1298, 0.0
        %v1321 = vmax.f32 %v1299, 0.0
        %v1322 = vmax.f32 %v1300, 0.0
        %v1323 = vmax.f32 %v1301, 0.0
        %v1324 = vmax.f32 %v1302, 0.0
        %v1325 = vmax.f32 %v1303, 0.0
        %v1326 = vmax.f32 %v1304, 0.0
        %v1327 = vmax.f32 %v1305, 0.0
        %v1328 = vmax.f32 %v1306, 0.0
        %v1329 = vmax.f32 %v1307, 0.0
        %v1330 = vmax.f32 %v1308, 0.0
        %v1331 = vmax.f32 %v1309, 0.0
        %v1332 = vmax.f32 %v1310, 0.0
        %v1333 = vmax.f32 %v1311, 0.0
        %v1334 = vmax.f32 %v1312, 0.0
        %v1335 = vmax.f32 %v1313, 0.0
        %v1336 = vmax.f32 %v1314, 0.0
        %s1337 = scalar_lea.vmem %s1, 352
        %v1338 = vld [vmem:[%s1337] sm:$0xff]
        %v1339 = vld [vmem:[%s1337 + $0x8] sm:$0x7]
        %v1340 = vld [vmem:[%s1337 + $0x10] sm:$0xff]
        %v1341 = vld [vmem:[%s1337 + $0x18] sm:$0x7]
        %v1342 = vld [vmem:[%s1337 + $0x20] sm:$0xff]
        %v1343 = vld [vmem:[%s1337 + $0x28] sm:$0x7]
        %v1344 = vld [vmem:[%s1337 + $0x30] sm:$0xff]
        %v1345 = vld [vmem:[%s1337 + $0x38] sm:$0x7]
        %v1346 = vld [vmem:[%s1337 + $0x40] sm:$0xff]
        %v1347 = vld [vmem:[%s1337 + $0x48] sm:$0x7]
        %v1348 = vld [vmem:[%s1337 + $0x50] sm:$0xff]
        %v1349 = vld [vmem:[%s1337 + $0x58] sm:$0x7]
        %v1350 = vld [vmem:[%s1337 + $0x60] sm:$0xff]
        %v1351 = vld [vmem:[%s1337 + $0x68] sm:$0x7]
        %v1352 = vld [vmem:[%s1337 + $0x70] sm:$0xff]
        %v1353 = vld [vmem:[%s1337 + $0x78] sm:$0x7]
        %v1354 = vld [vmem:[%s1337 + $0x80] sm:$0xff]
        %v1355 = vld [vmem:[%s1337 + $0x88] sm:$0x7]
        %v1356 = vld [vmem:[%s1337 + $0x90] sm:$0xff]
        %v1357 = vld [vmem:[%s1337 + $0x98] sm:$0x7]
        %v1358 = vld [vmem:[%s1337 + $0xa0] sm:$0xff]
        %v1359 = vld [vmem:[%s1337 + $0xa8] sm:$0x7]
        %1361 = vset.pattern.permute.xlu0 0
        %1362 = vperm.xlu0 %1361, %v1338
        %v1363 = vpop.permute.xlu0 %1362
        %1366 = vset.pattern.permute.xlu0 0
        %1367 = vperm.xlu0 %1366, %v1339
        %v1368 = vpop.permute.xlu0 %1367
        %1371 = vset.pattern.permute.xlu0 0
        %1372 = vperm.xlu0 %1371, %v1340
        %v1373 = vpop.permute.xlu0 %1372
        %1376 = vset.pattern.permute.xlu0 0
        %1377 = vperm.xlu0 %1376, %v1341
        %v1378 = vpop.permute.xlu0 %1377
        %1381 = vset.pattern.permute.xlu0 0
        %1382 = vperm.xlu0 %1381, %v1342
        %v1383 = vpop.permute.xlu0 %1382
        %1386 = vset.pattern.permute.xlu0 0
        %1387 = vperm.xlu0 %1386, %v1343
        %v1388 = vpop.permute.xlu0 %1387
        %1391 = vset.pattern.permute.xlu0 0
        %1392 = vperm.xlu0 %1391, %v1344
        %v1393 = vpop.permute.xlu0 %1392
        %1396 = vset.pattern.permute.xlu0 0
        %1397 = vperm.xlu0 %1396, %v1345
        %v1398 = vpop.permute.xlu0 %1397
        %1401 = vset.pattern.permute.xlu0 0
        %1402 = vperm.xlu0 %1401, %v1346
        %v1403 = vpop.permute.xlu0 %1402
        %1406 = vset.pattern.permute.xlu0 0
        %1407 = vperm.xlu0 %1406, %v1347
        %v1408 = vpop.permute.xlu0 %1407
        %1411 = vset.pattern.permute.xlu0 0
        %1412 = vperm.xlu0 %1411, %v1348
        %v1413 = vpop.permute.xlu0 %1412
        %1416 = vset.pattern.permute.xlu0 0
        %1417 = vperm.xlu0 %1416, %v1349
        %v1418 = vpop.permute.xlu0 %1417
        %1421 = vset.pattern.permute.xlu0 0
        %1422 = vperm.xlu0 %1421, %v1350
        %v1423 = vpop.permute.xlu0 %1422
        %1426 = vset.pattern.permute.xlu0 0
        %1427 = vperm.xlu0 %1426, %v1351
        %v1428 = vpop.permute.xlu0 %1427
        %1431 = vset.pattern.permute.xlu0 0
        %1432 = vperm.xlu0 %1431, %v1352
        %v1433 = vpop.permute.xlu0 %1432
        %1436 = vset.pattern.permute.xlu0 0
        %1437 = vperm.xlu0 %1436, %v1353
        %v1438 = vpop.permute.xlu0 %1437
        %1441 = vset.pattern.permute.xlu0 0
        %1442 = vperm.xlu0 %1441, %v1354
        %v1443 = vpop.permute.xlu0 %1442
        %1446 = vset.pattern.permute.xlu0 0
        %1447 = vperm.xlu0 %1446, %v1355
        %v1448 = vpop.permute.xlu0 %1447
        %1451 = vset.pattern.permute.xlu0 0
        %1452 = vperm.xlu0 %1451, %v1356
        %v1453 = vpop.permute.xlu0 %1452
        %1456 = vset.pattern.permute.xlu0 0
        %1457 = vperm.xlu0 %1456, %v1357
        %v1458 = vpop.permute.xlu0 %1457
        %1461 = vset.pattern.permute.xlu0 0
        %1462 = vperm.xlu0 %1461, %v1358
        %v1463 = vpop.permute.xlu0 %1462
        %1466 = vset.pattern.permute.xlu0 0
        %1467 = vperm.xlu0 %1466, %v1359
        %v1468 = vpop.permute.xlu0 %1467
        %v1470 = vmul.f32 %v1315, %v1363
        %v1471 = vmul.f32 %v1316, %v1368
        %v1472 = vmul.f32 %v1317, %v1373
        %v1473 = vmul.f32 %v1318, %v1378
        %v1474 = vmul.f32 %v1319, %v1383
        %v1475 = vmul.f32 %v1320, %v1388
        %v1476 = vmul.f32 %v1321, %v1393
        %v1477 = vmul.f32 %v1322, %v1398
        %v1478 = vmul.f32 %v1323, %v1403
        %v1479 = vmul.f32 %v1324, %v1408
        %v1480 = vmul.f32 %v1325, %v1413
        %v1481 = vmul.f32 %v1326, %v1418
        %v1482 = vmul.f32 %v1327, %v1423
        %v1483 = vmul.f32 %v1328, %v1428
        %v1484 = vmul.f32 %v1329, %v1433
        %v1485 = vmul.f32 %v1330, %v1438
        %v1486 = vmul.f32 %v1331, %v1443
        %v1487 = vmul.f32 %v1332, %v1448
        %v1488 = vmul.f32 %v1333, %v1453
        %v1489 = vmul.f32 %v1334, %v1458
        %v1490 = vmul.f32 %v1335, %v1463
        %v1491 = vmul.f32 %v1336, %v1468
        %v1492 = vpack.c.bf16 %v1471, %v1470
        %v1493 = vpack.c.bf16 %v1473, %v1472
        %v1494 = vpack.c.bf16 %v1475, %v1474
        %v1495 = vpack.c.bf16 %v1477, %v1476
        %v1496 = vpack.c.bf16 %v1479, %v1478
        %v1497 = vpack.c.bf16 %v1481, %v1480
        %v1498 = vpack.c.bf16 %v1483, %v1482
        %v1499 = vpack.c.bf16 %v1485, %v1484
        %v1500 = vpack.c.bf16 %v1487, %v1486
        %v1501 = vpack.c.bf16 %v1489, %v1488
        %v1502 = vpack.c.bf16 %v1491, %v1490
        %v1514 = vunpack.c.l.b16 %v1492
        %v1515 = vunpack.c.h.b16 %v1492
        %v1516 = vunpack.c.l.b16 %v1493
        %v1517 = vunpack.c.h.b16 %v1493
        %v1518 = vunpack.c.l.b16 %v1494
        %v1519 = vunpack.c.h.b16 %v1494
        %v1520 = vunpack.c.l.b16 %v1495
        %v1521 = vunpack.c.h.b16 %v1495
        %v1522 = vunpack.c.l.b16 %v1496
        %v1523 = vunpack.c.h.b16 %v1496
        %v1524 = vunpack.c.l.b16 %v1497
        %v1525 = vunpack.c.h.b16 %v1497
        %v1526 = vunpack.c.l.b16 %v1498
        %v1527 = vunpack.c.h.b16 %v1498
        %v1528 = vunpack.c.l.b16 %v1499
        %v1529 = vunpack.c.h.b16 %v1499
        %v1530 = vunpack.c.l.b16 %v1500
        %v1531 = vunpack.c.h.b16 %v1500
        %v1532 = vunpack.c.l.b16 %v1501
        %v1533 = vunpack.c.h.b16 %v1501
        %v1534 = vunpack.c.l.b16 %v1502
        %v1535 = vunpack.c.h.b16 %v1502
        %v1536 = vpack.c.b16 %v1514, %v1514
        %v1537 = vpack.c.b16 %v1515, %v1515
        %v1538 = vpack.c.b16 %v1516, %v1516
        %v1539 = vpack.c.b16 %v1517, %v1517
        %v1540 = vpack.c.b16 %v1518, %v1518
        %v1541 = vpack.c.b16 %v1519, %v1519
        %v1542 = vpack.c.b16 %v1520, %v1520
        %v1543 = vpack.c.b16 %v1521, %v1521
        %v1544 = vpack.c.b16 %v1522, %v1522
        %v1545 = vpack.c.b16 %v1523, %v1523
        %v1546 = vpack.c.b16 %v1524, %v1524
        %v1547 = vpack.c.b16 %v1525, %v1525
        %v1548 = vpack.c.b16 %v1526, %v1526
        %v1549 = vpack.c.b16 %v1527, %v1527
        %v1550 = vpack.c.b16 %v1528, %v1528
        %v1551 = vpack.c.b16 %v1529, %v1529
        %v1552 = vpack.c.b16 %v1530, %v1530
        %v1553 = vpack.c.b16 %v1531, %v1531
        %v1554 = vpack.c.b16 %v1532, %v1532
        %v1555 = vpack.c.b16 %v1533, %v1533
        %v1556 = vpack.c.b16 %v1534, %v1534
        %v1557 = vpack.c.b16 %v1535, %v1535
        %s1580 = scalar_lea.vmem [#allocation2], 176
        %1581 = vst.msk [vmem:[%s1580] sm:$0xf] %vm779, %v1536
        %v1582 = vld [vmem:[%s1580 + $0x4] sm:$0x3]
        %v1583 = vsel %vm783, %v1537, %v1582
        %1584 = vst [vmem:[%s1580 + $0x4] sm:$0x3] %v1583
        %1585 = vst.msk [vmem:[%s1580 + $0x8] sm:$0xf] %vm779, %v1538
        %v1586 = vld [vmem:[%s1580 + $0xc] sm:$0x3]
        %v1587 = vsel %vm783, %v1539, %v1586
        %1588 = vst [vmem:[%s1580 + $0xc] sm:$0x3] %v1587
        %1589 = vst.msk [vmem:[%s1580 + $0x10] sm:$0xf] %vm779, %v1540
        %v1590 = vld [vmem:[%s1580 + $0x14] sm:$0x3]
        %v1591 = vsel %vm783, %v1541, %v1590
        %1592 = vst [vmem:[%s1580 + $0x14] sm:$0x3] %v1591
        %1593 = vst.msk [vmem:[%s1580 + $0x18] sm:$0xf] %vm779, %v1542
        %v1594 = vld [vmem:[%s1580 + $0x1c] sm:$0x3]
        %v1595 = vsel %vm783, %v1543, %v1594
        %1596 = vst [vmem:[%s1580 + $0x1c] sm:$0x3] %v1595
        %1597 = vst.msk [vmem:[%s1580 + $0x20] sm:$0xf] %vm779, %v1544
        %v1598 = vld [vmem:[%s1580 + $0x24] sm:$0x3]
        %v1599 = vsel %vm783, %v1545, %v1598
        %1600 = vst [vmem:[%s1580 + $0x24] sm:$0x3] %v1599
        %1601 = vst.msk [vmem:[%s1580 + $0x28] sm:$0xf] %vm779, %v1546
        %v1602 = vld [vmem:[%s1580 + $0x2c] sm:$0x3]
        %v1603 = vsel %vm783, %v1547, %v1602
        %1604 = vst [vmem:[%s1580 + $0x2c] sm:$0x3] %v1603
        %1605 = vst.msk [vmem:[%s1580 + $0x30] sm:$0xf] %vm779, %v1548
        %v1606 = vld [vmem:[%s1580 + $0x34] sm:$0x3]
        %v1607 = vsel %vm783, %v1549, %v1606
        %1608 = vst [vmem:[%s1580 + $0x34] sm:$0x3] %v1607
        %1609 = vst.msk [vmem:[%s1580 + $0x38] sm:$0xf] %vm779, %v1550
        %v1610 = vld [vmem:[%s1580 + $0x3c] sm:$0x3]
        %v1611 = vsel %vm783, %v1551, %v1610
        %1612 = vst [vmem:[%s1580 + $0x3c] sm:$0x3] %v1611
        %1613 = vst.msk [vmem:[%s1580 + $0x40] sm:$0xf] %vm779, %v1552
        %v1614 = vld [vmem:[%s1580 + $0x44] sm:$0x3]
        %v1615 = vsel %vm783, %v1553, %v1614
        %1616 = vst [vmem:[%s1580 + $0x44] sm:$0x3] %v1615
        %1617 = vst.msk [vmem:[%s1580 + $0x48] sm:$0xf] %vm779, %v1554
        %v1618 = vld [vmem:[%s1580 + $0x4c] sm:$0x3]
        %v1619 = vsel %vm783, %v1555, %v1618
        %1620 = vst [vmem:[%s1580 + $0x4c] sm:$0x3] %v1619
        %1621 = vst.msk [vmem:[%s1580 + $0x50] sm:$0xf] %vm779, %v1556
        %v1622 = vld [vmem:[%s1580 + $0x54] sm:$0x3]
        %v1623 = vsel %vm783, %v1557, %v1622
        %1624 = vst [vmem:[%s1580 + $0x54] sm:$0x3] %v1623
        %s1625 = scalar_lea.vmem %s403, 264
        %v1626 = vld [vmem:[%s1625] sm:$0xf]
        %v1627 = vld [vmem:[%s1625 + $0x4] sm:$0x3]
        %v1628 = vld [vmem:[%s1625 + $0x8] sm:$0xf]
        %v1629 = vld [vmem:[%s1625 + $0xc] sm:$0x3]
        %v1630 = vld [vmem:[%s1625 + $0x10] sm:$0xf]
        %v1631 = vld [vmem:[%s1625 + $0x14] sm:$0x3]
        %v1632 = vld [vmem:[%s1625 + $0x18] sm:$0xf]
        %v1633 = vld [vmem:[%s1625 + $0x1c] sm:$0x3]
        %v1634 = vld [vmem:[%s1625 + $0x20] sm:$0xf]
        %v1635 = vld [vmem:[%s1625 + $0x24] sm:$0x3]
        %v1636 = vld [vmem:[%s1625 + $0x28] sm:$0xf]
        %v1637 = vld [vmem:[%s1625 + $0x2c] sm:$0x3]
        %v1638 = vld [vmem:[%s1625 + $0x30] sm:$0xf]
        %v1639 = vld [vmem:[%s1625 + $0x34] sm:$0x3]
        %v1640 = vld [vmem:[%s1625 + $0x38] sm:$0xf]
        %v1641 = vld [vmem:[%s1625 + $0x3c] sm:$0x3]
        %v1642 = vld [vmem:[%s1625 + $0x40] sm:$0xf]
        %v1643 = vld [vmem:[%s1625 + $0x44] sm:$0x3]
        %v1644 = vld [vmem:[%s1625 + $0x48] sm:$0xf]
        %v1645 = vld [vmem:[%s1625 + $0x4c] sm:$0x3]
        %v1646 = vld [vmem:[%s1625 + $0x50] sm:$0xf]
        %v1647 = vld [vmem:[%s1625 + $0x54] sm:$0x3]
        %v1648 = vunpack.c.l.bf16 %v1626
        %v1649 = vunpack.c.l.bf16 %v1627
        %v1650 = vunpack.c.l.bf16 %v1628
        %v1651 = vunpack.c.l.bf16 %v1629
        %v1652 = vunpack.c.l.bf16 %v1630
        %v1653 = vunpack.c.l.bf16 %v1631
        %v1654 = vunpack.c.l.bf16 %v1632
        %v1655 = vunpack.c.l.bf16 %v1633
        %v1656 = vunpack.c.l.bf16 %v1634
        %v1657 = vunpack.c.l.bf16 %v1635
        %v1658 = vunpack.c.l.bf16 %v1636
        %v1659 = vunpack.c.l.bf16 %v1637
        %v1660 = vunpack.c.l.bf16 %v1638
        %v1661 = vunpack.c.l.bf16 %v1639
        %v1662 = vunpack.c.l.bf16 %v1640
        %v1663 = vunpack.c.l.bf16 %v1641
        %v1664 = vunpack.c.l.bf16 %v1642
        %v1665 = vunpack.c.l.bf16 %v1643
        %v1666 = vunpack.c.l.bf16 %v1644
        %v1667 = vunpack.c.l.bf16 %v1645
        %v1668 = vunpack.c.l.bf16 %v1646
        %v1669 = vunpack.c.l.bf16 %v1647
        %v1670 = vmul.f32 %v1648, %v463
        %v1671 = vmul.f32 %v1649, %v463
        %v1672 = vmul.f32 %v1650, %v463
        %v1673 = vmul.f32 %v1651, %v463
        %v1674 = vmul.f32 %v1652, %v463
        %v1675 = vmul.f32 %v1653, %v463
        %v1676 = vmul.f32 %v1654, %v463
        %v1677 = vmul.f32 %v1655, %v463
        %v1678 = vmul.f32 %v1656, %v463
        %v1679 = vmul.f32 %v1657, %v463
        %v1680 = vmul.f32 %v1658, %v463
        %v1681 = vmul.f32 %v1659, %v463
        %v1682 = vmul.f32 %v1660, %v463
        %v1683 = vmul.f32 %v1661, %v463
        %v1684 = vmul.f32 %v1662, %v463
        %v1685 = vmul.f32 %v1663, %v463
        %v1686 = vmul.f32 %v1664, %v463
        %v1687 = vmul.f32 %v1665, %v463
        %v1688 = vmul.f32 %v1666, %v463
        %v1689 = vmul.f32 %v1667, %v463
        %v1690 = vmul.f32 %v1668, %v463
        %v1691 = vmul.f32 %v1669, %v463
        %v1692 = vadd.f32 %v1670, %v491
        %v1693 = vadd.f32 %v1671, %v491
        %v1694 = vadd.f32 %v1672, %v491
        %v1695 = vadd.f32 %v1673, %v491
        %v1696 = vadd.f32 %v1674, %v491
        %v1697 = vadd.f32 %v1675, %v491
        %v1698 = vadd.f32 %v1676, %v491
        %v1699 = vadd.f32 %v1677, %v491
        %v1700 = vadd.f32 %v1678, %v491
        %v1701 = vadd.f32 %v1679, %v491
        %v1702 = vadd.f32 %v1680, %v491
        %v1703 = vadd.f32 %v1681, %v491
        %v1704 = vadd.f32 %v1682, %v491
        %v1705 = vadd.f32 %v1683, %v491
        %v1706 = vadd.f32 %v1684, %v491
        %v1707 = vadd.f32 %v1685, %v491
        %v1708 = vadd.f32 %v1686, %v491
        %v1709 = vadd.f32 %v1687, %v491
        %v1710 = vadd.f32 %v1688, %v491
        %v1711 = vadd.f32 %v1689, %v491
        %v1712 = vadd.f32 %v1690, %v491
        %v1713 = vadd.f32 %v1691, %v491
        %v1714 = vmax.f32 %v1692, 0.0
        %v1715 = vmax.f32 %v1693, 0.0
        %v1716 = vmax.f32 %v1694, 0.0
        %v1717 = vmax.f32 %v1695, 0.0
        %v1718 = vmax.f32 %v1696, 0.0
        %v1719 = vmax.f32 %v1697, 0.0
        %v1720 = vmax.f32 %v1698, 0.0
        %v1721 = vmax.f32 %v1699, 0.0
        %v1722 = vmax.f32 %v1700, 0.0
        %v1723 = vmax.f32 %v1701, 0.0
        %v1724 = vmax.f32 %v1702, 0.0
        %v1725 = vmax.f32 %v1703, 0.0
        %v1726 = vmax.f32 %v1704, 0.0
        %v1727 = vmax.f32 %v1705, 0.0
        %v1728 = vmax.f32 %v1706, 0.0
        %v1729 = vmax.f32 %v1707, 0.0
        %v1730 = vmax.f32 %v1708, 0.0
        %v1731 = vmax.f32 %v1709, 0.0
        %v1732 = vmax.f32 %v1710, 0.0
        %v1733 = vmax.f32 %v1711, 0.0
        %v1734 = vmax.f32 %v1712, 0.0
        %v1735 = vmax.f32 %v1713, 0.0
        %s1736 = scalar_lea.vmem %s1, 528
        %v1737 = vld [vmem:[%s1736] sm:$0xff]
        %v1738 = vld [vmem:[%s1736 + $0x8] sm:$0x7]
        %v1739 = vld [vmem:[%s1736 + $0x10] sm:$0xff]
        %v1740 = vld [vmem:[%s1736 + $0x18] sm:$0x7]
        %v1741 = vld [vmem:[%s1736 + $0x20] sm:$0xff]
        %v1742 = vld [vmem:[%s1736 + $0x28] sm:$0x7]
        %v1743 = vld [vmem:[%s1736 + $0x30] sm:$0xff]
        %v1744 = vld [vmem:[%s1736 + $0x38] sm:$0x7]
        %v1745 = vld [vmem:[%s1736 + $0x40] sm:$0xff]
        %v1746 = vld [vmem:[%s1736 + $0x48] sm:$0x7]
        %v1747 = vld [vmem:[%s1736 + $0x50] sm:$0xff]
        %v1748 = vld [vmem:[%s1736 + $0x58] sm:$0x7]
        %v1749 = vld [vmem:[%s1736 + $0x60] sm:$0xff]
        %v1750 = vld [vmem:[%s1736 + $0x68] sm:$0x7]
        %v1751 = vld [vmem:[%s1736 + $0x70] sm:$0xff]
        %v1752 = vld [vmem:[%s1736 + $0x78] sm:$0x7]
        %v1753 = vld [vmem:[%s1736 + $0x80] sm:$0xff]
        %v1754 = vld [vmem:[%s1736 + $0x88] sm:$0x7]
        %v1755 = vld [vmem:[%s1736 + $0x90] sm:$0xff]
        %v1756 = vld [vmem:[%s1736 + $0x98] sm:$0x7]
        %v1757 = vld [vmem:[%s1736 + $0xa0] sm:$0xff]
        %v1758 = vld [vmem:[%s1736 + $0xa8] sm:$0x7]
        %1760 = vset.pattern.permute.xlu0 0
        %1761 = vperm.xlu0 %1760, %v1737
        %v1762 = vpop.permute.xlu0 %1761
        %1765 = vset.pattern.permute.xlu0 0
        %1766 = vperm.xlu0 %1765, %v1738
        %v1767 = vpop.permute.xlu0 %1766
        %1770 = vset.pattern.permute.xlu0 0
        %1771 = vperm.xlu0 %1770, %v1739
        %v1772 = vpop.permute.xlu0 %1771
        %1775 = vset.pattern.permute.xlu0 0
        %1776 = vperm.xlu0 %1775, %v1740
        %v1777 = vpop.permute.xlu0 %1776
        %1780 = vset.pattern.permute.xlu0 0
        %1781 = vperm.xlu0 %1780, %v1741
        %v1782 = vpop.permute.xlu0 %1781
        %1785 = vset.pattern.permute.xlu0 0
        %1786 = vperm.xlu0 %1785, %v1742
        %v1787 = vpop.permute.xlu0 %1786
        %1790 = vset.pattern.permute.xlu0 0
        %1791 = vperm.xlu0 %1790, %v1743
        %v1792 = vpop.permute.xlu0 %1791
        %1795 = vset.pattern.permute.xlu0 0
        %1796 = vperm.xlu0 %1795, %v1744
        %v1797 = vpop.permute.xlu0 %1796
        %1800 = vset.pattern.permute.xlu0 0
        %1801 = vperm.xlu0 %1800, %v1745
        %v1802 = vpop.permute.xlu0 %1801
        %1805 = vset.pattern.permute.xlu0 0
        %1806 = vperm.xlu0 %1805, %v1746
        %v1807 = vpop.permute.xlu0 %1806
        %1810 = vset.pattern.permute.xlu0 0
        %1811 = vperm.xlu0 %1810, %v1747
        %v1812 = vpop.permute.xlu0 %1811
        %1815 = vset.pattern.permute.xlu0 0
        %1816 = vperm.xlu0 %1815, %v1748
        %v1817 = vpop.permute.xlu0 %1816
        %1820 = vset.pattern.permute.xlu0 0
        %1821 = vperm.xlu0 %1820, %v1749
        %v1822 = vpop.permute.xlu0 %1821
        %1825 = vset.pattern.permute.xlu0 0
        %1826 = vperm.xlu0 %1825, %v1750
        %v1827 = vpop.permute.xlu0 %1826
        %1830 = vset.pattern.permute.xlu0 0
        %1831 = vperm.xlu0 %1830, %v1751
        %v1832 = vpop.permute.xlu0 %1831
        %1835 = vset.pattern.permute.xlu0 0
        %1836 = vperm.xlu0 %1835, %v1752
        %v1837 = vpop.permute.xlu0 %1836
        %1840 = vset.pattern.permute.xlu0 0
        %1841 = vperm.xlu0 %1840, %v1753
        %v1842 = vpop.permute.xlu0 %1841
        %1845 = vset.pattern.permute.xlu0 0
        %1846 = vperm.xlu0 %1845, %v1754
        %v1847 = vpop.permute.xlu0 %1846
        %1850 = vset.pattern.permute.xlu0 0
        %1851 = vperm.xlu0 %1850, %v1755
        %v1852 = vpop.permute.xlu0 %1851
        %1855 = vset.pattern.permute.xlu0 0
        %1856 = vperm.xlu0 %1855, %v1756
        %v1857 = vpop.permute.xlu0 %1856
        %1860 = vset.pattern.permute.xlu0 0
        %1861 = vperm.xlu0 %1860, %v1757
        %v1862 = vpop.permute.xlu0 %1861
        %1865 = vset.pattern.permute.xlu0 0
        %1866 = vperm.xlu0 %1865, %v1758
        %v1867 = vpop.permute.xlu0 %1866
        %v1869 = vmul.f32 %v1714, %v1762
        %v1870 = vmul.f32 %v1715, %v1767
        %v1871 = vmul.f32 %v1716, %v1772
        %v1872 = vmul.f32 %v1717, %v1777
        %v1873 = vmul.f32 %v1718, %v1782
        %v1874 = vmul.f32 %v1719, %v1787
        %v1875 = vmul.f32 %v1720, %v1792
        %v1876 = vmul.f32 %v1721, %v1797
        %v1877 = vmul.f32 %v1722, %v1802
        %v1878 = vmul.f32 %v1723, %v1807
        %v1879 = vmul.f32 %v1724, %v1812
        %v1880 = vmul.f32 %v1725, %v1817
        %v1881 = vmul.f32 %v1726, %v1822
        %v1882 = vmul.f32 %v1727, %v1827
        %v1883 = vmul.f32 %v1728, %v1832
        %v1884 = vmul.f32 %v1729, %v1837
        %v1885 = vmul.f32 %v1730, %v1842
        %v1886 = vmul.f32 %v1731, %v1847
        %v1887 = vmul.f32 %v1732, %v1852
        %v1888 = vmul.f32 %v1733, %v1857
        %v1889 = vmul.f32 %v1734, %v1862
        %v1890 = vmul.f32 %v1735, %v1867
        %v1891 = vpack.c.bf16 %v1870, %v1869
        %v1892 = vpack.c.bf16 %v1872, %v1871
        %v1893 = vpack.c.bf16 %v1874, %v1873
        %v1894 = vpack.c.bf16 %v1876, %v1875
        %v1895 = vpack.c.bf16 %v1878, %v1877
        %v1896 = vpack.c.bf16 %v1880, %v1879
        %v1897 = vpack.c.bf16 %v1882, %v1881
        %v1898 = vpack.c.bf16 %v1884, %v1883
        %v1899 = vpack.c.bf16 %v1886, %v1885
        %v1900 = vpack.c.bf16 %v1888, %v1887
        %v1901 = vpack.c.bf16 %v1890, %v1889
        %v1913 = vunpack.c.l.b16 %v1891
        %v1914 = vunpack.c.h.b16 %v1891
        %v1915 = vunpack.c.l.b16 %v1892
        %v1916 = vunpack.c.h.b16 %v1892
        %v1917 = vunpack.c.l.b16 %v1893
        %v1918 = vunpack.c.h.b16 %v1893
        %v1919 = vunpack.c.l.b16 %v1894
        %v1920 = vunpack.c.h.b16 %v1894
        %v1921 = vunpack.c.l.b16 %v1895
        %v1922 = vunpack.c.h.b16 %v1895
        %v1923 = vunpack.c.l.b16 %v1896
        %v1924 = vunpack.c.h.b16 %v1896
        %v1925 = vunpack.c.l.b16 %v1897
        %v1926 = vunpack.c.h.b16 %v1897
        %v1927 = vunpack.c.l.b16 %v1898
        %v1928 = vunpack.c.h.b16 %v1898
        %v1929 = vunpack.c.l.b16 %v1899
        %v1930 = vunpack.c.h.b16 %v1899
        %v1931 = vunpack.c.l.b16 %v1900
        %v1932 = vunpack.c.h.b16 %v1900
        %v1933 = vunpack.c.l.b16 %v1901
        %v1934 = vunpack.c.h.b16 %v1901
        %v1935 = vpack.c.b16 %v1913, %v1913
        %v1936 = vpack.c.b16 %v1914, %v1914
        %v1937 = vpack.c.b16 %v1915, %v1915
        %v1938 = vpack.c.b16 %v1916, %v1916
        %v1939 = vpack.c.b16 %v1917, %v1917
        %v1940 = vpack.c.b16 %v1918, %v1918
        %v1941 = vpack.c.b16 %v1919, %v1919
        %v1942 = vpack.c.b16 %v1920, %v1920
        %v1943 = vpack.c.b16 %v1921, %v1921
        %v1944 = vpack.c.b16 %v1922, %v1922
        %v1945 = vpack.c.b16 %v1923, %v1923
        %v1946 = vpack.c.b16 %v1924, %v1924
        %v1947 = vpack.c.b16 %v1925, %v1925
        %v1948 = vpack.c.b16 %v1926, %v1926
        %v1949 = vpack.c.b16 %v1927, %v1927
        %v1950 = vpack.c.b16 %v1928, %v1928
        %v1951 = vpack.c.b16 %v1929, %v1929
        %v1952 = vpack.c.b16 %v1930, %v1930
        %v1953 = vpack.c.b16 %v1931, %v1931
        %v1954 = vpack.c.b16 %v1932, %v1932
        %v1955 = vpack.c.b16 %v1933, %v1933
        %v1956 = vpack.c.b16 %v1934, %v1934
        %s1979 = scalar_lea.vmem [#allocation2], 264
        %1980 = vst.msk [vmem:[%s1979] sm:$0xf] %vm779, %v1935
        %v1981 = vld [vmem:[%s1979 + $0x4] sm:$0x3]
        %v1982 = vsel %vm783, %v1936, %v1981
        %1983 = vst [vmem:[%s1979 + $0x4] sm:$0x3] %v1982
        %1984 = vst.msk [vmem:[%s1979 + $0x8] sm:$0xf] %vm779, %v1937
        %v1985 = vld [vmem:[%s1979 + $0xc] sm:$0x3]
        %v1986 = vsel %vm783, %v1938, %v1985
        %1987 = vst [vmem:[%s1979 + $0xc] sm:$0x3] %v1986
        %1988 = vst.msk [vmem:[%s1979 + $0x10] sm:$0xf] %vm779, %v1939
        %v1989 = vld [vmem:[%s1979 + $0x14] sm:$0x3]
        %v1990 = vsel %vm783, %v1940, %v1989
        %1991 = vst [vmem:[%s1979 + $0x14] sm:$0x3] %v1990
        %1992 = vst.msk [vmem:[%s1979 + $0x18] sm:$0xf] %vm779, %v1941
        %v1993 = vld [vmem:[%s1979 + $0x1c] sm:$0x3]
        %v1994 = vsel %vm783, %v1942, %v1993
        %1995 = vst [vmem:[%s1979 + $0x1c] sm:$0x3] %v1994
        %1996 = vst.msk [vmem:[%s1979 + $0x20] sm:$0xf] %vm779, %v1943
        %v1997 = vld [vmem:[%s1979 + $0x24] sm:$0x3]
        %v1998 = vsel %vm783, %v1944, %v1997
        %1999 = vst [vmem:[%s1979 + $0x24] sm:$0x3] %v1998
        %2000 = vst.msk [vmem:[%s1979 + $0x28] sm:$0xf] %vm779, %v1945
        %v2001 = vld [vmem:[%s1979 + $0x2c] sm:$0x3]
        %v2002 = vsel %vm783, %v1946, %v2001
        %2003 = vst [vmem:[%s1979 + $0x2c] sm:$0x3] %v2002
        %2004 = vst.msk [vmem:[%s1979 + $0x30] sm:$0xf] %vm779, %v1947
        %v2005 = vld [vmem:[%s1979 + $0x34] sm:$0x3]
        %v2006 = vsel %vm783, %v1948, %v2005
        %2007 = vst [vmem:[%s1979 + $0x34] sm:$0x3] %v2006
        %2008 = vst.msk [vmem:[%s1979 + $0x38] sm:$0xf] %vm779, %v1949
        %v2009 = vld [vmem:[%s1979 + $0x3c] sm:$0x3]
        %v2010 = vsel %vm783, %v1950, %v2009
        %2011 = vst [vmem:[%s1979 + $0x3c] sm:$0x3] %v2010
        %2012 = vst.msk [vmem:[%s1979 + $0x40] sm:$0xf] %vm779, %v1951
        %v2013 = vld [vmem:[%s1979 + $0x44] sm:$0x3]
        %v2014 = vsel %vm783, %v1952, %v2013
        %2015 = vst [vmem:[%s1979 + $0x44] sm:$0x3] %v2014
        %2016 = vst.msk [vmem:[%s1979 + $0x48] sm:$0xf] %vm779, %v1953
        %v2017 = vld [vmem:[%s1979 + $0x4c] sm:$0x3]
        %v2018 = vsel %vm783, %v1954, %v2017
        %2019 = vst [vmem:[%s1979 + $0x4c] sm:$0x3] %v2018
        %2020 = vst.msk [vmem:[%s1979 + $0x50] sm:$0xf] %vm779, %v1955
        %v2021 = vld [vmem:[%s1979 + $0x54] sm:$0x3]
        %v2022 = vsel %vm783, %v1956, %v2021
        %2023 = vst [vmem:[%s1979 + $0x54] sm:$0x3] %v2022
        %v2024 = vld [vmem:[#allocation2] sm:$0xf]
        %v2025 = vld [vmem:[#allocation2 + $0x4] sm:$0x1]
        %v2026 = vld [vmem:[#allocation2 + $0x8] sm:$0xf]
        %v2027 = vld [vmem:[#allocation2 + $0xc] sm:$0x1]
        %v2028 = vld [vmem:[#allocation2 + $0x10] sm:$0xf]
        %v2029 = vld [vmem:[#allocation2 + $0x14] sm:$0x1]
        %v2030 = vld [vmem:[#allocation2 + $0x18] sm:$0xf]
        %v2031 = vld [vmem:[#allocation2 + $0x1c] sm:$0x1]
        %v2032 = vld [vmem:[#allocation2 + $0x20] sm:$0xf]
        %v2033 = vld [vmem:[#allocation2 + $0x24] sm:$0x1]
        %v2034 = vld [vmem:[#allocation2 + $0x28] sm:$0xf]
        %v2035 = vld [vmem:[#allocation2 + $0x2c] sm:$0x1]
        %v2036 = vld [vmem:[#allocation2 + $0x30] sm:$0xf]
        %v2037 = vld [vmem:[#allocation2 + $0x34] sm:$0x1]
        %v2038 = vld [vmem:[#allocation2 + $0x38] sm:$0xf]
        %v2039 = vld [vmem:[#allocation2 + $0x3c] sm:$0x1]
        %v2040 = vld [vmem:[#allocation2 + $0x40] sm:$0xf]
        %v2041 = vld [vmem:[#allocation2 + $0x44] sm:$0x1]
        %v2042 = vld [vmem:[#allocation2 + $0x48] sm:$0xf]
        %v2043 = vld [vmem:[#allocation2 + $0x4c] sm:$0x1]
        %v2044 = vld [vmem:[%s2] sm:$0xf]
        %v2045 = vld [vmem:[%s2 + $0x4] sm:$0xf]
        %v2046 = vld [vmem:[%s1181] sm:$0xf]
        %v2047 = vld [vmem:[%s1181 + $0x4] sm:$0x1]
        %v2048 = vld [vmem:[%s1181 + $0x8] sm:$0xf]
        %v2049 = vld [vmem:[%s1181 + $0xc] sm:$0x1]
        %v2050 = vld [vmem:[%s1181 + $0x10] sm:$0xf]
        %v2051 = vld [vmem:[%s1181 + $0x14] sm:$0x1]
        %v2052 = vld [vmem:[%s1181 + $0x18] sm:$0xf]
        %v2053 = vld [vmem:[%s1181 + $0x1c] sm:$0x1]
        %v2054 = vld [vmem:[%s1181 + $0x20] sm:$0xf]
        %v2055 = vld [vmem:[%s1181 + $0x24] sm:$0x1]
        %v2056 = vld [vmem:[%s1181 + $0x28] sm:$0xf]
        %v2057 = vld [vmem:[%s1181 + $0x2c] sm:$0x1]
        %v2058 = vld [vmem:[%s1181 + $0x30] sm:$0xf]
        %v2059 = vld [vmem:[%s1181 + $0x34] sm:$0x1]
        %v2060 = vld [vmem:[%s1181 + $0x38] sm:$0xf]
        %v2061 = vld [vmem:[%s1181 + $0x3c] sm:$0x1]
        %v2062 = vld [vmem:[%s1181 + $0x40] sm:$0xf]
        %v2063 = vld [vmem:[%s1181 + $0x44] sm:$0x1]
        %v2064 = vld [vmem:[%s1181 + $0x48] sm:$0xf]
        %v2065 = vld [vmem:[%s1181 + $0x4c] sm:$0x1]
        %s2066 = scalar_lea.vmem %s2, 8
        %v2067 = vld [vmem:[%s2066] sm:$0xf]
        %v2068 = vld [vmem:[%s2066 + $0x4] sm:$0xf]
        %v2071 = vunpack.c.l.b16 %v2046
        %v2072 = vunpack.c.l.b16 %v2047
        %v2073 = vpack.c.b16 %v2072, %v2071
        %v2076 = vunpack.c.l.b16 %v2067
        %v2077 = vunpack.c.l.b16 %v2068
        %v2078 = vpack.c.b16 %v2077, %v2076
        %vm2080 = vcmask 130048
        %v2082 = vsel %vm2080, %v2073, 0
        %2084 = vmatprep.subr.bf16.mxu0 0
        %2085 = vmatpush1.bf16.msra.mxu0 0
        %2086 = vmatprep.subr.bf16.mxu0 0
        %2087 = vmatpush1.bf16.msra.mxu0 0
        %2088 = vmatprep.subr.bf16.mxu0 0
        %2089 = vmatpush1.bf16.msra.mxu0 0
        %2090 = vmatprep.subr.bf16.mxu0 0
        %2091 = vmatpush1.bf16.msra.mxu0 0
        %2092 = vmatprep.subr.bf16.mxu0 0
        %2093 = vmatpush1.bf16.msra.mxu0 0
        %2094 = vmatprep.subr.bf16.mxu0 0
        %2095 = vmatpush1.bf16.msra.mxu0 0
        %2096 = vmatprep.subr.bf16.mxu0 0
        %2097 = vmatpush1.bf16.msra.mxu0 0
        %2098 = vmatprep.subr.bf16.mxu0 0
        %2099 = vmatpush1.bf16.msra.mxu0 %v2078
        %2100 = vmatprep.subr.bf16.mxu0 0
        %2101 = vmatpush2.bf16.msra.mxu0 0
        %2102 = vmatprep.subr.bf16.mxu0 0
        %2103 = vmatpush2.bf16.msra.mxu0 0
        %2104 = vmatprep.subr.bf16.mxu0 0
        %2105 = vmatpush2.bf16.msra.mxu0 0
        %2106 = vmatprep.subr.bf16.mxu0 0
        %2107 = vmatpush2.bf16.msra.mxu0 0
        %2108 = vmatprep.subr.bf16.mxu0 0
        %2109 = vmatpush2.bf16.msra.mxu0 0
        %2110 = vmatprep.subr.bf16.mxu0 0
        %2111 = vmatpush2.bf16.msra.mxu0 0
        %2112 = vmatprep.subr.bf16.mxu0 0
        %2113 = vmatpush2.bf16.msra.mxu0 0
        %2114 = vmatprep.subr.bf16.mxu0 0
        %2115 = vmatpush2.bf16.msra.mxu0 0
        %2116 = vmatprep.mubr.bf16.mxu0 0
        %2117 = vmatmul.mubr.bf16.gmra.mxu0 %v2082
        %v2118 = vpop.f32.mrf.mxu0
        %v2119 = vadd.f32 0.0, %v2118
        %v2120 = vpop.f32.mrf.mxu0
        %v2121 = vpop.f32.mrf.mxu0
        %v2122 = vadd.f32 0.0, %v2121
        %v2123 = vpop.f32.mrf.mxu0
        %2124 = vdwg.mxu0
        %v2127 = vunpack.c.l.b16 %v2048
        %v2128 = vunpack.c.l.b16 %v2049
        %v2129 = vpack.c.b16 %v2128, %v2127
        %v2131 = vsel %vm2080, %v2129, 0
        %2133 = vmatprep.subr.bf16.mxu0 0
        %2134 = vmatpush1.bf16.msra.mxu0 0
        %2135 = vmatprep.subr.bf16.mxu0 0
        %2136 = vmatpush1.bf16.msra.mxu0 0
        %2137 = vmatprep.subr.bf16.mxu0 0
        %2138 = vmatpush1.bf16.msra.mxu0 0
        %2139 = vmatprep.subr.bf16.mxu0 0
        %2140 = vmatpush1.bf16.msra.mxu0 0
        %2141 = vmatprep.subr.bf16.mxu0 0
        %2142 = vmatpush1.bf16.msra.mxu0 0
        %2143 = vmatprep.subr.bf16.mxu0 0
        %2144 = vmatpush1.bf16.msra.mxu0 0
        %2145 = vmatprep.subr.bf16.mxu0 0
        %2146 = vmatpush1.bf16.msra.mxu0 0
        %2147 = vmatprep.subr.bf16.mxu0 0
        %2148 = vmatpush1.bf16.msra.mxu0 %v2078
        %2149 = vmatprep.subr.bf16.mxu0 0
        %2150 = vmatpush2.bf16.msra.mxu0 0
        %2151 = vmatprep.subr.bf16.mxu0 0
        %2152 = vmatpush2.bf16.msra.mxu0 0
        %2153 = vmatprep.subr.bf16.mxu0 0
        %2154 = vmatpush2.bf16.msra.mxu0 0
        %2155 = vmatprep.subr.bf16.mxu0 0
        %2156 = vmatpush2.bf16.msra.mxu0 0
        %2157 = vmatprep.subr.bf16.mxu0 0
        %2158 = vmatpush2.bf16.msra.mxu0 0
        %2159 = vmatprep.subr.bf16.mxu0 0
        %2160 = vmatpush2.bf16.msra.mxu0 0
        %2161 = vmatprep.subr.bf16.mxu0 0
        %2162 = vmatpush2.bf16.msra.mxu0 0
        %2163 = vmatprep.subr.bf16.mxu0 0
        %2164 = vmatpush2.bf16.msra.mxu0 0
        %2165 = vmatprep.mubr.bf16.mxu0 0
        %2166 = vmatmul.mubr.bf16.gmra.mxu0 %v2131
        %v2167 = vpop.f32.mrf.mxu0
        %v2168 = vadd.f32 0.0, %v2167
        %v2169 = vpop.f32.mrf.mxu0
        %v2170 = vpop.f32.mrf.mxu0
        %v2171 = vadd.f32 0.0, %v2170
        %v2172 = vpop.f32.mrf.mxu0
        %2173 = vdwg.mxu0
        %v2176 = vunpack.c.l.b16 %v2050
        %v2177 = vunpack.c.l.b16 %v2051
        %v2178 = vpack.c.b16 %v2177, %v2176
        %v2180 = vsel %vm2080, %v2178, 0
        %2182 = vmatprep.subr.bf16.mxu0 0
        %2183 = vmatpush1.bf16.msra.mxu0 0
        %2184 = vmatprep.subr.bf16.mxu0 0
        %2185 = vmatpush1.bf16.msra.mxu0 0
        %2186 = vmatprep.subr.bf16.mxu0 0
        %2187 = vmatpush1.bf16.msra.mxu0 0
        %2188 = vmatprep.subr.bf16.mxu0 0
        %2189 = vmatpush1.bf16.msra.mxu0 0
        %2190 = vmatprep.subr.bf16.mxu0 0
        %2191 = vmatpush1.bf16.msra.mxu0 0
        %2192 = vmatprep.subr.bf16.mxu0 0
        %2193 = vmatpush1.bf16.msra.mxu0 0
        %2194 = vmatprep.subr.bf16.mxu0 0
        %2195 = vmatpush1.bf16.msra.mxu0 0
        %2196 = vmatprep.subr.bf16.mxu0 0
        %2197 = vmatpush1.bf16.msra.mxu0 %v2078
        %2198 = vmatprep.subr.bf16.mxu0 0
        %2199 = vmatpush2.bf16.msra.mxu0 0
        %2200 = vmatprep.subr.bf16.mxu0 0
        %2201 = vmatpush2.bf16.msra.mxu0 0
        %2202 = vmatprep.subr.bf16.mxu0 0
        %2203 = vmatpush2.bf16.msra.mxu0 0
        %2204 = vmatprep.subr.bf16.mxu0 0
        %2205 = vmatpush2.bf16.msra.mxu0 0
        %2206 = vmatprep.subr.bf16.mxu0 0
        %2207 = vmatpush2.bf16.msra.mxu0 0
        %2208 = vmatprep.subr.bf16.mxu0 0
        %2209 = vmatpush2.bf16.msra.mxu0 0
        %2210 = vmatprep.subr.bf16.mxu0 0
        %2211 = vmatpush2.bf16.msra.mxu0 0
        %2212 = vmatprep.subr.bf16.mxu0 0
        %2213 = vmatpush2.bf16.msra.mxu0 0
        %2214 = vmatprep.mubr.bf16.mxu0 0
        %2215 = vmatmul.mubr.bf16.gmra.mxu0 %v2180
        %v2216 = vpop.f32.mrf.mxu0
        %v2217 = vadd.f32 0.0, %v2216
        %v2218 = vpop.f32.mrf.mxu0
        %v2219 = vpop.f32.mrf.mxu0
        %v2220 = vadd.f32 0.0, %v2219
        %v2221 = vpop.f32.mrf.mxu0
        %2222 = vdwg.mxu0
        %v2225 = vunpack.c.l.b16 %v2052
        %v2226 = vunpack.c.l.b16 %v2053
        %v2227 = vpack.c.b16 %v2226, %v2225
        %v2229 = vsel %vm2080, %v2227, 0
        %2231 = vmatprep.subr.bf16.mxu0 0
        %2232 = vmatpush1.bf16.msra.mxu0 0
        %2233 = vmatprep.subr.bf16.mxu0 0
        %2234 = vmatpush1.bf16.msra.mxu0 0
        %2235 = vmatprep.subr.bf16.mxu0 0
        %2236 = vmatpush1.bf16.msra.mxu0 0
        %2237 = vmatprep.subr.bf16.mxu0 0
        %2238 = vmatpush1.bf16.msra.mxu0 0
        %2239 = vmatprep.subr.bf16.mxu0 0
        %2240 = vmatpush1.bf16.msra.mxu0 0
        %2241 = vmatprep.subr.bf16.mxu0 0
        %2242 = vmatpush1.bf16.msra.mxu0 0
        %2243 = vmatprep.subr.bf16.mxu0 0
        %2244 = vmatpush1.bf16.msra.mxu0 0
        %2245 = vmatprep.subr.bf16.mxu0 0
        %2246 = vmatpush1.bf16.msra.mxu0 %v2078
        %2247 = vmatprep.subr.bf16.mxu0 0
        %2248 = vmatpush2.bf16.msra.mxu0 0
        %2249 = vmatprep.subr.bf16.mxu0 0
        %2250 = vmatpush2.bf16.msra.mxu0 0
        %2251 = vmatprep.subr.bf16.mxu0 0
        %2252 = vmatpush2.bf16.msra.mxu0 0
        %2253 = vmatprep.subr.bf16.mxu0 0
        %2254 = vmatpush2.bf16.msra.mxu0 0
        %2255 = vmatprep.subr.bf16.mxu0 0
        %2256 = vmatpush2.bf16.msra.mxu0 0
        %2257 = vmatprep.subr.bf16.mxu0 0
        %2258 = vmatpush2.bf16.msra.mxu0 0
        %2259 = vmatprep.subr.bf16.mxu0 0
        %2260 = vmatpush2.bf16.msra.mxu0 0
        %2261 = vmatprep.subr.bf16.mxu0 0
        %2262 = vmatpush2.bf16.msra.mxu0 0
        %2263 = vmatprep.mubr.bf16.mxu0 0
        %2264 = vmatmul.mubr.bf16.gmra.mxu0 %v2229
        %v2265 = vpop.f32.mrf.mxu0
        %v2266 = vadd.f32 0.0, %v2265
        %v2267 = vpop.f32.mrf.mxu0
        %v2268 = vpop.f32.mrf.mxu0
        %v2269 = vadd.f32 0.0, %v2268
        %v2270 = vpop.f32.mrf.mxu0
        %2271 = vdwg.mxu0
        %v2274 = vunpack.c.l.b16 %v2054
        %v2275 = vunpack.c.l.b16 %v2055
        %v2276 = vpack.c.b16 %v2275, %v2274
        %v2278 = vsel %vm2080, %v2276, 0
        %2280 = vmatprep.subr.bf16.mxu0 0
        %2281 = vmatpush1.bf16.msra.mxu0 0
        %2282 = vmatprep.subr.bf16.mxu0 0
        %2283 = vmatpush1.bf16.msra.mxu0 0
        %2284 = vmatprep.subr.bf16.mxu0 0
        %2285 = vmatpush1.bf16.msra.mxu0 0
        %2286 = vmatprep.subr.bf16.mxu0 0
        %2287 = vmatpush1.bf16.msra.mxu0 0
        %2288 = vmatprep.subr.bf16.mxu0 0
        %2289 = vmatpush1.bf16.msra.mxu0 0
        %2290 = vmatprep.subr.bf16.mxu0 0
        %2291 = vmatpush1.bf16.msra.mxu0 0
        %2292 = vmatprep.subr.bf16.mxu0 0
        %2293 = vmatpush1.bf16.msra.mxu0 0
        %2294 = vmatprep.subr.bf16.mxu0 0
        %2295 = vmatpush1.bf16.msra.mxu0 %v2078
        %2296 = vmatprep.subr.bf16.mxu0 0
        %2297 = vmatpush2.bf16.msra.mxu0 0
        %2298 = vmatprep.subr.bf16.mxu0 0
        %2299 = vmatpush2.bf16.msra.mxu0 0
        %2300 = vmatprep.subr.bf16.mxu0 0
        %2301 = vmatpush2.bf16.msra.mxu0 0
        %2302 = vmatprep.subr.bf16.mxu0 0
        %2303 = vmatpush2.bf16.msra.mxu0 0
        %2304 = vmatprep.subr.bf16.mxu0 0
        %2305 = vmatpush2.bf16.msra.mxu0 0
        %2306 = vmatprep.subr.bf16.mxu0 0
        %2307 = vmatpush2.bf16.msra.mxu0 0
        %2308 = vmatprep.subr.bf16.mxu0 0
        %2309 = vmatpush2.bf16.msra.mxu0 0
        %2310 = vmatprep.subr.bf16.mxu0 0
        %2311 = vmatpush2.bf16.msra.mxu0 0
        %2312 = vmatprep.mubr.bf16.mxu0 0
        %2313 = vmatmul.mubr.bf16.gmra.mxu0 %v2278
        %v2314 = vpop.f32.mrf.mxu0
        %v2315 = vadd.f32 0.0, %v2314
        %v2316 = vpop.f32.mrf.mxu0
        %v2317 = vpop.f32.mrf.mxu0
        %v2318 = vadd.f32 0.0, %v2317
        %v2319 = vpop.f32.mrf.mxu0
        %2320 = vdwg.mxu0
        %v2323 = vunpack.c.l.b16 %v2056
        %v2324 = vunpack.c.l.b16 %v2057
        %v2325 = vpack.c.b16 %v2324, %v2323
        %v2327 = vsel %vm2080, %v2325, 0
        %2329 = vmatprep.subr.bf16.mxu0 0
        %2330 = vmatpush1.bf16.msra.mxu0 0
        %2331 = vmatprep.subr.bf16.mxu0 0
        %2332 = vmatpush1.bf16.msra.mxu0 0
        %2333 = vmatprep.subr.bf16.mxu0 0
        %2334 = vmatpush1.bf16.msra.mxu0 0
        %2335 = vmatprep.subr.bf16.mxu0 0
        %2336 = vmatpush1.bf16.msra.mxu0 0
        %2337 = vmatprep.subr.bf16.mxu0 0
        %2338 = vmatpush1.bf16.msra.mxu0 0
        %2339 = vmatprep.subr.bf16.mxu0 0
        %2340 = vmatpush1.bf16.msra.mxu0 0
        %2341 = vmatprep.subr.bf16.mxu0 0
        %2342 = vmatpush1.bf16.msra.mxu0 0
        %2343 = vmatprep.subr.bf16.mxu0 0
        %2344 = vmatpush1.bf16.msra.mxu0 %v2078
        %2345 = vmatprep.subr.bf16.mxu0 0
        %2346 = vmatpush2.bf16.msra.mxu0 0
        %2347 = vmatprep.subr.bf16.mxu0 0
        %2348 = vmatpush2.bf16.msra.mxu0 0
        %2349 = vmatprep.subr.bf16.mxu0 0
        %2350 = vmatpush2.bf16.msra.mxu0 0
        %2351 = vmatprep.subr.bf16.mxu0 0
        %2352 = vmatpush2.bf16.msra.mxu0 0
        %2353 = vmatprep.subr.bf16.mxu0 0
        %2354 = vmatpush2.bf16.msra.mxu0 0
        %2355 = vmatprep.subr.bf16.mxu0 0
        %2356 = vmatpush2.bf16.msra.mxu0 0
        %2357 = vmatprep.subr.bf16.mxu0 0
        %2358 = vmatpush2.bf16.msra.mxu0 0
        %2359 = vmatprep.subr.bf16.mxu0 0
        %2360 = vmatpush2.bf16.msra.mxu0 0
        %2361 = vmatprep.mubr.bf16.mxu0 0
        %2362 = vmatmul.mubr.bf16.gmra.mxu0 %v2327
        %v2363 = vpop.f32.mrf.mxu0
        %v2364 = vadd.f32 0.0, %v2363
        %v2365 = vpop.f32.mrf.mxu0
        %v2366 = vpop.f32.mrf.mxu0
        %v2367 = vadd.f32 0.0, %v2366
        %v2368 = vpop.f32.mrf.mxu0
        %2369 = vdwg.mxu0
        %v2372 = vunpack.c.l.b16 %v2058
        %v2373 = vunpack.c.l.b16 %v2059
        %v2374 = vpack.c.b16 %v2373, %v2372
        %v2376 = vsel %vm2080, %v2374, 0
        %2378 = vmatprep.subr.bf16.mxu0 0
        %2379 = vmatpush1.bf16.msra.mxu0 0
        %2380 = vmatprep.subr.bf16.mxu0 0
        %2381 = vmatpush1.bf16.msra.mxu0 0
        %2382 = vmatprep.subr.bf16.mxu0 0
        %2383 = vmatpush1.bf16.msra.mxu0 0
        %2384 = vmatprep.subr.bf16.mxu0 0
        %2385 = vmatpush1.bf16.msra.mxu0 0
        %2386 = vmatprep.subr.bf16.mxu0 0
        %2387 = vmatpush1.bf16.msra.mxu0 0
        %2388 = vmatprep.subr.bf16.mxu0 0
        %2389 = vmatpush1.bf16.msra.mxu0 0
        %2390 = vmatprep.subr.bf16.mxu0 0
        %2391 = vmatpush1.bf16.msra.mxu0 0
        %2392 = vmatprep.subr.bf16.mxu0 0
        %2393 = vmatpush1.bf16.msra.mxu0 %v2078
        %2394 = vmatprep.subr.bf16.mxu0 0
        %2395 = vmatpush2.bf16.msra.mxu0 0
        %2396 = vmatprep.subr.bf16.mxu0 0
        %2397 = vmatpush2.bf16.msra.mxu0 0
        %2398 = vmatprep.subr.bf16.mxu0 0
        %2399 = vmatpush2.bf16.msra.mxu0 0
        %2400 = vmatprep.subr.bf16.mxu0 0
        %2401 = vmatpush2.bf16.msra.mxu0 0
        %2402 = vmatprep.subr.bf16.mxu0 0
        %2403 = vmatpush2.bf16.msra.mxu0 0
        %2404 = vmatprep.subr.bf16.mxu0 0
        %2405 = vmatpush2.bf16.msra.mxu0 0
        %2406 = vmatprep.subr.bf16.mxu0 0
        %2407 = vmatpush2.bf16.msra.mxu0 0
        %2408 = vmatprep.subr.bf16.mxu0 0
        %2409 = vmatpush2.bf16.msra.mxu0 0
        %2410 = vmatprep.mubr.bf16.mxu0 0
        %2411 = vmatmul.mubr.bf16.gmra.mxu0 %v2376
        %v2412 = vpop.f32.mrf.mxu0
        %v2413 = vadd.f32 0.0, %v2412
        %v2414 = vpop.f32.mrf.mxu0
        %v2415 = vpop.f32.mrf.mxu0
        %v2416 = vadd.f32 0.0, %v2415
        %v2417 = vpop.f32.mrf.mxu0
        %2418 = vdwg.mxu0
        %v2421 = vunpack.c.l.b16 %v2060
        %v2422 = vunpack.c.l.b16 %v2061
        %v2423 = vpack.c.b16 %v2422, %v2421
        %v2425 = vsel %vm2080, %v2423, 0
        %2427 = vmatprep.subr.bf16.mxu0 0
        %2428 = vmatpush1.bf16.msra.mxu0 0
        %2429 = vmatprep.subr.bf16.mxu0 0
        %2430 = vmatpush1.bf16.msra.mxu0 0
        %2431 = vmatprep.subr.bf16.mxu0 0
        %2432 = vmatpush1.bf16.msra.mxu0 0
        %2433 = vmatprep.subr.bf16.mxu0 0
        %2434 = vmatpush1.bf16.msra.mxu0 0
        %2435 = vmatprep.subr.bf16.mxu0 0
        %2436 = vmatpush1.bf16.msra.mxu0 0
        %2437 = vmatprep.subr.bf16.mxu0 0
        %2438 = vmatpush1.bf16.msra.mxu0 0
        %2439 = vmatprep.subr.bf16.mxu0 0
        %2440 = vmatpush1.bf16.msra.mxu0 0
        %2441 = vmatprep.subr.bf16.mxu0 0
        %2442 = vmatpush1.bf16.msra.mxu0 %v2078
        %2443 = vmatprep.subr.bf16.mxu0 0
        %2444 = vmatpush2.bf16.msra.mxu0 0
        %2445 = vmatprep.subr.bf16.mxu0 0
        %2446 = vmatpush2.bf16.msra.mxu0 0
        %2447 = vmatprep.subr.bf16.mxu0 0
        %2448 = vmatpush2.bf16.msra.mxu0 0
        %2449 = vmatprep.subr.bf16.mxu0 0
        %2450 = vmatpush2.bf16.msra.mxu0 0
        %2451 = vmatprep.subr.bf16.mxu0 0
        %2452 = vmatpush2.bf16.msra.mxu0 0
        %2453 = vmatprep.subr.bf16.mxu0 0
        %2454 = vmatpush2.bf16.msra.mxu0 0
        %2455 = vmatprep.subr.bf16.mxu0 0
        %2456 = vmatpush2.bf16.msra.mxu0 0
        %2457 = vmatprep.subr.bf16.mxu0 0
        %2458 = vmatpush2.bf16.msra.mxu0 0
        %2459 = vmatprep.mubr.bf16.mxu0 0
        %2460 = vmatmul.mubr.bf16.gmra.mxu0 %v2425
        %v2461 = vpop.f32.mrf.mxu0
        %v2462 = vadd.f32 0.0, %v2461
        %v2463 = vpop.f32.mrf.mxu0
        %v2464 = vpop.f32.mrf.mxu0
        %v2465 = vadd.f32 0.0, %v2464
        %v2466 = vpop.f32.mrf.mxu0
        %2467 = vdwg.mxu0
        %v2470 = vunpack.c.l.b16 %v2062
        %v2471 = vunpack.c.l.b16 %v2063
        %v2472 = vpack.c.b16 %v2471, %v2470
        %v2474 = vsel %vm2080, %v2472, 0
        %2476 = vmatprep.subr.bf16.mxu0 0
        %2477 = vmatpush1.bf16.msra.mxu0 0
        %2478 = vmatprep.subr.bf16.mxu0 0
        %2479 = vmatpush1.bf16.msra.mxu0 0
        %2480 = vmatprep.subr.bf16.mxu0 0
        %2481 = vmatpush1.bf16.msra.mxu0 0
        %2482 = vmatprep.subr.bf16.mxu0 0
        %2483 = vmatpush1.bf16.msra.mxu0 0
        %2484 = vmatprep.subr.bf16.mxu0 0
        %2485 = vmatpush1.bf16.msra.mxu0 0
        %2486 = vmatprep.subr.bf16.mxu0 0
        %2487 = vmatpush1.bf16.msra.mxu0 0
        %2488 = vmatprep.subr.bf16.mxu0 0
        %2489 = vmatpush1.bf16.msra.mxu0 0
        %2490 = vmatprep.subr.bf16.mxu0 0
        %2491 = vmatpush1.bf16.msra.mxu0 %v2078
        %2492 = vmatprep.subr.bf16.mxu0 0
        %2493 = vmatpush2.bf16.msra.mxu0 0
        %2494 = vmatprep.subr.bf16.mxu0 0
        %2495 = vmatpush2.bf16.msra.mxu0 0
        %2496 = vmatprep.subr.bf16.mxu0 0
        %2497 = vmatpush2.bf16.msra.mxu0 0
        %2498 = vmatprep.subr.bf16.mxu0 0
        %2499 = vmatpush2.bf16.msra.mxu0 0
        %2500 = vmatprep.subr.bf16.mxu0 0
        %2501 = vmatpush2.bf16.msra.mxu0 0
        %2502 = vmatprep.subr.bf16.mxu0 0
        %2503 = vmatpush2.bf16.msra.mxu0 0
        %2504 = vmatprep.subr.bf16.mxu0 0
        %2505 = vmatpush2.bf16.msra.mxu0 0
        %2506 = vmatprep.subr.bf16.mxu0 0
        %2507 = vmatpush2.bf16.msra.mxu0 0
        %2508 = vmatprep.mubr.bf16.mxu0 0
        %2509 = vmatmul.mubr.bf16.gmra.mxu0 %v2474
        %v2510 = vpop.f32.mrf.mxu0
        %v2511 = vadd.f32 0.0, %v2510
        %v2512 = vpop.f32.mrf.mxu0
        %v2513 = vpop.f32.mrf.mxu0
        %v2514 = vadd.f32 0.0, %v2513
        %v2515 = vpop.f32.mrf.mxu0
        %2516 = vdwg.mxu0
        %v2519 = vunpack.c.l.b16 %v2064
        %v2520 = vunpack.c.l.b16 %v2065
        %v2521 = vpack.c.b16 %v2520, %v2519
        %v2523 = vsel %vm2080, %v2521, 0
        %2525 = vmatprep.subr.bf16.mxu0 0
        %2526 = vmatpush1.bf16.msra.mxu0 0
        %2527 = vmatprep.subr.bf16.mxu0 0
        %2528 = vmatpush1.bf16.msra.mxu0 0
        %2529 = vmatprep.subr.bf16.mxu0 0
        %2530 = vmatpush1.bf16.msra.mxu0 0
        %2531 = vmatprep.subr.bf16.mxu0 0
        %2532 = vmatpush1.bf16.msra.mxu0 0
        %2533 = vmatprep.subr.bf16.mxu0 0
        %2534 = vmatpush1.bf16.msra.mxu0 0
        %2535 = vmatprep.subr.bf16.mxu0 0
        %2536 = vmatpush1.bf16.msra.mxu0 0
        %2537 = vmatprep.subr.bf16.mxu0 0
        %2538 = vmatpush1.bf16.msra.mxu0 0
        %2539 = vmatprep.subr.bf16.mxu0 0
        %2540 = vmatpush1.bf16.msra.mxu0 %v2078
        %2541 = vmatprep.subr.bf16.mxu0 0
        %2542 = vmatpush2.bf16.msra.mxu0 0
        %2543 = vmatprep.subr.bf16.mxu0 0
        %2544 = vmatpush2.bf16.msra.mxu0 0
        %2545 = vmatprep.subr.bf16.mxu0 0
        %2546 = vmatpush2.bf16.msra.mxu0 0
        %2547 = vmatprep.subr.bf16.mxu0 0
        %2548 = vmatpush2.bf16.msra.mxu0 0
        %2549 = vmatprep.subr.bf16.mxu0 0
        %2550 = vmatpush2.bf16.msra.mxu0 0
        %2551 = vmatprep.subr.bf16.mxu0 0
        %2552 = vmatpush2.bf16.msra.mxu0 0
        %2553 = vmatprep.subr.bf16.mxu0 0
        %2554 = vmatpush2.bf16.msra.mxu0 0
        %2555 = vmatprep.subr.bf16.mxu0 0
        %2556 = vmatpush2.bf16.msra.mxu0 0
        %2557 = vmatprep.mubr.bf16.mxu0 0
        %2558 = vmatmul.mubr.bf16.gmra.mxu0 %v2523
        %v2559 = vpop.f32.mrf.mxu0
        %v2560 = vadd.f32 0.0, %v2559
        %v2561 = vpop.f32.mrf.mxu0
        %v2562 = vpop.f32.mrf.mxu0
        %v2563 = vadd.f32 0.0, %v2562
        %v2564 = vpop.f32.mrf.mxu0
        %2565 = vdwg.mxu0
        %v2568 = vunpack.c.l.b16 %v2024
        %v2569 = vunpack.c.l.b16 %v2025
        %v2570 = vpack.c.b16 %v2569, %v2568
        %v2573 = vunpack.c.l.b16 %v2044
        %v2574 = vunpack.c.l.b16 %v2045
        %v2575 = vpack.c.b16 %v2574, %v2573
        %v2578 = vsel %vm2080, %v2570, 0
        %2580 = vmatprep.subr.bf16.mxu0 0
        %2581 = vmatpush1.bf16.msra.mxu0 0
        %2582 = vmatprep.subr.bf16.mxu0 0
        %2583 = vmatpush1.bf16.msra.mxu0 0
        %2584 = vmatprep.subr.bf16.mxu0 0
        %2585 = vmatpush1.bf16.msra.mxu0 0
        %2586 = vmatprep.subr.bf16.mxu0 0
        %2587 = vmatpush1.bf16.msra.mxu0 0
        %2588 = vmatprep.subr.bf16.mxu0 0
        %2589 = vmatpush1.bf16.msra.mxu0 0
        %2590 = vmatprep.subr.bf16.mxu0 0
        %2591 = vmatpush1.bf16.msra.mxu0 0
        %2592 = vmatprep.subr.bf16.mxu0 0
        %2593 = vmatpush1.bf16.msra.mxu0 0
        %2594 = vmatprep.subr.bf16.mxu0 0
        %2595 = vmatpush1.bf16.msra.mxu0 %v2575
        %2596 = vmatprep.subr.bf16.mxu0 0
        %2597 = vmatpush2.bf16.msra.mxu0 0
        %2598 = vmatprep.subr.bf16.mxu0 0
        %2599 = vmatpush2.bf16.msra.mxu0 0
        %2600 = vmatprep.subr.bf16.mxu0 0
        %2601 = vmatpush2.bf16.msra.mxu0 0
        %2602 = vmatprep.subr.bf16.mxu0 0
        %2603 = vmatpush2.bf16.msra.mxu0 0
        %2604 = vmatprep.subr.bf16.mxu0 0
        %2605 = vmatpush2.bf16.msra.mxu0 0
        %2606 = vmatprep.subr.bf16.mxu0 0
        %2607 = vmatpush2.bf16.msra.mxu0 0
        %2608 = vmatprep.subr.bf16.mxu0 0
        %2609 = vmatpush2.bf16.msra.mxu0 0
        %2610 = vmatprep.subr.bf16.mxu0 0
        %2611 = vmatpush2.bf16.msra.mxu0 0
        %2612 = vmatprep.mubr.bf16.mxu0 0
        %2613 = vmatmul.mubr.bf16.gmra.mxu0 %v2578
        %v2614 = vpop.f32.mrf.mxu0
        %v2615 = vadd.f32 %v2119, %v2614
        %v2616 = vpop.f32.mrf.mxu0
        %v2617 = vpop.f32.mrf.mxu0
        %v2618 = vadd.f32 %v2122, %v2617
        %v2619 = vpop.f32.mrf.mxu0
        %2620 = vdwg.mxu0
        %v2623 = vunpack.c.l.b16 %v2026
        %v2624 = vunpack.c.l.b16 %v2027
        %v2625 = vpack.c.b16 %v2624, %v2623
        %v2627 = vsel %vm2080, %v2625, 0
        %2629 = vmatprep.subr.bf16.mxu0 0
        %2630 = vmatpush1.bf16.msra.mxu0 0
        %2631 = vmatprep.subr.bf16.mxu0 0
        %2632 = vmatpush1.bf16.msra.mxu0 0
        %2633 = vmatprep.subr.bf16.mxu0 0
        %2634 = vmatpush1.bf16.msra.mxu0 0
        %2635 = vmatprep.subr.bf16.mxu0 0
        %2636 = vmatpush1.bf16.msra.mxu0 0
        %2637 = vmatprep.subr.bf16.mxu0 0
        %2638 = vmatpush1.bf16.msra.mxu0 0
        %2639 = vmatprep.subr.bf16.mxu0 0
        %2640 = vmatpush1.bf16.msra.mxu0 0
        %2641 = vmatprep.subr.bf16.mxu0 0
        %2642 = vmatpush1.bf16.msra.mxu0 0
        %2643 = vmatprep.subr.bf16.mxu0 0
        %2644 = vmatpush1.bf16.msra.mxu0 %v2575
        %2645 = vmatprep.subr.bf16.mxu0 0
        %2646 = vmatpush2.bf16.msra.mxu0 0
        %2647 = vmatprep.subr.bf16.mxu0 0
        %2648 = vmatpush2.bf16.msra.mxu0 0
        %2649 = vmatprep.subr.bf16.mxu0 0
        %2650 = vmatpush2.bf16.msra.mxu0 0
        %2651 = vmatprep.subr.bf16.mxu0 0
        %2652 = vmatpush2.bf16.msra.mxu0 0
        %2653 = vmatprep.subr.bf16.mxu0 0
        %2654 = vmatpush2.bf16.msra.mxu0 0
        %2655 = vmatprep.subr.bf16.mxu0 0
        %2656 = vmatpush2.bf16.msra.mxu0 0
        %2657 = vmatprep.subr.bf16.mxu0 0
        %2658 = vmatpush2.bf16.msra.mxu0 0
        %2659 = vmatprep.subr.bf16.mxu0 0
        %2660 = vmatpush2.bf16.msra.mxu0 0
        %2661 = vmatprep.mubr.bf16.mxu0 0
        %2662 = vmatmul.mubr.bf16.gmra.mxu0 %v2627
        %v2663 = vpop.f32.mrf.mxu0
        %v2664 = vadd.f32 %v2168, %v2663
        %v2665 = vpop.f32.mrf.mxu0
        %v2666 = vpop.f32.mrf.mxu0
        %v2667 = vadd.f32 %v2171, %v2666
        %v2668 = vpop.f32.mrf.mxu0
        %2669 = vdwg.mxu0
        %v2672 = vunpack.c.l.b16 %v2028
        %v2673 = vunpack.c.l.b16 %v2029
        %v2674 = vpack.c.b16 %v2673, %v2672
        %v2676 = vsel %vm2080, %v2674, 0
        %2678 = vmatprep.subr.bf16.mxu0 0
        %2679 = vmatpush1.bf16.msra.mxu0 0
        %2680 = vmatprep.subr.bf16.mxu0 0
        %2681 = vmatpush1.bf16.msra.mxu0 0
        %2682 = vmatprep.subr.bf16.mxu0 0
        %2683 = vmatpush1.bf16.msra.mxu0 0
        %2684 = vmatprep.subr.bf16.mxu0 0
        %2685 = vmatpush1.bf16.msra.mxu0 0
        %2686 = vmatprep.subr.bf16.mxu0 0
        %2687 = vmatpush1.bf16.msra.mxu0 0
        %2688 = vmatprep.subr.bf16.mxu0 0
        %2689 = vmatpush1.bf16.msra.mxu0 0
        %2690 = vmatprep.subr.bf16.mxu0 0
        %2691 = vmatpush1.bf16.msra.mxu0 0
        %2692 = vmatprep.subr.bf16.mxu0 0
        %2693 = vmatpush1.bf16.msra.mxu0 %v2575
        %2694 = vmatprep.subr.bf16.mxu0 0
        %2695 = vmatpush2.bf16.msra.mxu0 0
        %2696 = vmatprep.subr.bf16.mxu0 0
        %2697 = vmatpush2.bf16.msra.mxu0 0
        %2698 = vmatprep.subr.bf16.mxu0 0
        %2699 = vmatpush2.bf16.msra.mxu0 0
        %2700 = vmatprep.subr.bf16.mxu0 0
        %2701 = vmatpush2.bf16.msra.mxu0 0
        %2702 = vmatprep.subr.bf16.mxu0 0
        %2703 = vmatpush2.bf16.msra.mxu0 0
        %2704 = vmatprep.subr.bf16.mxu0 0
        %2705 = vmatpush2.bf16.msra.mxu0 0
        %2706 = vmatprep.subr.bf16.mxu0 0
        %2707 = vmatpush2.bf16.msra.mxu0 0
        %2708 = vmatprep.subr.bf16.mxu0 0
        %2709 = vmatpush2.bf16.msra.mxu0 0
        %2710 = vmatprep.mubr.bf16.mxu0 0
        %2711 = vmatmul.mubr.bf16.gmra.mxu0 %v2676
        %v2712 = vpop.f32.mrf.mxu0
        %v2713 = vadd.f32 %v2217, %v2712
        %v2714 = vpop.f32.mrf.mxu0
        %v2715 = vpop.f32.mrf.mxu0
        %v2716 = vadd.f32 %v2220, %v2715
        %v2717 = vpop.f32.mrf.mxu0
        %2718 = vdwg.mxu0
        %v2721 = vunpack.c.l.b16 %v2030
        %v2722 = vunpack.c.l.b16 %v2031
        %v2723 = vpack.c.b16 %v2722, %v2721
        %v2725 = vsel %vm2080, %v2723, 0
        %2727 = vmatprep.subr.bf16.mxu0 0
        %2728 = vmatpush1.bf16.msra.mxu0 0
        %2729 = vmatprep.subr.bf16.mxu0 0
        %2730 = vmatpush1.bf16.msra.mxu0 0
        %2731 = vmatprep.subr.bf16.mxu0 0
        %2732 = vmatpush1.bf16.msra.mxu0 0
        %2733 = vmatprep.subr.bf16.mxu0 0
        %2734 = vmatpush1.bf16.msra.mxu0 0
        %2735 = vmatprep.subr.bf16.mxu0 0
        %2736 = vmatpush1.bf16.msra.mxu0 0
        %2737 = vmatprep.subr.bf16.mxu0 0
        %2738 = vmatpush1.bf16.msra.mxu0 0
        %2739 = vmatprep.subr.bf16.mxu0 0
        %2740 = vmatpush1.bf16.msra.mxu0 0
        %2741 = vmatprep.subr.bf16.mxu0 0
        %2742 = vmatpush1.bf16.msra.mxu0 %v2575
        %2743 = vmatprep.subr.bf16.mxu0 0
        %2744 = vmatpush2.bf16.msra.mxu0 0
        %2745 = vmatprep.subr.bf16.mxu0 0
        %2746 = vmatpush2.bf16.msra.mxu0 0
        %2747 = vmatprep.subr.bf16.mxu0 0
        %2748 = vmatpush2.bf16.msra.mxu0 0
        %2749 = vmatprep.subr.bf16.mxu0 0
        %2750 = vmatpush2.bf16.msra.mxu0 0
        %2751 = vmatprep.subr.bf16.mxu0 0
        %2752 = vmatpush2.bf16.msra.mxu0 0
        %2753 = vmatprep.subr.bf16.mxu0 0
        %2754 = vmatpush2.bf16.msra.mxu0 0
        %2755 = vmatprep.subr.bf16.mxu0 0
        %2756 = vmatpush2.bf16.msra.mxu0 0
        %2757 = vmatprep.subr.bf16.mxu0 0
        %2758 = vmatpush2.bf16.msra.mxu0 0
        %2759 = vmatprep.mubr.bf16.mxu0 0
        %2760 = vmatmul.mubr.bf16.gmra.mxu0 %v2725
        %v2761 = vpop.f32.mrf.mxu0
        %v2762 = vadd.f32 %v2266, %v2761
        %v2763 = vpop.f32.mrf.mxu0
        %v2764 = vpop.f32.mrf.mxu0
        %v2765 = vadd.f32 %v2269, %v2764
        %v2766 = vpop.f32.mrf.mxu0
        %2767 = vdwg.mxu0
        %v2770 = vunpack.c.l.b16 %v2032
        %v2771 = vunpack.c.l.b16 %v2033
        %v2772 = vpack.c.b16 %v2771, %v2770
        %v2774 = vsel %vm2080, %v2772, 0
        %2776 = vmatprep.subr.bf16.mxu0 0
        %2777 = vmatpush1.bf16.msra.mxu0 0
        %2778 = vmatprep.subr.bf16.mxu0 0
        %2779 = vmatpush1.bf16.msra.mxu0 0
        %2780 = vmatprep.subr.bf16.mxu0 0
        %2781 = vmatpush1.bf16.msra.mxu0 0
        %2782 = vmatprep.subr.bf16.mxu0 0
        %2783 = vmatpush1.bf16.msra.mxu0 0
        %2784 = vmatprep.subr.bf16.mxu0 0
        %2785 = vmatpush1.bf16.msra.mxu0 0
        %2786 = vmatprep.subr.bf16.mxu0 0
        %2787 = vmatpush1.bf16.msra.mxu0 0
        %2788 = vmatprep.subr.bf16.mxu0 0
        %2789 = vmatpush1.bf16.msra.mxu0 0
        %2790 = vmatprep.subr.bf16.mxu0 0
        %2791 = vmatpush1.bf16.msra.mxu0 %v2575
        %2792 = vmatprep.subr.bf16.mxu0 0
        %2793 = vmatpush2.bf16.msra.mxu0 0
        %2794 = vmatprep.subr.bf16.mxu0 0
        %2795 = vmatpush2.bf16.msra.mxu0 0
        %2796 = vmatprep.subr.bf16.mxu0 0
        %2797 = vmatpush2.bf16.msra.mxu0 0
        %2798 = vmatprep.subr.bf16.mxu0 0
        %2799 = vmatpush2.bf16.msra.mxu0 0
        %2800 = vmatprep.subr.bf16.mxu0 0
        %2801 = vmatpush2.bf16.msra.mxu0 0
        %2802 = vmatprep.subr.bf16.mxu0 0
        %2803 = vmatpush2.bf16.msra.mxu0 0
        %2804 = vmatprep.subr.bf16.mxu0 0
        %2805 = vmatpush2.bf16.msra.mxu0 0
        %2806 = vmatprep.subr.bf16.mxu0 0
        %2807 = vmatpush2.bf16.msra.mxu0 0
        %2808 = vmatprep.mubr.bf16.mxu0 0
        %2809 = vmatmul.mubr.bf16.gmra.mxu0 %v2774
        %v2810 = vpop.f32.mrf.mxu0
        %v2811 = vadd.f32 %v2315, %v2810
        %v2812 = vpop.f32.mrf.mxu0
        %v2813 = vpop.f32.mrf.mxu0
        %v2814 = vadd.f32 %v2318, %v2813
        %v2815 = vpop.f32.mrf.mxu0
        %2816 = vdwg.mxu0
        %v2819 = vunpack.c.l.b16 %v2034
        %v2820 = vunpack.c.l.b16 %v2035
        %v2821 = vpack.c.b16 %v2820, %v2819
        %v2823 = vsel %vm2080, %v2821, 0
        %2825 = vmatprep.subr.bf16.mxu0 0
        %2826 = vmatpush1.bf16.msra.mxu0 0
        %2827 = vmatprep.subr.bf16.mxu0 0
        %2828 = vmatpush1.bf16.msra.mxu0 0
        %2829 = vmatprep.subr.bf16.mxu0 0
        %2830 = vmatpush1.bf16.msra.mxu0 0
        %2831 = vmatprep.subr.bf16.mxu0 0
        %2832 = vmatpush1.bf16.msra.mxu0 0
        %2833 = vmatprep.subr.bf16.mxu0 0
        %2834 = vmatpush1.bf16.msra.mxu0 0
        %2835 = vmatprep.subr.bf16.mxu0 0
        %2836 = vmatpush1.bf16.msra.mxu0 0
        %2837 = vmatprep.subr.bf16.mxu0 0
        %2838 = vmatpush1.bf16.msra.mxu0 0
        %2839 = vmatprep.subr.bf16.mxu0 0
        %2840 = vmatpush1.bf16.msra.mxu0 %v2575
        %2841 = vmatprep.subr.bf16.mxu0 0
        %2842 = vmatpush2.bf16.msra.mxu0 0
        %2843 = vmatprep.subr.bf16.mxu0 0
        %2844 = vmatpush2.bf16.msra.mxu0 0
        %2845 = vmatprep.subr.bf16.mxu0 0
        %2846 = vmatpush2.bf16.msra.mxu0 0
        %2847 = vmatprep.subr.bf16.mxu0 0
        %2848 = vmatpush2.bf16.msra.mxu0 0
        %2849 = vmatprep.subr.bf16.mxu0 0
        %2850 = vmatpush2.bf16.msra.mxu0 0
        %2851 = vmatprep.subr.bf16.mxu0 0
        %2852 = vmatpush2.bf16.msra.mxu0 0
        %2853 = vmatprep.subr.bf16.mxu0 0
        %2854 = vmatpush2.bf16.msra.mxu0 0
        %2855 = vmatprep.subr.bf16.mxu0 0
        %2856 = vmatpush2.bf16.msra.mxu0 0
        %2857 = vmatprep.mubr.bf16.mxu0 0
        %2858 = vmatmul.mubr.bf16.gmra.mxu0 %v2823
        %v2859 = vpop.f32.mrf.mxu0
        %v2860 = vadd.f32 %v2364, %v2859
        %v2861 = vpop.f32.mrf.mxu0
        %v2862 = vpop.f32.mrf.mxu0
        %v2863 = vadd.f32 %v2367, %v2862
        %v2864 = vpop.f32.mrf.mxu0
        %2865 = vdwg.mxu0
        %v2868 = vunpack.c.l.b16 %v2036
        %v2869 = vunpack.c.l.b16 %v2037
        %v2870 = vpack.c.b16 %v2869, %v2868
        %v2872 = vsel %vm2080, %v2870, 0
        %2874 = vmatprep.subr.bf16.mxu0 0
        %2875 = vmatpush1.bf16.msra.mxu0 0
        %2876 = vmatprep.subr.bf16.mxu0 0
        %2877 = vmatpush1.bf16.msra.mxu0 0
        %2878 = vmatprep.subr.bf16.mxu0 0
        %2879 = vmatpush1.bf16.msra.mxu0 0
        %2880 = vmatprep.subr.bf16.mxu0 0
        %2881 = vmatpush1.bf16.msra.mxu0 0
        %2882 = vmatprep.subr.bf16.mxu0 0
        %2883 = vmatpush1.bf16.msra.mxu0 0
        %2884 = vmatprep.subr.bf16.mxu0 0
        %2885 = vmatpush1.bf16.msra.mxu0 0
        %2886 = vmatprep.subr.bf16.mxu0 0
        %2887 = vmatpush1.bf16.msra.mxu0 0
        %2888 = vmatprep.subr.bf16.mxu0 0
        %2889 = vmatpush1.bf16.msra.mxu0 %v2575
        %2890 = vmatprep.subr.bf16.mxu0 0
        %2891 = vmatpush2.bf16.msra.mxu0 0
        %2892 = vmatprep.subr.bf16.mxu0 0
        %2893 = vmatpush2.bf16.msra.mxu0 0
        %2894 = vmatprep.subr.bf16.mxu0 0
        %2895 = vmatpush2.bf16.msra.mxu0 0
        %2896 = vmatprep.subr.bf16.mxu0 0
        %2897 = vmatpush2.bf16.msra.mxu0 0
        %2898 = vmatprep.subr.bf16.mxu0 0
        %2899 = vmatpush2.bf16.msra.mxu0 0
        %2900 = vmatprep.subr.bf16.mxu0 0
        %2901 = vmatpush2.bf16.msra.mxu0 0
        %2902 = vmatprep.subr.bf16.mxu0 0
        %2903 = vmatpush2.bf16.msra.mxu0 0
        %2904 = vmatprep.subr.bf16.mxu0 0
        %2905 = vmatpush2.bf16.msra.mxu0 0
        %2906 = vmatprep.mubr.bf16.mxu0 0
        %2907 = vmatmul.mubr.bf16.gmra.mxu0 %v2872
        %v2908 = vpop.f32.mrf.mxu0
        %v2909 = vadd.f32 %v2413, %v2908
        %v2910 = vpop.f32.mrf.mxu0
        %v2911 = vpop.f32.mrf.mxu0
        %v2912 = vadd.f32 %v2416, %v2911
        %v2913 = vpop.f32.mrf.mxu0
        %2914 = vdwg.mxu0
        %v2917 = vunpack.c.l.b16 %v2038
        %v2918 = vunpack.c.l.b16 %v2039
        %v2919 = vpack.c.b16 %v2918, %v2917
        %v2921 = vsel %vm2080, %v2919, 0
        %2923 = vmatprep.subr.bf16.mxu0 0
        %2924 = vmatpush1.bf16.msra.mxu0 0
        %2925 = vmatprep.subr.bf16.mxu0 0
        %2926 = vmatpush1.bf16.msra.mxu0 0
        %2927 = vmatprep.subr.bf16.mxu0 0
        %2928 = vmatpush1.bf16.msra.mxu0 0
        %2929 = vmatprep.subr.bf16.mxu0 0
        %2930 = vmatpush1.bf16.msra.mxu0 0
        %2931 = vmatprep.subr.bf16.mxu0 0
        %2932 = vmatpush1.bf16.msra.mxu0 0
        %2933 = vmatprep.subr.bf16.mxu0 0
        %2934 = vmatpush1.bf16.msra.mxu0 0
        %2935 = vmatprep.subr.bf16.mxu0 0
        %2936 = vmatpush1.bf16.msra.mxu0 0
        %2937 = vmatprep.subr.bf16.mxu0 0
        %2938 = vmatpush1.bf16.msra.mxu0 %v2575
        %2939 = vmatprep.subr.bf16.mxu0 0
        %2940 = vmatpush2.bf16.msra.mxu0 0
        %2941 = vmatprep.subr.bf16.mxu0 0
        %2942 = vmatpush2.bf16.msra.mxu0 0
        %2943 = vmatprep.subr.bf16.mxu0 0
        %2944 = vmatpush2.bf16.msra.mxu0 0
        %2945 = vmatprep.subr.bf16.mxu0 0
        %2946 = vmatpush2.bf16.msra.mxu0 0
        %2947 = vmatprep.subr.bf16.mxu0 0
        %2948 = vmatpush2.bf16.msra.mxu0 0
        %2949 = vmatprep.subr.bf16.mxu0 0
        %2950 = vmatpush2.bf16.msra.mxu0 0
        %2951 = vmatprep.subr.bf16.mxu0 0
        %2952 = vmatpush2.bf16.msra.mxu0 0
        %2953 = vmatprep.subr.bf16.mxu0 0
        %2954 = vmatpush2.bf16.msra.mxu0 0
        %2955 = vmatprep.mubr.bf16.mxu0 0
        %2956 = vmatmul.mubr.bf16.gmra.mxu0 %v2921
        %v2957 = vpop.f32.mrf.mxu0
        %v2958 = vadd.f32 %v2462, %v2957
        %v2959 = vpop.f32.mrf.mxu0
        %v2960 = vpop.f32.mrf.mxu0
        %v2961 = vadd.f32 %v2465, %v2960
        %v2962 = vpop.f32.mrf.mxu0
        %2963 = vdwg.mxu0
        %v2966 = vunpack.c.l.b16 %v2040
        %v2967 = vunpack.c.l.b16 %v2041
        %v2968 = vpack.c.b16 %v2967, %v2966
        %v2970 = vsel %vm2080, %v2968, 0
        %2972 = vmatprep.subr.bf16.mxu0 0
        %2973 = vmatpush1.bf16.msra.mxu0 0
        %2974 = vmatprep.subr.bf16.mxu0 0
        %2975 = vmatpush1.bf16.msra.mxu0 0
        %2976 = vmatprep.subr.bf16.mxu0 0
        %2977 = vmatpush1.bf16.msra.mxu0 0
        %2978 = vmatprep.subr.bf16.mxu0 0
        %2979 = vmatpush1.bf16.msra.mxu0 0
        %2980 = vmatprep.subr.bf16.mxu0 0
        %2981 = vmatpush1.bf16.msra.mxu0 0
        %2982 = vmatprep.subr.bf16.mxu0 0
        %2983 = vmatpush1.bf16.msra.mxu0 0
        %2984 = vmatprep.subr.bf16.mxu0 0
        %2985 = vmatpush1.bf16.msra.mxu0 0
        %2986 = vmatprep.subr.bf16.mxu0 0
        %2987 = vmatpush1.bf16.msra.mxu0 %v2575
        %2988 = vmatprep.subr.bf16.mxu0 0
        %2989 = vmatpush2.bf16.msra.mxu0 0
        %2990 = vmatprep.subr.bf16.mxu0 0
        %2991 = vmatpush2.bf16.msra.mxu0 0
        %2992 = vmatprep.subr.bf16.mxu0 0
        %2993 = vmatpush2.bf16.msra.mxu0 0
        %2994 = vmatprep.subr.bf16.mxu0 0
        %2995 = vmatpush2.bf16.msra.mxu0 0
        %2996 = vmatprep.subr.bf16.mxu0 0
        %2997 = vmatpush2.bf16.msra.mxu0 0
        %2998 = vmatprep.subr.bf16.mxu0 0
        %2999 = vmatpush2.bf16.msra.mxu0 0
        %3000 = vmatprep.subr.bf16.mxu0 0
        %3001 = vmatpush2.bf16.msra.mxu0 0
        %3002 = vmatprep.subr.bf16.mxu0 0
        %3003 = vmatpush2.bf16.msra.mxu0 0
        %3004 = vmatprep.mubr.bf16.mxu0 0
        %3005 = vmatmul.mubr.bf16.gmra.mxu0 %v2970
        %v3006 = vpop.f32.mrf.mxu0
        %v3007 = vadd.f32 %v2511, %v3006
        %v3008 = vpop.f32.mrf.mxu0
        %v3009 = vpop.f32.mrf.mxu0
        %v3010 = vadd.f32 %v2514, %v3009
        %v3011 = vpop.f32.mrf.mxu0
        %3012 = vdwg.mxu0
        %v3015 = vunpack.c.l.b16 %v2042
        %v3016 = vunpack.c.l.b16 %v2043
        %v3017 = vpack.c.b16 %v3016, %v3015
        %v3019 = vsel %vm2080, %v3017, 0
        %3021 = vmatprep.subr.bf16.mxu0 0
        %3022 = vmatpush1.bf16.msra.mxu0 0
        %3023 = vmatprep.subr.bf16.mxu0 0
        %3024 = vmatpush1.bf16.msra.mxu0 0
        %3025 = vmatprep.subr.bf16.mxu0 0
        %3026 = vmatpush1.bf16.msra.mxu0 0
        %3027 = vmatprep.subr.bf16.mxu0 0
        %3028 = vmatpush1.bf16.msra.mxu0 0
        %3029 = vmatprep.subr.bf16.mxu0 0
        %3030 = vmatpush1.bf16.msra.mxu0 0
        %3031 = vmatprep.subr.bf16.mxu0 0
        %3032 = vmatpush1.bf16.msra.mxu0 0
        %3033 = vmatprep.subr.bf16.mxu0 0
        %3034 = vmatpush1.bf16.msra.mxu0 0
        %3035 = vmatprep.subr.bf16.mxu0 0
        %3036 = vmatpush1.bf16.msra.mxu0 %v2575
        %3037 = vmatprep.subr.bf16.mxu0 0
        %3038 = vmatpush2.bf16.msra.mxu0 0
        %3039 = vmatprep.subr.bf16.mxu0 0
        %3040 = vmatpush2.bf16.msra.mxu0 0
        %3041 = vmatprep.subr.bf16.mxu0 0
        %3042 = vmatpush2.bf16.msra.mxu0 0
        %3043 = vmatprep.subr.bf16.mxu0 0
        %3044 = vmatpush2.bf16.msra.mxu0 0
        %3045 = vmatprep.subr.bf16.mxu0 0
        %3046 = vmatpush2.bf16.msra.mxu0 0
        %3047 = vmatprep.subr.bf16.mxu0 0
        %3048 = vmatpush2.bf16.msra.mxu0 0
        %3049 = vmatprep.subr.bf16.mxu0 0
        %3050 = vmatpush2.bf16.msra.mxu0 0
        %3051 = vmatprep.subr.bf16.mxu0 0
        %3052 = vmatpush2.bf16.msra.mxu0 0
        %3053 = vmatprep.mubr.bf16.mxu0 0
        %3054 = vmatmul.mubr.bf16.gmra.mxu0 %v3019
        %v3055 = vpop.f32.mrf.mxu0
        %v3056 = vadd.f32 %v2560, %v3055
        %v3057 = vpop.f32.mrf.mxu0
        %v3058 = vpop.f32.mrf.mxu0
        %v3059 = vadd.f32 %v2563, %v3058
        %v3060 = vpop.f32.mrf.mxu0
        %3061 = vdwg.mxu0
        %v3062 = vld [vmem:[#allocation2 + $0x4] sm:$0x3]
        %v3063 = vld [vmem:[#allocation2 + $0xc] sm:$0x3]
        %v3064 = vld [vmem:[#allocation2 + $0x14] sm:$0x3]
        %v3065 = vld [vmem:[#allocation2 + $0x1c] sm:$0x3]
        %v3066 = vld [vmem:[#allocation2 + $0x24] sm:$0x3]
        %v3067 = vld [vmem:[#allocation2 + $0x2c] sm:$0x3]
        %v3068 = vld [vmem:[#allocation2 + $0x34] sm:$0x3]
        %v3069 = vld [vmem:[#allocation2 + $0x3c] sm:$0x3]
        %v3070 = vld [vmem:[#allocation2 + $0x44] sm:$0x3]
        %v3071 = vld [vmem:[#allocation2 + $0x4c] sm:$0x3]
        %s3072 = scalar_lea.vmem %s2, 16
        %v3073 = vld [vmem:[%s3072] sm:$0xf]
        %v3074 = vld [vmem:[%s3072 + $0x4] sm:$0xf]
        %v3076 = vunpack.c.l.b16 %v3062
        %v3077 = vpack.c.b16 %v3076, %v2568
        %v3079 = vshrl.u32 %v3077, 16
        %v3081 = vshll.u32 %v3077, 16
        %v3083 = vrot.slane %v3081, 1
        %v3084 = vor.u32 %v3079, %v3083
        %v3087 = vunpack.c.l.b16 %v3073
        %v3088 = vunpack.c.l.b16 %v3074
        %v3089 = vpack.c.b16 %v3088, %v3087
        %v3092 = vsel %vm2080, %v3084, 0
        %3094 = vmatprep.subr.bf16.mxu0 0
        %3095 = vmatpush1.bf16.msra.mxu0 0
        %3096 = vmatprep.subr.bf16.mxu0 0
        %3097 = vmatpush1.bf16.msra.mxu0 0
        %3098 = vmatprep.subr.bf16.mxu0 0
        %3099 = vmatpush1.bf16.msra.mxu0 0
        %3100 = vmatprep.subr.bf16.mxu0 0
        %3101 = vmatpush1.bf16.msra.mxu0 0
        %3102 = vmatprep.subr.bf16.mxu0 0
        %3103 = vmatpush1.bf16.msra.mxu0 0
        %3104 = vmatprep.subr.bf16.mxu0 0
        %3105 = vmatpush1.bf16.msra.mxu0 0
        %3106 = vmatprep.subr.bf16.mxu0 0
        %3107 = vmatpush1.bf16.msra.mxu0 0
        %3108 = vmatprep.subr.bf16.mxu0 0
        %3109 = vmatpush1.bf16.msra.mxu0 %v3089
        %3110 = vmatprep.subr.bf16.mxu0 0
        %3111 = vmatpush2.bf16.msra.mxu0 0
        %3112 = vmatprep.subr.bf16.mxu0 0
        %3113 = vmatpush2.bf16.msra.mxu0 0
        %3114 = vmatprep.subr.bf16.mxu0 0
        %3115 = vmatpush2.bf16.msra.mxu0 0
        %3116 = vmatprep.subr.bf16.mxu0 0
        %3117 = vmatpush2.bf16.msra.mxu0 0
        %3118 = vmatprep.subr.bf16.mxu0 0
        %3119 = vmatpush2.bf16.msra.mxu0 0
        %3120 = vmatprep.subr.bf16.mxu0 0
        %3121 = vmatpush2.bf16.msra.mxu0 0
        %3122 = vmatprep.subr.bf16.mxu0 0
        %3123 = vmatpush2.bf16.msra.mxu0 0
        %3124 = vmatprep.subr.bf16.mxu0 0
        %3125 = vmatpush2.bf16.msra.mxu0 0
        %3126 = vmatprep.mubr.bf16.mxu0 0
        %3127 = vmatmul.mubr.bf16.gmra.mxu0 %v3092
        %v3128 = vpop.f32.mrf.mxu0
        %v3129 = vadd.f32 0.0, %v3128
        %v3130 = vpop.f32.mrf.mxu0
        %v3131 = vpop.f32.mrf.mxu0
        %v3132 = vadd.f32 0.0, %v3131
        %v3133 = vpop.f32.mrf.mxu0
        %3134 = vdwg.mxu0
        %v3136 = vunpack.c.l.b16 %v3063
        %v3137 = vpack.c.b16 %v3136, %v2623
        %v3139 = vshrl.u32 %v3137, 16
        %v3141 = vshll.u32 %v3137, 16
        %v3143 = vrot.slane %v3141, 1
        %v3144 = vor.u32 %v3139, %v3143
        %v3146 = vsel %vm2080, %v3144, 0
        %3148 = vmatprep.subr.bf16.mxu0 0
        %3149 = vmatpush1.bf16.msra.mxu0 0
        %3150 = vmatprep.subr.bf16.mxu0 0
        %3151 = vmatpush1.bf16.msra.mxu0 0
        %3152 = vmatprep.subr.bf16.mxu0 0
        %3153 = vmatpush1.bf16.msra.mxu0 0
        %3154 = vmatprep.subr.bf16.mxu0 0
        %3155 = vmatpush1.bf16.msra.mxu0 0
        %3156 = vmatprep.subr.bf16.mxu0 0
        %3157 = vmatpush1.bf16.msra.mxu0 0
        %3158 = vmatprep.subr.bf16.mxu0 0
        %3159 = vmatpush1.bf16.msra.mxu0 0
        %3160 = vmatprep.subr.bf16.mxu0 0
        %3161 = vmatpush1.bf16.msra.mxu0 0
        %3162 = vmatprep.subr.bf16.mxu0 0
        %3163 = vmatpush1.bf16.msra.mxu0 %v3089
        %3164 = vmatprep.subr.bf16.mxu0 0
        %3165 = vmatpush2.bf16.msra.mxu0 0
        %3166 = vmatprep.subr.bf16.mxu0 0
        %3167 = vmatpush2.bf16.msra.mxu0 0
        %3168 = vmatprep.subr.bf16.mxu0 0
        %3169 = vmatpush2.bf16.msra.mxu0 0
        %3170 = vmatprep.subr.bf16.mxu0 0
        %3171 = vmatpush2.bf16.msra.mxu0 0
        %3172 = vmatprep.subr.bf16.mxu0 0
        %3173 = vmatpush2.bf16.msra.mxu0 0
        %3174 = vmatprep.subr.bf16.mxu0 0
        %3175 = vmatpush2.bf16.msra.mxu0 0
        %3176 = vmatprep.subr.bf16.mxu0 0
        %3177 = vmatpush2.bf16.msra.mxu0 0
        %3178 = vmatprep.subr.bf16.mxu0 0
        %3179 = vmatpush2.bf16.msra.mxu0 0
        %3180 = vmatprep.mubr.bf16.mxu0 0
        %3181 = vmatmul.mubr.bf16.gmra.mxu0 %v3146
        %v3182 = vpop.f32.mrf.mxu0
        %v3183 = vadd.f32 0.0, %v3182
        %v3184 = vpop.f32.mrf.mxu0
        %v3185 = vpop.f32.mrf.mxu0
        %v3186 = vadd.f32 0.0, %v3185
        %v3187 = vpop.f32.mrf.mxu0
        %3188 = vdwg.mxu0
        %v3190 = vunpack.c.l.b16 %v3064
        %v3191 = vpack.c.b16 %v3190, %v2672
        %v3193 = vshrl.u32 %v3191, 16
        %v3195 = vshll.u32 %v3191, 16
        %v3197 = vrot.slane %v3195, 1
        %v3198 = vor.u32 %v3193, %v3197
        %v3200 = vsel %vm2080, %v3198, 0
        %3202 = vmatprep.subr.bf16.mxu0 0
        %3203 = vmatpush1.bf16.msra.mxu0 0
        %3204 = vmatprep.subr.bf16.mxu0 0
        %3205 = vmatpush1.bf16.msra.mxu0 0
        %3206 = vmatprep.subr.bf16.mxu0 0
        %3207 = vmatpush1.bf16.msra.mxu0 0
        %3208 = vmatprep.subr.bf16.mxu0 0
        %3209 = vmatpush1.bf16.msra.mxu0 0
        %3210 = vmatprep.subr.bf16.mxu0 0
        %3211 = vmatpush1.bf16.msra.mxu0 0
        %3212 = vmatprep.subr.bf16.mxu0 0
        %3213 = vmatpush1.bf16.msra.mxu0 0
        %3214 = vmatprep.subr.bf16.mxu0 0
        %3215 = vmatpush1.bf16.msra.mxu0 0
        %3216 = vmatprep.subr.bf16.mxu0 0
        %3217 = vmatpush1.bf16.msra.mxu0 %v3089
        %3218 = vmatprep.subr.bf16.mxu0 0
        %3219 = vmatpush2.bf16.msra.mxu0 0
        %3220 = vmatprep.subr.bf16.mxu0 0
        %3221 = vmatpush2.bf16.msra.mxu0 0
        %3222 = vmatprep.subr.bf16.mxu0 0
        %3223 = vmatpush2.bf16.msra.mxu0 0
        %3224 = vmatprep.subr.bf16.mxu0 0
        %3225 = vmatpush2.bf16.msra.mxu0 0
        %3226 = vmatprep.subr.bf16.mxu0 0
        %3227 = vmatpush2.bf16.msra.mxu0 0
        %3228 = vmatprep.subr.bf16.mxu0 0
        %3229 = vmatpush2.bf16.msra.mxu0 0
        %3230 = vmatprep.subr.bf16.mxu0 0
        %3231 = vmatpush2.bf16.msra.mxu0 0
        %3232 = vmatprep.subr.bf16.mxu0 0
        %3233 = vmatpush2.bf16.msra.mxu0 0
        %3234 = vmatprep.mubr.bf16.mxu0 0
        %3235 = vmatmul.mubr.bf16.gmra.mxu0 %v3200
        %v3236 = vpop.f32.mrf.mxu0
        %v3237 = vadd.f32 0.0, %v3236
        %v3238 = vpop.f32.mrf.mxu0
        %v3239 = vpop.f32.mrf.mxu0
        %v3240 = vadd.f32 0.0, %v3239
        %v3241 = vpop.f32.mrf.mxu0
        %3242 = vdwg.mxu0
        %v3244 = vunpack.c.l.b16 %v3065
        %v3245 = vpack.c.b16 %v3244, %v2721
        %v3247 = vshrl.u32 %v3245, 16
        %v3249 = vshll.u32 %v3245, 16
        %v3251 = vrot.slane %v3249, 1
        %v3252 = vor.u32 %v3247, %v3251
        %v3254 = vsel %vm2080, %v3252, 0
        %3256 = vmatprep.subr.bf16.mxu0 0
        %3257 = vmatpush1.bf16.msra.mxu0 0
        %3258 = vmatprep.subr.bf16.mxu0 0
        %3259 = vmatpush1.bf16.msra.mxu0 0
        %3260 = vmatprep.subr.bf16.mxu0 0
        %3261 = vmatpush1.bf16.msra.mxu0 0
        %3262 = vmatprep.subr.bf16.mxu0 0
        %3263 = vmatpush1.bf16.msra.mxu0 0
        %3264 = vmatprep.subr.bf16.mxu0 0
        %3265 = vmatpush1.bf16.msra.mxu0 0
        %3266 = vmatprep.subr.bf16.mxu0 0
        %3267 = vmatpush1.bf16.msra.mxu0 0
        %3268 = vmatprep.subr.bf16.mxu0 0
        %3269 = vmatpush1.bf16.msra.mxu0 0
        %3270 = vmatprep.subr.bf16.mxu0 0
        %3271 = vmatpush1.bf16.msra.mxu0 %v3089
        %3272 = vmatprep.subr.bf16.mxu0 0
        %3273 = vmatpush2.bf16.msra.mxu0 0
        %3274 = vmatprep.subr.bf16.mxu0 0
        %3275 = vmatpush2.bf16.msra.mxu0 0
        %3276 = vmatprep.subr.bf16.mxu0 0
        %3277 = vmatpush2.bf16.msra.mxu0 0
        %3278 = vmatprep.subr.bf16.mxu0 0
        %3279 = vmatpush2.bf16.msra.mxu0 0
        %3280 = vmatprep.subr.bf16.mxu0 0
        %3281 = vmatpush2.bf16.msra.mxu0 0
        %3282 = vmatprep.subr.bf16.mxu0 0
        %3283 = vmatpush2.bf16.msra.mxu0 0
        %3284 = vmatprep.subr.bf16.mxu0 0
        %3285 = vmatpush2.bf16.msra.mxu0 0
        %3286 = vmatprep.subr.bf16.mxu0 0
        %3287 = vmatpush2.bf16.msra.mxu0 0
        %3288 = vmatprep.mubr.bf16.mxu0 0
        %3289 = vmatmul.mubr.bf16.gmra.mxu0 %v3254
        %v3290 = vpop.f32.mrf.mxu0
        %v3291 = vadd.f32 0.0, %v3290
        %v3292 = vpop.f32.mrf.mxu0
        %v3293 = vpop.f32.mrf.mxu0
        %v3294 = vadd.f32 0.0, %v3293
        %v3295 = vpop.f32.mrf.mxu0
        %3296 = vdwg.mxu0
        %v3298 = vunpack.c.l.b16 %v3066
        %v3299 = vpack.c.b16 %v3298, %v2770
        %v3301 = vshrl.u32 %v3299, 16
        %v3303 = vshll.u32 %v3299, 16
        %v3305 = vrot.slane %v3303, 1
        %v3306 = vor.u32 %v3301, %v3305
        %v3308 = vsel %vm2080, %v3306, 0
        %3310 = vmatprep.subr.bf16.mxu0 0
        %3311 = vmatpush1.bf16.msra.mxu0 0
        %3312 = vmatprep.subr.bf16.mxu0 0
        %3313 = vmatpush1.bf16.msra.mxu0 0
        %3314 = vmatprep.subr.bf16.mxu0 0
        %3315 = vmatpush1.bf16.msra.mxu0 0
        %3316 = vmatprep.subr.bf16.mxu0 0
        %3317 = vmatpush1.bf16.msra.mxu0 0
        %3318 = vmatprep.subr.bf16.mxu0 0
        %3319 = vmatpush1.bf16.msra.mxu0 0
        %3320 = vmatprep.subr.bf16.mxu0 0
        %3321 = vmatpush1.bf16.msra.mxu0 0
        %3322 = vmatprep.subr.bf16.mxu0 0
        %3323 = vmatpush1.bf16.msra.mxu0 0
        %3324 = vmatprep.subr.bf16.mxu0 0
        %3325 = vmatpush1.bf16.msra.mxu0 %v3089
        %3326 = vmatprep.subr.bf16.mxu0 0
        %3327 = vmatpush2.bf16.msra.mxu0 0
        %3328 = vmatprep.subr.bf16.mxu0 0
        %3329 = vmatpush2.bf16.msra.mxu0 0
        %3330 = vmatprep.subr.bf16.mxu0 0
        %3331 = vmatpush2.bf16.msra.mxu0 0
        %3332 = vmatprep.subr.bf16.mxu0 0
        %3333 = vmatpush2.bf16.msra.mxu0 0
        %3334 = vmatprep.subr.bf16.mxu0 0
        %3335 = vmatpush2.bf16.msra.mxu0 0
        %3336 = vmatprep.subr.bf16.mxu0 0
        %3337 = vmatpush2.bf16.msra.mxu0 0
        %3338 = vmatprep.subr.bf16.mxu0 0
        %3339 = vmatpush2.bf16.msra.mxu0 0
        %3340 = vmatprep.subr.bf16.mxu0 0
        %3341 = vmatpush2.bf16.msra.mxu0 0
        %3342 = vmatprep.mubr.bf16.mxu0 0
        %3343 = vmatmul.mubr.bf16.gmra.mxu0 %v3308
        %v3344 = vpop.f32.mrf.mxu0
        %v3345 = vadd.f32 0.0, %v3344
        %v3346 = vpop.f32.mrf.mxu0
        %v3347 = vpop.f32.mrf.mxu0
        %v3348 = vadd.f32 0.0, %v3347
        %v3349 = vpop.f32.mrf.mxu0
        %3350 = vdwg.mxu0
        %v3352 = vunpack.c.l.b16 %v3067
        %v3353 = vpack.c.b16 %v3352, %v2819
        %v3355 = vshrl.u32 %v3353, 16
        %v3357 = vshll.u32 %v3353, 16
        %v3359 = vrot.slane %v3357, 1
        %v3360 = vor.u32 %v3355, %v3359
        %v3362 = vsel %vm2080, %v3360, 0
        %3364 = vmatprep.subr.bf16.mxu0 0
        %3365 = vmatpush1.bf16.msra.mxu0 0
        %3366 = vmatprep.subr.bf16.mxu0 0
        %3367 = vmatpush1.bf16.msra.mxu0 0
        %3368 = vmatprep.subr.bf16.mxu0 0
        %3369 = vmatpush1.bf16.msra.mxu0 0
        %3370 = vmatprep.subr.bf16.mxu0 0
        %3371 = vmatpush1.bf16.msra.mxu0 0
        %3372 = vmatprep.subr.bf16.mxu0 0
        %3373 = vmatpush1.bf16.msra.mxu0 0
        %3374 = vmatprep.subr.bf16.mxu0 0
        %3375 = vmatpush1.bf16.msra.mxu0 0
        %3376 = vmatprep.subr.bf16.mxu0 0
        %3377 = vmatpush1.bf16.msra.mxu0 0
        %3378 = vmatprep.subr.bf16.mxu0 0
        %3379 = vmatpush1.bf16.msra.mxu0 %v3089
        %3380 = vmatprep.subr.bf16.mxu0 0
        %3381 = vmatpush2.bf16.msra.mxu0 0
        %3382 = vmatprep.subr.bf16.mxu0 0
        %3383 = vmatpush2.bf16.msra.mxu0 0
        %3384 = vmatprep.subr.bf16.mxu0 0
        %3385 = vmatpush2.bf16.msra.mxu0 0
        %3386 = vmatprep.subr.bf16.mxu0 0
        %3387 = vmatpush2.bf16.msra.mxu0 0
        %3388 = vmatprep.subr.bf16.mxu0 0
        %3389 = vmatpush2.bf16.msra.mxu0 0
        %3390 = vmatprep.subr.bf16.mxu0 0
        %3391 = vmatpush2.bf16.msra.mxu0 0
        %3392 = vmatprep.subr.bf16.mxu0 0
        %3393 = vmatpush2.bf16.msra.mxu0 0
        %3394 = vmatprep.subr.bf16.mxu0 0
        %3395 = vmatpush2.bf16.msra.mxu0 0
        %3396 = vmatprep.mubr.bf16.mxu0 0
        %3397 = vmatmul.mubr.bf16.gmra.mxu0 %v3362
        %v3398 = vpop.f32.mrf.mxu0
        %v3399 = vadd.f32 0.0, %v3398
        %v3400 = vpop.f32.mrf.mxu0
        %v3401 = vpop.f32.mrf.mxu0
        %v3402 = vadd.f32 0.0, %v3401
        %v3403 = vpop.f32.mrf.mxu0
        %3404 = vdwg.mxu0
        %v3406 = vunpack.c.l.b16 %v3068
        %v3407 = vpack.c.b16 %v3406, %v2868
        %v3409 = vshrl.u32 %v3407, 16
        %v3411 = vshll.u32 %v3407, 16
        %v3413 = vrot.slane %v3411, 1
        %v3414 = vor.u32 %v3409, %v3413
        %v3416 = vsel %vm2080, %v3414, 0
        %3418 = vmatprep.subr.bf16.mxu0 0
        %3419 = vmatpush1.bf16.msra.mxu0 0
        %3420 = vmatprep.subr.bf16.mxu0 0
        %3421 = vmatpush1.bf16.msra.mxu0 0
        %3422 = vmatprep.subr.bf16.mxu0 0
        %3423 = vmatpush1.bf16.msra.mxu0 0
        %3424 = vmatprep.subr.bf16.mxu0 0
        %3425 = vmatpush1.bf16.msra.mxu0 0
        %3426 = vmatprep.subr.bf16.mxu0 0
        %3427 = vmatpush1.bf16.msra.mxu0 0
        %3428 = vmatprep.subr.bf16.mxu0 0
        %3429 = vmatpush1.bf16.msra.mxu0 0
        %3430 = vmatprep.subr.bf16.mxu0 0
        %3431 = vmatpush1.bf16.msra.mxu0 0
        %3432 = vmatprep.subr.bf16.mxu0 0
        %3433 = vmatpush1.bf16.msra.mxu0 %v3089
        %3434 = vmatprep.subr.bf16.mxu0 0
        %3435 = vmatpush2.bf16.msra.mxu0 0
        %3436 = vmatprep.subr.bf16.mxu0 0
        %3437 = vmatpush2.bf16.msra.mxu0 0
        %3438 = vmatprep.subr.bf16.mxu0 0
        %3439 = vmatpush2.bf16.msra.mxu0 0
        %3440 = vmatprep.subr.bf16.mxu0 0
        %3441 = vmatpush2.bf16.msra.mxu0 0
        %3442 = vmatprep.subr.bf16.mxu0 0
        %3443 = vmatpush2.bf16.msra.mxu0 0
        %3444 = vmatprep.subr.bf16.mxu0 0
        %3445 = vmatpush2.bf16.msra.mxu0 0
        %3446 = vmatprep.subr.bf16.mxu0 0
        %3447 = vmatpush2.bf16.msra.mxu0 0
        %3448 = vmatprep.subr.bf16.mxu0 0
        %3449 = vmatpush2.bf16.msra.mxu0 0
        %3450 = vmatprep.mubr.bf16.mxu0 0
        %3451 = vmatmul.mubr.bf16.gmra.mxu0 %v3416
        %v3452 = vpop.f32.mrf.mxu0
        %v3453 = vadd.f32 0.0, %v3452
        %v3454 = vpop.f32.mrf.mxu0
        %v3455 = vpop.f32.mrf.mxu0
        %v3456 = vadd.f32 0.0, %v3455
        %v3457 = vpop.f32.mrf.mxu0
        %3458 = vdwg.mxu0
        %v3460 = vunpack.c.l.b16 %v3069
        %v3461 = vpack.c.b16 %v3460, %v2917
        %v3463 = vshrl.u32 %v3461, 16
        %v3465 = vshll.u32 %v3461, 16
        %v3467 = vrot.slane %v3465, 1
        %v3468 = vor.u32 %v3463, %v3467
        %v3470 = vsel %vm2080, %v3468, 0
        %3472 = vmatprep.subr.bf16.mxu0 0
        %3473 = vmatpush1.bf16.msra.mxu0 0
        %3474 = vmatprep.subr.bf16.mxu0 0
        %3475 = vmatpush1.bf16.msra.mxu0 0
        %3476 = vmatprep.subr.bf16.mxu0 0
        %3477 = vmatpush1.bf16.msra.mxu0 0
        %3478 = vmatprep.subr.bf16.mxu0 0
        %3479 = vmatpush1.bf16.msra.mxu0 0
        %3480 = vmatprep.subr.bf16.mxu0 0
        %3481 = vmatpush1.bf16.msra.mxu0 0
        %3482 = vmatprep.subr.bf16.mxu0 0
        %3483 = vmatpush1.bf16.msra.mxu0 0
        %3484 = vmatprep.subr.bf16.mxu0 0
        %3485 = vmatpush1.bf16.msra.mxu0 0
        %3486 = vmatprep.subr.bf16.mxu0 0
        %3487 = vmatpush1.bf16.msra.mxu0 %v3089
        %3488 = vmatprep.subr.bf16.mxu0 0
        %3489 = vmatpush2.bf16.msra.mxu0 0
        %3490 = vmatprep.subr.bf16.mxu0 0
        %3491 = vmatpush2.bf16.msra.mxu0 0
        %3492 = vmatprep.subr.bf16.mxu0 0
        %3493 = vmatpush2.bf16.msra.mxu0 0
        %3494 = vmatprep.subr.bf16.mxu0 0
        %3495 = vmatpush2.bf16.msra.mxu0 0
        %3496 = vmatprep.subr.bf16.mxu0 0
        %3497 = vmatpush2.bf16.msra.mxu0 0
        %3498 = vmatprep.subr.bf16.mxu0 0
        %3499 = vmatpush2.bf16.msra.mxu0 0
        %3500 = vmatprep.subr.bf16.mxu0 0
        %3501 = vmatpush2.bf16.msra.mxu0 0
        %3502 = vmatprep.subr.bf16.mxu0 0
        %3503 = vmatpush2.bf16.msra.mxu0 0
        %3504 = vmatprep.mubr.bf16.mxu0 0
        %3505 = vmatmul.mubr.bf16.gmra.mxu0 %v3470
        %v3506 = vpop.f32.mrf.mxu0
        %v3507 = vadd.f32 0.0, %v3506
        %v3508 = vpop.f32.mrf.mxu0
        %v3509 = vpop.f32.mrf.mxu0
        %v3510 = vadd.f32 0.0, %v3509
        %v3511 = vpop.f32.mrf.mxu0
        %3512 = vdwg.mxu0
        %v3514 = vunpack.c.l.b16 %v3070
        %v3515 = vpack.c.b16 %v3514, %v2966
        %v3517 = vshrl.u32 %v3515, 16
        %v3519 = vshll.u32 %v3515, 16
        %v3521 = vrot.slane %v3519, 1
        %v3522 = vor.u32 %v3517, %v3521
        %v3524 = vsel %vm2080, %v3522, 0
        %3526 = vmatprep.subr.bf16.mxu0 0
        %3527 = vmatpush1.bf16.msra.mxu0 0
        %3528 = vmatprep.subr.bf16.mxu0 0
        %3529 = vmatpush1.bf16.msra.mxu0 0
        %3530 = vmatprep.subr.bf16.mxu0 0
        %3531 = vmatpush1.bf16.msra.mxu0 0
        %3532 = vmatprep.subr.bf16.mxu0 0
        %3533 = vmatpush1.bf16.msra.mxu0 0
        %3534 = vmatprep.subr.bf16.mxu0 0
        %3535 = vmatpush1.bf16.msra.mxu0 0
        %3536 = vmatprep.subr.bf16.mxu0 0
        %3537 = vmatpush1.bf16.msra.mxu0 0
        %3538 = vmatprep.subr.bf16.mxu0 0
        %3539 = vmatpush1.bf16.msra.mxu0 0
        %3540 = vmatprep.subr.bf16.mxu0 0
        %3541 = vmatpush1.bf16.msra.mxu0 %v3089
        %3542 = vmatprep.subr.bf16.mxu0 0
        %3543 = vmatpush2.bf16.msra.mxu0 0
        %3544 = vmatprep.subr.bf16.mxu0 0
        %3545 = vmatpush2.bf16.msra.mxu0 0
        %3546 = vmatprep.subr.bf16.mxu0 0
        %3547 = vmatpush2.bf16.msra.mxu0 0
        %3548 = vmatprep.subr.bf16.mxu0 0
        %3549 = vmatpush2.bf16.msra.mxu0 0
        %3550 = vmatprep.subr.bf16.mxu0 0
        %3551 = vmatpush2.bf16.msra.mxu0 0
        %3552 = vmatprep.subr.bf16.mxu0 0
        %3553 = vmatpush2.bf16.msra.mxu0 0
        %3554 = vmatprep.subr.bf16.mxu0 0
        %3555 = vmatpush2.bf16.msra.mxu0 0
        %3556 = vmatprep.subr.bf16.mxu0 0
        %3557 = vmatpush2.bf16.msra.mxu0 0
        %3558 = vmatprep.mubr.bf16.mxu0 0
        %3559 = vmatmul.mubr.bf16.gmra.mxu0 %v3524
        %v3560 = vpop.f32.mrf.mxu0
        %v3561 = vadd.f32 0.0, %v3560
        %v3562 = vpop.f32.mrf.mxu0
        %v3563 = vpop.f32.mrf.mxu0
        %v3564 = vadd.f32 0.0, %v3563
        %v3565 = vpop.f32.mrf.mxu0
        %3566 = vdwg.mxu0
        %v3568 = vunpack.c.l.b16 %v3071
        %v3569 = vpack.c.b16 %v3568, %v3015
        %v3571 = vshrl.u32 %v3569, 16
        %v3573 = vshll.u32 %v3569, 16
        %v3575 = vrot.slane %v3573, 1
        %v3576 = vor.u32 %v3571, %v3575
        %v3578 = vsel %vm2080, %v3576, 0
        %3580 = vmatprep.subr.bf16.mxu0 0
        %3581 = vmatpush1.bf16.msra.mxu0 0
        %3582 = vmatprep.subr.bf16.mxu0 0
        %3583 = vmatpush1.bf16.msra.mxu0 0
        %3584 = vmatprep.subr.bf16.mxu0 0
        %3585 = vmatpush1.bf16.msra.mxu0 0
        %3586 = vmatprep.subr.bf16.mxu0 0
        %3587 = vmatpush1.bf16.msra.mxu0 0
        %3588 = vmatprep.subr.bf16.mxu0 0
        %3589 = vmatpush1.bf16.msra.mxu0 0
        %3590 = vmatprep.subr.bf16.mxu0 0
        %3591 = vmatpush1.bf16.msra.mxu0 0
        %3592 = vmatprep.subr.bf16.mxu0 0
        %3593 = vmatpush1.bf16.msra.mxu0 0
        %3594 = vmatprep.subr.bf16.mxu0 0
        %3595 = vmatpush1.bf16.msra.mxu0 %v3089
        %3596 = vmatprep.subr.bf16.mxu0 0
        %3597 = vmatpush2.bf16.msra.mxu0 0
        %3598 = vmatprep.subr.bf16.mxu0 0
        %3599 = vmatpush2.bf16.msra.mxu0 0
        %3600 = vmatprep.subr.bf16.mxu0 0
        %3601 = vmatpush2.bf16.msra.mxu0 0
        %3602 = vmatprep.subr.bf16.mxu0 0
        %3603 = vmatpush2.bf16.msra.mxu0 0
        %3604 = vmatprep.subr.bf16.mxu0 0
        %3605 = vmatpush2.bf16.msra.mxu0 0
        %3606 = vmatprep.subr.bf16.mxu0 0
        %3607 = vmatpush2.bf16.msra.mxu0 0
        %3608 = vmatprep.subr.bf16.mxu0 0
        %3609 = vmatpush2.bf16.msra.mxu0 0
        %3610 = vmatprep.subr.bf16.mxu0 0
        %3611 = vmatpush2.bf16.msra.mxu0 0
        %3612 = vmatprep.mubr.bf16.mxu0 0
        %3613 = vmatmul.mubr.bf16.gmra.mxu0 %v3578
        %v3614 = vpop.f32.mrf.mxu0
        %v3615 = vadd.f32 0.0, %v3614
        %v3616 = vpop.f32.mrf.mxu0
        %v3617 = vpop.f32.mrf.mxu0
        %v3618 = vadd.f32 0.0, %v3617
        %v3619 = vpop.f32.mrf.mxu0
        %3620 = vdwg.mxu0
        %v3621 = vadd.f32 %v2615, %v3129
        %v3622 = vadd.f32 %v2618, %v3132
        %v3623 = vadd.f32 %v2664, %v3183
        %v3624 = vadd.f32 %v2667, %v3186
        %v3625 = vadd.f32 %v2713, %v3237
        %v3626 = vadd.f32 %v2716, %v3240
        %v3627 = vadd.f32 %v2762, %v3291
        %v3628 = vadd.f32 %v2765, %v3294
        %v3629 = vadd.f32 %v2811, %v3345
        %v3630 = vadd.f32 %v2814, %v3348
        %v3631 = vadd.f32 %v2860, %v3399
        %v3632 = vadd.f32 %v2863, %v3402
        %v3633 = vadd.f32 %v2909, %v3453
        %v3634 = vadd.f32 %v2912, %v3456
        %v3635 = vadd.f32 %v2958, %v3507
        %v3636 = vadd.f32 %v2961, %v3510
        %v3637 = vadd.f32 %v3007, %v3561
        %v3638 = vadd.f32 %v3010, %v3564
        %v3639 = vadd.f32 %v3056, %v3615
        %v3640 = vadd.f32 %v3059, %v3618
        %v3641 = vld [vmem:[%s1580] sm:$0xf]
        %v3642 = vld [vmem:[%s1580 + $0x4] sm:$0x1]
        %v3643 = vld [vmem:[%s1580 + $0x8] sm:$0xf]
        %v3644 = vld [vmem:[%s1580 + $0xc] sm:$0x1]
        %v3645 = vld [vmem:[%s1580 + $0x10] sm:$0xf]
        %v3646 = vld [vmem:[%s1580 + $0x14] sm:$0x1]
        %v3647 = vld [vmem:[%s1580 + $0x18] sm:$0xf]
        %v3648 = vld [vmem:[%s1580 + $0x1c] sm:$0x1]
        %v3649 = vld [vmem:[%s1580 + $0x20] sm:$0xf]
        %v3650 = vld [vmem:[%s1580 + $0x24] sm:$0x1]
        %v3651 = vld [vmem:[%s1580 + $0x28] sm:$0xf]
        %v3652 = vld [vmem:[%s1580 + $0x2c] sm:$0x1]
        %v3653 = vld [vmem:[%s1580 + $0x30] sm:$0xf]
        %v3654 = vld [vmem:[%s1580 + $0x34] sm:$0x1]
        %v3655 = vld [vmem:[%s1580 + $0x38] sm:$0xf]
        %v3656 = vld [vmem:[%s1580 + $0x3c] sm:$0x1]
        %v3657 = vld [vmem:[%s1580 + $0x40] sm:$0xf]
        %v3658 = vld [vmem:[%s1580 + $0x44] sm:$0x1]
        %v3659 = vld [vmem:[%s1580 + $0x48] sm:$0xf]
        %v3660 = vld [vmem:[%s1580 + $0x4c] sm:$0x1]
        %s3661 = scalar_lea.vmem %s2, 24
        %v3662 = vld [vmem:[%s3661] sm:$0xf]
        %v3663 = vld [vmem:[%s3661 + $0x4] sm:$0xf]
        %v3666 = vunpack.c.l.b16 %v3641
        %v3667 = vunpack.c.l.b16 %v3642
        %v3668 = vpack.c.b16 %v3667, %v3666
        %v3671 = vunpack.c.l.b16 %v3662
        %v3672 = vunpack.c.l.b16 %v3663
        %v3673 = vpack.c.b16 %v3672, %v3671
        %v3676 = vsel %vm2080, %v3668, 0
        %3678 = vmatprep.subr.bf16.mxu0 0
        %3679 = vmatpush1.bf16.msra.mxu0 0
        %3680 = vmatprep.subr.bf16.mxu0 0
        %3681 = vmatpush1.bf16.msra.mxu0 0
        %3682 = vmatprep.subr.bf16.mxu0 0
        %3683 = vmatpush1.bf16.msra.mxu0 0
        %3684 = vmatprep.subr.bf16.mxu0 0
        %3685 = vmatpush1.bf16.msra.mxu0 0
        %3686 = vmatprep.subr.bf16.mxu0 0
        %3687 = vmatpush1.bf16.msra.mxu0 0
        %3688 = vmatprep.subr.bf16.mxu0 0
        %3689 = vmatpush1.bf16.msra.mxu0 0
        %3690 = vmatprep.subr.bf16.mxu0 0
        %3691 = vmatpush1.bf16.msra.mxu0 0
        %3692 = vmatprep.subr.bf16.mxu0 0
        %3693 = vmatpush1.bf16.msra.mxu0 %v3673
        %3694 = vmatprep.subr.bf16.mxu0 0
        %3695 = vmatpush2.bf16.msra.mxu0 0
        %3696 = vmatprep.subr.bf16.mxu0 0
        %3697 = vmatpush2.bf16.msra.mxu0 0
        %3698 = vmatprep.subr.bf16.mxu0 0
        %3699 = vmatpush2.bf16.msra.mxu0 0
        %3700 = vmatprep.subr.bf16.mxu0 0
        %3701 = vmatpush2.bf16.msra.mxu0 0
        %3702 = vmatprep.subr.bf16.mxu0 0
        %3703 = vmatpush2.bf16.msra.mxu0 0
        %3704 = vmatprep.subr.bf16.mxu0 0
        %3705 = vmatpush2.bf16.msra.mxu0 0
        %3706 = vmatprep.subr.bf16.mxu0 0
        %3707 = vmatpush2.bf16.msra.mxu0 0
        %3708 = vmatprep.subr.bf16.mxu0 0
        %3709 = vmatpush2.bf16.msra.mxu0 0
        %3710 = vmatprep.mubr.bf16.mxu0 0
        %3711 = vmatmul.mubr.bf16.gmra.mxu0 %v3676
        %v3712 = vpop.f32.mrf.mxu0
        %v3713 = vadd.f32 0.0, %v3712
        %v3714 = vpop.f32.mrf.mxu0
        %v3715 = vpop.f32.mrf.mxu0
        %v3716 = vadd.f32 0.0, %v3715
        %v3717 = vpop.f32.mrf.mxu0
        %3718 = vdwg.mxu0
        %v3721 = vunpack.c.l.b16 %v3643
        %v3722 = vunpack.c.l.b16 %v3644
        %v3723 = vpack.c.b16 %v3722, %v3721
        %v3725 = vsel %vm2080, %v3723, 0
        %3727 = vmatprep.subr.bf16.mxu0 0
        %3728 = vmatpush1.bf16.msra.mxu0 0
        %3729 = vmatprep.subr.bf16.mxu0 0
        %3730 = vmatpush1.bf16.msra.mxu0 0
        %3731 = vmatprep.subr.bf16.mxu0 0
        %3732 = vmatpush1.bf16.msra.mxu0 0
        %3733 = vmatprep.subr.bf16.mxu0 0
        %3734 = vmatpush1.bf16.msra.mxu0 0
        %3735 = vmatprep.subr.bf16.mxu0 0
        %3736 = vmatpush1.bf16.msra.mxu0 0
        %3737 = vmatprep.subr.bf16.mxu0 0
        %3738 = vmatpush1.bf16.msra.mxu0 0
        %3739 = vmatprep.subr.bf16.mxu0 0
        %3740 = vmatpush1.bf16.msra.mxu0 0
        %3741 = vmatprep.subr.bf16.mxu0 0
        %3742 = vmatpush1.bf16.msra.mxu0 %v3673
        %3743 = vmatprep.subr.bf16.mxu0 0
        %3744 = vmatpush2.bf16.msra.mxu0 0
        %3745 = vmatprep.subr.bf16.mxu0 0
        %3746 = vmatpush2.bf16.msra.mxu0 0
        %3747 = vmatprep.subr.bf16.mxu0 0
        %3748 = vmatpush2.bf16.msra.mxu0 0
        %3749 = vmatprep.subr.bf16.mxu0 0
        %3750 = vmatpush2.bf16.msra.mxu0 0
        %3751 = vmatprep.subr.bf16.mxu0 0
        %3752 = vmatpush2.bf16.msra.mxu0 0
        %3753 = vmatprep.subr.bf16.mxu0 0
        %3754 = vmatpush2.bf16.msra.mxu0 0
        %3755 = vmatprep.subr.bf16.mxu0 0
        %3756 = vmatpush2.bf16.msra.mxu0 0
        %3757 = vmatprep.subr.bf16.mxu0 0
        %3758 = vmatpush2.bf16.msra.mxu0 0
        %3759 = vmatprep.mubr.bf16.mxu0 0
        %3760 = vmatmul.mubr.bf16.gmra.mxu0 %v3725
        %v3761 = vpop.f32.mrf.mxu0
        %v3762 = vadd.f32 0.0, %v3761
        %v3763 = vpop.f32.mrf.mxu0
        %v3764 = vpop.f32.mrf.mxu0
        %v3765 = vadd.f32 0.0, %v3764
        %v3766 = vpop.f32.mrf.mxu0
        %3767 = vdwg.mxu0
        %v3770 = vunpack.c.l.b16 %v3645
        %v3771 = vunpack.c.l.b16 %v3646
        %v3772 = vpack.c.b16 %v3771, %v3770
        %v3774 = vsel %vm2080, %v3772, 0
        %3776 = vmatprep.subr.bf16.mxu0 0
        %3777 = vmatpush1.bf16.msra.mxu0 0
        %3778 = vmatprep.subr.bf16.mxu0 0
        %3779 = vmatpush1.bf16.msra.mxu0 0
        %3780 = vmatprep.subr.bf16.mxu0 0
        %3781 = vmatpush1.bf16.msra.mxu0 0
        %3782 = vmatprep.subr.bf16.mxu0 0
        %3783 = vmatpush1.bf16.msra.mxu0 0
        %3784 = vmatprep.subr.bf16.mxu0 0
        %3785 = vmatpush1.bf16.msra.mxu0 0
        %3786 = vmatprep.subr.bf16.mxu0 0
        %3787 = vmatpush1.bf16.msra.mxu0 0
        %3788 = vmatprep.subr.bf16.mxu0 0
        %3789 = vmatpush1.bf16.msra.mxu0 0
        %3790 = vmatprep.subr.bf16.mxu0 0
        %3791 = vmatpush1.bf16.msra.mxu0 %v3673
        %3792 = vmatprep.subr.bf16.mxu0 0
        %3793 = vmatpush2.bf16.msra.mxu0 0
        %3794 = vmatprep.subr.bf16.mxu0 0
        %3795 = vmatpush2.bf16.msra.mxu0 0
        %3796 = vmatprep.subr.bf16.mxu0 0
        %3797 = vmatpush2.bf16.msra.mxu0 0
        %3798 = vmatprep.subr.bf16.mxu0 0
        %3799 = vmatpush2.bf16.msra.mxu0 0
        %3800 = vmatprep.subr.bf16.mxu0 0
        %3801 = vmatpush2.bf16.msra.mxu0 0
        %3802 = vmatprep.subr.bf16.mxu0 0
        %3803 = vmatpush2.bf16.msra.mxu0 0
        %3804 = vmatprep.subr.bf16.mxu0 0
        %3805 = vmatpush2.bf16.msra.mxu0 0
        %3806 = vmatprep.subr.bf16.mxu0 0
        %3807 = vmatpush2.bf16.msra.mxu0 0
        %3808 = vmatprep.mubr.bf16.mxu0 0
        %3809 = vmatmul.mubr.bf16.gmra.mxu0 %v3774
        %v3810 = vpop.f32.mrf.mxu0
        %v3811 = vadd.f32 0.0, %v3810
        %v3812 = vpop.f32.mrf.mxu0
        %v3813 = vpop.f32.mrf.mxu0
        %v3814 = vadd.f32 0.0, %v3813
        %v3815 = vpop.f32.mrf.mxu0
        %3816 = vdwg.mxu0
        %v3819 = vunpack.c.l.b16 %v3647
        %v3820 = vunpack.c.l.b16 %v3648
        %v3821 = vpack.c.b16 %v3820, %v3819
        %v3823 = vsel %vm2080, %v3821, 0
        %3825 = vmatprep.subr.bf16.mxu0 0
        %3826 = vmatpush1.bf16.msra.mxu0 0
        %3827 = vmatprep.subr.bf16.mxu0 0
        %3828 = vmatpush1.bf16.msra.mxu0 0
        %3829 = vmatprep.subr.bf16.mxu0 0
        %3830 = vmatpush1.bf16.msra.mxu0 0
        %3831 = vmatprep.subr.bf16.mxu0 0
        %3832 = vmatpush1.bf16.msra.mxu0 0
        %3833 = vmatprep.subr.bf16.mxu0 0
        %3834 = vmatpush1.bf16.msra.mxu0 0
        %3835 = vmatprep.subr.bf16.mxu0 0
        %3836 = vmatpush1.bf16.msra.mxu0 0
        %3837 = vmatprep.subr.bf16.mxu0 0
        %3838 = vmatpush1.bf16.msra.mxu0 0
        %3839 = vmatprep.subr.bf16.mxu0 0
        %3840 = vmatpush1.bf16.msra.mxu0 %v3673
        %3841 = vmatprep.subr.bf16.mxu0 0
        %3842 = vmatpush2.bf16.msra.mxu0 0
        %3843 = vmatprep.subr.bf16.mxu0 0
        %3844 = vmatpush2.bf16.msra.mxu0 0
        %3845 = vmatprep.subr.bf16.mxu0 0
        %3846 = vmatpush2.bf16.msra.mxu0 0
        %3847 = vmatprep.subr.bf16.mxu0 0
        %3848 = vmatpush2.bf16.msra.mxu0 0
        %3849 = vmatprep.subr.bf16.mxu0 0
        %3850 = vmatpush2.bf16.msra.mxu0 0
        %3851 = vmatprep.subr.bf16.mxu0 0
        %3852 = vmatpush2.bf16.msra.mxu0 0
        %3853 = vmatprep.subr.bf16.mxu0 0
        %3854 = vmatpush2.bf16.msra.mxu0 0
        %3855 = vmatprep.subr.bf16.mxu0 0
        %3856 = vmatpush2.bf16.msra.mxu0 0
        %3857 = vmatprep.mubr.bf16.mxu0 0
        %3858 = vmatmul.mubr.bf16.gmra.mxu0 %v3823
        %v3859 = vpop.f32.mrf.mxu0
        %v3860 = vadd.f32 0.0, %v3859
        %v3861 = vpop.f32.mrf.mxu0
        %v3862 = vpop.f32.mrf.mxu0
        %v3863 = vadd.f32 0.0, %v3862
        %v3864 = vpop.f32.mrf.mxu0
        %3865 = vdwg.mxu0
        %v3868 = vunpack.c.l.b16 %v3649
        %v3869 = vunpack.c.l.b16 %v3650
        %v3870 = vpack.c.b16 %v3869, %v3868
        %v3872 = vsel %vm2080, %v3870, 0
        %3874 = vmatprep.subr.bf16.mxu0 0
        %3875 = vmatpush1.bf16.msra.mxu0 0
        %3876 = vmatprep.subr.bf16.mxu0 0
        %3877 = vmatpush1.bf16.msra.mxu0 0
        %3878 = vmatprep.subr.bf16.mxu0 0
        %3879 = vmatpush1.bf16.msra.mxu0 0
        %3880 = vmatprep.subr.bf16.mxu0 0
        %3881 = vmatpush1.bf16.msra.mxu0 0
        %3882 = vmatprep.subr.bf16.mxu0 0
        %3883 = vmatpush1.bf16.msra.mxu0 0
        %3884 = vmatprep.subr.bf16.mxu0 0
        %3885 = vmatpush1.bf16.msra.mxu0 0
        %3886 = vmatprep.subr.bf16.mxu0 0
        %3887 = vmatpush1.bf16.msra.mxu0 0
        %3888 = vmatprep.subr.bf16.mxu0 0
        %3889 = vmatpush1.bf16.msra.mxu0 %v3673
        %3890 = vmatprep.subr.bf16.mxu0 0
        %3891 = vmatpush2.bf16.msra.mxu0 0
        %3892 = vmatprep.subr.bf16.mxu0 0
        %3893 = vmatpush2.bf16.msra.mxu0 0
        %3894 = vmatprep.subr.bf16.mxu0 0
        %3895 = vmatpush2.bf16.msra.mxu0 0
        %3896 = vmatprep.subr.bf16.mxu0 0
        %3897 = vmatpush2.bf16.msra.mxu0 0
        %3898 = vmatprep.subr.bf16.mxu0 0
        %3899 = vmatpush2.bf16.msra.mxu0 0
        %3900 = vmatprep.subr.bf16.mxu0 0
        %3901 = vmatpush2.bf16.msra.mxu0 0
        %3902 = vmatprep.subr.bf16.mxu0 0
        %3903 = vmatpush2.bf16.msra.mxu0 0
        %3904 = vmatprep.subr.bf16.mxu0 0
        %3905 = vmatpush2.bf16.msra.mxu0 0
        %3906 = vmatprep.mubr.bf16.mxu0 0
        %3907 = vmatmul.mubr.bf16.gmra.mxu0 %v3872
        %v3908 = vpop.f32.mrf.mxu0
        %v3909 = vadd.f32 0.0, %v3908
        %v3910 = vpop.f32.mrf.mxu0
        %v3911 = vpop.f32.mrf.mxu0
        %v3912 = vadd.f32 0.0, %v3911
        %v3913 = vpop.f32.mrf.mxu0
        %3914 = vdwg.mxu0
        %v3917 = vunpack.c.l.b16 %v3651
        %v3918 = vunpack.c.l.b16 %v3652
        %v3919 = vpack.c.b16 %v3918, %v3917
        %v3921 = vsel %vm2080, %v3919, 0
        %3923 = vmatprep.subr.bf16.mxu0 0
        %3924 = vmatpush1.bf16.msra.mxu0 0
        %3925 = vmatprep.subr.bf16.mxu0 0
        %3926 = vmatpush1.bf16.msra.mxu0 0
        %3927 = vmatprep.subr.bf16.mxu0 0
        %3928 = vmatpush1.bf16.msra.mxu0 0
        %3929 = vmatprep.subr.bf16.mxu0 0
        %3930 = vmatpush1.bf16.msra.mxu0 0
        %3931 = vmatprep.subr.bf16.mxu0 0
        %3932 = vmatpush1.bf16.msra.mxu0 0
        %3933 = vmatprep.subr.bf16.mxu0 0
        %3934 = vmatpush1.bf16.msra.mxu0 0
        %3935 = vmatprep.subr.bf16.mxu0 0
        %3936 = vmatpush1.bf16.msra.mxu0 0
        %3937 = vmatprep.subr.bf16.mxu0 0
        %3938 = vmatpush1.bf16.msra.mxu0 %v3673
        %3939 = vmatprep.subr.bf16.mxu0 0
        %3940 = vmatpush2.bf16.msra.mxu0 0
        %3941 = vmatprep.subr.bf16.mxu0 0
        %3942 = vmatpush2.bf16.msra.mxu0 0
        %3943 = vmatprep.subr.bf16.mxu0 0
        %3944 = vmatpush2.bf16.msra.mxu0 0
        %3945 = vmatprep.subr.bf16.mxu0 0
        %3946 = vmatpush2.bf16.msra.mxu0 0
        %3947 = vmatprep.subr.bf16.mxu0 0
        %3948 = vmatpush2.bf16.msra.mxu0 0
        %3949 = vmatprep.subr.bf16.mxu0 0
        %3950 = vmatpush2.bf16.msra.mxu0 0
        %3951 = vmatprep.subr.bf16.mxu0 0
        %3952 = vmatpush2.bf16.msra.mxu0 0
        %3953 = vmatprep.subr.bf16.mxu0 0
        %3954 = vmatpush2.bf16.msra.mxu0 0
        %3955 = vmatprep.mubr.bf16.mxu0 0
        %3956 = vmatmul.mubr.bf16.gmra.mxu0 %v3921
        %v3957 = vpop.f32.mrf.mxu0
        %v3958 = vadd.f32 0.0, %v3957
        %v3959 = vpop.f32.mrf.mxu0
        %v3960 = vpop.f32.mrf.mxu0
        %v3961 = vadd.f32 0.0, %v3960
        %v3962 = vpop.f32.mrf.mxu0
        %3963 = vdwg.mxu0
        %v3966 = vunpack.c.l.b16 %v3653
        %v3967 = vunpack.c.l.b16 %v3654
        %v3968 = vpack.c.b16 %v3967, %v3966
        %v3970 = vsel %vm2080, %v3968, 0
        %3972 = vmatprep.subr.bf16.mxu0 0
        %3973 = vmatpush1.bf16.msra.mxu0 0
        %3974 = vmatprep.subr.bf16.mxu0 0
        %3975 = vmatpush1.bf16.msra.mxu0 0
        %3976 = vmatprep.subr.bf16.mxu0 0
        %3977 = vmatpush1.bf16.msra.mxu0 0
        %3978 = vmatprep.subr.bf16.mxu0 0
        %3979 = vmatpush1.bf16.msra.mxu0 0
        %3980 = vmatprep.subr.bf16.mxu0 0
        %3981 = vmatpush1.bf16.msra.mxu0 0
        %3982 = vmatprep.subr.bf16.mxu0 0
        %3983 = vmatpush1.bf16.msra.mxu0 0
        %3984 = vmatprep.subr.bf16.mxu0 0
        %3985 = vmatpush1.bf16.msra.mxu0 0
        %3986 = vmatprep.subr.bf16.mxu0 0
        %3987 = vmatpush1.bf16.msra.mxu0 %v3673
        %3988 = vmatprep.subr.bf16.mxu0 0
        %3989 = vmatpush2.bf16.msra.mxu0 0
        %3990 = vmatprep.subr.bf16.mxu0 0
        %3991 = vmatpush2.bf16.msra.mxu0 0
        %3992 = vmatprep.subr.bf16.mxu0 0
        %3993 = vmatpush2.bf16.msra.mxu0 0
        %3994 = vmatprep.subr.bf16.mxu0 0
        %3995 = vmatpush2.bf16.msra.mxu0 0
        %3996 = vmatprep.subr.bf16.mxu0 0
        %3997 = vmatpush2.bf16.msra.mxu0 0
        %3998 = vmatprep.subr.bf16.mxu0 0
        %3999 = vmatpush2.bf16.msra.mxu0 0
        %4000 = vmatprep.subr.bf16.mxu0 0
        %4001 = vmatpush2.bf16.msra.mxu0 0
        %4002 = vmatprep.subr.bf16.mxu0 0
        %4003 = vmatpush2.bf16.msra.mxu0 0
        %4004 = vmatprep.mubr.bf16.mxu0 0
        %4005 = vmatmul.mubr.bf16.gmra.mxu0 %v3970
        %v4006 = vpop.f32.mrf.mxu0
        %v4007 = vadd.f32 0.0, %v4006
        %v4008 = vpop.f32.mrf.mxu0
        %v4009 = vpop.f32.mrf.mxu0
        %v4010 = vadd.f32 0.0, %v4009
        %v4011 = vpop.f32.mrf.mxu0
        %4012 = vdwg.mxu0
        %v4015 = vunpack.c.l.b16 %v3655
        %v4016 = vunpack.c.l.b16 %v3656
        %v4017 = vpack.c.b16 %v4016, %v4015
        %v4019 = vsel %vm2080, %v4017, 0
        %4021 = vmatprep.subr.bf16.mxu0 0
        %4022 = vmatpush1.bf16.msra.mxu0 0
        %4023 = vmatprep.subr.bf16.mxu0 0
        %4024 = vmatpush1.bf16.msra.mxu0 0
        %4025 = vmatprep.subr.bf16.mxu0 0
        %4026 = vmatpush1.bf16.msra.mxu0 0
        %4027 = vmatprep.subr.bf16.mxu0 0
        %4028 = vmatpush1.bf16.msra.mxu0 0
        %4029 = vmatprep.subr.bf16.mxu0 0
        %4030 = vmatpush1.bf16.msra.mxu0 0
        %4031 = vmatprep.subr.bf16.mxu0 0
        %4032 = vmatpush1.bf16.msra.mxu0 0
        %4033 = vmatprep.subr.bf16.mxu0 0
        %4034 = vmatpush1.bf16.msra.mxu0 0
        %4035 = vmatprep.subr.bf16.mxu0 0
        %4036 = vmatpush1.bf16.msra.mxu0 %v3673
        %4037 = vmatprep.subr.bf16.mxu0 0
        %4038 = vmatpush2.bf16.msra.mxu0 0
        %4039 = vmatprep.subr.bf16.mxu0 0
        %4040 = vmatpush2.bf16.msra.mxu0 0
        %4041 = vmatprep.subr.bf16.mxu0 0
        %4042 = vmatpush2.bf16.msra.mxu0 0
        %4043 = vmatprep.subr.bf16.mxu0 0
        %4044 = vmatpush2.bf16.msra.mxu0 0
        %4045 = vmatprep.subr.bf16.mxu0 0
        %4046 = vmatpush2.bf16.msra.mxu0 0
        %4047 = vmatprep.subr.bf16.mxu0 0
        %4048 = vmatpush2.bf16.msra.mxu0 0
        %4049 = vmatprep.subr.bf16.mxu0 0
        %4050 = vmatpush2.bf16.msra.mxu0 0
        %4051 = vmatprep.subr.bf16.mxu0 0
        %4052 = vmatpush2.bf16.msra.mxu0 0
        %4053 = vmatprep.mubr.bf16.mxu0 0
        %4054 = vmatmul.mubr.bf16.gmra.mxu0 %v4019
        %v4055 = vpop.f32.mrf.mxu0
        %v4056 = vadd.f32 0.0, %v4055
        %v4057 = vpop.f32.mrf.mxu0
        %v4058 = vpop.f32.mrf.mxu0
        %v4059 = vadd.f32 0.0, %v4058
        %v4060 = vpop.f32.mrf.mxu0
        %4061 = vdwg.mxu0
        %v4064 = vunpack.c.l.b16 %v3657
        %v4065 = vunpack.c.l.b16 %v3658
        %v4066 = vpack.c.b16 %v4065, %v4064
        %v4068 = vsel %vm2080, %v4066, 0
        %4070 = vmatprep.subr.bf16.mxu0 0
        %4071 = vmatpush1.bf16.msra.mxu0 0
        %4072 = vmatprep.subr.bf16.mxu0 0
        %4073 = vmatpush1.bf16.msra.mxu0 0
        %4074 = vmatprep.subr.bf16.mxu0 0
        %4075 = vmatpush1.bf16.msra.mxu0 0
        %4076 = vmatprep.subr.bf16.mxu0 0
        %4077 = vmatpush1.bf16.msra.mxu0 0
        %4078 = vmatprep.subr.bf16.mxu0 0
        %4079 = vmatpush1.bf16.msra.mxu0 0
        %4080 = vmatprep.subr.bf16.mxu0 0
        %4081 = vmatpush1.bf16.msra.mxu0 0
        %4082 = vmatprep.subr.bf16.mxu0 0
        %4083 = vmatpush1.bf16.msra.mxu0 0
        %4084 = vmatprep.subr.bf16.mxu0 0
        %4085 = vmatpush1.bf16.msra.mxu0 %v3673
        %4086 = vmatprep.subr.bf16.mxu0 0
        %4087 = vmatpush2.bf16.msra.mxu0 0
        %4088 = vmatprep.subr.bf16.mxu0 0
        %4089 = vmatpush2.bf16.msra.mxu0 0
        %4090 = vmatprep.subr.bf16.mxu0 0
        %4091 = vmatpush2.bf16.msra.mxu0 0
        %4092 = vmatprep.subr.bf16.mxu0 0
        %4093 = vmatpush2.bf16.msra.mxu0 0
        %4094 = vmatprep.subr.bf16.mxu0 0
        %4095 = vmatpush2.bf16.msra.mxu0 0
        %4096 = vmatprep.subr.bf16.mxu0 0
        %4097 = vmatpush2.bf16.msra.mxu0 0
        %4098 = vmatprep.subr.bf16.mxu0 0
        %4099 = vmatpush2.bf16.msra.mxu0 0
        %4100 = vmatprep.subr.bf16.mxu0 0
        %4101 = vmatpush2.bf16.msra.mxu0 0
        %4102 = vmatprep.mubr.bf16.mxu0 0
        %4103 = vmatmul.mubr.bf16.gmra.mxu0 %v4068
        %v4104 = vpop.f32.mrf.mxu0
        %v4105 = vadd.f32 0.0, %v4104
        %v4106 = vpop.f32.mrf.mxu0
        %v4107 = vpop.f32.mrf.mxu0
        %v4108 = vadd.f32 0.0, %v4107
        %v4109 = vpop.f32.mrf.mxu0
        %4110 = vdwg.mxu0
        %v4113 = vunpack.c.l.b16 %v3659
        %v4114 = vunpack.c.l.b16 %v3660
        %v4115 = vpack.c.b16 %v4114, %v4113
        %v4117 = vsel %vm2080, %v4115, 0
        %4119 = vmatprep.subr.bf16.mxu0 0
        %4120 = vmatpush1.bf16.msra.mxu0 0
        %4121 = vmatprep.subr.bf16.mxu0 0
        %4122 = vmatpush1.bf16.msra.mxu0 0
        %4123 = vmatprep.subr.bf16.mxu0 0
        %4124 = vmatpush1.bf16.msra.mxu0 0
        %4125 = vmatprep.subr.bf16.mxu0 0
        %4126 = vmatpush1.bf16.msra.mxu0 0
        %4127 = vmatprep.subr.bf16.mxu0 0
        %4128 = vmatpush1.bf16.msra.mxu0 0
        %4129 = vmatprep.subr.bf16.mxu0 0
        %4130 = vmatpush1.bf16.msra.mxu0 0
        %4131 = vmatprep.subr.bf16.mxu0 0
        %4132 = vmatpush1.bf16.msra.mxu0 0
        %4133 = vmatprep.subr.bf16.mxu0 0
        %4134 = vmatpush1.bf16.msra.mxu0 %v3673
        %4135 = vmatprep.subr.bf16.mxu0 0
        %4136 = vmatpush2.bf16.msra.mxu0 0
        %4137 = vmatprep.subr.bf16.mxu0 0
        %4138 = vmatpush2.bf16.msra.mxu0 0
        %4139 = vmatprep.subr.bf16.mxu0 0
        %4140 = vmatpush2.bf16.msra.mxu0 0
        %4141 = vmatprep.subr.bf16.mxu0 0
        %4142 = vmatpush2.bf16.msra.mxu0 0
        %4143 = vmatprep.subr.bf16.mxu0 0
        %4144 = vmatpush2.bf16.msra.mxu0 0
        %4145 = vmatprep.subr.bf16.mxu0 0
        %4146 = vmatpush2.bf16.msra.mxu0 0
        %4147 = vmatprep.subr.bf16.mxu0 0
        %4148 = vmatpush2.bf16.msra.mxu0 0
        %4149 = vmatprep.subr.bf16.mxu0 0
        %4150 = vmatpush2.bf16.msra.mxu0 0
        %4151 = vmatprep.mubr.bf16.mxu0 0
        %4152 = vmatmul.mubr.bf16.gmra.mxu0 %v4117
        %v4153 = vpop.f32.mrf.mxu0
        %v4154 = vadd.f32 0.0, %v4153
        %v4155 = vpop.f32.mrf.mxu0
        %v4156 = vpop.f32.mrf.mxu0
        %v4157 = vadd.f32 0.0, %v4156
        %v4158 = vpop.f32.mrf.mxu0
        %4159 = vdwg.mxu0
        %v4160 = vadd.f32 %v3621, %v3713
        %v4161 = vadd.f32 %v3622, %v3716
        %v4162 = vadd.f32 %v3623, %v3762
        %v4163 = vadd.f32 %v3624, %v3765
        %v4164 = vadd.f32 %v3625, %v3811
        %v4165 = vadd.f32 %v3626, %v3814
        %v4166 = vadd.f32 %v3627, %v3860
        %v4167 = vadd.f32 %v3628, %v3863
        %v4168 = vadd.f32 %v3629, %v3909
        %v4169 = vadd.f32 %v3630, %v3912
        %v4170 = vadd.f32 %v3631, %v3958
        %v4171 = vadd.f32 %v3632, %v3961
        %v4172 = vadd.f32 %v3633, %v4007
        %v4173 = vadd.f32 %v3634, %v4010
        %v4174 = vadd.f32 %v3635, %v4056
        %v4175 = vadd.f32 %v3636, %v4059
        %v4176 = vadd.f32 %v3637, %v4105
        %v4177 = vadd.f32 %v3638, %v4108
        %v4178 = vadd.f32 %v3639, %v4154
        %v4179 = vadd.f32 %v3640, %v4157
        %v4180 = vld [vmem:[%s1979] sm:$0xf]
        %v4181 = vld [vmem:[%s1979 + $0x4] sm:$0x1]
        %v4182 = vld [vmem:[%s1979 + $0x8] sm:$0xf]
        %v4183 = vld [vmem:[%s1979 + $0xc] sm:$0x1]
        %v4184 = vld [vmem:[%s1979 + $0x10] sm:$0xf]
        %v4185 = vld [vmem:[%s1979 + $0x14] sm:$0x1]
        %v4186 = vld [vmem:[%s1979 + $0x18] sm:$0xf]
        %v4187 = vld [vmem:[%s1979 + $0x1c] sm:$0x1]
        %v4188 = vld [vmem:[%s1979 + $0x20] sm:$0xf]
        %v4189 = vld [vmem:[%s1979 + $0x24] sm:$0x1]
        %v4190 = vld [vmem:[%s1979 + $0x28] sm:$0xf]
        %v4191 = vld [vmem:[%s1979 + $0x2c] sm:$0x1]
        %v4192 = vld [vmem:[%s1979 + $0x30] sm:$0xf]
        %v4193 = vld [vmem:[%s1979 + $0x34] sm:$0x1]
        %v4194 = vld [vmem:[%s1979 + $0x38] sm:$0xf]
        %v4195 = vld [vmem:[%s1979 + $0x3c] sm:$0x1]
        %v4196 = vld [vmem:[%s1979 + $0x40] sm:$0xf]
        %v4197 = vld [vmem:[%s1979 + $0x44] sm:$0x1]
        %v4198 = vld [vmem:[%s1979 + $0x48] sm:$0xf]
        %v4199 = vld [vmem:[%s1979 + $0x4c] sm:$0x1]
        %s4200 = scalar_lea.vmem %s2, 32
        %v4201 = vld [vmem:[%s4200] sm:$0xf]
        %v4202 = vld [vmem:[%s4200 + $0x4] sm:$0xf]
        %v4205 = vunpack.c.l.b16 %v4180
        %v4206 = vunpack.c.l.b16 %v4181
        %v4207 = vpack.c.b16 %v4206, %v4205
        %v4210 = vunpack.c.l.b16 %v4201
        %v4211 = vunpack.c.l.b16 %v4202
        %v4212 = vpack.c.b16 %v4211, %v4210
        %v4215 = vsel %vm2080, %v4207, 0
        %4217 = vmatprep.subr.bf16.mxu0 0
        %4218 = vmatpush1.bf16.msra.mxu0 0
        %4219 = vmatprep.subr.bf16.mxu0 0
        %4220 = vmatpush1.bf16.msra.mxu0 0
        %4221 = vmatprep.subr.bf16.mxu0 0
        %4222 = vmatpush1.bf16.msra.mxu0 0
        %4223 = vmatprep.subr.bf16.mxu0 0
        %4224 = vmatpush1.bf16.msra.mxu0 0
        %4225 = vmatprep.subr.bf16.mxu0 0
        %4226 = vmatpush1.bf16.msra.mxu0 0
        %4227 = vmatprep.subr.bf16.mxu0 0
        %4228 = vmatpush1.bf16.msra.mxu0 0
        %4229 = vmatprep.subr.bf16.mxu0 0
        %4230 = vmatpush1.bf16.msra.mxu0 0
        %4231 = vmatprep.subr.bf16.mxu0 0
        %4232 = vmatpush1.bf16.msra.mxu0 %v4212
        %4233 = vmatprep.subr.bf16.mxu0 0
        %4234 = vmatpush2.bf16.msra.mxu0 0
        %4235 = vmatprep.subr.bf16.mxu0 0
        %4236 = vmatpush2.bf16.msra.mxu0 0
        %4237 = vmatprep.subr.bf16.mxu0 0
        %4238 = vmatpush2.bf16.msra.mxu0 0
        %4239 = vmatprep.subr.bf16.mxu0 0
        %4240 = vmatpush2.bf16.msra.mxu0 0
        %4241 = vmatprep.subr.bf16.mxu0 0
        %4242 = vmatpush2.bf16.msra.mxu0 0
        %4243 = vmatprep.subr.bf16.mxu0 0
        %4244 = vmatpush2.bf16.msra.mxu0 0
        %4245 = vmatprep.subr.bf16.mxu0 0
        %4246 = vmatpush2.bf16.msra.mxu0 0
        %4247 = vmatprep.subr.bf16.mxu0 0
        %4248 = vmatpush2.bf16.msra.mxu0 0
        %4249 = vmatprep.mubr.bf16.mxu0 0
        %4250 = vmatmul.mubr.bf16.gmra.mxu0 %v4215
        %v4251 = vpop.f32.mrf.mxu0
        %v4252 = vadd.f32 0.0, %v4251
        %v4253 = vpop.f32.mrf.mxu0
        %v4254 = vpop.f32.mrf.mxu0
        %v4255 = vadd.f32 0.0, %v4254
        %v4256 = vpop.f32.mrf.mxu0
        %4257 = vdwg.mxu0
        %v4260 = vunpack.c.l.b16 %v4182
        %v4261 = vunpack.c.l.b16 %v4183
        %v4262 = vpack.c.b16 %v4261, %v4260
        %v4264 = vsel %vm2080, %v4262, 0
        %4266 = vmatprep.subr.bf16.mxu0 0
        %4267 = vmatpush1.bf16.msra.mxu0 0
        %4268 = vmatprep.subr.bf16.mxu0 0
        %4269 = vmatpush1.bf16.msra.mxu0 0
        %4270 = vmatprep.subr.bf16.mxu0 0
        %4271 = vmatpush1.bf16.msra.mxu0 0
        %4272 = vmatprep.subr.bf16.mxu0 0
        %4273 = vmatpush1.bf16.msra.mxu0 0
        %4274 = vmatprep.subr.bf16.mxu0 0
        %4275 = vmatpush1.bf16.msra.mxu0 0
        %4276 = vmatprep.subr.bf16.mxu0 0
        %4277 = vmatpush1.bf16.msra.mxu0 0
        %4278 = vmatprep.subr.bf16.mxu0 0
        %4279 = vmatpush1.bf16.msra.mxu0 0
        %4280 = vmatprep.subr.bf16.mxu0 0
        %4281 = vmatpush1.bf16.msra.mxu0 %v4212
        %4282 = vmatprep.subr.bf16.mxu0 0
        %4283 = vmatpush2.bf16.msra.mxu0 0
        %4284 = vmatprep.subr.bf16.mxu0 0
        %4285 = vmatpush2.bf16.msra.mxu0 0
        %4286 = vmatprep.subr.bf16.mxu0 0
        %4287 = vmatpush2.bf16.msra.mxu0 0
        %4288 = vmatprep.subr.bf16.mxu0 0
        %4289 = vmatpush2.bf16.msra.mxu0 0
        %4290 = vmatprep.subr.bf16.mxu0 0
        %4291 = vmatpush2.bf16.msra.mxu0 0
        %4292 = vmatprep.subr.bf16.mxu0 0
        %4293 = vmatpush2.bf16.msra.mxu0 0
        %4294 = vmatprep.subr.bf16.mxu0 0
        %4295 = vmatpush2.bf16.msra.mxu0 0
        %4296 = vmatprep.subr.bf16.mxu0 0
        %4297 = vmatpush2.bf16.msra.mxu0 0
        %4298 = vmatprep.mubr.bf16.mxu0 0
        %4299 = vmatmul.mubr.bf16.gmra.mxu0 %v4264
        %v4300 = vpop.f32.mrf.mxu0
        %v4301 = vadd.f32 0.0, %v4300
        %v4302 = vpop.f32.mrf.mxu0
        %v4303 = vpop.f32.mrf.mxu0
        %v4304 = vadd.f32 0.0, %v4303
        %v4305 = vpop.f32.mrf.mxu0
        %4306 = vdwg.mxu0
        %v4309 = vunpack.c.l.b16 %v4184
        %v4310 = vunpack.c.l.b16 %v4185
        %v4311 = vpack.c.b16 %v4310, %v4309
        %v4313 = vsel %vm2080, %v4311, 0
        %4315 = vmatprep.subr.bf16.mxu0 0
        %4316 = vmatpush1.bf16.msra.mxu0 0
        %4317 = vmatprep.subr.bf16.mxu0 0
        %4318 = vmatpush1.bf16.msra.mxu0 0
        %4319 = vmatprep.subr.bf16.mxu0 0
        %4320 = vmatpush1.bf16.msra.mxu0 0
        %4321 = vmatprep.subr.bf16.mxu0 0
        %4322 = vmatpush1.bf16.msra.mxu0 0
        %4323 = vmatprep.subr.bf16.mxu0 0
        %4324 = vmatpush1.bf16.msra.mxu0 0
        %4325 = vmatprep.subr.bf16.mxu0 0
        %4326 = vmatpush1.bf16.msra.mxu0 0
        %4327 = vmatprep.subr.bf16.mxu0 0
        %4328 = vmatpush1.bf16.msra.mxu0 0
        %4329 = vmatprep.subr.bf16.mxu0 0
        %4330 = vmatpush1.bf16.msra.mxu0 %v4212
        %4331 = vmatprep.subr.bf16.mxu0 0
        %4332 = vmatpush2.bf16.msra.mxu0 0
        %4333 = vmatprep.subr.bf16.mxu0 0
        %4334 = vmatpush2.bf16.msra.mxu0 0
        %4335 = vmatprep.subr.bf16.mxu0 0
        %4336 = vmatpush2.bf16.msra.mxu0 0
        %4337 = vmatprep.subr.bf16.mxu0 0
        %4338 = vmatpush2.bf16.msra.mxu0 0
        %4339 = vmatprep.subr.bf16.mxu0 0
        %4340 = vmatpush2.bf16.msra.mxu0 0
        %4341 = vmatprep.subr.bf16.mxu0 0
        %4342 = vmatpush2.bf16.msra.mxu0 0
        %4343 = vmatprep.subr.bf16.mxu0 0
        %4344 = vmatpush2.bf16.msra.mxu0 0
        %4345 = vmatprep.subr.bf16.mxu0 0
        %4346 = vmatpush2.bf16.msra.mxu0 0
        %4347 = vmatprep.mubr.bf16.mxu0 0
        %4348 = vmatmul.mubr.bf16.gmra.mxu0 %v4313
        %v4349 = vpop.f32.mrf.mxu0
        %v4350 = vadd.f32 0.0, %v4349
        %v4351 = vpop.f32.mrf.mxu0
        %v4352 = vpop.f32.mrf.mxu0
        %v4353 = vadd.f32 0.0, %v4352
        %v4354 = vpop.f32.mrf.mxu0
        %4355 = vdwg.mxu0
        %v4358 = vunpack.c.l.b16 %v4186
        %v4359 = vunpack.c.l.b16 %v4187
        %v4360 = vpack.c.b16 %v4359, %v4358
        %v4362 = vsel %vm2080, %v4360, 0
        %4364 = vmatprep.subr.bf16.mxu0 0
        %4365 = vmatpush1.bf16.msra.mxu0 0
        %4366 = vmatprep.subr.bf16.mxu0 0
        %4367 = vmatpush1.bf16.msra.mxu0 0
        %4368 = vmatprep.subr.bf16.mxu0 0
        %4369 = vmatpush1.bf16.msra.mxu0 0
        %4370 = vmatprep.subr.bf16.mxu0 0
        %4371 = vmatpush1.bf16.msra.mxu0 0
        %4372 = vmatprep.subr.bf16.mxu0 0
        %4373 = vmatpush1.bf16.msra.mxu0 0
        %4374 = vmatprep.subr.bf16.mxu0 0
        %4375 = vmatpush1.bf16.msra.mxu0 0
        %4376 = vmatprep.subr.bf16.mxu0 0
        %4377 = vmatpush1.bf16.msra.mxu0 0
        %4378 = vmatprep.subr.bf16.mxu0 0
        %4379 = vmatpush1.bf16.msra.mxu0 %v4212
        %4380 = vmatprep.subr.bf16.mxu0 0
        %4381 = vmatpush2.bf16.msra.mxu0 0
        %4382 = vmatprep.subr.bf16.mxu0 0
        %4383 = vmatpush2.bf16.msra.mxu0 0
        %4384 = vmatprep.subr.bf16.mxu0 0
        %4385 = vmatpush2.bf16.msra.mxu0 0
        %4386 = vmatprep.subr.bf16.mxu0 0
        %4387 = vmatpush2.bf16.msra.mxu0 0
        %4388 = vmatprep.subr.bf16.mxu0 0
        %4389 = vmatpush2.bf16.msra.mxu0 0
        %4390 = vmatprep.subr.bf16.mxu0 0
        %4391 = vmatpush2.bf16.msra.mxu0 0
        %4392 = vmatprep.subr.bf16.mxu0 0
        %4393 = vmatpush2.bf16.msra.mxu0 0
        %4394 = vmatprep.subr.bf16.mxu0 0
        %4395 = vmatpush2.bf16.msra.mxu0 0
        %4396 = vmatprep.mubr.bf16.mxu0 0
        %4397 = vmatmul.mubr.bf16.gmra.mxu0 %v4362
        %v4398 = vpop.f32.mrf.mxu0
        %v4399 = vadd.f32 0.0, %v4398
        %v4400 = vpop.f32.mrf.mxu0
        %v4401 = vpop.f32.mrf.mxu0
        %v4402 = vadd.f32 0.0, %v4401
        %v4403 = vpop.f32.mrf.mxu0
        %4404 = vdwg.mxu0
        %v4407 = vunpack.c.l.b16 %v4188
        %v4408 = vunpack.c.l.b16 %v4189
        %v4409 = vpack.c.b16 %v4408, %v4407
        %v4411 = vsel %vm2080, %v4409, 0
        %4413 = vmatprep.subr.bf16.mxu0 0
        %4414 = vmatpush1.bf16.msra.mxu0 0
        %4415 = vmatprep.subr.bf16.mxu0 0
        %4416 = vmatpush1.bf16.msra.mxu0 0
        %4417 = vmatprep.subr.bf16.mxu0 0
        %4418 = vmatpush1.bf16.msra.mxu0 0
        %4419 = vmatprep.subr.bf16.mxu0 0
        %4420 = vmatpush1.bf16.msra.mxu0 0
        %4421 = vmatprep.subr.bf16.mxu0 0
        %4422 = vmatpush1.bf16.msra.mxu0 0
        %4423 = vmatprep.subr.bf16.mxu0 0
        %4424 = vmatpush1.bf16.msra.mxu0 0
        %4425 = vmatprep.subr.bf16.mxu0 0
        %4426 = vmatpush1.bf16.msra.mxu0 0
        %4427 = vmatprep.subr.bf16.mxu0 0
        %4428 = vmatpush1.bf16.msra.mxu0 %v4212
        %4429 = vmatprep.subr.bf16.mxu0 0
        %4430 = vmatpush2.bf16.msra.mxu0 0
        %4431 = vmatprep.subr.bf16.mxu0 0
        %4432 = vmatpush2.bf16.msra.mxu0 0
        %4433 = vmatprep.subr.bf16.mxu0 0
        %4434 = vmatpush2.bf16.msra.mxu0 0
        %4435 = vmatprep.subr.bf16.mxu0 0
        %4436 = vmatpush2.bf16.msra.mxu0 0
        %4437 = vmatprep.subr.bf16.mxu0 0
        %4438 = vmatpush2.bf16.msra.mxu0 0
        %4439 = vmatprep.subr.bf16.mxu0 0
        %4440 = vmatpush2.bf16.msra.mxu0 0
        %4441 = vmatprep.subr.bf16.mxu0 0
        %4442 = vmatpush2.bf16.msra.mxu0 0
        %4443 = vmatprep.subr.bf16.mxu0 0
        %4444 = vmatpush2.bf16.msra.mxu0 0
        %4445 = vmatprep.mubr.bf16.mxu0 0
        %4446 = vmatmul.mubr.bf16.gmra.mxu0 %v4411
        %v4447 = vpop.f32.mrf.mxu0
        %v4448 = vadd.f32 0.0, %v4447
        %v4449 = vpop.f32.mrf.mxu0
        %v4450 = vpop.f32.mrf.mxu0
        %v4451 = vadd.f32 0.0, %v4450
        %v4452 = vpop.f32.mrf.mxu0
        %4453 = vdwg.mxu0
        %v4456 = vunpack.c.l.b16 %v4190
        %v4457 = vunpack.c.l.b16 %v4191
        %v4458 = vpack.c.b16 %v4457, %v4456
        %v4460 = vsel %vm2080, %v4458, 0
        %4462 = vmatprep.subr.bf16.mxu0 0
        %4463 = vmatpush1.bf16.msra.mxu0 0
        %4464 = vmatprep.subr.bf16.mxu0 0
        %4465 = vmatpush1.bf16.msra.mxu0 0
        %4466 = vmatprep.subr.bf16.mxu0 0
        %4467 = vmatpush1.bf16.msra.mxu0 0
        %4468 = vmatprep.subr.bf16.mxu0 0
        %4469 = vmatpush1.bf16.msra.mxu0 0
        %4470 = vmatprep.subr.bf16.mxu0 0
        %4471 = vmatpush1.bf16.msra.mxu0 0
        %4472 = vmatprep.subr.bf16.mxu0 0
        %4473 = vmatpush1.bf16.msra.mxu0 0
        %4474 = vmatprep.subr.bf16.mxu0 0
        %4475 = vmatpush1.bf16.msra.mxu0 0
        %4476 = vmatprep.subr.bf16.mxu0 0
        %4477 = vmatpush1.bf16.msra.mxu0 %v4212
        %4478 = vmatprep.subr.bf16.mxu0 0
        %4479 = vmatpush2.bf16.msra.mxu0 0
        %4480 = vmatprep.subr.bf16.mxu0 0
        %4481 = vmatpush2.bf16.msra.mxu0 0
        %4482 = vmatprep.subr.bf16.mxu0 0
        %4483 = vmatpush2.bf16.msra.mxu0 0
        %4484 = vmatprep.subr.bf16.mxu0 0
        %4485 = vmatpush2.bf16.msra.mxu0 0
        %4486 = vmatprep.subr.bf16.mxu0 0
        %4487 = vmatpush2.bf16.msra.mxu0 0
        %4488 = vmatprep.subr.bf16.mxu0 0
        %4489 = vmatpush2.bf16.msra.mxu0 0
        %4490 = vmatprep.subr.bf16.mxu0 0
        %4491 = vmatpush2.bf16.msra.mxu0 0
        %4492 = vmatprep.subr.bf16.mxu0 0
        %4493 = vmatpush2.bf16.msra.mxu0 0
        %4494 = vmatprep.mubr.bf16.mxu0 0
        %4495 = vmatmul.mubr.bf16.gmra.mxu0 %v4460
        %v4496 = vpop.f32.mrf.mxu0
        %v4497 = vadd.f32 0.0, %v4496
        %v4498 = vpop.f32.mrf.mxu0
        %v4499 = vpop.f32.mrf.mxu0
        %v4500 = vadd.f32 0.0, %v4499
        %v4501 = vpop.f32.mrf.mxu0
        %4502 = vdwg.mxu0
        %v4505 = vunpack.c.l.b16 %v4192
        %v4506 = vunpack.c.l.b16 %v4193
        %v4507 = vpack.c.b16 %v4506, %v4505
        %v4509 = vsel %vm2080, %v4507, 0
        %4511 = vmatprep.subr.bf16.mxu0 0
        %4512 = vmatpush1.bf16.msra.mxu0 0
        %4513 = vmatprep.subr.bf16.mxu0 0
        %4514 = vmatpush1.bf16.msra.mxu0 0
        %4515 = vmatprep.subr.bf16.mxu0 0
        %4516 = vmatpush1.bf16.msra.mxu0 0
        %4517 = vmatprep.subr.bf16.mxu0 0
        %4518 = vmatpush1.bf16.msra.mxu0 0
        %4519 = vmatprep.subr.bf16.mxu0 0
        %4520 = vmatpush1.bf16.msra.mxu0 0
        %4521 = vmatprep.subr.bf16.mxu0 0
        %4522 = vmatpush1.bf16.msra.mxu0 0
        %4523 = vmatprep.subr.bf16.mxu0 0
        %4524 = vmatpush1.bf16.msra.mxu0 0
        %4525 = vmatprep.subr.bf16.mxu0 0
        %4526 = vmatpush1.bf16.msra.mxu0 %v4212
        %4527 = vmatprep.subr.bf16.mxu0 0
        %4528 = vmatpush2.bf16.msra.mxu0 0
        %4529 = vmatprep.subr.bf16.mxu0 0
        %4530 = vmatpush2.bf16.msra.mxu0 0
        %4531 = vmatprep.subr.bf16.mxu0 0
        %4532 = vmatpush2.bf16.msra.mxu0 0
        %4533 = vmatprep.subr.bf16.mxu0 0
        %4534 = vmatpush2.bf16.msra.mxu0 0
        %4535 = vmatprep.subr.bf16.mxu0 0
        %4536 = vmatpush2.bf16.msra.mxu0 0
        %4537 = vmatprep.subr.bf16.mxu0 0
        %4538 = vmatpush2.bf16.msra.mxu0 0
        %4539 = vmatprep.subr.bf16.mxu0 0
        %4540 = vmatpush2.bf16.msra.mxu0 0
        %4541 = vmatprep.subr.bf16.mxu0 0
        %4542 = vmatpush2.bf16.msra.mxu0 0
        %4543 = vmatprep.mubr.bf16.mxu0 0
        %4544 = vmatmul.mubr.bf16.gmra.mxu0 %v4509
        %v4545 = vpop.f32.mrf.mxu0
        %v4546 = vadd.f32 0.0, %v4545
        %v4547 = vpop.f32.mrf.mxu0
        %v4548 = vpop.f32.mrf.mxu0
        %v4549 = vadd.f32 0.0, %v4548
        %v4550 = vpop.f32.mrf.mxu0
        %4551 = vdwg.mxu0
        %v4554 = vunpack.c.l.b16 %v4194
        %v4555 = vunpack.c.l.b16 %v4195
        %v4556 = vpack.c.b16 %v4555, %v4554
        %v4558 = vsel %vm2080, %v4556, 0
        %4560 = vmatprep.subr.bf16.mxu0 0
        %4561 = vmatpush1.bf16.msra.mxu0 0
        %4562 = vmatprep.subr.bf16.mxu0 0
        %4563 = vmatpush1.bf16.msra.mxu0 0
        %4564 = vmatprep.subr.bf16.mxu0 0
        %4565 = vmatpush1.bf16.msra.mxu0 0
        %4566 = vmatprep.subr.bf16.mxu0 0
        %4567 = vmatpush1.bf16.msra.mxu0 0
        %4568 = vmatprep.subr.bf16.mxu0 0
        %4569 = vmatpush1.bf16.msra.mxu0 0
        %4570 = vmatprep.subr.bf16.mxu0 0
        %4571 = vmatpush1.bf16.msra.mxu0 0
        %4572 = vmatprep.subr.bf16.mxu0 0
        %4573 = vmatpush1.bf16.msra.mxu0 0
        %4574 = vmatprep.subr.bf16.mxu0 0
        %4575 = vmatpush1.bf16.msra.mxu0 %v4212
        %4576 = vmatprep.subr.bf16.mxu0 0
        %4577 = vmatpush2.bf16.msra.mxu0 0
        %4578 = vmatprep.subr.bf16.mxu0 0
        %4579 = vmatpush2.bf16.msra.mxu0 0
        %4580 = vmatprep.subr.bf16.mxu0 0
        %4581 = vmatpush2.bf16.msra.mxu0 0
        %4582 = vmatprep.subr.bf16.mxu0 0
        %4583 = vmatpush2.bf16.msra.mxu0 0
        %4584 = vmatprep.subr.bf16.mxu0 0
        %4585 = vmatpush2.bf16.msra.mxu0 0
        %4586 = vmatprep.subr.bf16.mxu0 0
        %4587 = vmatpush2.bf16.msra.mxu0 0
        %4588 = vmatprep.subr.bf16.mxu0 0
        %4589 = vmatpush2.bf16.msra.mxu0 0
        %4590 = vmatprep.subr.bf16.mxu0 0
        %4591 = vmatpush2.bf16.msra.mxu0 0
        %4592 = vmatprep.mubr.bf16.mxu0 0
        %4593 = vmatmul.mubr.bf16.gmra.mxu0 %v4558
        %v4594 = vpop.f32.mrf.mxu0
        %v4595 = vadd.f32 0.0, %v4594
        %v4596 = vpop.f32.mrf.mxu0
        %v4597 = vpop.f32.mrf.mxu0
        %v4598 = vadd.f32 0.0, %v4597
        %v4599 = vpop.f32.mrf.mxu0
        %4600 = vdwg.mxu0
        %v4603 = vunpack.c.l.b16 %v4196
        %v4604 = vunpack.c.l.b16 %v4197
        %v4605 = vpack.c.b16 %v4604, %v4603
        %v4607 = vsel %vm2080, %v4605, 0
        %4609 = vmatprep.subr.bf16.mxu0 0
        %4610 = vmatpush1.bf16.msra.mxu0 0
        %4611 = vmatprep.subr.bf16.mxu0 0
        %4612 = vmatpush1.bf16.msra.mxu0 0
        %4613 = vmatprep.subr.bf16.mxu0 0
        %4614 = vmatpush1.bf16.msra.mxu0 0
        %4615 = vmatprep.subr.bf16.mxu0 0
        %4616 = vmatpush1.bf16.msra.mxu0 0
        %4617 = vmatprep.subr.bf16.mxu0 0
        %4618 = vmatpush1.bf16.msra.mxu0 0
        %4619 = vmatprep.subr.bf16.mxu0 0
        %4620 = vmatpush1.bf16.msra.mxu0 0
        %4621 = vmatprep.subr.bf16.mxu0 0
        %4622 = vmatpush1.bf16.msra.mxu0 0
        %4623 = vmatprep.subr.bf16.mxu0 0
        %4624 = vmatpush1.bf16.msra.mxu0 %v4212
        %4625 = vmatprep.subr.bf16.mxu0 0
        %4626 = vmatpush2.bf16.msra.mxu0 0
        %4627 = vmatprep.subr.bf16.mxu0 0
        %4628 = vmatpush2.bf16.msra.mxu0 0
        %4629 = vmatprep.subr.bf16.mxu0 0
        %4630 = vmatpush2.bf16.msra.mxu0 0
        %4631 = vmatprep.subr.bf16.mxu0 0
        %4632 = vmatpush2.bf16.msra.mxu0 0
        %4633 = vmatprep.subr.bf16.mxu0 0
        %4634 = vmatpush2.bf16.msra.mxu0 0
        %4635 = vmatprep.subr.bf16.mxu0 0
        %4636 = vmatpush2.bf16.msra.mxu0 0
        %4637 = vmatprep.subr.bf16.mxu0 0
        %4638 = vmatpush2.bf16.msra.mxu0 0
        %4639 = vmatprep.subr.bf16.mxu0 0
        %4640 = vmatpush2.bf16.msra.mxu0 0
        %4641 = vmatprep.mubr.bf16.mxu0 0
        %4642 = vmatmul.mubr.bf16.gmra.mxu0 %v4607
        %v4643 = vpop.f32.mrf.mxu0
        %v4644 = vadd.f32 0.0, %v4643
        %v4645 = vpop.f32.mrf.mxu0
        %v4646 = vpop.f32.mrf.mxu0
        %v4647 = vadd.f32 0.0, %v4646
        %v4648 = vpop.f32.mrf.mxu0
        %4649 = vdwg.mxu0
        %v4652 = vunpack.c.l.b16 %v4198
        %v4653 = vunpack.c.l.b16 %v4199
        %v4654 = vpack.c.b16 %v4653, %v4652
        %v4656 = vsel %vm2080, %v4654, 0
        %4658 = vmatprep.subr.bf16.mxu0 0
        %4659 = vmatpush1.bf16.msra.mxu0 0
        %4660 = vmatprep.subr.bf16.mxu0 0
        %4661 = vmatpush1.bf16.msra.mxu0 0
        %4662 = vmatprep.subr.bf16.mxu0 0
        %4663 = vmatpush1.bf16.msra.mxu0 0
        %4664 = vmatprep.subr.bf16.mxu0 0
        %4665 = vmatpush1.bf16.msra.mxu0 0
        %4666 = vmatprep.subr.bf16.mxu0 0
        %4667 = vmatpush1.bf16.msra.mxu0 0
        %4668 = vmatprep.subr.bf16.mxu0 0
        %4669 = vmatpush1.bf16.msra.mxu0 0
        %4670 = vmatprep.subr.bf16.mxu0 0
        %4671 = vmatpush1.bf16.msra.mxu0 0
        %4672 = vmatprep.subr.bf16.mxu0 0
        %4673 = vmatpush1.bf16.msra.mxu0 %v4212
        %4674 = vmatprep.subr.bf16.mxu0 0
        %4675 = vmatpush2.bf16.msra.mxu0 0
        %4676 = vmatprep.subr.bf16.mxu0 0
        %4677 = vmatpush2.bf16.msra.mxu0 0
        %4678 = vmatprep.subr.bf16.mxu0 0
        %4679 = vmatpush2.bf16.msra.mxu0 0
        %4680 = vmatprep.subr.bf16.mxu0 0
        %4681 = vmatpush2.bf16.msra.mxu0 0
        %4682 = vmatprep.subr.bf16.mxu0 0
        %4683 = vmatpush2.bf16.msra.mxu0 0
        %4684 = vmatprep.subr.bf16.mxu0 0
        %4685 = vmatpush2.bf16.msra.mxu0 0
        %4686 = vmatprep.subr.bf16.mxu0 0
        %4687 = vmatpush2.bf16.msra.mxu0 0
        %4688 = vmatprep.subr.bf16.mxu0 0
        %4689 = vmatpush2.bf16.msra.mxu0 0
        %4690 = vmatprep.mubr.bf16.mxu0 0
        %4691 = vmatmul.mubr.bf16.gmra.mxu0 %v4656
        %v4692 = vpop.f32.mrf.mxu0
        %v4693 = vadd.f32 0.0, %v4692
        %v4694 = vpop.f32.mrf.mxu0
        %v4695 = vpop.f32.mrf.mxu0
        %v4696 = vadd.f32 0.0, %v4695
        %v4697 = vpop.f32.mrf.mxu0
        %4698 = vdwg.mxu0
        %v4699 = vadd.f32 %v4160, %v4252
        %v4700 = vadd.f32 %v4161, %v4255
        %v4701 = vadd.f32 %v4162, %v4301
        %v4702 = vadd.f32 %v4163, %v4304
        %v4703 = vadd.f32 %v4164, %v4350
        %v4704 = vadd.f32 %v4165, %v4353
        %v4705 = vadd.f32 %v4166, %v4399
        %v4706 = vadd.f32 %v4167, %v4402
        %v4707 = vadd.f32 %v4168, %v4448
        %v4708 = vadd.f32 %v4169, %v4451
        %v4709 = vadd.f32 %v4170, %v4497
        %v4710 = vadd.f32 %v4171, %v4500
        %v4711 = vadd.f32 %v4172, %v4546
        %v4712 = vadd.f32 %v4173, %v4549
        %v4713 = vadd.f32 %v4174, %v4595
        %v4714 = vadd.f32 %v4175, %v4598
        %v4715 = vadd.f32 %v4176, %v4644
        %v4716 = vadd.f32 %v4177, %v4647
        %v4717 = vadd.f32 %v4178, %v4693
        %v4718 = vadd.f32 %v4179, %v4696
        %v4719 = vld [vmem:[%s1580 + $0x4] sm:$0x3]
        %v4720 = vld [vmem:[%s1580 + $0xc] sm:$0x3]
        %v4721 = vld [vmem:[%s1580 + $0x14] sm:$0x3]
        %v4722 = vld [vmem:[%s1580 + $0x1c] sm:$0x3]
        %v4723 = vld [vmem:[%s1580 + $0x24] sm:$0x3]
        %v4724 = vld [vmem:[%s1580 + $0x2c] sm:$0x3]
        %v4725 = vld [vmem:[%s1580 + $0x34] sm:$0x3]
        %v4726 = vld [vmem:[%s1580 + $0x3c] sm:$0x3]
        %v4727 = vld [vmem:[%s1580 + $0x44] sm:$0x3]
        %v4728 = vld [vmem:[%s1580 + $0x4c] sm:$0x3]
        %s4729 = scalar_lea.vmem %s2, 40
        %v4730 = vld [vmem:[%s4729] sm:$0xf]
        %v4731 = vld [vmem:[%s4729 + $0x4] sm:$0xf]
        %v4733 = vunpack.c.l.b16 %v4719
        %v4734 = vpack.c.b16 %v4733, %v3666
        %v4736 = vshrl.u32 %v4734, 16
        %v4738 = vshll.u32 %v4734, 16
        %v4740 = vrot.slane %v4738, 1
        %v4741 = vor.u32 %v4736, %v4740
        %v4744 = vunpack.c.l.b16 %v4730
        %v4745 = vunpack.c.l.b16 %v4731
        %v4746 = vpack.c.b16 %v4745, %v4744
        %v4749 = vsel %vm2080, %v4741, 0
        %4751 = vmatprep.subr.bf16.mxu0 0
        %4752 = vmatpush1.bf16.msra.mxu0 0
        %4753 = vmatprep.subr.bf16.mxu0 0
        %4754 = vmatpush1.bf16.msra.mxu0 0
        %4755 = vmatprep.subr.bf16.mxu0 0
        %4756 = vmatpush1.bf16.msra.mxu0 0
        %4757 = vmatprep.subr.bf16.mxu0 0
        %4758 = vmatpush1.bf16.msra.mxu0 0
        %4759 = vmatprep.subr.bf16.mxu0 0
        %4760 = vmatpush1.bf16.msra.mxu0 0
        %4761 = vmatprep.subr.bf16.mxu0 0
        %4762 = vmatpush1.bf16.msra.mxu0 0
        %4763 = vmatprep.subr.bf16.mxu0 0
        %4764 = vmatpush1.bf16.msra.mxu0 0
        %4765 = vmatprep.subr.bf16.mxu0 0
        %4766 = vmatpush1.bf16.msra.mxu0 %v4746
        %4767 = vmatprep.subr.bf16.mxu0 0
        %4768 = vmatpush2.bf16.msra.mxu0 0
        %4769 = vmatprep.subr.bf16.mxu0 0
        %4770 = vmatpush2.bf16.msra.mxu0 0
        %4771 = vmatprep.subr.bf16.mxu0 0
        %4772 = vmatpush2.bf16.msra.mxu0 0
        %4773 = vmatprep.subr.bf16.mxu0 0
        %4774 = vmatpush2.bf16.msra.mxu0 0
        %4775 = vmatprep.subr.bf16.mxu0 0
        %4776 = vmatpush2.bf16.msra.mxu0 0
        %4777 = vmatprep.subr.bf16.mxu0 0
        %4778 = vmatpush2.bf16.msra.mxu0 0
        %4779 = vmatprep.subr.bf16.mxu0 0
        %4780 = vmatpush2.bf16.msra.mxu0 0
        %4781 = vmatprep.subr.bf16.mxu0 0
        %4782 = vmatpush2.bf16.msra.mxu0 0
        %4783 = vmatprep.mubr.bf16.mxu0 0
        %4784 = vmatmul.mubr.bf16.gmra.mxu0 %v4749
        %v4785 = vpop.f32.mrf.mxu0
        %v4786 = vadd.f32 0.0, %v4785
        %v4787 = vpop.f32.mrf.mxu0
        %v4788 = vpop.f32.mrf.mxu0
        %v4789 = vadd.f32 0.0, %v4788
        %v4790 = vpop.f32.mrf.mxu0
        %4791 = vdwg.mxu0
        %v4793 = vunpack.c.l.b16 %v4720
        %v4794 = vpack.c.b16 %v4793, %v3721
        %v4796 = vshrl.u32 %v4794, 16
        %v4798 = vshll.u32 %v4794, 16
        %v4800 = vrot.slane %v4798, 1
        %v4801 = vor.u32 %v4796, %v4800
        %v4803 = vsel %vm2080, %v4801, 0
        %4805 = vmatprep.subr.bf16.mxu0 0
        %4806 = vmatpush1.bf16.msra.mxu0 0
        %4807 = vmatprep.subr.bf16.mxu0 0
        %4808 = vmatpush1.bf16.msra.mxu0 0
        %4809 = vmatprep.subr.bf16.mxu0 0
        %4810 = vmatpush1.bf16.msra.mxu0 0
        %4811 = vmatprep.subr.bf16.mxu0 0
        %4812 = vmatpush1.bf16.msra.mxu0 0
        %4813 = vmatprep.subr.bf16.mxu0 0
        %4814 = vmatpush1.bf16.msra.mxu0 0
        %4815 = vmatprep.subr.bf16.mxu0 0
        %4816 = vmatpush1.bf16.msra.mxu0 0
        %4817 = vmatprep.subr.bf16.mxu0 0
        %4818 = vmatpush1.bf16.msra.mxu0 0
        %4819 = vmatprep.subr.bf16.mxu0 0
        %4820 = vmatpush1.bf16.msra.mxu0 %v4746
        %4821 = vmatprep.subr.bf16.mxu0 0
        %4822 = vmatpush2.bf16.msra.mxu0 0
        %4823 = vmatprep.subr.bf16.mxu0 0
        %4824 = vmatpush2.bf16.msra.mxu0 0
        %4825 = vmatprep.subr.bf16.mxu0 0
        %4826 = vmatpush2.bf16.msra.mxu0 0
        %4827 = vmatprep.subr.bf16.mxu0 0
        %4828 = vmatpush2.bf16.msra.mxu0 0
        %4829 = vmatprep.subr.bf16.mxu0 0
        %4830 = vmatpush2.bf16.msra.mxu0 0
        %4831 = vmatprep.subr.bf16.mxu0 0
        %4832 = vmatpush2.bf16.msra.mxu0 0
        %4833 = vmatprep.subr.bf16.mxu0 0
        %4834 = vmatpush2.bf16.msra.mxu0 0
        %4835 = vmatprep.subr.bf16.mxu0 0
        %4836 = vmatpush2.bf16.msra.mxu0 0
        %4837 = vmatprep.mubr.bf16.mxu0 0
        %4838 = vmatmul.mubr.bf16.gmra.mxu0 %v4803
        %v4839 = vpop.f32.mrf.mxu0
        %v4840 = vadd.f32 0.0, %v4839
        %v4841 = vpop.f32.mrf.mxu0
        %v4842 = vpop.f32.mrf.mxu0
        %v4843 = vadd.f32 0.0, %v4842
        %v4844 = vpop.f32.mrf.mxu0
        %4845 = vdwg.mxu0
        %v4847 = vunpack.c.l.b16 %v4721
        %v4848 = vpack.c.b16 %v4847, %v3770
        %v4850 = vshrl.u32 %v4848, 16
        %v4852 = vshll.u32 %v4848, 16
        %v4854 = vrot.slane %v4852, 1
        %v4855 = vor.u32 %v4850, %v4854
        %v4857 = vsel %vm2080, %v4855, 0
        %4859 = vmatprep.subr.bf16.mxu0 0
        %4860 = vmatpush1.bf16.msra.mxu0 0
        %4861 = vmatprep.subr.bf16.mxu0 0
        %4862 = vmatpush1.bf16.msra.mxu0 0
        %4863 = vmatprep.subr.bf16.mxu0 0
        %4864 = vmatpush1.bf16.msra.mxu0 0
        %4865 = vmatprep.subr.bf16.mxu0 0
        %4866 = vmatpush1.bf16.msra.mxu0 0
        %4867 = vmatprep.subr.bf16.mxu0 0
        %4868 = vmatpush1.bf16.msra.mxu0 0
        %4869 = vmatprep.subr.bf16.mxu0 0
        %4870 = vmatpush1.bf16.msra.mxu0 0
        %4871 = vmatprep.subr.bf16.mxu0 0
        %4872 = vmatpush1.bf16.msra.mxu0 0
        %4873 = vmatprep.subr.bf16.mxu0 0
        %4874 = vmatpush1.bf16.msra.mxu0 %v4746
        %4875 = vmatprep.subr.bf16.mxu0 0
        %4876 = vmatpush2.bf16.msra.mxu0 0
        %4877 = vmatprep.subr.bf16.mxu0 0
        %4878 = vmatpush2.bf16.msra.mxu0 0
        %4879 = vmatprep.subr.bf16.mxu0 0
        %4880 = vmatpush2.bf16.msra.mxu0 0
        %4881 = vmatprep.subr.bf16.mxu0 0
        %4882 = vmatpush2.bf16.msra.mxu0 0
        %4883 = vmatprep.subr.bf16.mxu0 0
        %4884 = vmatpush2.bf16.msra.mxu0 0
        %4885 = vmatprep.subr.bf16.mxu0 0
        %4886 = vmatpush2.bf16.msra.mxu0 0
        %4887 = vmatprep.subr.bf16.mxu0 0
        %4888 = vmatpush2.bf16.msra.mxu0 0
        %4889 = vmatprep.subr.bf16.mxu0 0
        %4890 = vmatpush2.bf16.msra.mxu0 0
        %4891 = vmatprep.mubr.bf16.mxu0 0
        %4892 = vmatmul.mubr.bf16.gmra.mxu0 %v4857
        %v4893 = vpop.f32.mrf.mxu0
        %v4894 = vadd.f32 0.0, %v4893
        %v4895 = vpop.f32.mrf.mxu0
        %v4896 = vpop.f32.mrf.mxu0
        %v4897 = vadd.f32 0.0, %v4896
        %v4898 = vpop.f32.mrf.mxu0
        %4899 = vdwg.mxu0
        %v4901 = vunpack.c.l.b16 %v4722
        %v4902 = vpack.c.b16 %v4901, %v3819
        %v4904 = vshrl.u32 %v4902, 16
        %v4906 = vshll.u32 %v4902, 16
        %v4908 = vrot.slane %v4906, 1
        %v4909 = vor.u32 %v4904, %v4908
        %v4911 = vsel %vm2080, %v4909, 0
        %4913 = vmatprep.subr.bf16.mxu0 0
        %4914 = vmatpush1.bf16.msra.mxu0 0
        %4915 = vmatprep.subr.bf16.mxu0 0
        %4916 = vmatpush1.bf16.msra.mxu0 0
        %4917 = vmatprep.subr.bf16.mxu0 0
        %4918 = vmatpush1.bf16.msra.mxu0 0
        %4919 = vmatprep.subr.bf16.mxu0 0
        %4920 = vmatpush1.bf16.msra.mxu0 0
        %4921 = vmatprep.subr.bf16.mxu0 0
        %4922 = vmatpush1.bf16.msra.mxu0 0
        %4923 = vmatprep.subr.bf16.mxu0 0
        %4924 = vmatpush1.bf16.msra.mxu0 0
        %4925 = vmatprep.subr.bf16.mxu0 0
        %4926 = vmatpush1.bf16.msra.mxu0 0
        %4927 = vmatprep.subr.bf16.mxu0 0
        %4928 = vmatpush1.bf16.msra.mxu0 %v4746
        %4929 = vmatprep.subr.bf16.mxu0 0
        %4930 = vmatpush2.bf16.msra.mxu0 0
        %4931 = vmatprep.subr.bf16.mxu0 0
        %4932 = vmatpush2.bf16.msra.mxu0 0
        %4933 = vmatprep.subr.bf16.mxu0 0
        %4934 = vmatpush2.bf16.msra.mxu0 0
        %4935 = vmatprep.subr.bf16.mxu0 0
        %4936 = vmatpush2.bf16.msra.mxu0 0
        %4937 = vmatprep.subr.bf16.mxu0 0
        %4938 = vmatpush2.bf16.msra.mxu0 0
        %4939 = vmatprep.subr.bf16.mxu0 0
        %4940 = vmatpush2.bf16.msra.mxu0 0
        %4941 = vmatprep.subr.bf16.mxu0 0
        %4942 = vmatpush2.bf16.msra.mxu0 0
        %4943 = vmatprep.subr.bf16.mxu0 0
        %4944 = vmatpush2.bf16.msra.mxu0 0
        %4945 = vmatprep.mubr.bf16.mxu0 0
        %4946 = vmatmul.mubr.bf16.gmra.mxu0 %v4911
        %v4947 = vpop.f32.mrf.mxu0
        %v4948 = vadd.f32 0.0, %v4947
        %v4949 = vpop.f32.mrf.mxu0
        %v4950 = vpop.f32.mrf.mxu0
        %v4951 = vadd.f32 0.0, %v4950
        %v4952 = vpop.f32.mrf.mxu0
        %4953 = vdwg.mxu0
        %v4955 = vunpack.c.l.b16 %v4723
        %v4956 = vpack.c.b16 %v4955, %v3868
        %v4958 = vshrl.u32 %v4956, 16
        %v4960 = vshll.u32 %v4956, 16
        %v4962 = vrot.slane %v4960, 1
        %v4963 = vor.u32 %v4958, %v4962
        %v4965 = vsel %vm2080, %v4963, 0
        %4967 = vmatprep.subr.bf16.mxu0 0
        %4968 = vmatpush1.bf16.msra.mxu0 0
        %4969 = vmatprep.subr.bf16.mxu0 0
        %4970 = vmatpush1.bf16.msra.mxu0 0
        %4971 = vmatprep.subr.bf16.mxu0 0
        %4972 = vmatpush1.bf16.msra.mxu0 0
        %4973 = vmatprep.subr.bf16.mxu0 0
        %4974 = vmatpush1.bf16.msra.mxu0 0
        %4975 = vmatprep.subr.bf16.mxu0 0
        %4976 = vmatpush1.bf16.msra.mxu0 0
        %4977 = vmatprep.subr.bf16.mxu0 0
        %4978 = vmatpush1.bf16.msra.mxu0 0
        %4979 = vmatprep.subr.bf16.mxu0 0
        %4980 = vmatpush1.bf16.msra.mxu0 0
        %4981 = vmatprep.subr.bf16.mxu0 0
        %4982 = vmatpush1.bf16.msra.mxu0 %v4746
        %4983 = vmatprep.subr.bf16.mxu0 0
        %4984 = vmatpush2.bf16.msra.mxu0 0
        %4985 = vmatprep.subr.bf16.mxu0 0
        %4986 = vmatpush2.bf16.msra.mxu0 0
        %4987 = vmatprep.subr.bf16.mxu0 0
        %4988 = vmatpush2.bf16.msra.mxu0 0
        %4989 = vmatprep.subr.bf16.mxu0 0
        %4990 = vmatpush2.bf16.msra.mxu0 0
        %4991 = vmatprep.subr.bf16.mxu0 0
        %4992 = vmatpush2.bf16.msra.mxu0 0
        %4993 = vmatprep.subr.bf16.mxu0 0
        %4994 = vmatpush2.bf16.msra.mxu0 0
        %4995 = vmatprep.subr.bf16.mxu0 0
        %4996 = vmatpush2.bf16.msra.mxu0 0
        %4997 = vmatprep.subr.bf16.mxu0 0
        %4998 = vmatpush2.bf16.msra.mxu0 0
        %4999 = vmatprep.mubr.bf16.mxu0 0
        %5000 = vmatmul.mubr.bf16.gmra.mxu0 %v4965
        %v5001 = vpop.f32.mrf.mxu0
        %v5002 = vadd.f32 0.0, %v5001
        %v5003 = vpop.f32.mrf.mxu0
        %v5004 = vpop.f32.mrf.mxu0
        %v5005 = vadd.f32 0.0, %v5004
        %v5006 = vpop.f32.mrf.mxu0
        %5007 = vdwg.mxu0
        %v5009 = vunpack.c.l.b16 %v4724
        %v5010 = vpack.c.b16 %v5009, %v3917
        %v5012 = vshrl.u32 %v5010, 16
        %v5014 = vshll.u32 %v5010, 16
        %v5016 = vrot.slane %v5014, 1
        %v5017 = vor.u32 %v5012, %v5016
        %v5019 = vsel %vm2080, %v5017, 0
        %5021 = vmatprep.subr.bf16.mxu0 0
        %5022 = vmatpush1.bf16.msra.mxu0 0
        %5023 = vmatprep.subr.bf16.mxu0 0
        %5024 = vmatpush1.bf16.msra.mxu0 0
        %5025 = vmatprep.subr.bf16.mxu0 0
        %5026 = vmatpush1.bf16.msra.mxu0 0
        %5027 = vmatprep.subr.bf16.mxu0 0
        %5028 = vmatpush1.bf16.msra.mxu0 0
        %5029 = vmatprep.subr.bf16.mxu0 0
        %5030 = vmatpush1.bf16.msra.mxu0 0
        %5031 = vmatprep.subr.bf16.mxu0 0
        %5032 = vmatpush1.bf16.msra.mxu0 0
        %5033 = vmatprep.subr.bf16.mxu0 0
        %5034 = vmatpush1.bf16.msra.mxu0 0
        %5035 = vmatprep.subr.bf16.mxu0 0
        %5036 = vmatpush1.bf16.msra.mxu0 %v4746
        %5037 = vmatprep.subr.bf16.mxu0 0
        %5038 = vmatpush2.bf16.msra.mxu0 0
        %5039 = vmatprep.subr.bf16.mxu0 0
        %5040 = vmatpush2.bf16.msra.mxu0 0
        %5041 = vmatprep.subr.bf16.mxu0 0
        %5042 = vmatpush2.bf16.msra.mxu0 0
        %5043 = vmatprep.subr.bf16.mxu0 0
        %5044 = vmatpush2.bf16.msra.mxu0 0
        %5045 = vmatprep.subr.bf16.mxu0 0
        %5046 = vmatpush2.bf16.msra.mxu0 0
        %5047 = vmatprep.subr.bf16.mxu0 0
        %5048 = vmatpush2.bf16.msra.mxu0 0
        %5049 = vmatprep.subr.bf16.mxu0 0
        %5050 = vmatpush2.bf16.msra.mxu0 0
        %5051 = vmatprep.subr.bf16.mxu0 0
        %5052 = vmatpush2.bf16.msra.mxu0 0
        %5053 = vmatprep.mubr.bf16.mxu0 0
        %5054 = vmatmul.mubr.bf16.gmra.mxu0 %v5019
        %v5055 = vpop.f32.mrf.mxu0
        %v5056 = vadd.f32 0.0, %v5055
        %v5057 = vpop.f32.mrf.mxu0
        %v5058 = vpop.f32.mrf.mxu0
        %v5059 = vadd.f32 0.0, %v5058
        %v5060 = vpop.f32.mrf.mxu0
        %5061 = vdwg.mxu0
        %v5063 = vunpack.c.l.b16 %v4725
        %v5064 = vpack.c.b16 %v5063, %v3966
        %v5066 = vshrl.u32 %v5064, 16
        %v5068 = vshll.u32 %v5064, 16
        %v5070 = vrot.slane %v5068, 1
        %v5071 = vor.u32 %v5066, %v5070
        %v5073 = vsel %vm2080, %v5071, 0
        %5075 = vmatprep.subr.bf16.mxu0 0
        %5076 = vmatpush1.bf16.msra.mxu0 0
        %5077 = vmatprep.subr.bf16.mxu0 0
        %5078 = vmatpush1.bf16.msra.mxu0 0
        %5079 = vmatprep.subr.bf16.mxu0 0
        %5080 = vmatpush1.bf16.msra.mxu0 0
        %5081 = vmatprep.subr.bf16.mxu0 0
        %5082 = vmatpush1.bf16.msra.mxu0 0
        %5083 = vmatprep.subr.bf16.mxu0 0
        %5084 = vmatpush1.bf16.msra.mxu0 0
        %5085 = vmatprep.subr.bf16.mxu0 0
        %5086 = vmatpush1.bf16.msra.mxu0 0
        %5087 = vmatprep.subr.bf16.mxu0 0
        %5088 = vmatpush1.bf16.msra.mxu0 0
        %5089 = vmatprep.subr.bf16.mxu0 0
        %5090 = vmatpush1.bf16.msra.mxu0 %v4746
        %5091 = vmatprep.subr.bf16.mxu0 0
        %5092 = vmatpush2.bf16.msra.mxu0 0
        %5093 = vmatprep.subr.bf16.mxu0 0
        %5094 = vmatpush2.bf16.msra.mxu0 0
        %5095 = vmatprep.subr.bf16.mxu0 0
        %5096 = vmatpush2.bf16.msra.mxu0 0
        %5097 = vmatprep.subr.bf16.mxu0 0
        %5098 = vmatpush2.bf16.msra.mxu0 0
        %5099 = vmatprep.subr.bf16.mxu0 0
        %5100 = vmatpush2.bf16.msra.mxu0 0
        %5101 = vmatprep.subr.bf16.mxu0 0
        %5102 = vmatpush2.bf16.msra.mxu0 0
        %5103 = vmatprep.subr.bf16.mxu0 0
        %5104 = vmatpush2.bf16.msra.mxu0 0
        %5105 = vmatprep.subr.bf16.mxu0 0
        %5106 = vmatpush2.bf16.msra.mxu0 0
        %5107 = vmatprep.mubr.bf16.mxu0 0
        %5108 = vmatmul.mubr.bf16.gmra.mxu0 %v5073
        %v5109 = vpop.f32.mrf.mxu0
        %v5110 = vadd.f32 0.0, %v5109
        %v5111 = vpop.f32.mrf.mxu0
        %v5112 = vpop.f32.mrf.mxu0
        %v5113 = vadd.f32 0.0, %v5112
        %v5114 = vpop.f32.mrf.mxu0
        %5115 = vdwg.mxu0
        %v5117 = vunpack.c.l.b16 %v4726
        %v5118 = vpack.c.b16 %v5117, %v4015
        %v5120 = vshrl.u32 %v5118, 16
        %v5122 = vshll.u32 %v5118, 16
        %v5124 = vrot.slane %v5122, 1
        %v5125 = vor.u32 %v5120, %v5124
        %v5127 = vsel %vm2080, %v5125, 0
        %5129 = vmatprep.subr.bf16.mxu0 0
        %5130 = vmatpush1.bf16.msra.mxu0 0
        %5131 = vmatprep.subr.bf16.mxu0 0
        %5132 = vmatpush1.bf16.msra.mxu0 0
        %5133 = vmatprep.subr.bf16.mxu0 0
        %5134 = vmatpush1.bf16.msra.mxu0 0
        %5135 = vmatprep.subr.bf16.mxu0 0
        %5136 = vmatpush1.bf16.msra.mxu0 0
        %5137 = vmatprep.subr.bf16.mxu0 0
        %5138 = vmatpush1.bf16.msra.mxu0 0
        %5139 = vmatprep.subr.bf16.mxu0 0
        %5140 = vmatpush1.bf16.msra.mxu0 0
        %5141 = vmatprep.subr.bf16.mxu0 0
        %5142 = vmatpush1.bf16.msra.mxu0 0
        %5143 = vmatprep.subr.bf16.mxu0 0
        %5144 = vmatpush1.bf16.msra.mxu0 %v4746
        %5145 = vmatprep.subr.bf16.mxu0 0
        %5146 = vmatpush2.bf16.msra.mxu0 0
        %5147 = vmatprep.subr.bf16.mxu0 0
        %5148 = vmatpush2.bf16.msra.mxu0 0
        %5149 = vmatprep.subr.bf16.mxu0 0
        %5150 = vmatpush2.bf16.msra.mxu0 0
        %5151 = vmatprep.subr.bf16.mxu0 0
        %5152 = vmatpush2.bf16.msra.mxu0 0
        %5153 = vmatprep.subr.bf16.mxu0 0
        %5154 = vmatpush2.bf16.msra.mxu0 0
        %5155 = vmatprep.subr.bf16.mxu0 0
        %5156 = vmatpush2.bf16.msra.mxu0 0
        %5157 = vmatprep.subr.bf16.mxu0 0
        %5158 = vmatpush2.bf16.msra.mxu0 0
        %5159 = vmatprep.subr.bf16.mxu0 0
        %5160 = vmatpush2.bf16.msra.mxu0 0
        %5161 = vmatprep.mubr.bf16.mxu0 0
        %5162 = vmatmul.mubr.bf16.gmra.mxu0 %v5127
        %v5163 = vpop.f32.mrf.mxu0
        %v5164 = vadd.f32 0.0, %v5163
        %v5165 = vpop.f32.mrf.mxu0
        %v5166 = vpop.f32.mrf.mxu0
        %v5167 = vadd.f32 0.0, %v5166
        %v5168 = vpop.f32.mrf.mxu0
        %5169 = vdwg.mxu0
        %v5171 = vunpack.c.l.b16 %v4727
        %v5172 = vpack.c.b16 %v5171, %v4064
        %v5174 = vshrl.u32 %v5172, 16
        %v5176 = vshll.u32 %v5172, 16
        %v5178 = vrot.slane %v5176, 1
        %v5179 = vor.u32 %v5174, %v5178
        %v5181 = vsel %vm2080, %v5179, 0
        %5183 = vmatprep.subr.bf16.mxu0 0
        %5184 = vmatpush1.bf16.msra.mxu0 0
        %5185 = vmatprep.subr.bf16.mxu0 0
        %5186 = vmatpush1.bf16.msra.mxu0 0
        %5187 = vmatprep.subr.bf16.mxu0 0
        %5188 = vmatpush1.bf16.msra.mxu0 0
        %5189 = vmatprep.subr.bf16.mxu0 0
        %5190 = vmatpush1.bf16.msra.mxu0 0
        %5191 = vmatprep.subr.bf16.mxu0 0
        %5192 = vmatpush1.bf16.msra.mxu0 0
        %5193 = vmatprep.subr.bf16.mxu0 0
        %5194 = vmatpush1.bf16.msra.mxu0 0
        %5195 = vmatprep.subr.bf16.mxu0 0
        %5196 = vmatpush1.bf16.msra.mxu0 0
        %5197 = vmatprep.subr.bf16.mxu0 0
        %5198 = vmatpush1.bf16.msra.mxu0 %v4746
        %5199 = vmatprep.subr.bf16.mxu0 0
        %5200 = vmatpush2.bf16.msra.mxu0 0
        %5201 = vmatprep.subr.bf16.mxu0 0
        %5202 = vmatpush2.bf16.msra.mxu0 0
        %5203 = vmatprep.subr.bf16.mxu0 0
        %5204 = vmatpush2.bf16.msra.mxu0 0
        %5205 = vmatprep.subr.bf16.mxu0 0
        %5206 = vmatpush2.bf16.msra.mxu0 0
        %5207 = vmatprep.subr.bf16.mxu0 0
        %5208 = vmatpush2.bf16.msra.mxu0 0
        %5209 = vmatprep.subr.bf16.mxu0 0
        %5210 = vmatpush2.bf16.msra.mxu0 0
        %5211 = vmatprep.subr.bf16.mxu0 0
        %5212 = vmatpush2.bf16.msra.mxu0 0
        %5213 = vmatprep.subr.bf16.mxu0 0
        %5214 = vmatpush2.bf16.msra.mxu0 0
        %5215 = vmatprep.mubr.bf16.mxu0 0
        %5216 = vmatmul.mubr.bf16.gmra.mxu0 %v5181
        %v5217 = vpop.f32.mrf.mxu0
        %v5218 = vadd.f32 0.0, %v5217
        %v5219 = vpop.f32.mrf.mxu0
        %v5220 = vpop.f32.mrf.mxu0
        %v5221 = vadd.f32 0.0, %v5220
        %v5222 = vpop.f32.mrf.mxu0
        %5223 = vdwg.mxu0
        %v5225 = vunpack.c.l.b16 %v4728
        %v5226 = vpack.c.b16 %v5225, %v4113
        %v5228 = vshrl.u32 %v5226, 16
        %v5230 = vshll.u32 %v5226, 16
        %v5232 = vrot.slane %v5230, 1
        %v5233 = vor.u32 %v5228, %v5232
        %v5235 = vsel %vm2080, %v5233, 0
        %5237 = vmatprep.subr.bf16.mxu0 0
        %5238 = vmatpush1.bf16.msra.mxu0 0
        %5239 = vmatprep.subr.bf16.mxu0 0
        %5240 = vmatpush1.bf16.msra.mxu0 0
        %5241 = vmatprep.subr.bf16.mxu0 0
        %5242 = vmatpush1.bf16.msra.mxu0 0
        %5243 = vmatprep.subr.bf16.mxu0 0
        %5244 = vmatpush1.bf16.msra.mxu0 0
        %5245 = vmatprep.subr.bf16.mxu0 0
        %5246 = vmatpush1.bf16.msra.mxu0 0
        %5247 = vmatprep.subr.bf16.mxu0 0
        %5248 = vmatpush1.bf16.msra.mxu0 0
        %5249 = vmatprep.subr.bf16.mxu0 0
        %5250 = vmatpush1.bf16.msra.mxu0 0
        %5251 = vmatprep.subr.bf16.mxu0 0
        %5252 = vmatpush1.bf16.msra.mxu0 %v4746
        %5253 = vmatprep.subr.bf16.mxu0 0
        %5254 = vmatpush2.bf16.msra.mxu0 0
        %5255 = vmatprep.subr.bf16.mxu0 0
        %5256 = vmatpush2.bf16.msra.mxu0 0
        %5257 = vmatprep.subr.bf16.mxu0 0
        %5258 = vmatpush2.bf16.msra.mxu0 0
        %5259 = vmatprep.subr.bf16.mxu0 0
        %5260 = vmatpush2.bf16.msra.mxu0 0
        %5261 = vmatprep.subr.bf16.mxu0 0
        %5262 = vmatpush2.bf16.msra.mxu0 0
        %5263 = vmatprep.subr.bf16.mxu0 0
        %5264 = vmatpush2.bf16.msra.mxu0 0
        %5265 = vmatprep.subr.bf16.mxu0 0
        %5266 = vmatpush2.bf16.msra.mxu0 0
        %5267 = vmatprep.subr.bf16.mxu0 0
        %5268 = vmatpush2.bf16.msra.mxu0 0
        %5269 = vmatprep.mubr.bf16.mxu0 0
        %5270 = vmatmul.mubr.bf16.gmra.mxu0 %v5235
        %v5271 = vpop.f32.mrf.mxu0
        %v5272 = vadd.f32 0.0, %v5271
        %v5273 = vpop.f32.mrf.mxu0
        %v5274 = vpop.f32.mrf.mxu0
        %v5275 = vadd.f32 0.0, %v5274
        %v5276 = vpop.f32.mrf.mxu0
        %5277 = vdwg.mxu0
        %v5278 = vadd.f32 %v4699, %v4786
        %v5279 = vadd.f32 %v4700, %v4789
        %v5280 = vadd.f32 %v4701, %v4840
        %v5281 = vadd.f32 %v4702, %v4843
        %v5282 = vadd.f32 %v4703, %v4894
        %v5283 = vadd.f32 %v4704, %v4897
        %v5284 = vadd.f32 %v4705, %v4948
        %v5285 = vadd.f32 %v4706, %v4951
        %v5286 = vadd.f32 %v4707, %v5002
        %v5287 = vadd.f32 %v4708, %v5005
        %v5288 = vadd.f32 %v4709, %v5056
        %v5289 = vadd.f32 %v4710, %v5059
        %v5290 = vadd.f32 %v4711, %v5110
        %v5291 = vadd.f32 %v4712, %v5113
        %v5292 = vadd.f32 %v4713, %v5164
        %v5293 = vadd.f32 %v4714, %v5167
        %v5294 = vadd.f32 %v4715, %v5218
        %v5295 = vadd.f32 %v4716, %v5221
        %v5296 = vadd.f32 %v4717, %v5272
        %v5297 = vadd.f32 %v4718, %v5275
        %s5298 = scalar_lea.vmem [#allocation2], 8
        %v5299 = vld [vmem:[%s5298] sm:$0xf]
        %v5300 = vld [vmem:[%s5298 + $0x4] sm:$0x1]
        %v5301 = vld [vmem:[%s5298 + $0x8] sm:$0xf]
        %v5302 = vld [vmem:[%s5298 + $0xc] sm:$0x1]
        %v5303 = vld [vmem:[%s5298 + $0x10] sm:$0xf]
        %v5304 = vld [vmem:[%s5298 + $0x14] sm:$0x1]
        %v5305 = vld [vmem:[%s5298 + $0x18] sm:$0xf]
        %v5306 = vld [vmem:[%s5298 + $0x1c] sm:$0x1]
        %v5307 = vld [vmem:[%s5298 + $0x20] sm:$0xf]
        %v5308 = vld [vmem:[%s5298 + $0x24] sm:$0x1]
        %v5309 = vld [vmem:[%s5298 + $0x28] sm:$0xf]
        %v5310 = vld [vmem:[%s5298 + $0x2c] sm:$0x1]
        %v5311 = vld [vmem:[%s5298 + $0x30] sm:$0xf]
        %v5312 = vld [vmem:[%s5298 + $0x34] sm:$0x1]
        %v5313 = vld [vmem:[%s5298 + $0x38] sm:$0xf]
        %v5314 = vld [vmem:[%s5298 + $0x3c] sm:$0x1]
        %v5315 = vld [vmem:[%s5298 + $0x40] sm:$0xf]
        %v5316 = vld [vmem:[%s5298 + $0x44] sm:$0x1]
        %v5317 = vld [vmem:[%s5298 + $0x48] sm:$0xf]
        %v5318 = vld [vmem:[%s5298 + $0x4c] sm:$0x1]
        %s5319 = scalar_lea.vmem %s2, 48
        %v5320 = vld [vmem:[%s5319] sm:$0xf]
        %v5321 = vld [vmem:[%s5319 + $0x4] sm:$0xf]
        %v5324 = vunpack.c.l.b16 %v5299
        %v5325 = vunpack.c.l.b16 %v5300
        %v5326 = vpack.c.b16 %v5325, %v5324
        %v5329 = vunpack.c.l.b16 %v5320
        %v5330 = vunpack.c.l.b16 %v5321
        %v5331 = vpack.c.b16 %v5330, %v5329
        %v5334 = vsel %vm2080, %v5326, 0
        %5336 = vmatprep.subr.bf16.mxu0 0
        %5337 = vmatpush1.bf16.msra.mxu0 0
        %5338 = vmatprep.subr.bf16.mxu0 0
        %5339 = vmatpush1.bf16.msra.mxu0 0
        %5340 = vmatprep.subr.bf16.mxu0 0
        %5341 = vmatpush1.bf16.msra.mxu0 0
        %5342 = vmatprep.subr.bf16.mxu0 0
        %5343 = vmatpush1.bf16.msra.mxu0 0
        %5344 = vmatprep.subr.bf16.mxu0 0
        %5345 = vmatpush1.bf16.msra.mxu0 0
        %5346 = vmatprep.subr.bf16.mxu0 0
        %5347 = vmatpush1.bf16.msra.mxu0 0
        %5348 = vmatprep.subr.bf16.mxu0 0
        %5349 = vmatpush1.bf16.msra.mxu0 0
        %5350 = vmatprep.subr.bf16.mxu0 0
        %5351 = vmatpush1.bf16.msra.mxu0 %v5331
        %5352 = vmatprep.subr.bf16.mxu0 0
        %5353 = vmatpush2.bf16.msra.mxu0 0
        %5354 = vmatprep.subr.bf16.mxu0 0
        %5355 = vmatpush2.bf16.msra.mxu0 0
        %5356 = vmatprep.subr.bf16.mxu0 0
        %5357 = vmatpush2.bf16.msra.mxu0 0
        %5358 = vmatprep.subr.bf16.mxu0 0
        %5359 = vmatpush2.bf16.msra.mxu0 0
        %5360 = vmatprep.subr.bf16.mxu0 0
        %5361 = vmatpush2.bf16.msra.mxu0 0
        %5362 = vmatprep.subr.bf16.mxu0 0
        %5363 = vmatpush2.bf16.msra.mxu0 0
        %5364 = vmatprep.subr.bf16.mxu0 0
        %5365 = vmatpush2.bf16.msra.mxu0 0
        %5366 = vmatprep.subr.bf16.mxu0 0
        %5367 = vmatpush2.bf16.msra.mxu0 0
        %5368 = vmatprep.mubr.bf16.mxu0 0
        %5369 = vmatmul.mubr.bf16.gmra.mxu0 %v5334
        %v5370 = vpop.f32.mrf.mxu0
        %v5371 = vadd.f32 0.0, %v5370
        %v5372 = vpop.f32.mrf.mxu0
        %v5373 = vpop.f32.mrf.mxu0
        %v5374 = vadd.f32 0.0, %v5373
        %v5375 = vpop.f32.mrf.mxu0
        %5376 = vdwg.mxu0
        %v5379 = vunpack.c.l.b16 %v5301
        %v5380 = vunpack.c.l.b16 %v5302
        %v5381 = vpack.c.b16 %v5380, %v5379
        %v5383 = vsel %vm2080, %v5381, 0
        %5385 = vmatprep.subr.bf16.mxu0 0
        %5386 = vmatpush1.bf16.msra.mxu0 0
        %5387 = vmatprep.subr.bf16.mxu0 0
        %5388 = vmatpush1.bf16.msra.mxu0 0
        %5389 = vmatprep.subr.bf16.mxu0 0
        %5390 = vmatpush1.bf16.msra.mxu0 0
        %5391 = vmatprep.subr.bf16.mxu0 0
        %5392 = vmatpush1.bf16.msra.mxu0 0
        %5393 = vmatprep.subr.bf16.mxu0 0
        %5394 = vmatpush1.bf16.msra.mxu0 0
        %5395 = vmatprep.subr.bf16.mxu0 0
        %5396 = vmatpush1.bf16.msra.mxu0 0
        %5397 = vmatprep.subr.bf16.mxu0 0
        %5398 = vmatpush1.bf16.msra.mxu0 0
        %5399 = vmatprep.subr.bf16.mxu0 0
        %5400 = vmatpush1.bf16.msra.mxu0 %v5331
        %5401 = vmatprep.subr.bf16.mxu0 0
        %5402 = vmatpush2.bf16.msra.mxu0 0
        %5403 = vmatprep.subr.bf16.mxu0 0
        %5404 = vmatpush2.bf16.msra.mxu0 0
        %5405 = vmatprep.subr.bf16.mxu0 0
        %5406 = vmatpush2.bf16.msra.mxu0 0
        %5407 = vmatprep.subr.bf16.mxu0 0
        %5408 = vmatpush2.bf16.msra.mxu0 0
        %5409 = vmatprep.subr.bf16.mxu0 0
        %5410 = vmatpush2.bf16.msra.mxu0 0
        %5411 = vmatprep.subr.bf16.mxu0 0
        %5412 = vmatpush2.bf16.msra.mxu0 0
        %5413 = vmatprep.subr.bf16.mxu0 0
        %5414 = vmatpush2.bf16.msra.mxu0 0
        %5415 = vmatprep.subr.bf16.mxu0 0
        %5416 = vmatpush2.bf16.msra.mxu0 0
        %5417 = vmatprep.mubr.bf16.mxu0 0
        %5418 = vmatmul.mubr.bf16.gmra.mxu0 %v5383
        %v5419 = vpop.f32.mrf.mxu0
        %v5420 = vadd.f32 0.0, %v5419
        %v5421 = vpop.f32.mrf.mxu0
        %v5422 = vpop.f32.mrf.mxu0
        %v5423 = vadd.f32 0.0, %v5422
        %v5424 = vpop.f32.mrf.mxu0
        %5425 = vdwg.mxu0
        %v5428 = vunpack.c.l.b16 %v5303
        %v5429 = vunpack.c.l.b16 %v5304
        %v5430 = vpack.c.b16 %v5429, %v5428
        %v5432 = vsel %vm2080, %v5430, 0
        %5434 = vmatprep.subr.bf16.mxu0 0
        %5435 = vmatpush1.bf16.msra.mxu0 0
        %5436 = vmatprep.subr.bf16.mxu0 0
        %5437 = vmatpush1.bf16.msra.mxu0 0
        %5438 = vmatprep.subr.bf16.mxu0 0
        %5439 = vmatpush1.bf16.msra.mxu0 0
        %5440 = vmatprep.subr.bf16.mxu0 0
        %5441 = vmatpush1.bf16.msra.mxu0 0
        %5442 = vmatprep.subr.bf16.mxu0 0
        %5443 = vmatpush1.bf16.msra.mxu0 0
        %5444 = vmatprep.subr.bf16.mxu0 0
        %5445 = vmatpush1.bf16.msra.mxu0 0
        %5446 = vmatprep.subr.bf16.mxu0 0
        %5447 = vmatpush1.bf16.msra.mxu0 0
        %5448 = vmatprep.subr.bf16.mxu0 0
        %5449 = vmatpush1.bf16.msra.mxu0 %v5331
        %5450 = vmatprep.subr.bf16.mxu0 0
        %5451 = vmatpush2.bf16.msra.mxu0 0
        %5452 = vmatprep.subr.bf16.mxu0 0
        %5453 = vmatpush2.bf16.msra.mxu0 0
        %5454 = vmatprep.subr.bf16.mxu0 0
        %5455 = vmatpush2.bf16.msra.mxu0 0
        %5456 = vmatprep.subr.bf16.mxu0 0
        %5457 = vmatpush2.bf16.msra.mxu0 0
        %5458 = vmatprep.subr.bf16.mxu0 0
        %5459 = vmatpush2.bf16.msra.mxu0 0
        %5460 = vmatprep.subr.bf16.mxu0 0
        %5461 = vmatpush2.bf16.msra.mxu0 0
        %5462 = vmatprep.subr.bf16.mxu0 0
        %5463 = vmatpush2.bf16.msra.mxu0 0
        %5464 = vmatprep.subr.bf16.mxu0 0
        %5465 = vmatpush2.bf16.msra.mxu0 0
        %5466 = vmatprep.mubr.bf16.mxu0 0
        %5467 = vmatmul.mubr.bf16.gmra.mxu0 %v5432
        %v5468 = vpop.f32.mrf.mxu0
        %v5469 = vadd.f32 0.0, %v5468
        %v5470 = vpop.f32.mrf.mxu0
        %v5471 = vpop.f32.mrf.mxu0
        %v5472 = vadd.f32 0.0, %v5471
        %v5473 = vpop.f32.mrf.mxu0
        %5474 = vdwg.mxu0
        %v5477 = vunpack.c.l.b16 %v5305
        %v5478 = vunpack.c.l.b16 %v5306
        %v5479 = vpack.c.b16 %v5478, %v5477
        %v5481 = vsel %vm2080, %v5479, 0
        %5483 = vmatprep.subr.bf16.mxu0 0
        %5484 = vmatpush1.bf16.msra.mxu0 0
        %5485 = vmatprep.subr.bf16.mxu0 0
        %5486 = vmatpush1.bf16.msra.mxu0 0
        %5487 = vmatprep.subr.bf16.mxu0 0
        %5488 = vmatpush1.bf16.msra.mxu0 0
        %5489 = vmatprep.subr.bf16.mxu0 0
        %5490 = vmatpush1.bf16.msra.mxu0 0
        %5491 = vmatprep.subr.bf16.mxu0 0
        %5492 = vmatpush1.bf16.msra.mxu0 0
        %5493 = vmatprep.subr.bf16.mxu0 0
        %5494 = vmatpush1.bf16.msra.mxu0 0
        %5495 = vmatprep.subr.bf16.mxu0 0
        %5496 = vmatpush1.bf16.msra.mxu0 0
        %5497 = vmatprep.subr.bf16.mxu0 0
        %5498 = vmatpush1.bf16.msra.mxu0 %v5331
        %5499 = vmatprep.subr.bf16.mxu0 0
        %5500 = vmatpush2.bf16.msra.mxu0 0
        %5501 = vmatprep.subr.bf16.mxu0 0
        %5502 = vmatpush2.bf16.msra.mxu0 0
        %5503 = vmatprep.subr.bf16.mxu0 0
        %5504 = vmatpush2.bf16.msra.mxu0 0
        %5505 = vmatprep.subr.bf16.mxu0 0
        %5506 = vmatpush2.bf16.msra.mxu0 0
        %5507 = vmatprep.subr.bf16.mxu0 0
        %5508 = vmatpush2.bf16.msra.mxu0 0
        %5509 = vmatprep.subr.bf16.mxu0 0
        %5510 = vmatpush2.bf16.msra.mxu0 0
        %5511 = vmatprep.subr.bf16.mxu0 0
        %5512 = vmatpush2.bf16.msra.mxu0 0
        %5513 = vmatprep.subr.bf16.mxu0 0
        %5514 = vmatpush2.bf16.msra.mxu0 0
        %5515 = vmatprep.mubr.bf16.mxu0 0
        %5516 = vmatmul.mubr.bf16.gmra.mxu0 %v5481
        %v5517 = vpop.f32.mrf.mxu0
        %v5518 = vadd.f32 0.0, %v5517
        %v5519 = vpop.f32.mrf.mxu0
        %v5520 = vpop.f32.mrf.mxu0
        %v5521 = vadd.f32 0.0, %v5520
        %v5522 = vpop.f32.mrf.mxu0
        %5523 = vdwg.mxu0
        %v5526 = vunpack.c.l.b16 %v5307
        %v5527 = vunpack.c.l.b16 %v5308
        %v5528 = vpack.c.b16 %v5527, %v5526
        %v5530 = vsel %vm2080, %v5528, 0
        %5532 = vmatprep.subr.bf16.mxu0 0
        %5533 = vmatpush1.bf16.msra.mxu0 0
        %5534 = vmatprep.subr.bf16.mxu0 0
        %5535 = vmatpush1.bf16.msra.mxu0 0
        %5536 = vmatprep.subr.bf16.mxu0 0
        %5537 = vmatpush1.bf16.msra.mxu0 0
        %5538 = vmatprep.subr.bf16.mxu0 0
        %5539 = vmatpush1.bf16.msra.mxu0 0
        %5540 = vmatprep.subr.bf16.mxu0 0
        %5541 = vmatpush1.bf16.msra.mxu0 0
        %5542 = vmatprep.subr.bf16.mxu0 0
        %5543 = vmatpush1.bf16.msra.mxu0 0
        %5544 = vmatprep.subr.bf16.mxu0 0
        %5545 = vmatpush1.bf16.msra.mxu0 0
        %5546 = vmatprep.subr.bf16.mxu0 0
        %5547 = vmatpush1.bf16.msra.mxu0 %v5331
        %5548 = vmatprep.subr.bf16.mxu0 0
        %5549 = vmatpush2.bf16.msra.mxu0 0
        %5550 = vmatprep.subr.bf16.mxu0 0
        %5551 = vmatpush2.bf16.msra.mxu0 0
        %5552 = vmatprep.subr.bf16.mxu0 0
        %5553 = vmatpush2.bf16.msra.mxu0 0
        %5554 = vmatprep.subr.bf16.mxu0 0
        %5555 = vmatpush2.bf16.msra.mxu0 0
        %5556 = vmatprep.subr.bf16.mxu0 0
        %5557 = vmatpush2.bf16.msra.mxu0 0
        %5558 = vmatprep.subr.bf16.mxu0 0
        %5559 = vmatpush2.bf16.msra.mxu0 0
        %5560 = vmatprep.subr.bf16.mxu0 0
        %5561 = vmatpush2.bf16.msra.mxu0 0
        %5562 = vmatprep.subr.bf16.mxu0 0
        %5563 = vmatpush2.bf16.msra.mxu0 0
        %5564 = vmatprep.mubr.bf16.mxu0 0
        %5565 = vmatmul.mubr.bf16.gmra.mxu0 %v5530
        %v5566 = vpop.f32.mrf.mxu0
        %v5567 = vadd.f32 0.0, %v5566
        %v5568 = vpop.f32.mrf.mxu0
        %v5569 = vpop.f32.mrf.mxu0
        %v5570 = vadd.f32 0.0, %v5569
        %v5571 = vpop.f32.mrf.mxu0
        %5572 = vdwg.mxu0
        %v5575 = vunpack.c.l.b16 %v5309
        %v5576 = vunpack.c.l.b16 %v5310
        %v5577 = vpack.c.b16 %v5576, %v5575
        %v5579 = vsel %vm2080, %v5577, 0
        %5581 = vmatprep.subr.bf16.mxu0 0
        %5582 = vmatpush1.bf16.msra.mxu0 0
        %5583 = vmatprep.subr.bf16.mxu0 0
        %5584 = vmatpush1.bf16.msra.mxu0 0
        %5585 = vmatprep.subr.bf16.mxu0 0
        %5586 = vmatpush1.bf16.msra.mxu0 0
        %5587 = vmatprep.subr.bf16.mxu0 0
        %5588 = vmatpush1.bf16.msra.mxu0 0
        %5589 = vmatprep.subr.bf16.mxu0 0
        %5590 = vmatpush1.bf16.msra.mxu0 0
        %5591 = vmatprep.subr.bf16.mxu0 0
        %5592 = vmatpush1.bf16.msra.mxu0 0
        %5593 = vmatprep.subr.bf16.mxu0 0
        %5594 = vmatpush1.bf16.msra.mxu0 0
        %5595 = vmatprep.subr.bf16.mxu0 0
        %5596 = vmatpush1.bf16.msra.mxu0 %v5331
        %5597 = vmatprep.subr.bf16.mxu0 0
        %5598 = vmatpush2.bf16.msra.mxu0 0
        %5599 = vmatprep.subr.bf16.mxu0 0
        %5600 = vmatpush2.bf16.msra.mxu0 0
        %5601 = vmatprep.subr.bf16.mxu0 0
        %5602 = vmatpush2.bf16.msra.mxu0 0
        %5603 = vmatprep.subr.bf16.mxu0 0
        %5604 = vmatpush2.bf16.msra.mxu0 0
        %5605 = vmatprep.subr.bf16.mxu0 0
        %5606 = vmatpush2.bf16.msra.mxu0 0
        %5607 = vmatprep.subr.bf16.mxu0 0
        %5608 = vmatpush2.bf16.msra.mxu0 0
        %5609 = vmatprep.subr.bf16.mxu0 0
        %5610 = vmatpush2.bf16.msra.mxu0 0
        %5611 = vmatprep.subr.bf16.mxu0 0
        %5612 = vmatpush2.bf16.msra.mxu0 0
        %5613 = vmatprep.mubr.bf16.mxu0 0
        %5614 = vmatmul.mubr.bf16.gmra.mxu0 %v5579
        %v5615 = vpop.f32.mrf.mxu0
        %v5616 = vadd.f32 0.0, %v5615
        %v5617 = vpop.f32.mrf.mxu0
        %v5618 = vpop.f32.mrf.mxu0
        %v5619 = vadd.f32 0.0, %v5618
        %v5620 = vpop.f32.mrf.mxu0
        %5621 = vdwg.mxu0
        %v5624 = vunpack.c.l.b16 %v5311
        %v5625 = vunpack.c.l.b16 %v5312
        %v5626 = vpack.c.b16 %v5625, %v5624
        %v5628 = vsel %vm2080, %v5626, 0
        %5630 = vmatprep.subr.bf16.mxu0 0
        %5631 = vmatpush1.bf16.msra.mxu0 0
        %5632 = vmatprep.subr.bf16.mxu0 0
        %5633 = vmatpush1.bf16.msra.mxu0 0
        %5634 = vmatprep.subr.bf16.mxu0 0
        %5635 = vmatpush1.bf16.msra.mxu0 0
        %5636 = vmatprep.subr.bf16.mxu0 0
        %5637 = vmatpush1.bf16.msra.mxu0 0
        %5638 = vmatprep.subr.bf16.mxu0 0
        %5639 = vmatpush1.bf16.msra.mxu0 0
        %5640 = vmatprep.subr.bf16.mxu0 0
        %5641 = vmatpush1.bf16.msra.mxu0 0
        %5642 = vmatprep.subr.bf16.mxu0 0
        %5643 = vmatpush1.bf16.msra.mxu0 0
        %5644 = vmatprep.subr.bf16.mxu0 0
        %5645 = vmatpush1.bf16.msra.mxu0 %v5331
        %5646 = vmatprep.subr.bf16.mxu0 0
        %5647 = vmatpush2.bf16.msra.mxu0 0
        %5648 = vmatprep.subr.bf16.mxu0 0
        %5649 = vmatpush2.bf16.msra.mxu0 0
        %5650 = vmatprep.subr.bf16.mxu0 0
        %5651 = vmatpush2.bf16.msra.mxu0 0
        %5652 = vmatprep.subr.bf16.mxu0 0
        %5653 = vmatpush2.bf16.msra.mxu0 0
        %5654 = vmatprep.subr.bf16.mxu0 0
        %5655 = vmatpush2.bf16.msra.mxu0 0
        %5656 = vmatprep.subr.bf16.mxu0 0
        %5657 = vmatpush2.bf16.msra.mxu0 0
        %5658 = vmatprep.subr.bf16.mxu0 0
        %5659 = vmatpush2.bf16.msra.mxu0 0
        %5660 = vmatprep.subr.bf16.mxu0 0
        %5661 = vmatpush2.bf16.msra.mxu0 0
        %5662 = vmatprep.mubr.bf16.mxu0 0
        %5663 = vmatmul.mubr.bf16.gmra.mxu0 %v5628
        %v5664 = vpop.f32.mrf.mxu0
        %v5665 = vadd.f32 0.0, %v5664
        %v5666 = vpop.f32.mrf.mxu0
        %v5667 = vpop.f32.mrf.mxu0
        %v5668 = vadd.f32 0.0, %v5667
        %v5669 = vpop.f32.mrf.mxu0
        %5670 = vdwg.mxu0
        %v5673 = vunpack.c.l.b16 %v5313
        %v5674 = vunpack.c.l.b16 %v5314
        %v5675 = vpack.c.b16 %v5674, %v5673
        %v5677 = vsel %vm2080, %v5675, 0
        %5679 = vmatprep.subr.bf16.mxu0 0
        %5680 = vmatpush1.bf16.msra.mxu0 0
        %5681 = vmatprep.subr.bf16.mxu0 0
        %5682 = vmatpush1.bf16.msra.mxu0 0
        %5683 = vmatprep.subr.bf16.mxu0 0
        %5684 = vmatpush1.bf16.msra.mxu0 0
        %5685 = vmatprep.subr.bf16.mxu0 0
        %5686 = vmatpush1.bf16.msra.mxu0 0
        %5687 = vmatprep.subr.bf16.mxu0 0
        %5688 = vmatpush1.bf16.msra.mxu0 0
        %5689 = vmatprep.subr.bf16.mxu0 0
        %5690 = vmatpush1.bf16.msra.mxu0 0
        %5691 = vmatprep.subr.bf16.mxu0 0
        %5692 = vmatpush1.bf16.msra.mxu0 0
        %5693 = vmatprep.subr.bf16.mxu0 0
        %5694 = vmatpush1.bf16.msra.mxu0 %v5331
        %5695 = vmatprep.subr.bf16.mxu0 0
        %5696 = vmatpush2.bf16.msra.mxu0 0
        %5697 = vmatprep.subr.bf16.mxu0 0
        %5698 = vmatpush2.bf16.msra.mxu0 0
        %5699 = vmatprep.subr.bf16.mxu0 0
        %5700 = vmatpush2.bf16.msra.mxu0 0
        %5701 = vmatprep.subr.bf16.mxu0 0
        %5702 = vmatpush2.bf16.msra.mxu0 0
        %5703 = vmatprep.subr.bf16.mxu0 0
        %5704 = vmatpush2.bf16.msra.mxu0 0
        %5705 = vmatprep.subr.bf16.mxu0 0
        %5706 = vmatpush2.bf16.msra.mxu0 0
        %5707 = vmatprep.subr.bf16.mxu0 0
        %5708 = vmatpush2.bf16.msra.mxu0 0
        %5709 = vmatprep.subr.bf16.mxu0 0
        %5710 = vmatpush2.bf16.msra.mxu0 0
        %5711 = vmatprep.mubr.bf16.mxu0 0
        %5712 = vmatmul.mubr.bf16.gmra.mxu0 %v5677
        %v5713 = vpop.f32.mrf.mxu0
        %v5714 = vadd.f32 0.0, %v5713
        %v5715 = vpop.f32.mrf.mxu0
        %v5716 = vpop.f32.mrf.mxu0
        %v5717 = vadd.f32 0.0, %v5716
        %v5718 = vpop.f32.mrf.mxu0
        %5719 = vdwg.mxu0
        %v5722 = vunpack.c.l.b16 %v5315
        %v5723 = vunpack.c.l.b16 %v5316
        %v5724 = vpack.c.b16 %v5723, %v5722
        %v5726 = vsel %vm2080, %v5724, 0
        %5728 = vmatprep.subr.bf16.mxu0 0
        %5729 = vmatpush1.bf16.msra.mxu0 0
        %5730 = vmatprep.subr.bf16.mxu0 0
        %5731 = vmatpush1.bf16.msra.mxu0 0
        %5732 = vmatprep.subr.bf16.mxu0 0
        %5733 = vmatpush1.bf16.msra.mxu0 0
        %5734 = vmatprep.subr.bf16.mxu0 0
        %5735 = vmatpush1.bf16.msra.mxu0 0
        %5736 = vmatprep.subr.bf16.mxu0 0
        %5737 = vmatpush1.bf16.msra.mxu0 0
        %5738 = vmatprep.subr.bf16.mxu0 0
        %5739 = vmatpush1.bf16.msra.mxu0 0
        %5740 = vmatprep.subr.bf16.mxu0 0
        %5741 = vmatpush1.bf16.msra.mxu0 0
        %5742 = vmatprep.subr.bf16.mxu0 0
        %5743 = vmatpush1.bf16.msra.mxu0 %v5331
        %5744 = vmatprep.subr.bf16.mxu0 0
        %5745 = vmatpush2.bf16.msra.mxu0 0
        %5746 = vmatprep.subr.bf16.mxu0 0
        %5747 = vmatpush2.bf16.msra.mxu0 0
        %5748 = vmatprep.subr.bf16.mxu0 0
        %5749 = vmatpush2.bf16.msra.mxu0 0
        %5750 = vmatprep.subr.bf16.mxu0 0
        %5751 = vmatpush2.bf16.msra.mxu0 0
        %5752 = vmatprep.subr.bf16.mxu0 0
        %5753 = vmatpush2.bf16.msra.mxu0 0
        %5754 = vmatprep.subr.bf16.mxu0 0
        %5755 = vmatpush2.bf16.msra.mxu0 0
        %5756 = vmatprep.subr.bf16.mxu0 0
        %5757 = vmatpush2.bf16.msra.mxu0 0
        %5758 = vmatprep.subr.bf16.mxu0 0
        %5759 = vmatpush2.bf16.msra.mxu0 0
        %5760 = vmatprep.mubr.bf16.mxu0 0
        %5761 = vmatmul.mubr.bf16.gmra.mxu0 %v5726
        %v5762 = vpop.f32.mrf.mxu0
        %v5763 = vadd.f32 0.0, %v5762
        %v5764 = vpop.f32.mrf.mxu0
        %v5765 = vpop.f32.mrf.mxu0
        %v5766 = vadd.f32 0.0, %v5765
        %v5767 = vpop.f32.mrf.mxu0
        %5768 = vdwg.mxu0
        %v5771 = vunpack.c.l.b16 %v5317
        %v5772 = vunpack.c.l.b16 %v5318
        %v5773 = vpack.c.b16 %v5772, %v5771
        %v5775 = vsel %vm2080, %v5773, 0
        %5777 = vmatprep.subr.bf16.mxu0 0
        %5778 = vmatpush1.bf16.msra.mxu0 0
        %5779 = vmatprep.subr.bf16.mxu0 0
        %5780 = vmatpush1.bf16.msra.mxu0 0
        %5781 = vmatprep.subr.bf16.mxu0 0
        %5782 = vmatpush1.bf16.msra.mxu0 0
        %5783 = vmatprep.subr.bf16.mxu0 0
        %5784 = vmatpush1.bf16.msra.mxu0 0
        %5785 = vmatprep.subr.bf16.mxu0 0
        %5786 = vmatpush1.bf16.msra.mxu0 0
        %5787 = vmatprep.subr.bf16.mxu0 0
        %5788 = vmatpush1.bf16.msra.mxu0 0
        %5789 = vmatprep.subr.bf16.mxu0 0
        %5790 = vmatpush1.bf16.msra.mxu0 0
        %5791 = vmatprep.subr.bf16.mxu0 0
        %5792 = vmatpush1.bf16.msra.mxu0 %v5331
        %5793 = vmatprep.subr.bf16.mxu0 0
        %5794 = vmatpush2.bf16.msra.mxu0 0
        %5795 = vmatprep.subr.bf16.mxu0 0
        %5796 = vmatpush2.bf16.msra.mxu0 0
        %5797 = vmatprep.subr.bf16.mxu0 0
        %5798 = vmatpush2.bf16.msra.mxu0 0
        %5799 = vmatprep.subr.bf16.mxu0 0
        %5800 = vmatpush2.bf16.msra.mxu0 0
        %5801 = vmatprep.subr.bf16.mxu0 0
        %5802 = vmatpush2.bf16.msra.mxu0 0
        %5803 = vmatprep.subr.bf16.mxu0 0
        %5804 = vmatpush2.bf16.msra.mxu0 0
        %5805 = vmatprep.subr.bf16.mxu0 0
        %5806 = vmatpush2.bf16.msra.mxu0 0
        %5807 = vmatprep.subr.bf16.mxu0 0
        %5808 = vmatpush2.bf16.msra.mxu0 0
        %5809 = vmatprep.mubr.bf16.mxu0 0
        %5810 = vmatmul.mubr.bf16.gmra.mxu0 %v5775
        %v5811 = vpop.f32.mrf.mxu0
        %v5812 = vadd.f32 0.0, %v5811
        %v5813 = vpop.f32.mrf.mxu0
        %v5814 = vpop.f32.mrf.mxu0
        %v5815 = vadd.f32 0.0, %v5814
        %v5816 = vpop.f32.mrf.mxu0
        %5817 = vdwg.mxu0
        %v5818 = vadd.f32 %v5278, %v5371
        %v5819 = vadd.f32 %v5279, %v5374
        %v5820 = vadd.f32 %v5280, %v5420
        %v5821 = vadd.f32 %v5281, %v5423
        %v5822 = vadd.f32 %v5282, %v5469
        %v5823 = vadd.f32 %v5283, %v5472
        %v5824 = vadd.f32 %v5284, %v5518
        %v5825 = vadd.f32 %v5285, %v5521
        %v5826 = vadd.f32 %v5286, %v5567
        %v5827 = vadd.f32 %v5287, %v5570
        %v5828 = vadd.f32 %v5288, %v5616
        %v5829 = vadd.f32 %v5289, %v5619
        %v5830 = vadd.f32 %v5290, %v5665
        %v5831 = vadd.f32 %v5291, %v5668
        %v5832 = vadd.f32 %v5292, %v5714
        %v5833 = vadd.f32 %v5293, %v5717
        %v5834 = vadd.f32 %v5294, %v5763
        %v5835 = vadd.f32 %v5295, %v5766
        %v5836 = vadd.f32 %v5296, %v5812
        %v5837 = vadd.f32 %v5297, %v5815
        %s5838 = scalar_lea.vmem [#allocation2], 96
        %v5839 = vld [vmem:[%s5838] sm:$0xf]
        %v5840 = vld [vmem:[%s5838 + $0x4] sm:$0x1]
        %v5841 = vld [vmem:[%s5838 + $0x8] sm:$0xf]
        %v5842 = vld [vmem:[%s5838 + $0xc] sm:$0x1]
        %v5843 = vld [vmem:[%s5838 + $0x10] sm:$0xf]
        %v5844 = vld [vmem:[%s5838 + $0x14] sm:$0x1]
        %v5845 = vld [vmem:[%s5838 + $0x18] sm:$0xf]
        %v5846 = vld [vmem:[%s5838 + $0x1c] sm:$0x1]
        %v5847 = vld [vmem:[%s5838 + $0x20] sm:$0xf]
        %v5848 = vld [vmem:[%s5838 + $0x24] sm:$0x1]
        %v5849 = vld [vmem:[%s5838 + $0x28] sm:$0xf]
        %v5850 = vld [vmem:[%s5838 + $0x2c] sm:$0x1]
        %v5851 = vld [vmem:[%s5838 + $0x30] sm:$0xf]
        %v5852 = vld [vmem:[%s5838 + $0x34] sm:$0x1]
        %v5853 = vld [vmem:[%s5838 + $0x38] sm:$0xf]
        %v5854 = vld [vmem:[%s5838 + $0x3c] sm:$0x1]
        %v5855 = vld [vmem:[%s5838 + $0x40] sm:$0xf]
        %v5856 = vld [vmem:[%s5838 + $0x44] sm:$0x1]
        %v5857 = vld [vmem:[%s5838 + $0x48] sm:$0xf]
        %v5858 = vld [vmem:[%s5838 + $0x4c] sm:$0x1]
        %s5859 = scalar_lea.vmem %s2, 56
        %v5860 = vld [vmem:[%s5859] sm:$0xf]
        %v5861 = vld [vmem:[%s5859 + $0x4] sm:$0xf]
        %v5864 = vunpack.c.l.b16 %v5839
        %v5865 = vunpack.c.l.b16 %v5840
        %v5866 = vpack.c.b16 %v5865, %v5864
        %v5869 = vunpack.c.l.b16 %v5860
        %v5870 = vunpack.c.l.b16 %v5861
        %v5871 = vpack.c.b16 %v5870, %v5869
        %v5874 = vsel %vm2080, %v5866, 0
        %5876 = vmatprep.subr.bf16.mxu0 0
        %5877 = vmatpush1.bf16.msra.mxu0 0
        %5878 = vmatprep.subr.bf16.mxu0 0
        %5879 = vmatpush1.bf16.msra.mxu0 0
        %5880 = vmatprep.subr.bf16.mxu0 0
        %5881 = vmatpush1.bf16.msra.mxu0 0
        %5882 = vmatprep.subr.bf16.mxu0 0
        %5883 = vmatpush1.bf16.msra.mxu0 0
        %5884 = vmatprep.subr.bf16.mxu0 0
        %5885 = vmatpush1.bf16.msra.mxu0 0
        %5886 = vmatprep.subr.bf16.mxu0 0
        %5887 = vmatpush1.bf16.msra.mxu0 0
        %5888 = vmatprep.subr.bf16.mxu0 0
        %5889 = vmatpush1.bf16.msra.mxu0 0
        %5890 = vmatprep.subr.bf16.mxu0 0
        %5891 = vmatpush1.bf16.msra.mxu0 %v5871
        %5892 = vmatprep.subr.bf16.mxu0 0
        %5893 = vmatpush2.bf16.msra.mxu0 0
        %5894 = vmatprep.subr.bf16.mxu0 0
        %5895 = vmatpush2.bf16.msra.mxu0 0
        %5896 = vmatprep.subr.bf16.mxu0 0
        %5897 = vmatpush2.bf16.msra.mxu0 0
        %5898 = vmatprep.subr.bf16.mxu0 0
        %5899 = vmatpush2.bf16.msra.mxu0 0
        %5900 = vmatprep.subr.bf16.mxu0 0
        %5901 = vmatpush2.bf16.msra.mxu0 0
        %5902 = vmatprep.subr.bf16.mxu0 0
        %5903 = vmatpush2.bf16.msra.mxu0 0
        %5904 = vmatprep.subr.bf16.mxu0 0
        %5905 = vmatpush2.bf16.msra.mxu0 0
        %5906 = vmatprep.subr.bf16.mxu0 0
        %5907 = vmatpush2.bf16.msra.mxu0 0
        %5908 = vmatprep.mubr.bf16.mxu0 0
        %5909 = vmatmul.mubr.bf16.gmra.mxu0 %v5874
        %v5910 = vpop.f32.mrf.mxu0
        %v5911 = vadd.f32 0.0, %v5910
        %v5912 = vpop.f32.mrf.mxu0
        %v5913 = vpop.f32.mrf.mxu0
        %v5914 = vadd.f32 0.0, %v5913
        %v5915 = vpop.f32.mrf.mxu0
        %5916 = vdwg.mxu0
        %v5919 = vunpack.c.l.b16 %v5841
        %v5920 = vunpack.c.l.b16 %v5842
        %v5921 = vpack.c.b16 %v5920, %v5919
        %v5923 = vsel %vm2080, %v5921, 0
        %5925 = vmatprep.subr.bf16.mxu0 0
        %5926 = vmatpush1.bf16.msra.mxu0 0
        %5927 = vmatprep.subr.bf16.mxu0 0
        %5928 = vmatpush1.bf16.msra.mxu0 0
        %5929 = vmatprep.subr.bf16.mxu0 0
        %5930 = vmatpush1.bf16.msra.mxu0 0
        %5931 = vmatprep.subr.bf16.mxu0 0
        %5932 = vmatpush1.bf16.msra.mxu0 0
        %5933 = vmatprep.subr.bf16.mxu0 0
        %5934 = vmatpush1.bf16.msra.mxu0 0
        %5935 = vmatprep.subr.bf16.mxu0 0
        %5936 = vmatpush1.bf16.msra.mxu0 0
        %5937 = vmatprep.subr.bf16.mxu0 0
        %5938 = vmatpush1.bf16.msra.mxu0 0
        %5939 = vmatprep.subr.bf16.mxu0 0
        %5940 = vmatpush1.bf16.msra.mxu0 %v5871
        %5941 = vmatprep.subr.bf16.mxu0 0
        %5942 = vmatpush2.bf16.msra.mxu0 0
        %5943 = vmatprep.subr.bf16.mxu0 0
        %5944 = vmatpush2.bf16.msra.mxu0 0
        %5945 = vmatprep.subr.bf16.mxu0 0
        %5946 = vmatpush2.bf16.msra.mxu0 0
        %5947 = vmatprep.subr.bf16.mxu0 0
        %5948 = vmatpush2.bf16.msra.mxu0 0
        %5949 = vmatprep.subr.bf16.mxu0 0
        %5950 = vmatpush2.bf16.msra.mxu0 0
        %5951 = vmatprep.subr.bf16.mxu0 0
        %5952 = vmatpush2.bf16.msra.mxu0 0
        %5953 = vmatprep.subr.bf16.mxu0 0
        %5954 = vmatpush2.bf16.msra.mxu0 0
        %5955 = vmatprep.subr.bf16.mxu0 0
        %5956 = vmatpush2.bf16.msra.mxu0 0
        %5957 = vmatprep.mubr.bf16.mxu0 0
        %5958 = vmatmul.mubr.bf16.gmra.mxu0 %v5923
        %v5959 = vpop.f32.mrf.mxu0
        %v5960 = vadd.f32 0.0, %v5959
        %v5961 = vpop.f32.mrf.mxu0
        %v5962 = vpop.f32.mrf.mxu0
        %v5963 = vadd.f32 0.0, %v5962
        %v5964 = vpop.f32.mrf.mxu0
        %5965 = vdwg.mxu0
        %v5968 = vunpack.c.l.b16 %v5843
        %v5969 = vunpack.c.l.b16 %v5844
        %v5970 = vpack.c.b16 %v5969, %v5968
        %v5972 = vsel %vm2080, %v5970, 0
        %5974 = vmatprep.subr.bf16.mxu0 0
        %5975 = vmatpush1.bf16.msra.mxu0 0
        %5976 = vmatprep.subr.bf16.mxu0 0
        %5977 = vmatpush1.bf16.msra.mxu0 0
        %5978 = vmatprep.subr.bf16.mxu0 0
        %5979 = vmatpush1.bf16.msra.mxu0 0
        %5980 = vmatprep.subr.bf16.mxu0 0
        %5981 = vmatpush1.bf16.msra.mxu0 0
        %5982 = vmatprep.subr.bf16.mxu0 0
        %5983 = vmatpush1.bf16.msra.mxu0 0
        %5984 = vmatprep.subr.bf16.mxu0 0
        %5985 = vmatpush1.bf16.msra.mxu0 0
        %5986 = vmatprep.subr.bf16.mxu0 0
        %5987 = vmatpush1.bf16.msra.mxu0 0
        %5988 = vmatprep.subr.bf16.mxu0 0
        %5989 = vmatpush1.bf16.msra.mxu0 %v5871
        %5990 = vmatprep.subr.bf16.mxu0 0
        %5991 = vmatpush2.bf16.msra.mxu0 0
        %5992 = vmatprep.subr.bf16.mxu0 0
        %5993 = vmatpush2.bf16.msra.mxu0 0
        %5994 = vmatprep.subr.bf16.mxu0 0
        %5995 = vmatpush2.bf16.msra.mxu0 0
        %5996 = vmatprep.subr.bf16.mxu0 0
        %5997 = vmatpush2.bf16.msra.mxu0 0
        %5998 = vmatprep.subr.bf16.mxu0 0
        %5999 = vmatpush2.bf16.msra.mxu0 0
        %6000 = vmatprep.subr.bf16.mxu0 0
        %6001 = vmatpush2.bf16.msra.mxu0 0
        %6002 = vmatprep.subr.bf16.mxu0 0
        %6003 = vmatpush2.bf16.msra.mxu0 0
        %6004 = vmatprep.subr.bf16.mxu0 0
        %6005 = vmatpush2.bf16.msra.mxu0 0
        %6006 = vmatprep.mubr.bf16.mxu0 0
        %6007 = vmatmul.mubr.bf16.gmra.mxu0 %v5972
        %v6008 = vpop.f32.mrf.mxu0
        %v6009 = vadd.f32 0.0, %v6008
        %v6010 = vpop.f32.mrf.mxu0
        %v6011 = vpop.f32.mrf.mxu0
        %v6012 = vadd.f32 0.0, %v6011
        %v6013 = vpop.f32.mrf.mxu0
        %6014 = vdwg.mxu0
        %v6017 = vunpack.c.l.b16 %v5845
        %v6018 = vunpack.c.l.b16 %v5846
        %v6019 = vpack.c.b16 %v6018, %v6017
        %v6021 = vsel %vm2080, %v6019, 0
        %6023 = vmatprep.subr.bf16.mxu0 0
        %6024 = vmatpush1.bf16.msra.mxu0 0
        %6025 = vmatprep.subr.bf16.mxu0 0
        %6026 = vmatpush1.bf16.msra.mxu0 0
        %6027 = vmatprep.subr.bf16.mxu0 0
        %6028 = vmatpush1.bf16.msra.mxu0 0
        %6029 = vmatprep.subr.bf16.mxu0 0
        %6030 = vmatpush1.bf16.msra.mxu0 0
        %6031 = vmatprep.subr.bf16.mxu0 0
        %6032 = vmatpush1.bf16.msra.mxu0 0
        %6033 = vmatprep.subr.bf16.mxu0 0
        %6034 = vmatpush1.bf16.msra.mxu0 0
        %6035 = vmatprep.subr.bf16.mxu0 0
        %6036 = vmatpush1.bf16.msra.mxu0 0
        %6037 = vmatprep.subr.bf16.mxu0 0
        %6038 = vmatpush1.bf16.msra.mxu0 %v5871
        %6039 = vmatprep.subr.bf16.mxu0 0
        %6040 = vmatpush2.bf16.msra.mxu0 0
        %6041 = vmatprep.subr.bf16.mxu0 0
        %6042 = vmatpush2.bf16.msra.mxu0 0
        %6043 = vmatprep.subr.bf16.mxu0 0
        %6044 = vmatpush2.bf16.msra.mxu0 0
        %6045 = vmatprep.subr.bf16.mxu0 0
        %6046 = vmatpush2.bf16.msra.mxu0 0
        %6047 = vmatprep.subr.bf16.mxu0 0
        %6048 = vmatpush2.bf16.msra.mxu0 0
        %6049 = vmatprep.subr.bf16.mxu0 0
        %6050 = vmatpush2.bf16.msra.mxu0 0
        %6051 = vmatprep.subr.bf16.mxu0 0
        %6052 = vmatpush2.bf16.msra.mxu0 0
        %6053 = vmatprep.subr.bf16.mxu0 0
        %6054 = vmatpush2.bf16.msra.mxu0 0
        %6055 = vmatprep.mubr.bf16.mxu0 0
        %6056 = vmatmul.mubr.bf16.gmra.mxu0 %v6021
        %v6057 = vpop.f32.mrf.mxu0
        %v6058 = vadd.f32 0.0, %v6057
        %v6059 = vpop.f32.mrf.mxu0
        %v6060 = vpop.f32.mrf.mxu0
        %v6061 = vadd.f32 0.0, %v6060
        %v6062 = vpop.f32.mrf.mxu0
        %6063 = vdwg.mxu0
        %v6066 = vunpack.c.l.b16 %v5847
        %v6067 = vunpack.c.l.b16 %v5848
        %v6068 = vpack.c.b16 %v6067, %v6066
        %v6070 = vsel %vm2080, %v6068, 0
        %6072 = vmatprep.subr.bf16.mxu0 0
        %6073 = vmatpush1.bf16.msra.mxu0 0
        %6074 = vmatprep.subr.bf16.mxu0 0
        %6075 = vmatpush1.bf16.msra.mxu0 0
        %6076 = vmatprep.subr.bf16.mxu0 0
        %6077 = vmatpush1.bf16.msra.mxu0 0
        %6078 = vmatprep.subr.bf16.mxu0 0
        %6079 = vmatpush1.bf16.msra.mxu0 0
        %6080 = vmatprep.subr.bf16.mxu0 0
        %6081 = vmatpush1.bf16.msra.mxu0 0
        %6082 = vmatprep.subr.bf16.mxu0 0
        %6083 = vmatpush1.bf16.msra.mxu0 0
        %6084 = vmatprep.subr.bf16.mxu0 0
        %6085 = vmatpush1.bf16.msra.mxu0 0
        %6086 = vmatprep.subr.bf16.mxu0 0
        %6087 = vmatpush1.bf16.msra.mxu0 %v5871
        %6088 = vmatprep.subr.bf16.mxu0 0
        %6089 = vmatpush2.bf16.msra.mxu0 0
        %6090 = vmatprep.subr.bf16.mxu0 0
        %6091 = vmatpush2.bf16.msra.mxu0 0
        %6092 = vmatprep.subr.bf16.mxu0 0
        %6093 = vmatpush2.bf16.msra.mxu0 0
        %6094 = vmatprep.subr.bf16.mxu0 0
        %6095 = vmatpush2.bf16.msra.mxu0 0
        %6096 = vmatprep.subr.bf16.mxu0 0
        %6097 = vmatpush2.bf16.msra.mxu0 0
        %6098 = vmatprep.subr.bf16.mxu0 0
        %6099 = vmatpush2.bf16.msra.mxu0 0
        %6100 = vmatprep.subr.bf16.mxu0 0
        %6101 = vmatpush2.bf16.msra.mxu0 0
        %6102 = vmatprep.subr.bf16.mxu0 0
        %6103 = vmatpush2.bf16.msra.mxu0 0
        %6104 = vmatprep.mubr.bf16.mxu0 0
        %6105 = vmatmul.mubr.bf16.gmra.mxu0 %v6070
        %v6106 = vpop.f32.mrf.mxu0
        %v6107 = vadd.f32 0.0, %v6106
        %v6108 = vpop.f32.mrf.mxu0
        %v6109 = vpop.f32.mrf.mxu0
        %v6110 = vadd.f32 0.0, %v6109
        %v6111 = vpop.f32.mrf.mxu0
        %6112 = vdwg.mxu0
        %v6115 = vunpack.c.l.b16 %v5849
        %v6116 = vunpack.c.l.b16 %v5850
        %v6117 = vpack.c.b16 %v6116, %v6115
        %v6119 = vsel %vm2080, %v6117, 0
        %6121 = vmatprep.subr.bf16.mxu0 0
        %6122 = vmatpush1.bf16.msra.mxu0 0
        %6123 = vmatprep.subr.bf16.mxu0 0
        %6124 = vmatpush1.bf16.msra.mxu0 0
        %6125 = vmatprep.subr.bf16.mxu0 0
        %6126 = vmatpush1.bf16.msra.mxu0 0
        %6127 = vmatprep.subr.bf16.mxu0 0
        %6128 = vmatpush1.bf16.msra.mxu0 0
        %6129 = vmatprep.subr.bf16.mxu0 0
        %6130 = vmatpush1.bf16.msra.mxu0 0
        %6131 = vmatprep.subr.bf16.mxu0 0
        %6132 = vmatpush1.bf16.msra.mxu0 0
        %6133 = vmatprep.subr.bf16.mxu0 0
        %6134 = vmatpush1.bf16.msra.mxu0 0
        %6135 = vmatprep.subr.bf16.mxu0 0
        %6136 = vmatpush1.bf16.msra.mxu0 %v5871
        %6137 = vmatprep.subr.bf16.mxu0 0
        %6138 = vmatpush2.bf16.msra.mxu0 0
        %6139 = vmatprep.subr.bf16.mxu0 0
        %6140 = vmatpush2.bf16.msra.mxu0 0
        %6141 = vmatprep.subr.bf16.mxu0 0
        %6142 = vmatpush2.bf16.msra.mxu0 0
        %6143 = vmatprep.subr.bf16.mxu0 0
        %6144 = vmatpush2.bf16.msra.mxu0 0
        %6145 = vmatprep.subr.bf16.mxu0 0
        %6146 = vmatpush2.bf16.msra.mxu0 0
        %6147 = vmatprep.subr.bf16.mxu0 0
        %6148 = vmatpush2.bf16.msra.mxu0 0
        %6149 = vmatprep.subr.bf16.mxu0 0
        %6150 = vmatpush2.bf16.msra.mxu0 0
        %6151 = vmatprep.subr.bf16.mxu0 0
        %6152 = vmatpush2.bf16.msra.mxu0 0
        %6153 = vmatprep.mubr.bf16.mxu0 0
        %6154 = vmatmul.mubr.bf16.gmra.mxu0 %v6119
        %v6155 = vpop.f32.mrf.mxu0
        %v6156 = vadd.f32 0.0, %v6155
        %v6157 = vpop.f32.mrf.mxu0
        %v6158 = vpop.f32.mrf.mxu0
        %v6159 = vadd.f32 0.0, %v6158
        %v6160 = vpop.f32.mrf.mxu0
        %6161 = vdwg.mxu0
        %v6164 = vunpack.c.l.b16 %v5851
        %v6165 = vunpack.c.l.b16 %v5852
        %v6166 = vpack.c.b16 %v6165, %v6164
        %v6168 = vsel %vm2080, %v6166, 0
        %6170 = vmatprep.subr.bf16.mxu0 0
        %6171 = vmatpush1.bf16.msra.mxu0 0
        %6172 = vmatprep.subr.bf16.mxu0 0
        %6173 = vmatpush1.bf16.msra.mxu0 0
        %6174 = vmatprep.subr.bf16.mxu0 0
        %6175 = vmatpush1.bf16.msra.mxu0 0
        %6176 = vmatprep.subr.bf16.mxu0 0
        %6177 = vmatpush1.bf16.msra.mxu0 0
        %6178 = vmatprep.subr.bf16.mxu0 0
        %6179 = vmatpush1.bf16.msra.mxu0 0
        %6180 = vmatprep.subr.bf16.mxu0 0
        %6181 = vmatpush1.bf16.msra.mxu0 0
        %6182 = vmatprep.subr.bf16.mxu0 0
        %6183 = vmatpush1.bf16.msra.mxu0 0
        %6184 = vmatprep.subr.bf16.mxu0 0
        %6185 = vmatpush1.bf16.msra.mxu0 %v5871
        %6186 = vmatprep.subr.bf16.mxu0 0
        %6187 = vmatpush2.bf16.msra.mxu0 0
        %6188 = vmatprep.subr.bf16.mxu0 0
        %6189 = vmatpush2.bf16.msra.mxu0 0
        %6190 = vmatprep.subr.bf16.mxu0 0
        %6191 = vmatpush2.bf16.msra.mxu0 0
        %6192 = vmatprep.subr.bf16.mxu0 0
        %6193 = vmatpush2.bf16.msra.mxu0 0
        %6194 = vmatprep.subr.bf16.mxu0 0
        %6195 = vmatpush2.bf16.msra.mxu0 0
        %6196 = vmatprep.subr.bf16.mxu0 0
        %6197 = vmatpush2.bf16.msra.mxu0 0
        %6198 = vmatprep.subr.bf16.mxu0 0
        %6199 = vmatpush2.bf16.msra.mxu0 0
        %6200 = vmatprep.subr.bf16.mxu0 0
        %6201 = vmatpush2.bf16.msra.mxu0 0
        %6202 = vmatprep.mubr.bf16.mxu0 0
        %6203 = vmatmul.mubr.bf16.gmra.mxu0 %v6168
        %v6204 = vpop.f32.mrf.mxu0
        %v6205 = vadd.f32 0.0, %v6204
        %v6206 = vpop.f32.mrf.mxu0
        %v6207 = vpop.f32.mrf.mxu0
        %v6208 = vadd.f32 0.0, %v6207
        %v6209 = vpop.f32.mrf.mxu0
        %6210 = vdwg.mxu0
        %v6213 = vunpack.c.l.b16 %v5853
        %v6214 = vunpack.c.l.b16 %v5854
        %v6215 = vpack.c.b16 %v6214, %v6213
        %v6217 = vsel %vm2080, %v6215, 0
        %6219 = vmatprep.subr.bf16.mxu0 0
        %6220 = vmatpush1.bf16.msra.mxu0 0
        %6221 = vmatprep.subr.bf16.mxu0 0
        %6222 = vmatpush1.bf16.msra.mxu0 0
        %6223 = vmatprep.subr.bf16.mxu0 0
        %6224 = vmatpush1.bf16.msra.mxu0 0
        %6225 = vmatprep.subr.bf16.mxu0 0
        %6226 = vmatpush1.bf16.msra.mxu0 0
        %6227 = vmatprep.subr.bf16.mxu0 0
        %6228 = vmatpush1.bf16.msra.mxu0 0
        %6229 = vmatprep.subr.bf16.mxu0 0
        %6230 = vmatpush1.bf16.msra.mxu0 0
        %6231 = vmatprep.subr.bf16.mxu0 0
        %6232 = vmatpush1.bf16.msra.mxu0 0
        %6233 = vmatprep.subr.bf16.mxu0 0
        %6234 = vmatpush1.bf16.msra.mxu0 %v5871
        %6235 = vmatprep.subr.bf16.mxu0 0
        %6236 = vmatpush2.bf16.msra.mxu0 0
        %6237 = vmatprep.subr.bf16.mxu0 0
        %6238 = vmatpush2.bf16.msra.mxu0 0
        %6239 = vmatprep.subr.bf16.mxu0 0
        %6240 = vmatpush2.bf16.msra.mxu0 0
        %6241 = vmatprep.subr.bf16.mxu0 0
        %6242 = vmatpush2.bf16.msra.mxu0 0
        %6243 = vmatprep.subr.bf16.mxu0 0
        %6244 = vmatpush2.bf16.msra.mxu0 0
        %6245 = vmatprep.subr.bf16.mxu0 0
        %6246 = vmatpush2.bf16.msra.mxu0 0
        %6247 = vmatprep.subr.bf16.mxu0 0
        %6248 = vmatpush2.bf16.msra.mxu0 0
        %6249 = vmatprep.subr.bf16.mxu0 0
        %6250 = vmatpush2.bf16.msra.mxu0 0
        %6251 = vmatprep.mubr.bf16.mxu0 0
        %6252 = vmatmul.mubr.bf16.gmra.mxu0 %v6217
        %v6253 = vpop.f32.mrf.mxu0
        %v6254 = vadd.f32 0.0, %v6253
        %v6255 = vpop.f32.mrf.mxu0
        %v6256 = vpop.f32.mrf.mxu0
        %v6257 = vadd.f32 0.0, %v6256
        %v6258 = vpop.f32.mrf.mxu0
        %6259 = vdwg.mxu0
        %v6262 = vunpack.c.l.b16 %v5855
        %v6263 = vunpack.c.l.b16 %v5856
        %v6264 = vpack.c.b16 %v6263, %v6262
        %v6266 = vsel %vm2080, %v6264, 0
        %6268 = vmatprep.subr.bf16.mxu0 0
        %6269 = vmatpush1.bf16.msra.mxu0 0
        %6270 = vmatprep.subr.bf16.mxu0 0
        %6271 = vmatpush1.bf16.msra.mxu0 0
        %6272 = vmatprep.subr.bf16.mxu0 0
        %6273 = vmatpush1.bf16.msra.mxu0 0
        %6274 = vmatprep.subr.bf16.mxu0 0
        %6275 = vmatpush1.bf16.msra.mxu0 0
        %6276 = vmatprep.subr.bf16.mxu0 0
        %6277 = vmatpush1.bf16.msra.mxu0 0
        %6278 = vmatprep.subr.bf16.mxu0 0
        %6279 = vmatpush1.bf16.msra.mxu0 0
        %6280 = vmatprep.subr.bf16.mxu0 0
        %6281 = vmatpush1.bf16.msra.mxu0 0
        %6282 = vmatprep.subr.bf16.mxu0 0
        %6283 = vmatpush1.bf16.msra.mxu0 %v5871
        %6284 = vmatprep.subr.bf16.mxu0 0
        %6285 = vmatpush2.bf16.msra.mxu0 0
        %6286 = vmatprep.subr.bf16.mxu0 0
        %6287 = vmatpush2.bf16.msra.mxu0 0
        %6288 = vmatprep.subr.bf16.mxu0 0
        %6289 = vmatpush2.bf16.msra.mxu0 0
        %6290 = vmatprep.subr.bf16.mxu0 0
        %6291 = vmatpush2.bf16.msra.mxu0 0
        %6292 = vmatprep.subr.bf16.mxu0 0
        %6293 = vmatpush2.bf16.msra.mxu0 0
        %6294 = vmatprep.subr.bf16.mxu0 0
        %6295 = vmatpush2.bf16.msra.mxu0 0
        %6296 = vmatprep.subr.bf16.mxu0 0
        %6297 = vmatpush2.bf16.msra.mxu0 0
        %6298 = vmatprep.subr.bf16.mxu0 0
        %6299 = vmatpush2.bf16.msra.mxu0 0
        %6300 = vmatprep.mubr.bf16.mxu0 0
        %6301 = vmatmul.mubr.bf16.gmra.mxu0 %v6266
        %v6302 = vpop.f32.mrf.mxu0
        %v6303 = vadd.f32 0.0, %v6302
        %v6304 = vpop.f32.mrf.mxu0
        %v6305 = vpop.f32.mrf.mxu0
        %v6306 = vadd.f32 0.0, %v6305
        %v6307 = vpop.f32.mrf.mxu0
        %6308 = vdwg.mxu0
        %v6311 = vunpack.c.l.b16 %v5857
        %v6312 = vunpack.c.l.b16 %v5858
        %v6313 = vpack.c.b16 %v6312, %v6311
        %v6315 = vsel %vm2080, %v6313, 0
        %6317 = vmatprep.subr.bf16.mxu0 0
        %6318 = vmatpush1.bf16.msra.mxu0 0
        %6319 = vmatprep.subr.bf16.mxu0 0
        %6320 = vmatpush1.bf16.msra.mxu0 0
        %6321 = vmatprep.subr.bf16.mxu0 0
        %6322 = vmatpush1.bf16.msra.mxu0 0
        %6323 = vmatprep.subr.bf16.mxu0 0
        %6324 = vmatpush1.bf16.msra.mxu0 0
        %6325 = vmatprep.subr.bf16.mxu0 0
        %6326 = vmatpush1.bf16.msra.mxu0 0
        %6327 = vmatprep.subr.bf16.mxu0 0
        %6328 = vmatpush1.bf16.msra.mxu0 0
        %6329 = vmatprep.subr.bf16.mxu0 0
        %6330 = vmatpush1.bf16.msra.mxu0 0
        %6331 = vmatprep.subr.bf16.mxu0 0
        %6332 = vmatpush1.bf16.msra.mxu0 %v5871
        %6333 = vmatprep.subr.bf16.mxu0 0
        %6334 = vmatpush2.bf16.msra.mxu0 0
        %6335 = vmatprep.subr.bf16.mxu0 0
        %6336 = vmatpush2.bf16.msra.mxu0 0
        %6337 = vmatprep.subr.bf16.mxu0 0
        %6338 = vmatpush2.bf16.msra.mxu0 0
        %6339 = vmatprep.subr.bf16.mxu0 0
        %6340 = vmatpush2.bf16.msra.mxu0 0
        %6341 = vmatprep.subr.bf16.mxu0 0
        %6342 = vmatpush2.bf16.msra.mxu0 0
        %6343 = vmatprep.subr.bf16.mxu0 0
        %6344 = vmatpush2.bf16.msra.mxu0 0
        %6345 = vmatprep.subr.bf16.mxu0 0
        %6346 = vmatpush2.bf16.msra.mxu0 0
        %6347 = vmatprep.subr.bf16.mxu0 0
        %6348 = vmatpush2.bf16.msra.mxu0 0
        %6349 = vmatprep.mubr.bf16.mxu0 0
        %6350 = vmatmul.mubr.bf16.gmra.mxu0 %v6315
        %v6351 = vpop.f32.mrf.mxu0
        %v6352 = vadd.f32 0.0, %v6351
        %v6353 = vpop.f32.mrf.mxu0
        %v6354 = vpop.f32.mrf.mxu0
        %v6355 = vadd.f32 0.0, %v6354
        %v6356 = vpop.f32.mrf.mxu0
        %6357 = vdwg.mxu0
        %v6358 = vadd.f32 %v5818, %v5911
        %v6359 = vadd.f32 %v5819, %v5914
        %v6360 = vadd.f32 %v5820, %v5960
        %v6361 = vadd.f32 %v5821, %v5963
        %v6362 = vadd.f32 %v5822, %v6009
        %v6363 = vadd.f32 %v5823, %v6012
        %v6364 = vadd.f32 %v5824, %v6058
        %v6365 = vadd.f32 %v5825, %v6061
        %v6366 = vadd.f32 %v5826, %v6107
        %v6367 = vadd.f32 %v5827, %v6110
        %v6368 = vadd.f32 %v5828, %v6156
        %v6369 = vadd.f32 %v5829, %v6159
        %v6370 = vadd.f32 %v5830, %v6205
        %v6371 = vadd.f32 %v5831, %v6208
        %v6372 = vadd.f32 %v5832, %v6254
        %v6373 = vadd.f32 %v5833, %v6257
        %v6374 = vadd.f32 %v5834, %v6303
        %v6375 = vadd.f32 %v5835, %v6306
        %v6376 = vadd.f32 %v5836, %v6352
        %v6377 = vadd.f32 %v5837, %v6355
        %v6378 = vld [vmem:[%s5298 + $0x4] sm:$0x3]
        %v6379 = vld [vmem:[%s5298 + $0xc] sm:$0x3]
        %v6380 = vld [vmem:[%s5298 + $0x14] sm:$0x3]
        %v6381 = vld [vmem:[%s5298 + $0x1c] sm:$0x3]
        %v6382 = vld [vmem:[%s5298 + $0x24] sm:$0x3]
        %v6383 = vld [vmem:[%s5298 + $0x2c] sm:$0x3]
        %v6384 = vld [vmem:[%s5298 + $0x34] sm:$0x3]
        %v6385 = vld [vmem:[%s5298 + $0x3c] sm:$0x3]
        %v6386 = vld [vmem:[%s5298 + $0x44] sm:$0x3]
        %v6387 = vld [vmem:[%s5298 + $0x4c] sm:$0x3]
        %s6388 = scalar_lea.vmem %s2, 64
        %v6389 = vld [vmem:[%s6388] sm:$0xf]
        %v6390 = vld [vmem:[%s6388 + $0x4] sm:$0xf]
        %v6392 = vunpack.c.l.b16 %v6378
        %v6393 = vpack.c.b16 %v6392, %v5324
        %v6395 = vshrl.u32 %v6393, 16
        %v6397 = vshll.u32 %v6393, 16
        %v6399 = vrot.slane %v6397, 1
        %v6400 = vor.u32 %v6395, %v6399
        %v6403 = vunpack.c.l.b16 %v6389
        %v6404 = vunpack.c.l.b16 %v6390
        %v6405 = vpack.c.b16 %v6404, %v6403
        %v6408 = vsel %vm2080, %v6400, 0
        %6410 = vmatprep.subr.bf16.mxu0 0
        %6411 = vmatpush1.bf16.msra.mxu0 0
        %6412 = vmatprep.subr.bf16.mxu0 0
        %6413 = vmatpush1.bf16.msra.mxu0 0
        %6414 = vmatprep.subr.bf16.mxu0 0
        %6415 = vmatpush1.bf16.msra.mxu0 0
        %6416 = vmatprep.subr.bf16.mxu0 0
        %6417 = vmatpush1.bf16.msra.mxu0 0
        %6418 = vmatprep.subr.bf16.mxu0 0
        %6419 = vmatpush1.bf16.msra.mxu0 0
        %6420 = vmatprep.subr.bf16.mxu0 0
        %6421 = vmatpush1.bf16.msra.mxu0 0
        %6422 = vmatprep.subr.bf16.mxu0 0
        %6423 = vmatpush1.bf16.msra.mxu0 0
        %6424 = vmatprep.subr.bf16.mxu0 0
        %6425 = vmatpush1.bf16.msra.mxu0 %v6405
        %6426 = vmatprep.subr.bf16.mxu0 0
        %6427 = vmatpush2.bf16.msra.mxu0 0
        %6428 = vmatprep.subr.bf16.mxu0 0
        %6429 = vmatpush2.bf16.msra.mxu0 0
        %6430 = vmatprep.subr.bf16.mxu0 0
        %6431 = vmatpush2.bf16.msra.mxu0 0
        %6432 = vmatprep.subr.bf16.mxu0 0
        %6433 = vmatpush2.bf16.msra.mxu0 0
        %6434 = vmatprep.subr.bf16.mxu0 0
        %6435 = vmatpush2.bf16.msra.mxu0 0
        %6436 = vmatprep.subr.bf16.mxu0 0
        %6437 = vmatpush2.bf16.msra.mxu0 0
        %6438 = vmatprep.subr.bf16.mxu0 0
        %6439 = vmatpush2.bf16.msra.mxu0 0
        %6440 = vmatprep.subr.bf16.mxu0 0
        %6441 = vmatpush2.bf16.msra.mxu0 0
        %6442 = vmatprep.mubr.bf16.mxu0 0
        %6443 = vmatmul.mubr.bf16.gmra.mxu0 %v6408
        %v6444 = vpop.f32.mrf.mxu0
        %v6445 = vadd.f32 0.0, %v6444
        %v6446 = vpop.f32.mrf.mxu0
        %v6447 = vpop.f32.mrf.mxu0
        %v6448 = vadd.f32 0.0, %v6447
        %v6449 = vpop.f32.mrf.mxu0
        %6450 = vdwg.mxu0
        %v6452 = vunpack.c.l.b16 %v6379
        %v6453 = vpack.c.b16 %v6452, %v5379
        %v6455 = vshrl.u32 %v6453, 16
        %v6457 = vshll.u32 %v6453, 16
        %v6459 = vrot.slane %v6457, 1
        %v6460 = vor.u32 %v6455, %v6459
        %v6462 = vsel %vm2080, %v6460, 0
        %6464 = vmatprep.subr.bf16.mxu0 0
        %6465 = vmatpush1.bf16.msra.mxu0 0
        %6466 = vmatprep.subr.bf16.mxu0 0
        %6467 = vmatpush1.bf16.msra.mxu0 0
        %6468 = vmatprep.subr.bf16.mxu0 0
        %6469 = vmatpush1.bf16.msra.mxu0 0
        %6470 = vmatprep.subr.bf16.mxu0 0
        %6471 = vmatpush1.bf16.msra.mxu0 0
        %6472 = vmatprep.subr.bf16.mxu0 0
        %6473 = vmatpush1.bf16.msra.mxu0 0
        %6474 = vmatprep.subr.bf16.mxu0 0
        %6475 = vmatpush1.bf16.msra.mxu0 0
        %6476 = vmatprep.subr.bf16.mxu0 0
        %6477 = vmatpush1.bf16.msra.mxu0 0
        %6478 = vmatprep.subr.bf16.mxu0 0
        %6479 = vmatpush1.bf16.msra.mxu0 %v6405
        %6480 = vmatprep.subr.bf16.mxu0 0
        %6481 = vmatpush2.bf16.msra.mxu0 0
        %6482 = vmatprep.subr.bf16.mxu0 0
        %6483 = vmatpush2.bf16.msra.mxu0 0
        %6484 = vmatprep.subr.bf16.mxu0 0
        %6485 = vmatpush2.bf16.msra.mxu0 0
        %6486 = vmatprep.subr.bf16.mxu0 0
        %6487 = vmatpush2.bf16.msra.mxu0 0
        %6488 = vmatprep.subr.bf16.mxu0 0
        %6489 = vmatpush2.bf16.msra.mxu0 0
        %6490 = vmatprep.subr.bf16.mxu0 0
        %6491 = vmatpush2.bf16.msra.mxu0 0
        %6492 = vmatprep.subr.bf16.mxu0 0
        %6493 = vmatpush2.bf16.msra.mxu0 0
        %6494 = vmatprep.subr.bf16.mxu0 0
        %6495 = vmatpush2.bf16.msra.mxu0 0
        %6496 = vmatprep.mubr.bf16.mxu0 0
        %6497 = vmatmul.mubr.bf16.gmra.mxu0 %v6462
        %v6498 = vpop.f32.mrf.mxu0
        %v6499 = vadd.f32 0.0, %v6498
        %v6500 = vpop.f32.mrf.mxu0
        %v6501 = vpop.f32.mrf.mxu0
        %v6502 = vadd.f32 0.0, %v6501
        %v6503 = vpop.f32.mrf.mxu0
        %6504 = vdwg.mxu0
        %v6506 = vunpack.c.l.b16 %v6380
        %v6507 = vpack.c.b16 %v6506, %v5428
        %v6509 = vshrl.u32 %v6507, 16
        %v6511 = vshll.u32 %v6507, 16
        %v6513 = vrot.slane %v6511, 1
        %v6514 = vor.u32 %v6509, %v6513
        %v6516 = vsel %vm2080, %v6514, 0
        %6518 = vmatprep.subr.bf16.mxu0 0
        %6519 = vmatpush1.bf16.msra.mxu0 0
        %6520 = vmatprep.subr.bf16.mxu0 0
        %6521 = vmatpush1.bf16.msra.mxu0 0
        %6522 = vmatprep.subr.bf16.mxu0 0
        %6523 = vmatpush1.bf16.msra.mxu0 0
        %6524 = vmatprep.subr.bf16.mxu0 0
        %6525 = vmatpush1.bf16.msra.mxu0 0
        %6526 = vmatprep.subr.bf16.mxu0 0
        %6527 = vmatpush1.bf16.msra.mxu0 0
        %6528 = vmatprep.subr.bf16.mxu0 0
        %6529 = vmatpush1.bf16.msra.mxu0 0
        %6530 = vmatprep.subr.bf16.mxu0 0
        %6531 = vmatpush1.bf16.msra.mxu0 0
        %6532 = vmatprep.subr.bf16.mxu0 0
        %6533 = vmatpush1.bf16.msra.mxu0 %v6405
        %6534 = vmatprep.subr.bf16.mxu0 0
        %6535 = vmatpush2.bf16.msra.mxu0 0
        %6536 = vmatprep.subr.bf16.mxu0 0
        %6537 = vmatpush2.bf16.msra.mxu0 0
        %6538 = vmatprep.subr.bf16.mxu0 0
        %6539 = vmatpush2.bf16.msra.mxu0 0
        %6540 = vmatprep.subr.bf16.mxu0 0
        %6541 = vmatpush2.bf16.msra.mxu0 0
        %6542 = vmatprep.subr.bf16.mxu0 0
        %6543 = vmatpush2.bf16.msra.mxu0 0
        %6544 = vmatprep.subr.bf16.mxu0 0
        %6545 = vmatpush2.bf16.msra.mxu0 0
        %6546 = vmatprep.subr.bf16.mxu0 0
        %6547 = vmatpush2.bf16.msra.mxu0 0
        %6548 = vmatprep.subr.bf16.mxu0 0
        %6549 = vmatpush2.bf16.msra.mxu0 0
        %6550 = vmatprep.mubr.bf16.mxu0 0
        %6551 = vmatmul.mubr.bf16.gmra.mxu0 %v6516
        %v6552 = vpop.f32.mrf.mxu0
        %v6553 = vadd.f32 0.0, %v6552
        %v6554 = vpop.f32.mrf.mxu0
        %v6555 = vpop.f32.mrf.mxu0
        %v6556 = vadd.f32 0.0, %v6555
        %v6557 = vpop.f32.mrf.mxu0
        %6558 = vdwg.mxu0
        %v6560 = vunpack.c.l.b16 %v6381
        %v6561 = vpack.c.b16 %v6560, %v5477
        %v6563 = vshrl.u32 %v6561, 16
        %v6565 = vshll.u32 %v6561, 16
        %v6567 = vrot.slane %v6565, 1
        %v6568 = vor.u32 %v6563, %v6567
        %v6570 = vsel %vm2080, %v6568, 0
        %6572 = vmatprep.subr.bf16.mxu0 0
        %6573 = vmatpush1.bf16.msra.mxu0 0
        %6574 = vmatprep.subr.bf16.mxu0 0
        %6575 = vmatpush1.bf16.msra.mxu0 0
        %6576 = vmatprep.subr.bf16.mxu0 0
        %6577 = vmatpush1.bf16.msra.mxu0 0
        %6578 = vmatprep.subr.bf16.mxu0 0
        %6579 = vmatpush1.bf16.msra.mxu0 0
        %6580 = vmatprep.subr.bf16.mxu0 0
        %6581 = vmatpush1.bf16.msra.mxu0 0
        %6582 = vmatprep.subr.bf16.mxu0 0
        %6583 = vmatpush1.bf16.msra.mxu0 0
        %6584 = vmatprep.subr.bf16.mxu0 0
        %6585 = vmatpush1.bf16.msra.mxu0 0
        %6586 = vmatprep.subr.bf16.mxu0 0
        %6587 = vmatpush1.bf16.msra.mxu0 %v6405
        %6588 = vmatprep.subr.bf16.mxu0 0
        %6589 = vmatpush2.bf16.msra.mxu0 0
        %6590 = vmatprep.subr.bf16.mxu0 0
        %6591 = vmatpush2.bf16.msra.mxu0 0
        %6592 = vmatprep.subr.bf16.mxu0 0
        %6593 = vmatpush2.bf16.msra.mxu0 0
        %6594 = vmatprep.subr.bf16.mxu0 0
        %6595 = vmatpush2.bf16.msra.mxu0 0
        %6596 = vmatprep.subr.bf16.mxu0 0
        %6597 = vmatpush2.bf16.msra.mxu0 0
        %6598 = vmatprep.subr.bf16.mxu0 0
        %6599 = vmatpush2.bf16.msra.mxu0 0
        %6600 = vmatprep.subr.bf16.mxu0 0
        %6601 = vmatpush2.bf16.msra.mxu0 0
        %6602 = vmatprep.subr.bf16.mxu0 0
        %6603 = vmatpush2.bf16.msra.mxu0 0
        %6604 = vmatprep.mubr.bf16.mxu0 0
        %6605 = vmatmul.mubr.bf16.gmra.mxu0 %v6570
        %v6606 = vpop.f32.mrf.mxu0
        %v6607 = vadd.f32 0.0, %v6606
        %v6608 = vpop.f32.mrf.mxu0
        %v6609 = vpop.f32.mrf.mxu0
        %v6610 = vadd.f32 0.0, %v6609
        %v6611 = vpop.f32.mrf.mxu0
        %6612 = vdwg.mxu0
        %v6614 = vunpack.c.l.b16 %v6382
        %v6615 = vpack.c.b16 %v6614, %v5526
        %v6617 = vshrl.u32 %v6615, 16
        %v6619 = vshll.u32 %v6615, 16
        %v6621 = vrot.slane %v6619, 1
        %v6622 = vor.u32 %v6617, %v6621
        %v6624 = vsel %vm2080, %v6622, 0
        %6626 = vmatprep.subr.bf16.mxu0 0
        %6627 = vmatpush1.bf16.msra.mxu0 0
        %6628 = vmatprep.subr.bf16.mxu0 0
        %6629 = vmatpush1.bf16.msra.mxu0 0
        %6630 = vmatprep.subr.bf16.mxu0 0
        %6631 = vmatpush1.bf16.msra.mxu0 0
        %6632 = vmatprep.subr.bf16.mxu0 0
        %6633 = vmatpush1.bf16.msra.mxu0 0
        %6634 = vmatprep.subr.bf16.mxu0 0
        %6635 = vmatpush1.bf16.msra.mxu0 0
        %6636 = vmatprep.subr.bf16.mxu0 0
        %6637 = vmatpush1.bf16.msra.mxu0 0
        %6638 = vmatprep.subr.bf16.mxu0 0
        %6639 = vmatpush1.bf16.msra.mxu0 0
        %6640 = vmatprep.subr.bf16.mxu0 0
        %6641 = vmatpush1.bf16.msra.mxu0 %v6405
        %6642 = vmatprep.subr.bf16.mxu0 0
        %6643 = vmatpush2.bf16.msra.mxu0 0
        %6644 = vmatprep.subr.bf16.mxu0 0
        %6645 = vmatpush2.bf16.msra.mxu0 0
        %6646 = vmatprep.subr.bf16.mxu0 0
        %6647 = vmatpush2.bf16.msra.mxu0 0
        %6648 = vmatprep.subr.bf16.mxu0 0
        %6649 = vmatpush2.bf16.msra.mxu0 0
        %6650 = vmatprep.subr.bf16.mxu0 0
        %6651 = vmatpush2.bf16.msra.mxu0 0
        %6652 = vmatprep.subr.bf16.mxu0 0
        %6653 = vmatpush2.bf16.msra.mxu0 0
        %6654 = vmatprep.subr.bf16.mxu0 0
        %6655 = vmatpush2.bf16.msra.mxu0 0
        %6656 = vmatprep.subr.bf16.mxu0 0
        %6657 = vmatpush2.bf16.msra.mxu0 0
        %6658 = vmatprep.mubr.bf16.mxu0 0
        %6659 = vmatmul.mubr.bf16.gmra.mxu0 %v6624
        %v6660 = vpop.f32.mrf.mxu0
        %v6661 = vadd.f32 0.0, %v6660
        %v6662 = vpop.f32.mrf.mxu0
        %v6663 = vpop.f32.mrf.mxu0
        %v6664 = vadd.f32 0.0, %v6663
        %v6665 = vpop.f32.mrf.mxu0
        %6666 = vdwg.mxu0
        %v6668 = vunpack.c.l.b16 %v6383
        %v6669 = vpack.c.b16 %v6668, %v5575
        %v6671 = vshrl.u32 %v6669, 16
        %v6673 = vshll.u32 %v6669, 16
        %v6675 = vrot.slane %v6673, 1
        %v6676 = vor.u32 %v6671, %v6675
        %v6678 = vsel %vm2080, %v6676, 0
        %6680 = vmatprep.subr.bf16.mxu0 0
        %6681 = vmatpush1.bf16.msra.mxu0 0
        %6682 = vmatprep.subr.bf16.mxu0 0
        %6683 = vmatpush1.bf16.msra.mxu0 0
        %6684 = vmatprep.subr.bf16.mxu0 0
        %6685 = vmatpush1.bf16.msra.mxu0 0
        %6686 = vmatprep.subr.bf16.mxu0 0
        %6687 = vmatpush1.bf16.msra.mxu0 0
        %6688 = vmatprep.subr.bf16.mxu0 0
        %6689 = vmatpush1.bf16.msra.mxu0 0
        %6690 = vmatprep.subr.bf16.mxu0 0
        %6691 = vmatpush1.bf16.msra.mxu0 0
        %6692 = vmatprep.subr.bf16.mxu0 0
        %6693 = vmatpush1.bf16.msra.mxu0 0
        %6694 = vmatprep.subr.bf16.mxu0 0
        %6695 = vmatpush1.bf16.msra.mxu0 %v6405
        %6696 = vmatprep.subr.bf16.mxu0 0
        %6697 = vmatpush2.bf16.msra.mxu0 0
        %6698 = vmatprep.subr.bf16.mxu0 0
        %6699 = vmatpush2.bf16.msra.mxu0 0
        %6700 = vmatprep.subr.bf16.mxu0 0
        %6701 = vmatpush2.bf16.msra.mxu0 0
        %6702 = vmatprep.subr.bf16.mxu0 0
        %6703 = vmatpush2.bf16.msra.mxu0 0
        %6704 = vmatprep.subr.bf16.mxu0 0
        %6705 = vmatpush2.bf16.msra.mxu0 0
        %6706 = vmatprep.subr.bf16.mxu0 0
        %6707 = vmatpush2.bf16.msra.mxu0 0
        %6708 = vmatprep.subr.bf16.mxu0 0
        %6709 = vmatpush2.bf16.msra.mxu0 0
        %6710 = vmatprep.subr.bf16.mxu0 0
        %6711 = vmatpush2.bf16.msra.mxu0 0
        %6712 = vmatprep.mubr.bf16.mxu0 0
        %6713 = vmatmul.mubr.bf16.gmra.mxu0 %v6678
        %v6714 = vpop.f32.mrf.mxu0
        %v6715 = vadd.f32 0.0, %v6714
        %v6716 = vpop.f32.mrf.mxu0
        %v6717 = vpop.f32.mrf.mxu0
        %v6718 = vadd.f32 0.0, %v6717
        %v6719 = vpop.f32.mrf.mxu0
        %6720 = vdwg.mxu0
        %v6722 = vunpack.c.l.b16 %v6384
        %v6723 = vpack.c.b16 %v6722, %v5624
        %v6725 = vshrl.u32 %v6723, 16
        %v6727 = vshll.u32 %v6723, 16
        %v6729 = vrot.slane %v6727, 1
        %v6730 = vor.u32 %v6725, %v6729
        %v6732 = vsel %vm2080, %v6730, 0
        %6734 = vmatprep.subr.bf16.mxu0 0
        %6735 = vmatpush1.bf16.msra.mxu0 0
        %6736 = vmatprep.subr.bf16.mxu0 0
        %6737 = vmatpush1.bf16.msra.mxu0 0
        %6738 = vmatprep.subr.bf16.mxu0 0
        %6739 = vmatpush1.bf16.msra.mxu0 0
        %6740 = vmatprep.subr.bf16.mxu0 0
        %6741 = vmatpush1.bf16.msra.mxu0 0
        %6742 = vmatprep.subr.bf16.mxu0 0
        %6743 = vmatpush1.bf16.msra.mxu0 0
        %6744 = vmatprep.subr.bf16.mxu0 0
        %6745 = vmatpush1.bf16.msra.mxu0 0
        %6746 = vmatprep.subr.bf16.mxu0 0
        %6747 = vmatpush1.bf16.msra.mxu0 0
        %6748 = vmatprep.subr.bf16.mxu0 0
        %6749 = vmatpush1.bf16.msra.mxu0 %v6405
        %6750 = vmatprep.subr.bf16.mxu0 0
        %6751 = vmatpush2.bf16.msra.mxu0 0
        %6752 = vmatprep.subr.bf16.mxu0 0
        %6753 = vmatpush2.bf16.msra.mxu0 0
        %6754 = vmatprep.subr.bf16.mxu0 0
        %6755 = vmatpush2.bf16.msra.mxu0 0
        %6756 = vmatprep.subr.bf16.mxu0 0
        %6757 = vmatpush2.bf16.msra.mxu0 0
        %6758 = vmatprep.subr.bf16.mxu0 0
        %6759 = vmatpush2.bf16.msra.mxu0 0
        %6760 = vmatprep.subr.bf16.mxu0 0
        %6761 = vmatpush2.bf16.msra.mxu0 0
        %6762 = vmatprep.subr.bf16.mxu0 0
        %6763 = vmatpush2.bf16.msra.mxu0 0
        %6764 = vmatprep.subr.bf16.mxu0 0
        %6765 = vmatpush2.bf16.msra.mxu0 0
        %6766 = vmatprep.mubr.bf16.mxu0 0
        %6767 = vmatmul.mubr.bf16.gmra.mxu0 %v6732
        %v6768 = vpop.f32.mrf.mxu0
        %v6769 = vadd.f32 0.0, %v6768
        %v6770 = vpop.f32.mrf.mxu0
        %v6771 = vpop.f32.mrf.mxu0
        %v6772 = vadd.f32 0.0, %v6771
        %v6773 = vpop.f32.mrf.mxu0
        %6774 = vdwg.mxu0
        %v6776 = vunpack.c.l.b16 %v6385
        %v6777 = vpack.c.b16 %v6776, %v5673
        %v6779 = vshrl.u32 %v6777, 16
        %v6781 = vshll.u32 %v6777, 16
        %v6783 = vrot.slane %v6781, 1
        %v6784 = vor.u32 %v6779, %v6783
        %v6786 = vsel %vm2080, %v6784, 0
        %6788 = vmatprep.subr.bf16.mxu0 0
        %6789 = vmatpush1.bf16.msra.mxu0 0
        %6790 = vmatprep.subr.bf16.mxu0 0
        %6791 = vmatpush1.bf16.msra.mxu0 0
        %6792 = vmatprep.subr.bf16.mxu0 0
        %6793 = vmatpush1.bf16.msra.mxu0 0
        %6794 = vmatprep.subr.bf16.mxu0 0
        %6795 = vmatpush1.bf16.msra.mxu0 0
        %6796 = vmatprep.subr.bf16.mxu0 0
        %6797 = vmatpush1.bf16.msra.mxu0 0
        %6798 = vmatprep.subr.bf16.mxu0 0
        %6799 = vmatpush1.bf16.msra.mxu0 0
        %6800 = vmatprep.subr.bf16.mxu0 0
        %6801 = vmatpush1.bf16.msra.mxu0 0
        %6802 = vmatprep.subr.bf16.mxu0 0
        %6803 = vmatpush1.bf16.msra.mxu0 %v6405
        %6804 = vmatprep.subr.bf16.mxu0 0
        %6805 = vmatpush2.bf16.msra.mxu0 0
        %6806 = vmatprep.subr.bf16.mxu0 0
        %6807 = vmatpush2.bf16.msra.mxu0 0
        %6808 = vmatprep.subr.bf16.mxu0 0
        %6809 = vmatpush2.bf16.msra.mxu0 0
        %6810 = vmatprep.subr.bf16.mxu0 0
        %6811 = vmatpush2.bf16.msra.mxu0 0
        %6812 = vmatprep.subr.bf16.mxu0 0
        %6813 = vmatpush2.bf16.msra.mxu0 0
        %6814 = vmatprep.subr.bf16.mxu0 0
        %6815 = vmatpush2.bf16.msra.mxu0 0
        %6816 = vmatprep.subr.bf16.mxu0 0
        %6817 = vmatpush2.bf16.msra.mxu0 0
        %6818 = vmatprep.subr.bf16.mxu0 0
        %6819 = vmatpush2.bf16.msra.mxu0 0
        %6820 = vmatprep.mubr.bf16.mxu0 0
        %6821 = vmatmul.mubr.bf16.gmra.mxu0 %v6786
        %v6822 = vpop.f32.mrf.mxu0
        %v6823 = vadd.f32 0.0, %v6822
        %v6824 = vpop.f32.mrf.mxu0
        %v6825 = vpop.f32.mrf.mxu0
        %v6826 = vadd.f32 0.0, %v6825
        %v6827 = vpop.f32.mrf.mxu0
        %6828 = vdwg.mxu0
        %v6830 = vunpack.c.l.b16 %v6386
        %v6831 = vpack.c.b16 %v6830, %v5722
        %v6833 = vshrl.u32 %v6831, 16
        %v6835 = vshll.u32 %v6831, 16
        %v6837 = vrot.slane %v6835, 1
        %v6838 = vor.u32 %v6833, %v6837
        %v6840 = vsel %vm2080, %v6838, 0
        %6842 = vmatprep.subr.bf16.mxu0 0
        %6843 = vmatpush1.bf16.msra.mxu0 0
        %6844 = vmatprep.subr.bf16.mxu0 0
        %6845 = vmatpush1.bf16.msra.mxu0 0
        %6846 = vmatprep.subr.bf16.mxu0 0
        %6847 = vmatpush1.bf16.msra.mxu0 0
        %6848 = vmatprep.subr.bf16.mxu0 0
        %6849 = vmatpush1.bf16.msra.mxu0 0
        %6850 = vmatprep.subr.bf16.mxu0 0
        %6851 = vmatpush1.bf16.msra.mxu0 0
        %6852 = vmatprep.subr.bf16.mxu0 0
        %6853 = vmatpush1.bf16.msra.mxu0 0
        %6854 = vmatprep.subr.bf16.mxu0 0
        %6855 = vmatpush1.bf16.msra.mxu0 0
        %6856 = vmatprep.subr.bf16.mxu0 0
        %6857 = vmatpush1.bf16.msra.mxu0 %v6405
        %6858 = vmatprep.subr.bf16.mxu0 0
        %6859 = vmatpush2.bf16.msra.mxu0 0
        %6860 = vmatprep.subr.bf16.mxu0 0
        %6861 = vmatpush2.bf16.msra.mxu0 0
        %6862 = vmatprep.subr.bf16.mxu0 0
        %6863 = vmatpush2.bf16.msra.mxu0 0
        %6864 = vmatprep.subr.bf16.mxu0 0
        %6865 = vmatpush2.bf16.msra.mxu0 0
        %6866 = vmatprep.subr.bf16.mxu0 0
        %6867 = vmatpush2.bf16.msra.mxu0 0
        %6868 = vmatprep.subr.bf16.mxu0 0
        %6869 = vmatpush2.bf16.msra.mxu0 0
        %6870 = vmatprep.subr.bf16.mxu0 0
        %6871 = vmatpush2.bf16.msra.mxu0 0
        %6872 = vmatprep.subr.bf16.mxu0 0
        %6873 = vmatpush2.bf16.msra.mxu0 0
        %6874 = vmatprep.mubr.bf16.mxu0 0
        %6875 = vmatmul.mubr.bf16.gmra.mxu0 %v6840
        %v6876 = vpop.f32.mrf.mxu0
        %v6877 = vadd.f32 0.0, %v6876
        %v6878 = vpop.f32.mrf.mxu0
        %v6879 = vpop.f32.mrf.mxu0
        %v6880 = vadd.f32 0.0, %v6879
        %v6881 = vpop.f32.mrf.mxu0
        %6882 = vdwg.mxu0
        %v6884 = vunpack.c.l.b16 %v6387
        %v6885 = vpack.c.b16 %v6884, %v5771
        %v6887 = vshrl.u32 %v6885, 16
        %v6889 = vshll.u32 %v6885, 16
        %v6891 = vrot.slane %v6889, 1
        %v6892 = vor.u32 %v6887, %v6891
        %v6894 = vsel %vm2080, %v6892, 0
        %6896 = vmatprep.subr.bf16.mxu0 0
        %6897 = vmatpush1.bf16.msra.mxu0 0
        %6898 = vmatprep.subr.bf16.mxu0 0
        %6899 = vmatpush1.bf16.msra.mxu0 0
        %6900 = vmatprep.subr.bf16.mxu0 0
        %6901 = vmatpush1.bf16.msra.mxu0 0
        %6902 = vmatprep.subr.bf16.mxu0 0
        %6903 = vmatpush1.bf16.msra.mxu0 0
        %6904 = vmatprep.subr.bf16.mxu0 0
        %6905 = vmatpush1.bf16.msra.mxu0 0
        %6906 = vmatprep.subr.bf16.mxu0 0
        %6907 = vmatpush1.bf16.msra.mxu0 0
        %6908 = vmatprep.subr.bf16.mxu0 0
        %6909 = vmatpush1.bf16.msra.mxu0 0
        %6910 = vmatprep.subr.bf16.mxu0 0
        %6911 = vmatpush1.bf16.msra.mxu0 %v6405
        %6912 = vmatprep.subr.bf16.mxu0 0
        %6913 = vmatpush2.bf16.msra.mxu0 0
        %6914 = vmatprep.subr.bf16.mxu0 0
        %6915 = vmatpush2.bf16.msra.mxu0 0
        %6916 = vmatprep.subr.bf16.mxu0 0
        %6917 = vmatpush2.bf16.msra.mxu0 0
        %6918 = vmatprep.subr.bf16.mxu0 0
        %6919 = vmatpush2.bf16.msra.mxu0 0
        %6920 = vmatprep.subr.bf16.mxu0 0
        %6921 = vmatpush2.bf16.msra.mxu0 0
        %6922 = vmatprep.subr.bf16.mxu0 0
        %6923 = vmatpush2.bf16.msra.mxu0 0
        %6924 = vmatprep.subr.bf16.mxu0 0
        %6925 = vmatpush2.bf16.msra.mxu0 0
        %6926 = vmatprep.subr.bf16.mxu0 0
        %6927 = vmatpush2.bf16.msra.mxu0 0
        %6928 = vmatprep.mubr.bf16.mxu0 0
        %6929 = vmatmul.mubr.bf16.gmra.mxu0 %v6894
        %v6930 = vpop.f32.mrf.mxu0
        %v6931 = vadd.f32 0.0, %v6930
        %v6932 = vpop.f32.mrf.mxu0
        %v6933 = vpop.f32.mrf.mxu0
        %v6934 = vadd.f32 0.0, %v6933
        %v6935 = vpop.f32.mrf.mxu0
        %6936 = vdwg.mxu0
        %v6937 = vadd.f32 %v6358, %v6445
        %v6938 = vadd.f32 %v6359, %v6448
        %v6939 = vadd.f32 %v6360, %v6499
        %v6940 = vadd.f32 %v6361, %v6502
        %v6941 = vadd.f32 %v6362, %v6553
        %v6942 = vadd.f32 %v6363, %v6556
        %v6943 = vadd.f32 %v6364, %v6607
        %v6944 = vadd.f32 %v6365, %v6610
        %v6945 = vadd.f32 %v6366, %v6661
        %v6946 = vadd.f32 %v6367, %v6664
        %v6947 = vadd.f32 %v6368, %v6715
        %v6948 = vadd.f32 %v6369, %v6718
        %v6949 = vadd.f32 %v6370, %v6769
        %v6950 = vadd.f32 %v6371, %v6772
        %v6951 = vadd.f32 %v6372, %v6823
        %v6952 = vadd.f32 %v6373, %v6826
        %v6953 = vadd.f32 %v6374, %v6877
        %v6954 = vadd.f32 %v6375, %v6880
        %v6955 = vadd.f32 %v6376, %v6931
        %v6956 = vadd.f32 %v6377, %v6934
        %v6958 = vlaneseq
        %v6959 = vshrl.u32 %v6958, 7
        %v6960 = vsub.s32 0, %v6959
        %v6961 = vrot.slane %v413, %v6960
        %v6963 = vmul.f32 %v6937, %v6961
        %v6964 = vmul.f32 %v6938, %v6961
        %v6965 = vmul.f32 %v6939, %v6961
        %v6966 = vmul.f32 %v6940, %v6961
        %v6967 = vmul.f32 %v6941, %v6961
        %v6968 = vmul.f32 %v6942, %v6961
        %v6969 = vmul.f32 %v6943, %v6961
        %v6970 = vmul.f32 %v6944, %v6961
        %v6971 = vmul.f32 %v6945, %v6961
        %v6972 = vmul.f32 %v6946, %v6961
        %v6973 = vmul.f32 %v6947, %v6961
        %v6974 = vmul.f32 %v6948, %v6961
        %v6975 = vmul.f32 %v6949, %v6961
        %v6976 = vmul.f32 %v6950, %v6961
        %v6977 = vmul.f32 %v6951, %v6961
        %v6978 = vmul.f32 %v6952, %v6961
        %v6979 = vmul.f32 %v6953, %v6961
        %v6980 = vmul.f32 %v6954, %v6961
        %v6981 = vmul.f32 %v6955, %v6961
        %v6982 = vmul.f32 %v6956, %v6961
        %v6984 = vlaneseq
        %v6985 = vshrl.u32 %v6984, 7
        %v6986 = vsub.s32 0, %v6985
        %v6987 = vrot.slane %v414, %v6986
        %v6989 = vadd.f32 %v6963, %v6987
        %v6990 = vadd.f32 %v6964, %v6987
        %v6991 = vadd.f32 %v6965, %v6987
        %v6992 = vadd.f32 %v6966, %v6987
        %v6993 = vadd.f32 %v6967, %v6987
        %v6994 = vadd.f32 %v6968, %v6987
        %v6995 = vadd.f32 %v6969, %v6987
        %v6996 = vadd.f32 %v6970, %v6987
        %v6997 = vadd.f32 %v6971, %v6987
        %v6998 = vadd.f32 %v6972, %v6987
        %v6999 = vadd.f32 %v6973, %v6987
        %v7000 = vadd.f32 %v6974, %v6987
        %v7001 = vadd.f32 %v6975, %v6987
        %v7002 = vadd.f32 %v6976, %v6987
        %v7003 = vadd.f32 %v6977, %v6987
        %v7004 = vadd.f32 %v6978, %v6987
        %v7005 = vadd.f32 %v6979, %v6987
        %v7006 = vadd.f32 %v6980, %v6987
        %v7007 = vadd.f32 %v6981, %v6987
        %v7008 = vadd.f32 %v6982, %v6987
        %v7009 = vmax.f32 %v6989, 0.0
        %v7010 = vmax.f32 %v6990, 0.0
        %v7011 = vmax.f32 %v6991, 0.0
        %v7012 = vmax.f32 %v6992, 0.0
        %v7013 = vmax.f32 %v6993, 0.0
        %v7014 = vmax.f32 %v6994, 0.0
        %v7015 = vmax.f32 %v6995, 0.0
        %v7016 = vmax.f32 %v6996, 0.0
        %v7017 = vmax.f32 %v6997, 0.0
        %v7018 = vmax.f32 %v6998, 0.0
        %v7019 = vmax.f32 %v6999, 0.0
        %v7020 = vmax.f32 %v7000, 0.0
        %v7021 = vmax.f32 %v7001, 0.0
        %v7022 = vmax.f32 %v7002, 0.0
        %v7023 = vmax.f32 %v7003, 0.0
        %v7024 = vmax.f32 %v7004, 0.0
        %v7025 = vmax.f32 %v7005, 0.0
        %v7026 = vmax.f32 %v7006, 0.0
        %v7027 = vmax.f32 %v7007, 0.0
        %v7028 = vmax.f32 %v7008, 0.0
        %v7029 = vld [vmem:[%s7] sm:$0xff]
        %v7030 = vld [vmem:[%s7 + $0x8] sm:$0x3]
        %v7031 = vld [vmem:[%s7 + $0x10] sm:$0xff]
        %v7032 = vld [vmem:[%s7 + $0x18] sm:$0x3]
        %v7033 = vld [vmem:[%s7 + $0x20] sm:$0xff]
        %v7034 = vld [vmem:[%s7 + $0x28] sm:$0x3]
        %v7035 = vld [vmem:[%s7 + $0x30] sm:$0xff]
        %v7036 = vld [vmem:[%s7 + $0x38] sm:$0x3]
        %v7037 = vld [vmem:[%s7 + $0x40] sm:$0xff]
        %v7038 = vld [vmem:[%s7 + $0x48] sm:$0x3]
        %v7039 = vld [vmem:[%s7 + $0x50] sm:$0xff]
        %v7040 = vld [vmem:[%s7 + $0x58] sm:$0x3]
        %v7041 = vld [vmem:[%s7 + $0x60] sm:$0xff]
        %v7042 = vld [vmem:[%s7 + $0x68] sm:$0x3]
        %v7043 = vld [vmem:[%s7 + $0x70] sm:$0xff]
        %v7044 = vld [vmem:[%s7 + $0x78] sm:$0x3]
        %v7045 = vld [vmem:[%s7 + $0x80] sm:$0xff]
        %v7046 = vld [vmem:[%s7 + $0x88] sm:$0x3]
        %v7047 = vld [vmem:[%s7 + $0x90] sm:$0xff]
        %v7048 = vld [vmem:[%s7 + $0x98] sm:$0x3]
        %7050 = vset.pattern.permute.xlu0 0
        %7051 = vperm.xlu0 %7050, %v7029
        %v7052 = vpop.permute.xlu0 %7051
        %7055 = vset.pattern.permute.xlu0 0
        %7056 = vperm.xlu0 %7055, %v7030
        %v7057 = vpop.permute.xlu0 %7056
        %7060 = vset.pattern.permute.xlu0 0
        %7061 = vperm.xlu0 %7060, %v7031
        %v7062 = vpop.permute.xlu0 %7061
        %7065 = vset.pattern.permute.xlu0 0
        %7066 = vperm.xlu0 %7065, %v7032
        %v7067 = vpop.permute.xlu0 %7066
        %7070 = vset.pattern.permute.xlu0 0
        %7071 = vperm.xlu0 %7070, %v7033
        %v7072 = vpop.permute.xlu0 %7071
        %7075 = vset.pattern.permute.xlu0 0
        %7076 = vperm.xlu0 %7075, %v7034
        %v7077 = vpop.permute.xlu0 %7076
        %7080 = vset.pattern.permute.xlu0 0
        %7081 = vperm.xlu0 %7080, %v7035
        %v7082 = vpop.permute.xlu0 %7081
        %7085 = vset.pattern.permute.xlu0 0
        %7086 = vperm.xlu0 %7085, %v7036
        %v7087 = vpop.permute.xlu0 %7086
        %7090 = vset.pattern.permute.xlu0 0
        %7091 = vperm.xlu0 %7090, %v7037
        %v7092 = vpop.permute.xlu0 %7091
        %7095 = vset.pattern.permute.xlu0 0
        %7096 = vperm.xlu0 %7095, %v7038
        %v7097 = vpop.permute.xlu0 %7096
        %7100 = vset.pattern.permute.xlu0 0
        %7101 = vperm.xlu0 %7100, %v7039
        %v7102 = vpop.permute.xlu0 %7101
        %7105 = vset.pattern.permute.xlu0 0
        %7106 = vperm.xlu0 %7105, %v7040
        %v7107 = vpop.permute.xlu0 %7106
        %7110 = vset.pattern.permute.xlu0 0
        %7111 = vperm.xlu0 %7110, %v7041
        %v7112 = vpop.permute.xlu0 %7111
        %7115 = vset.pattern.permute.xlu0 0
        %7116 = vperm.xlu0 %7115, %v7042
        %v7117 = vpop.permute.xlu0 %7116
        %7120 = vset.pattern.permute.xlu0 0
        %7121 = vperm.xlu0 %7120, %v7043
        %v7122 = vpop.permute.xlu0 %7121
        %7125 = vset.pattern.permute.xlu0 0
        %7126 = vperm.xlu0 %7125, %v7044
        %v7127 = vpop.permute.xlu0 %7126
        %7130 = vset.pattern.permute.xlu0 0
        %7131 = vperm.xlu0 %7130, %v7045
        %v7132 = vpop.permute.xlu0 %7131
        %7135 = vset.pattern.permute.xlu0 0
        %7136 = vperm.xlu0 %7135, %v7046
        %v7137 = vpop.permute.xlu0 %7136
        %7140 = vset.pattern.permute.xlu0 0
        %7141 = vperm.xlu0 %7140, %v7047
        %v7142 = vpop.permute.xlu0 %7141
        %7145 = vset.pattern.permute.xlu0 0
        %7146 = vperm.xlu0 %7145, %v7048
        %v7147 = vpop.permute.xlu0 %7146
        %v7149 = vmul.f32 %v7009, %v7052
        %v7150 = vmul.f32 %v7010, %v7057
        %v7151 = vmul.f32 %v7011, %v7062
        %v7152 = vmul.f32 %v7012, %v7067
        %v7153 = vmul.f32 %v7013, %v7072
        %v7154 = vmul.f32 %v7014, %v7077
        %v7155 = vmul.f32 %v7015, %v7082
        %v7156 = vmul.f32 %v7016, %v7087
        %v7157 = vmul.f32 %v7017, %v7092
        %v7158 = vmul.f32 %v7018, %v7097
        %v7159 = vmul.f32 %v7019, %v7102
        %v7160 = vmul.f32 %v7020, %v7107
        %v7161 = vmul.f32 %v7021, %v7112
        %v7162 = vmul.f32 %v7022, %v7117
        %v7163 = vmul.f32 %v7023, %v7122
        %v7164 = vmul.f32 %v7024, %v7127
        %v7165 = vmul.f32 %v7025, %v7132
        %v7166 = vmul.f32 %v7026, %v7137
        %v7167 = vmul.f32 %v7027, %v7142
        %v7168 = vmul.f32 %v7028, %v7147
        %v7169 = vpack.c.bf16 %v7150, %v7149
        %v7170 = vpack.c.bf16 %v7152, %v7151
        %v7171 = vpack.c.bf16 %v7154, %v7153
        %v7172 = vpack.c.bf16 %v7156, %v7155
        %v7173 = vpack.c.bf16 %v7158, %v7157
        %v7174 = vpack.c.bf16 %v7160, %v7159
        %v7175 = vpack.c.bf16 %v7162, %v7161
        %v7176 = vpack.c.bf16 %v7164, %v7163
        %v7177 = vpack.c.bf16 %v7166, %v7165
        %v7178 = vpack.c.bf16 %v7168, %v7167
        %v7189 = vunpack.c.l.b16 %v7169
        %v7190 = vunpack.c.h.b16 %v7169
        %v7191 = vunpack.c.l.b16 %v7170
        %v7192 = vunpack.c.h.b16 %v7170
        %v7193 = vunpack.c.l.b16 %v7171
        %v7194 = vunpack.c.h.b16 %v7171
        %v7195 = vunpack.c.l.b16 %v7172
        %v7196 = vunpack.c.h.b16 %v7172
        %v7197 = vunpack.c.l.b16 %v7173
        %v7198 = vunpack.c.h.b16 %v7173
        %v7199 = vunpack.c.l.b16 %v7174
        %v7200 = vunpack.c.h.b16 %v7174
        %v7201 = vunpack.c.l.b16 %v7175
        %v7202 = vunpack.c.h.b16 %v7175
        %v7203 = vunpack.c.l.b16 %v7176
        %v7204 = vunpack.c.h.b16 %v7176
        %v7205 = vunpack.c.l.b16 %v7177
        %v7206 = vunpack.c.h.b16 %v7177
        %v7207 = vunpack.c.l.b16 %v7178
        %v7208 = vunpack.c.h.b16 %v7178
        %v7209 = vpack.c.b16 %v7189, %v7189
        %v7210 = vpack.c.b16 %v7190, %v7190
        %v7211 = vpack.c.b16 %v7191, %v7191
        %v7212 = vpack.c.b16 %v7192, %v7192
        %v7213 = vpack.c.b16 %v7193, %v7193
        %v7214 = vpack.c.b16 %v7194, %v7194
        %v7215 = vpack.c.b16 %v7195, %v7195
        %v7216 = vpack.c.b16 %v7196, %v7196
        %v7217 = vpack.c.b16 %v7197, %v7197
        %v7218 = vpack.c.b16 %v7198, %v7198
        %v7219 = vpack.c.b16 %v7199, %v7199
        %v7220 = vpack.c.b16 %v7200, %v7200
        %v7221 = vpack.c.b16 %v7201, %v7201
        %v7222 = vpack.c.b16 %v7202, %v7202
        %v7223 = vpack.c.b16 %v7203, %v7203
        %v7224 = vpack.c.b16 %v7204, %v7204
        %v7225 = vpack.c.b16 %v7205, %v7205
        %v7226 = vpack.c.b16 %v7206, %v7206
        %v7227 = vpack.c.b16 %v7207, %v7207
        %v7228 = vpack.c.b16 %v7208, %v7208
        %vm7249 = vcmask 257024
        %7250 = vst.msk [vmem:[#allocation3] sm:$0xf] %vm7249, %v7209
        %vm7251 = vcmask 253952
        %7252 = vst.msk [vmem:[#allocation3 + $0x4] sm:$0x1] %vm7251, %v7210
        %7253 = vst.msk [vmem:[#allocation3 + $0x8] sm:$0xf] %vm7249, %v7211
        %7254 = vst.msk [vmem:[#allocation3 + $0xc] sm:$0x1] %vm7251, %v7212
        %7255 = vst.msk [vmem:[#allocation3 + $0x10] sm:$0xf] %vm7249, %v7213
        %7256 = vst.msk [vmem:[#allocation3 + $0x14] sm:$0x1] %vm7251, %v7214
        %7257 = vst.msk [vmem:[#allocation3 + $0x18] sm:$0xf] %vm7249, %v7215
        %7258 = vst.msk [vmem:[#allocation3 + $0x1c] sm:$0x1] %vm7251, %v7216
        %7259 = vst.msk [vmem:[#allocation3 + $0x20] sm:$0xf] %vm7249, %v7217
        %7260 = vst.msk [vmem:[#allocation3 + $0x24] sm:$0x1] %vm7251, %v7218
        %7261 = vst.msk [vmem:[#allocation3 + $0x28] sm:$0xf] %vm7249, %v7219
        %7262 = vst.msk [vmem:[#allocation3 + $0x2c] sm:$0x1] %vm7251, %v7220
        %7263 = vst.msk [vmem:[#allocation3 + $0x30] sm:$0xf] %vm7249, %v7221
        %7264 = vst.msk [vmem:[#allocation3 + $0x34] sm:$0x1] %vm7251, %v7222
        %7265 = vst.msk [vmem:[#allocation3 + $0x38] sm:$0xf] %vm7249, %v7223
        %7266 = vst.msk [vmem:[#allocation3 + $0x3c] sm:$0x1] %vm7251, %v7224
        %7267 = vst.msk [vmem:[#allocation3 + $0x40] sm:$0xf] %vm7249, %v7225
        %7268 = vst.msk [vmem:[#allocation3 + $0x44] sm:$0x1] %vm7251, %v7226
        %7269 = vst.msk [vmem:[#allocation3 + $0x48] sm:$0xf] %vm7249, %v7227
        %7270 = vst.msk [vmem:[#allocation3 + $0x4c] sm:$0x1] %vm7251, %v7228
        %v7271 = vld [vmem:[#allocation3] sm:$0xf]
        %v7272 = vld [vmem:[#allocation3 + $0x8] sm:$0xf]
        %v7273 = vld [vmem:[#allocation3 + $0x10] sm:$0xf]
        %v7274 = vld [vmem:[#allocation3 + $0x18] sm:$0xf]
        %v7275 = vld [vmem:[#allocation3 + $0x20] sm:$0xf]
        %v7276 = vld [vmem:[#allocation3 + $0x28] sm:$0xf]
        %v7277 = vld [vmem:[#allocation3 + $0x30] sm:$0xf]
        %v7278 = vld [vmem:[#allocation3 + $0x38] sm:$0xf]
        %v7279 = vld [vmem:[%s8] sm:$0xf]
        %v7280 = vld [vmem:[%s8 + $0x4] sm:$0xf]
        %v7281 = vld [vmem:[%s8 + $0x8] sm:$0xf]
        %v7282 = vld [vmem:[%s8 + $0xc] sm:$0xf]
        %v7283 = vld [vmem:[#allocation3 + $0x4] sm:$0x1]
        %v7284 = vld [vmem:[#allocation3 + $0xc] sm:$0x1]
        %v7285 = vld [vmem:[#allocation3 + $0x14] sm:$0x1]
        %v7286 = vld [vmem:[#allocation3 + $0x1c] sm:$0x1]
        %v7287 = vld [vmem:[#allocation3 + $0x24] sm:$0x1]
        %v7288 = vld [vmem:[#allocation3 + $0x2c] sm:$0x1]
        %v7289 = vld [vmem:[#allocation3 + $0x34] sm:$0x1]
        %v7290 = vld [vmem:[#allocation3 + $0x3c] sm:$0x1]
        %s7291 = scalar_lea.vmem %s8, 16
        %v7292 = vld [vmem:[%s7291] sm:$0xf]
        %v7293 = vld [vmem:[%s7291 + $0x4] sm:$0xf]
        %v7294 = vld [vmem:[%s7291 + $0x8] sm:$0xf]
        %v7295 = vld [vmem:[%s7291 + $0xc] sm:$0xf]
        %v7298 = vunpack.c.l.b16 %v7271
        %v7299 = vunpack.c.l.b16 %v7283
        %v7300 = vpack.c.b16 %v7299, %v7298
        %v7302 = vshrl.u32 %v7300, 16
        %v7304 = vshll.u32 %v7300, 16
        %v7306 = vrot.slane %v7304, 1
        %v7307 = vor.u32 %v7302, %v7306
        %v7312 = vunpack.c.l.b16 %v7292
        %v7313 = vunpack.c.l.b16 %v7293
        %v7314 = vunpack.c.l.b16 %v7294
        %v7315 = vunpack.c.l.b16 %v7295
        %v7316 = vpack.c.b16 %v7313, %v7312
        %v7317 = vpack.c.b16 %v7315, %v7314
        %vm7320 = vcmask 261120
        %v7322 = vsel %vm7320, %v7307, 0
        %7324 = vmatprep.subr.bf16.mxu0 0
        %7325 = vmatpush1.bf16.msra.mxu0 0
        %7326 = vmatprep.subr.bf16.mxu0 0
        %7327 = vmatpush1.bf16.msra.mxu0 0
        %7328 = vmatprep.subr.bf16.mxu0 0
        %7329 = vmatpush1.bf16.msra.mxu0 0
        %7330 = vmatprep.subr.bf16.mxu0 0
        %7331 = vmatpush1.bf16.msra.mxu0 0
        %7332 = vmatprep.subr.bf16.mxu0 0
        %7333 = vmatpush1.bf16.msra.mxu0 0
        %7334 = vmatprep.subr.bf16.mxu0 0
        %7335 = vmatpush1.bf16.msra.mxu0 0
        %7336 = vmatprep.subr.bf16.mxu0 0
        %7337 = vmatpush1.bf16.msra.mxu0 %v7317
        %7338 = vmatprep.subr.bf16.mxu0 0
        %7339 = vmatpush1.bf16.msra.mxu0 %v7316
        %7340 = vmatprep.subr.bf16.mxu0 0
        %7341 = vmatpush2.bf16.msra.mxu0 0
        %7342 = vmatprep.subr.bf16.mxu0 0
        %7343 = vmatpush2.bf16.msra.mxu0 0
        %7344 = vmatprep.subr.bf16.mxu0 0
        %7345 = vmatpush2.bf16.msra.mxu0 0
        %7346 = vmatprep.subr.bf16.mxu0 0
        %7347 = vmatpush2.bf16.msra.mxu0 0
        %7348 = vmatprep.subr.bf16.mxu0 0
        %7349 = vmatpush2.bf16.msra.mxu0 0
        %7350 = vmatprep.subr.bf16.mxu0 0
        %7351 = vmatpush2.bf16.msra.mxu0 0
        %7352 = vmatprep.subr.bf16.mxu0 0
        %7353 = vmatpush2.bf16.msra.mxu0 0
        %7354 = vmatprep.subr.bf16.mxu0 0
        %7355 = vmatpush2.bf16.msra.mxu0 0
        %7356 = vmatprep.mubr.bf16.mxu0 0
        %7357 = vmatmul.mubr.bf16.gmra.mxu0 %v7322
        %v7358 = vpop.f32.mrf.mxu0
        %v7359 = vadd.f32 0.0, %v7358
        %v7360 = vpop.f32.mrf.mxu0
        %v7361 = vpop.f32.mrf.mxu0
        %v7362 = vpop.f32.mrf.mxu0
        %7363 = vdwg.mxu0
        %v7366 = vunpack.c.l.b16 %v7272
        %v7367 = vunpack.c.l.b16 %v7284
        %v7368 = vpack.c.b16 %v7367, %v7366
        %v7370 = vshrl.u32 %v7368, 16
        %v7372 = vshll.u32 %v7368, 16
        %v7374 = vrot.slane %v7372, 1
        %v7375 = vor.u32 %v7370, %v7374
        %v7377 = vsel %vm7320, %v7375, 0
        %7379 = vmatprep.subr.bf16.mxu0 0
        %7380 = vmatpush1.bf16.msra.mxu0 0
        %7381 = vmatprep.subr.bf16.mxu0 0
        %7382 = vmatpush1.bf16.msra.mxu0 0
        %7383 = vmatprep.subr.bf16.mxu0 0
        %7384 = vmatpush1.bf16.msra.mxu0 0
        %7385 = vmatprep.subr.bf16.mxu0 0
        %7386 = vmatpush1.bf16.msra.mxu0 0
        %7387 = vmatprep.subr.bf16.mxu0 0
        %7388 = vmatpush1.bf16.msra.mxu0 0
        %7389 = vmatprep.subr.bf16.mxu0 0
        %7390 = vmatpush1.bf16.msra.mxu0 0
        %7391 = vmatprep.subr.bf16.mxu0 0
        %7392 = vmatpush1.bf16.msra.mxu0 %v7317
        %7393 = vmatprep.subr.bf16.mxu0 0
        %7394 = vmatpush1.bf16.msra.mxu0 %v7316
        %7395 = vmatprep.subr.bf16.mxu0 0
        %7396 = vmatpush2.bf16.msra.mxu0 0
        %7397 = vmatprep.subr.bf16.mxu0 0
        %7398 = vmatpush2.bf16.msra.mxu0 0
        %7399 = vmatprep.subr.bf16.mxu0 0
        %7400 = vmatpush2.bf16.msra.mxu0 0
        %7401 = vmatprep.subr.bf16.mxu0 0
        %7402 = vmatpush2.bf16.msra.mxu0 0
        %7403 = vmatprep.subr.bf16.mxu0 0
        %7404 = vmatpush2.bf16.msra.mxu0 0
        %7405 = vmatprep.subr.bf16.mxu0 0
        %7406 = vmatpush2.bf16.msra.mxu0 0
        %7407 = vmatprep.subr.bf16.mxu0 0
        %7408 = vmatpush2.bf16.msra.mxu0 0
        %7409 = vmatprep.subr.bf16.mxu0 0
        %7410 = vmatpush2.bf16.msra.mxu0 0
        %7411 = vmatprep.mubr.bf16.mxu0 0
        %7412 = vmatmul.mubr.bf16.gmra.mxu0 %v7377
        %v7413 = vpop.f32.mrf.mxu0
        %v7414 = vadd.f32 0.0, %v7413
        %v7415 = vpop.f32.mrf.mxu0
        %v7416 = vpop.f32.mrf.mxu0
        %v7417 = vpop.f32.mrf.mxu0
        %7418 = vdwg.mxu0
        %v7421 = vunpack.c.l.b16 %v7273
        %v7422 = vunpack.c.l.b16 %v7285
        %v7423 = vpack.c.b16 %v7422, %v7421
        %v7425 = vshrl.u32 %v7423, 16
        %v7427 = vshll.u32 %v7423, 16
        %v7429 = vrot.slane %v7427, 1
        %v7430 = vor.u32 %v7425, %v7429
        %v7432 = vsel %vm7320, %v7430, 0
        %7434 = vmatprep.subr.bf16.mxu0 0
        %7435 = vmatpush1.bf16.msra.mxu0 0
        %7436 = vmatprep.subr.bf16.mxu0 0
        %7437 = vmatpush1.bf16.msra.mxu0 0
        %7438 = vmatprep.subr.bf16.mxu0 0
        %7439 = vmatpush1.bf16.msra.mxu0 0
        %7440 = vmatprep.subr.bf16.mxu0 0
        %7441 = vmatpush1.bf16.msra.mxu0 0
        %7442 = vmatprep.subr.bf16.mxu0 0
        %7443 = vmatpush1.bf16.msra.mxu0 0
        %7444 = vmatprep.subr.bf16.mxu0 0
        %7445 = vmatpush1.bf16.msra.mxu0 0
        %7446 = vmatprep.subr.bf16.mxu0 0
        %7447 = vmatpush1.bf16.msra.mxu0 %v7317
        %7448 = vmatprep.subr.bf16.mxu0 0
        %7449 = vmatpush1.bf16.msra.mxu0 %v7316
        %7450 = vmatprep.subr.bf16.mxu0 0
        %7451 = vmatpush2.bf16.msra.mxu0 0
        %7452 = vmatprep.subr.bf16.mxu0 0
        %7453 = vmatpush2.bf16.msra.mxu0 0
        %7454 = vmatprep.subr.bf16.mxu0 0
        %7455 = vmatpush2.bf16.msra.mxu0 0
        %7456 = vmatprep.subr.bf16.mxu0 0
        %7457 = vmatpush2.bf16.msra.mxu0 0
        %7458 = vmatprep.subr.bf16.mxu0 0
        %7459 = vmatpush2.bf16.msra.mxu0 0
        %7460 = vmatprep.subr.bf16.mxu0 0
        %7461 = vmatpush2.bf16.msra.mxu0 0
        %7462 = vmatprep.subr.bf16.mxu0 0
        %7463 = vmatpush2.bf16.msra.mxu0 0
        %7464 = vmatprep.subr.bf16.mxu0 0
        %7465 = vmatpush2.bf16.msra.mxu0 0
        %7466 = vmatprep.mubr.bf16.mxu0 0
        %7467 = vmatmul.mubr.bf16.gmra.mxu0 %v7432
        %v7468 = vpop.f32.mrf.mxu0
        %v7469 = vadd.f32 0.0, %v7468
        %v7470 = vpop.f32.mrf.mxu0
        %v7471 = vpop.f32.mrf.mxu0
        %v7472 = vpop.f32.mrf.mxu0
        %7473 = vdwg.mxu0
        %v7476 = vunpack.c.l.b16 %v7274
        %v7477 = vunpack.c.l.b16 %v7286
        %v7478 = vpack.c.b16 %v7477, %v7476
        %v7480 = vshrl.u32 %v7478, 16
        %v7482 = vshll.u32 %v7478, 16
        %v7484 = vrot.slane %v7482, 1
        %v7485 = vor.u32 %v7480, %v7484
        %v7487 = vsel %vm7320, %v7485, 0
        %7489 = vmatprep.subr.bf16.mxu0 0
        %7490 = vmatpush1.bf16.msra.mxu0 0
        %7491 = vmatprep.subr.bf16.mxu0 0
        %7492 = vmatpush1.bf16.msra.mxu0 0
        %7493 = vmatprep.subr.bf16.mxu0 0
        %7494 = vmatpush1.bf16.msra.mxu0 0
        %7495 = vmatprep.subr.bf16.mxu0 0
        %7496 = vmatpush1.bf16.msra.mxu0 0
        %7497 = vmatprep.subr.bf16.mxu0 0
        %7498 = vmatpush1.bf16.msra.mxu0 0
        %7499 = vmatprep.subr.bf16.mxu0 0
        %7500 = vmatpush1.bf16.msra.mxu0 0
        %7501 = vmatprep.subr.bf16.mxu0 0
        %7502 = vmatpush1.bf16.msra.mxu0 %v7317
        %7503 = vmatprep.subr.bf16.mxu0 0
        %7504 = vmatpush1.bf16.msra.mxu0 %v7316
        %7505 = vmatprep.subr.bf16.mxu0 0
        %7506 = vmatpush2.bf16.msra.mxu0 0
        %7507 = vmatprep.subr.bf16.mxu0 0
        %7508 = vmatpush2.bf16.msra.mxu0 0
        %7509 = vmatprep.subr.bf16.mxu0 0
        %7510 = vmatpush2.bf16.msra.mxu0 0
        %7511 = vmatprep.subr.bf16.mxu0 0
        %7512 = vmatpush2.bf16.msra.mxu0 0
        %7513 = vmatprep.subr.bf16.mxu0 0
        %7514 = vmatpush2.bf16.msra.mxu0 0
        %7515 = vmatprep.subr.bf16.mxu0 0
        %7516 = vmatpush2.bf16.msra.mxu0 0
        %7517 = vmatprep.subr.bf16.mxu0 0
        %7518 = vmatpush2.bf16.msra.mxu0 0
        %7519 = vmatprep.subr.bf16.mxu0 0
        %7520 = vmatpush2.bf16.msra.mxu0 0
        %7521 = vmatprep.mubr.bf16.mxu0 0
        %7522 = vmatmul.mubr.bf16.gmra.mxu0 %v7487
        %v7523 = vpop.f32.mrf.mxu0
        %v7524 = vadd.f32 0.0, %v7523
        %v7525 = vpop.f32.mrf.mxu0
        %v7526 = vpop.f32.mrf.mxu0
        %v7527 = vpop.f32.mrf.mxu0
        %7528 = vdwg.mxu0
        %v7531 = vunpack.c.l.b16 %v7275
        %v7532 = vunpack.c.l.b16 %v7287
        %v7533 = vpack.c.b16 %v7532, %v7531
        %v7535 = vshrl.u32 %v7533, 16
        %v7537 = vshll.u32 %v7533, 16
        %v7539 = vrot.slane %v7537, 1
        %v7540 = vor.u32 %v7535, %v7539
        %v7542 = vsel %vm7320, %v7540, 0
        %7544 = vmatprep.subr.bf16.mxu0 0
        %7545 = vmatpush1.bf16.msra.mxu0 0
        %7546 = vmatprep.subr.bf16.mxu0 0
        %7547 = vmatpush1.bf16.msra.mxu0 0
        %7548 = vmatprep.subr.bf16.mxu0 0
        %7549 = vmatpush1.bf16.msra.mxu0 0
        %7550 = vmatprep.subr.bf16.mxu0 0
        %7551 = vmatpush1.bf16.msra.mxu0 0
        %7552 = vmatprep.subr.bf16.mxu0 0
        %7553 = vmatpush1.bf16.msra.mxu0 0
        %7554 = vmatprep.subr.bf16.mxu0 0
        %7555 = vmatpush1.bf16.msra.mxu0 0
        %7556 = vmatprep.subr.bf16.mxu0 0
        %7557 = vmatpush1.bf16.msra.mxu0 %v7317
        %7558 = vmatprep.subr.bf16.mxu0 0
        %7559 = vmatpush1.bf16.msra.mxu0 %v7316
        %7560 = vmatprep.subr.bf16.mxu0 0
        %7561 = vmatpush2.bf16.msra.mxu0 0
        %7562 = vmatprep.subr.bf16.mxu0 0
        %7563 = vmatpush2.bf16.msra.mxu0 0
        %7564 = vmatprep.subr.bf16.mxu0 0
        %7565 = vmatpush2.bf16.msra.mxu0 0
        %7566 = vmatprep.subr.bf16.mxu0 0
        %7567 = vmatpush2.bf16.msra.mxu0 0
        %7568 = vmatprep.subr.bf16.mxu0 0
        %7569 = vmatpush2.bf16.msra.mxu0 0
        %7570 = vmatprep.subr.bf16.mxu0 0
        %7571 = vmatpush2.bf16.msra.mxu0 0
        %7572 = vmatprep.subr.bf16.mxu0 0
        %7573 = vmatpush2.bf16.msra.mxu0 0
        %7574 = vmatprep.subr.bf16.mxu0 0
        %7575 = vmatpush2.bf16.msra.mxu0 0
        %7576 = vmatprep.mubr.bf16.mxu0 0
        %7577 = vmatmul.mubr.bf16.gmra.mxu0 %v7542
        %v7578 = vpop.f32.mrf.mxu0
        %v7579 = vadd.f32 0.0, %v7578
        %v7580 = vpop.f32.mrf.mxu0
        %v7581 = vpop.f32.mrf.mxu0
        %v7582 = vpop.f32.mrf.mxu0
        %7583 = vdwg.mxu0
        %v7586 = vunpack.c.l.b16 %v7276
        %v7587 = vunpack.c.l.b16 %v7288
        %v7588 = vpack.c.b16 %v7587, %v7586
        %v7590 = vshrl.u32 %v7588, 16
        %v7592 = vshll.u32 %v7588, 16
        %v7594 = vrot.slane %v7592, 1
        %v7595 = vor.u32 %v7590, %v7594
        %v7597 = vsel %vm7320, %v7595, 0
        %7599 = vmatprep.subr.bf16.mxu0 0
        %7600 = vmatpush1.bf16.msra.mxu0 0
        %7601 = vmatprep.subr.bf16.mxu0 0
        %7602 = vmatpush1.bf16.msra.mxu0 0
        %7603 = vmatprep.subr.bf16.mxu0 0
        %7604 = vmatpush1.bf16.msra.mxu0 0
        %7605 = vmatprep.subr.bf16.mxu0 0
        %7606 = vmatpush1.bf16.msra.mxu0 0
        %7607 = vmatprep.subr.bf16.mxu0 0
        %7608 = vmatpush1.bf16.msra.mxu0 0
        %7609 = vmatprep.subr.bf16.mxu0 0
        %7610 = vmatpush1.bf16.msra.mxu0 0
        %7611 = vmatprep.subr.bf16.mxu0 0
        %7612 = vmatpush1.bf16.msra.mxu0 %v7317
        %7613 = vmatprep.subr.bf16.mxu0 0
        %7614 = vmatpush1.bf16.msra.mxu0 %v7316
        %7615 = vmatprep.subr.bf16.mxu0 0
        %7616 = vmatpush2.bf16.msra.mxu0 0
        %7617 = vmatprep.subr.bf16.mxu0 0
        %7618 = vmatpush2.bf16.msra.mxu0 0
        %7619 = vmatprep.subr.bf16.mxu0 0
        %7620 = vmatpush2.bf16.msra.mxu0 0
        %7621 = vmatprep.subr.bf16.mxu0 0
        %7622 = vmatpush2.bf16.msra.mxu0 0
        %7623 = vmatprep.subr.bf16.mxu0 0
        %7624 = vmatpush2.bf16.msra.mxu0 0
        %7625 = vmatprep.subr.bf16.mxu0 0
        %7626 = vmatpush2.bf16.msra.mxu0 0
        %7627 = vmatprep.subr.bf16.mxu0 0
        %7628 = vmatpush2.bf16.msra.mxu0 0
        %7629 = vmatprep.subr.bf16.mxu0 0
        %7630 = vmatpush2.bf16.msra.mxu0 0
        %7631 = vmatprep.mubr.bf16.mxu0 0
        %7632 = vmatmul.mubr.bf16.gmra.mxu0 %v7597
        %v7633 = vpop.f32.mrf.mxu0
        %v7634 = vadd.f32 0.0, %v7633
        %v7635 = vpop.f32.mrf.mxu0
        %v7636 = vpop.f32.mrf.mxu0
        %v7637 = vpop.f32.mrf.mxu0
        %7638 = vdwg.mxu0
        %v7641 = vunpack.c.l.b16 %v7277
        %v7642 = vunpack.c.l.b16 %v7289
        %v7643 = vpack.c.b16 %v7642, %v7641
        %v7645 = vshrl.u32 %v7643, 16
        %v7647 = vshll.u32 %v7643, 16
        %v7649 = vrot.slane %v7647, 1
        %v7650 = vor.u32 %v7645, %v7649
        %v7652 = vsel %vm7320, %v7650, 0
        %7654 = vmatprep.subr.bf16.mxu0 0
        %7655 = vmatpush1.bf16.msra.mxu0 0
        %7656 = vmatprep.subr.bf16.mxu0 0
        %7657 = vmatpush1.bf16.msra.mxu0 0
        %7658 = vmatprep.subr.bf16.mxu0 0
        %7659 = vmatpush1.bf16.msra.mxu0 0
        %7660 = vmatprep.subr.bf16.mxu0 0
        %7661 = vmatpush1.bf16.msra.mxu0 0
        %7662 = vmatprep.subr.bf16.mxu0 0
        %7663 = vmatpush1.bf16.msra.mxu0 0
        %7664 = vmatprep.subr.bf16.mxu0 0
        %7665 = vmatpush1.bf16.msra.mxu0 0
        %7666 = vmatprep.subr.bf16.mxu0 0
        %7667 = vmatpush1.bf16.msra.mxu0 %v7317
        %7668 = vmatprep.subr.bf16.mxu0 0
        %7669 = vmatpush1.bf16.msra.mxu0 %v7316
        %7670 = vmatprep.subr.bf16.mxu0 0
        %7671 = vmatpush2.bf16.msra.mxu0 0
        %7672 = vmatprep.subr.bf16.mxu0 0
        %7673 = vmatpush2.bf16.msra.mxu0 0
        %7674 = vmatprep.subr.bf16.mxu0 0
        %7675 = vmatpush2.bf16.msra.mxu0 0
        %7676 = vmatprep.subr.bf16.mxu0 0
        %7677 = vmatpush2.bf16.msra.mxu0 0
        %7678 = vmatprep.subr.bf16.mxu0 0
        %7679 = vmatpush2.bf16.msra.mxu0 0
        %7680 = vmatprep.subr.bf16.mxu0 0
        %7681 = vmatpush2.bf16.msra.mxu0 0
        %7682 = vmatprep.subr.bf16.mxu0 0
        %7683 = vmatpush2.bf16.msra.mxu0 0
        %7684 = vmatprep.subr.bf16.mxu0 0
        %7685 = vmatpush2.bf16.msra.mxu0 0
        %7686 = vmatprep.mubr.bf16.mxu0 0
        %7687 = vmatmul.mubr.bf16.gmra.mxu0 %v7652
        %v7688 = vpop.f32.mrf.mxu0
        %v7689 = vadd.f32 0.0, %v7688
        %v7690 = vpop.f32.mrf.mxu0
        %v7691 = vpop.f32.mrf.mxu0
        %v7692 = vpop.f32.mrf.mxu0
        %7693 = vdwg.mxu0
        %v7696 = vunpack.c.l.b16 %v7278
        %v7697 = vunpack.c.l.b16 %v7290
        %v7698 = vpack.c.b16 %v7697, %v7696
        %v7700 = vshrl.u32 %v7698, 16
        %v7702 = vshll.u32 %v7698, 16
        %v7704 = vrot.slane %v7702, 1
        %v7705 = vor.u32 %v7700, %v7704
        %v7707 = vsel %vm7320, %v7705, 0
        %7709 = vmatprep.subr.bf16.mxu0 0
        %7710 = vmatpush1.bf16.msra.mxu0 0
        %7711 = vmatprep.subr.bf16.mxu0 0
        %7712 = vmatpush1.bf16.msra.mxu0 0
        %7713 = vmatprep.subr.bf16.mxu0 0
        %7714 = vmatpush1.bf16.msra.mxu0 0
        %7715 = vmatprep.subr.bf16.mxu0 0
        %7716 = vmatpush1.bf16.msra.mxu0 0
        %7717 = vmatprep.subr.bf16.mxu0 0
        %7718 = vmatpush1.bf16.msra.mxu0 0
        %7719 = vmatprep.subr.bf16.mxu0 0
        %7720 = vmatpush1.bf16.msra.mxu0 0
        %7721 = vmatprep.subr.bf16.mxu0 0
        %7722 = vmatpush1.bf16.msra.mxu0 %v7317
        %7723 = vmatprep.subr.bf16.mxu0 0
        %7724 = vmatpush1.bf16.msra.mxu0 %v7316
        %7725 = vmatprep.subr.bf16.mxu0 0
        %7726 = vmatpush2.bf16.msra.mxu0 0
        %7727 = vmatprep.subr.bf16.mxu0 0
        %7728 = vmatpush2.bf16.msra.mxu0 0
        %7729 = vmatprep.subr.bf16.mxu0 0
        %7730 = vmatpush2.bf16.msra.mxu0 0
        %7731 = vmatprep.subr.bf16.mxu0 0
        %7732 = vmatpush2.bf16.msra.mxu0 0
        %7733 = vmatprep.subr.bf16.mxu0 0
        %7734 = vmatpush2.bf16.msra.mxu0 0
        %7735 = vmatprep.subr.bf16.mxu0 0
        %7736 = vmatpush2.bf16.msra.mxu0 0
        %7737 = vmatprep.subr.bf16.mxu0 0
        %7738 = vmatpush2.bf16.msra.mxu0 0
        %7739 = vmatprep.subr.bf16.mxu0 0
        %7740 = vmatpush2.bf16.msra.mxu0 0
        %7741 = vmatprep.mubr.bf16.mxu0 0
        %7742 = vmatmul.mubr.bf16.gmra.mxu0 %v7707
        %v7743 = vpop.f32.mrf.mxu0
        %v7744 = vadd.f32 0.0, %v7743
        %v7745 = vpop.f32.mrf.mxu0
        %v7746 = vpop.f32.mrf.mxu0
        %v7747 = vpop.f32.mrf.mxu0
        %7748 = vdwg.mxu0
        %v7753 = vunpack.c.l.b16 %v7279
        %v7754 = vunpack.c.l.b16 %v7280
        %v7755 = vunpack.c.l.b16 %v7281
        %v7756 = vunpack.c.l.b16 %v7282
        %v7757 = vpack.c.b16 %v7754, %v7753
        %v7758 = vpack.c.b16 %v7756, %v7755
        %v7762 = vsel %vm7320, %v7271, 0
        %7764 = vmatprep.subr.bf16.mxu0 0
        %7765 = vmatpush1.bf16.msra.mxu0 0
        %7766 = vmatprep.subr.bf16.mxu0 0
        %7767 = vmatpush1.bf16.msra.mxu0 0
        %7768 = vmatprep.subr.bf16.mxu0 0
        %7769 = vmatpush1.bf16.msra.mxu0 0
        %7770 = vmatprep.subr.bf16.mxu0 0
        %7771 = vmatpush1.bf16.msra.mxu0 0
        %7772 = vmatprep.subr.bf16.mxu0 0
        %7773 = vmatpush1.bf16.msra.mxu0 0
        %7774 = vmatprep.subr.bf16.mxu0 0
        %7775 = vmatpush1.bf16.msra.mxu0 0
        %7776 = vmatprep.subr.bf16.mxu0 0
        %7777 = vmatpush1.bf16.msra.mxu0 %v7758
        %7778 = vmatprep.subr.bf16.mxu0 0
        %7779 = vmatpush1.bf16.msra.mxu0 %v7757
        %7780 = vmatprep.subr.bf16.mxu0 0
        %7781 = vmatpush2.bf16.msra.mxu0 0
        %7782 = vmatprep.subr.bf16.mxu0 0
        %7783 = vmatpush2.bf16.msra.mxu0 0
        %7784 = vmatprep.subr.bf16.mxu0 0
        %7785 = vmatpush2.bf16.msra.mxu0 0
        %7786 = vmatprep.subr.bf16.mxu0 0
        %7787 = vmatpush2.bf16.msra.mxu0 0
        %7788 = vmatprep.subr.bf16.mxu0 0
        %7789 = vmatpush2.bf16.msra.mxu0 0
        %7790 = vmatprep.subr.bf16.mxu0 0
        %7791 = vmatpush2.bf16.msra.mxu0 0
        %7792 = vmatprep.subr.bf16.mxu0 0
        %7793 = vmatpush2.bf16.msra.mxu0 0
        %7794 = vmatprep.subr.bf16.mxu0 0
        %7795 = vmatpush2.bf16.msra.mxu0 0
        %7796 = vmatprep.mubr.bf16.mxu0 0
        %7797 = vmatmul.mubr.bf16.gmra.mxu0 %v7762
        %v7798 = vpop.f32.mrf.mxu0
        %v7799 = vadd.f32 %v7359, %v7798
        %v7800 = vpop.f32.mrf.mxu0
        %v7801 = vpop.f32.mrf.mxu0
        %v7802 = vpop.f32.mrf.mxu0
        %7803 = vdwg.mxu0
        %v7805 = vsel %vm7320, %v7272, 0
        %7807 = vmatprep.subr.bf16.mxu0 0
        %7808 = vmatpush1.bf16.msra.mxu0 0
        %7809 = vmatprep.subr.bf16.mxu0 0
        %7810 = vmatpush1.bf16.msra.mxu0 0
        %7811 = vmatprep.subr.bf16.mxu0 0
        %7812 = vmatpush1.bf16.msra.mxu0 0
        %7813 = vmatprep.subr.bf16.mxu0 0
        %7814 = vmatpush1.bf16.msra.mxu0 0
        %7815 = vmatprep.subr.bf16.mxu0 0
        %7816 = vmatpush1.bf16.msra.mxu0 0
        %7817 = vmatprep.subr.bf16.mxu0 0
        %7818 = vmatpush1.bf16.msra.mxu0 0
        %7819 = vmatprep.subr.bf16.mxu0 0
        %7820 = vmatpush1.bf16.msra.mxu0 %v7758
        %7821 = vmatprep.subr.bf16.mxu0 0
        %7822 = vmatpush1.bf16.msra.mxu0 %v7757
        %7823 = vmatprep.subr.bf16.mxu0 0
        %7824 = vmatpush2.bf16.msra.mxu0 0
        %7825 = vmatprep.subr.bf16.mxu0 0
        %7826 = vmatpush2.bf16.msra.mxu0 0
        %7827 = vmatprep.subr.bf16.mxu0 0
        %7828 = vmatpush2.bf16.msra.mxu0 0
        %7829 = vmatprep.subr.bf16.mxu0 0
        %7830 = vmatpush2.bf16.msra.mxu0 0
        %7831 = vmatprep.subr.bf16.mxu0 0
        %7832 = vmatpush2.bf16.msra.mxu0 0
        %7833 = vmatprep.subr.bf16.mxu0 0
        %7834 = vmatpush2.bf16.msra.mxu0 0
        %7835 = vmatprep.subr.bf16.mxu0 0
        %7836 = vmatpush2.bf16.msra.mxu0 0
        %7837 = vmatprep.subr.bf16.mxu0 0
        %7838 = vmatpush2.bf16.msra.mxu0 0
        %7839 = vmatprep.mubr.bf16.mxu0 0
        %7840 = vmatmul.mubr.bf16.gmra.mxu0 %v7805
        %v7841 = vpop.f32.mrf.mxu0
        %v7842 = vadd.f32 %v7414, %v7841
        %v7843 = vpop.f32.mrf.mxu0
        %v7844 = vpop.f32.mrf.mxu0
        %v7845 = vpop.f32.mrf.mxu0
        %7846 = vdwg.mxu0
        %v7848 = vsel %vm7320, %v7273, 0
        %7850 = vmatprep.subr.bf16.mxu0 0
        %7851 = vmatpush1.bf16.msra.mxu0 0
        %7852 = vmatprep.subr.bf16.mxu0 0
        %7853 = vmatpush1.bf16.msra.mxu0 0
        %7854 = vmatprep.subr.bf16.mxu0 0
        %7855 = vmatpush1.bf16.msra.mxu0 0
        %7856 = vmatprep.subr.bf16.mxu0 0
        %7857 = vmatpush1.bf16.msra.mxu0 0
        %7858 = vmatprep.subr.bf16.mxu0 0
        %7859 = vmatpush1.bf16.msra.mxu0 0
        %7860 = vmatprep.subr.bf16.mxu0 0
        %7861 = vmatpush1.bf16.msra.mxu0 0
        %7862 = vmatprep.subr.bf16.mxu0 0
        %7863 = vmatpush1.bf16.msra.mxu0 %v7758
        %7864 = vmatprep.subr.bf16.mxu0 0
        %7865 = vmatpush1.bf16.msra.mxu0 %v7757
        %7866 = vmatprep.subr.bf16.mxu0 0
        %7867 = vmatpush2.bf16.msra.mxu0 0
        %7868 = vmatprep.subr.bf16.mxu0 0
        %7869 = vmatpush2.bf16.msra.mxu0 0
        %7870 = vmatprep.subr.bf16.mxu0 0
        %7871 = vmatpush2.bf16.msra.mxu0 0
        %7872 = vmatprep.subr.bf16.mxu0 0
        %7873 = vmatpush2.bf16.msra.mxu0 0
        %7874 = vmatprep.subr.bf16.mxu0 0
        %7875 = vmatpush2.bf16.msra.mxu0 0
        %7876 = vmatprep.subr.bf16.mxu0 0
        %7877 = vmatpush2.bf16.msra.mxu0 0
        %7878 = vmatprep.subr.bf16.mxu0 0
        %7879 = vmatpush2.bf16.msra.mxu0 0
        %7880 = vmatprep.subr.bf16.mxu0 0
        %7881 = vmatpush2.bf16.msra.mxu0 0
        %7882 = vmatprep.mubr.bf16.mxu0 0
        %7883 = vmatmul.mubr.bf16.gmra.mxu0 %v7848
        %v7884 = vpop.f32.mrf.mxu0
        %v7885 = vadd.f32 %v7469, %v7884
        %v7886 = vpop.f32.mrf.mxu0
        %v7887 = vpop.f32.mrf.mxu0
        %v7888 = vpop.f32.mrf.mxu0
        %7889 = vdwg.mxu0
        %v7891 = vsel %vm7320, %v7274, 0
        %7893 = vmatprep.subr.bf16.mxu0 0
        %7894 = vmatpush1.bf16.msra.mxu0 0
        %7895 = vmatprep.subr.bf16.mxu0 0
        %7896 = vmatpush1.bf16.msra.mxu0 0
        %7897 = vmatprep.subr.bf16.mxu0 0
        %7898 = vmatpush1.bf16.msra.mxu0 0
        %7899 = vmatprep.subr.bf16.mxu0 0
        %7900 = vmatpush1.bf16.msra.mxu0 0
        %7901 = vmatprep.subr.bf16.mxu0 0
        %7902 = vmatpush1.bf16.msra.mxu0 0
        %7903 = vmatprep.subr.bf16.mxu0 0
        %7904 = vmatpush1.bf16.msra.mxu0 0
        %7905 = vmatprep.subr.bf16.mxu0 0
        %7906 = vmatpush1.bf16.msra.mxu0 %v7758
        %7907 = vmatprep.subr.bf16.mxu0 0
        %7908 = vmatpush1.bf16.msra.mxu0 %v7757
        %7909 = vmatprep.subr.bf16.mxu0 0
        %7910 = vmatpush2.bf16.msra.mxu0 0
        %7911 = vmatprep.subr.bf16.mxu0 0
        %7912 = vmatpush2.bf16.msra.mxu0 0
        %7913 = vmatprep.subr.bf16.mxu0 0
        %7914 = vmatpush2.bf16.msra.mxu0 0
        %7915 = vmatprep.subr.bf16.mxu0 0
        %7916 = vmatpush2.bf16.msra.mxu0 0
        %7917 = vmatprep.subr.bf16.mxu0 0
        %7918 = vmatpush2.bf16.msra.mxu0 0
        %7919 = vmatprep.subr.bf16.mxu0 0
        %7920 = vmatpush2.bf16.msra.mxu0 0
        %7921 = vmatprep.subr.bf16.mxu0 0
        %7922 = vmatpush2.bf16.msra.mxu0 0
        %7923 = vmatprep.subr.bf16.mxu0 0
        %7924 = vmatpush2.bf16.msra.mxu0 0
        %7925 = vmatprep.mubr.bf16.mxu0 0
        %7926 = vmatmul.mubr.bf16.gmra.mxu0 %v7891
        %v7927 = vpop.f32.mrf.mxu0
        %v7928 = vadd.f32 %v7524, %v7927
        %v7929 = vpop.f32.mrf.mxu0
        %v7930 = vpop.f32.mrf.mxu0
        %v7931 = vpop.f32.mrf.mxu0
        %7932 = vdwg.mxu0
        %v7934 = vsel %vm7320, %v7275, 0
        %7936 = vmatprep.subr.bf16.mxu0 0
        %7937 = vmatpush1.bf16.msra.mxu0 0
        %7938 = vmatprep.subr.bf16.mxu0 0
        %7939 = vmatpush1.bf16.msra.mxu0 0
        %7940 = vmatprep.subr.bf16.mxu0 0
        %7941 = vmatpush1.bf16.msra.mxu0 0
        %7942 = vmatprep.subr.bf16.mxu0 0
        %7943 = vmatpush1.bf16.msra.mxu0 0
        %7944 = vmatprep.subr.bf16.mxu0 0
        %7945 = vmatpush1.bf16.msra.mxu0 0
        %7946 = vmatprep.subr.bf16.mxu0 0
        %7947 = vmatpush1.bf16.msra.mxu0 0
        %7948 = vmatprep.subr.bf16.mxu0 0
        %7949 = vmatpush1.bf16.msra.mxu0 %v7758
        %7950 = vmatprep.subr.bf16.mxu0 0
        %7951 = vmatpush1.bf16.msra.mxu0 %v7757
        %7952 = vmatprep.subr.bf16.mxu0 0
        %7953 = vmatpush2.bf16.msra.mxu0 0
        %7954 = vmatprep.subr.bf16.mxu0 0
        %7955 = vmatpush2.bf16.msra.mxu0 0
        %7956 = vmatprep.subr.bf16.mxu0 0
        %7957 = vmatpush2.bf16.msra.mxu0 0
        %7958 = vmatprep.subr.bf16.mxu0 0
        %7959 = vmatpush2.bf16.msra.mxu0 0
        %7960 = vmatprep.subr.bf16.mxu0 0
        %7961 = vmatpush2.bf16.msra.mxu0 0
        %7962 = vmatprep.subr.bf16.mxu0 0
        %7963 = vmatpush2.bf16.msra.mxu0 0
        %7964 = vmatprep.subr.bf16.mxu0 0
        %7965 = vmatpush2.bf16.msra.mxu0 0
        %7966 = vmatprep.subr.bf16.mxu0 0
        %7967 = vmatpush2.bf16.msra.mxu0 0
        %7968 = vmatprep.mubr.bf16.mxu0 0
        %7969 = vmatmul.mubr.bf16.gmra.mxu0 %v7934
        %v7970 = vpop.f32.mrf.mxu0
        %v7971 = vadd.f32 %v7579, %v7970
        %v7972 = vpop.f32.mrf.mxu0
        %v7973 = vpop.f32.mrf.mxu0
        %v7974 = vpop.f32.mrf.mxu0
        %7975 = vdwg.mxu0
        %v7977 = vsel %vm7320, %v7276, 0
        %7979 = vmatprep.subr.bf16.mxu0 0
        %7980 = vmatpush1.bf16.msra.mxu0 0
        %7981 = vmatprep.subr.bf16.mxu0 0
        %7982 = vmatpush1.bf16.msra.mxu0 0
        %7983 = vmatprep.subr.bf16.mxu0 0
        %7984 = vmatpush1.bf16.msra.mxu0 0
        %7985 = vmatprep.subr.bf16.mxu0 0
        %7986 = vmatpush1.bf16.msra.mxu0 0
        %7987 = vmatprep.subr.bf16.mxu0 0
        %7988 = vmatpush1.bf16.msra.mxu0 0
        %7989 = vmatprep.subr.bf16.mxu0 0
        %7990 = vmatpush1.bf16.msra.mxu0 0
        %7991 = vmatprep.subr.bf16.mxu0 0
        %7992 = vmatpush1.bf16.msra.mxu0 %v7758
        %7993 = vmatprep.subr.bf16.mxu0 0
        %7994 = vmatpush1.bf16.msra.mxu0 %v7757
        %7995 = vmatprep.subr.bf16.mxu0 0
        %7996 = vmatpush2.bf16.msra.mxu0 0
        %7997 = vmatprep.subr.bf16.mxu0 0
        %7998 = vmatpush2.bf16.msra.mxu0 0
        %7999 = vmatprep.subr.bf16.mxu0 0
        %8000 = vmatpush2.bf16.msra.mxu0 0
        %8001 = vmatprep.subr.bf16.mxu0 0
        %8002 = vmatpush2.bf16.msra.mxu0 0
        %8003 = vmatprep.subr.bf16.mxu0 0
        %8004 = vmatpush2.bf16.msra.mxu0 0
        %8005 = vmatprep.subr.bf16.mxu0 0
        %8006 = vmatpush2.bf16.msra.mxu0 0
        %8007 = vmatprep.subr.bf16.mxu0 0
        %8008 = vmatpush2.bf16.msra.mxu0 0
        %8009 = vmatprep.subr.bf16.mxu0 0
        %8010 = vmatpush2.bf16.msra.mxu0 0
        %8011 = vmatprep.mubr.bf16.mxu0 0
        %8012 = vmatmul.mubr.bf16.gmra.mxu0 %v7977
        %v8013 = vpop.f32.mrf.mxu0
        %v8014 = vadd.f32 %v7634, %v8013
        %v8015 = vpop.f32.mrf.mxu0
        %v8016 = vpop.f32.mrf.mxu0
        %v8017 = vpop.f32.mrf.mxu0
        %8018 = vdwg.mxu0
        %v8020 = vsel %vm7320, %v7277, 0
        %8022 = vmatprep.subr.bf16.mxu0 0
        %8023 = vmatpush1.bf16.msra.mxu0 0
        %8024 = vmatprep.subr.bf16.mxu0 0
        %8025 = vmatpush1.bf16.msra.mxu0 0
        %8026 = vmatprep.subr.bf16.mxu0 0
        %8027 = vmatpush1.bf16.msra.mxu0 0
        %8028 = vmatprep.subr.bf16.mxu0 0
        %8029 = vmatpush1.bf16.msra.mxu0 0
        %8030 = vmatprep.subr.bf16.mxu0 0
        %8031 = vmatpush1.bf16.msra.mxu0 0
        %8032 = vmatprep.subr.bf16.mxu0 0
        %8033 = vmatpush1.bf16.msra.mxu0 0
        %8034 = vmatprep.subr.bf16.mxu0 0
        %8035 = vmatpush1.bf16.msra.mxu0 %v7758
        %8036 = vmatprep.subr.bf16.mxu0 0
        %8037 = vmatpush1.bf16.msra.mxu0 %v7757
        %8038 = vmatprep.subr.bf16.mxu0 0
        %8039 = vmatpush2.bf16.msra.mxu0 0
        %8040 = vmatprep.subr.bf16.mxu0 0
        %8041 = vmatpush2.bf16.msra.mxu0 0
        %8042 = vmatprep.subr.bf16.mxu0 0
        %8043 = vmatpush2.bf16.msra.mxu0 0
        %8044 = vmatprep.subr.bf16.mxu0 0
        %8045 = vmatpush2.bf16.msra.mxu0 0
        %8046 = vmatprep.subr.bf16.mxu0 0
        %8047 = vmatpush2.bf16.msra.mxu0 0
        %8048 = vmatprep.subr.bf16.mxu0 0
        %8049 = vmatpush2.bf16.msra.mxu0 0
        %8050 = vmatprep.subr.bf16.mxu0 0
        %8051 = vmatpush2.bf16.msra.mxu0 0
        %8052 = vmatprep.subr.bf16.mxu0 0
        %8053 = vmatpush2.bf16.msra.mxu0 0
        %8054 = vmatprep.mubr.bf16.mxu0 0
        %8055 = vmatmul.mubr.bf16.gmra.mxu0 %v8020
        %v8056 = vpop.f32.mrf.mxu0
        %v8057 = vadd.f32 %v7689, %v8056
        %v8058 = vpop.f32.mrf.mxu0
        %v8059 = vpop.f32.mrf.mxu0
        %v8060 = vpop.f32.mrf.mxu0
        %8061 = vdwg.mxu0
        %v8063 = vsel %vm7320, %v7278, 0
        %8065 = vmatprep.subr.bf16.mxu0 0
        %8066 = vmatpush1.bf16.msra.mxu0 0
        %8067 = vmatprep.subr.bf16.mxu0 0
        %8068 = vmatpush1.bf16.msra.mxu0 0
        %8069 = vmatprep.subr.bf16.mxu0 0
        %8070 = vmatpush1.bf16.msra.mxu0 0
        %8071 = vmatprep.subr.bf16.mxu0 0
        %8072 = vmatpush1.bf16.msra.mxu0 0
        %8073 = vmatprep.subr.bf16.mxu0 0
        %8074 = vmatpush1.bf16.msra.mxu0 0
        %8075 = vmatprep.subr.bf16.mxu0 0
        %8076 = vmatpush1.bf16.msra.mxu0 0
        %8077 = vmatprep.subr.bf16.mxu0 0
        %8078 = vmatpush1.bf16.msra.mxu0 %v7758
        %8079 = vmatprep.subr.bf16.mxu0 0
        %8080 = vmatpush1.bf16.msra.mxu0 %v7757
        %8081 = vmatprep.subr.bf16.mxu0 0
        %8082 = vmatpush2.bf16.msra.mxu0 0
        %8083 = vmatprep.subr.bf16.mxu0 0
        %8084 = vmatpush2.bf16.msra.mxu0 0
        %8085 = vmatprep.subr.bf16.mxu0 0
        %8086 = vmatpush2.bf16.msra.mxu0 0
        %8087 = vmatprep.subr.bf16.mxu0 0
        %8088 = vmatpush2.bf16.msra.mxu0 0
        %8089 = vmatprep.subr.bf16.mxu0 0
        %8090 = vmatpush2.bf16.msra.mxu0 0
        %8091 = vmatprep.subr.bf16.mxu0 0
        %8092 = vmatpush2.bf16.msra.mxu0 0
        %8093 = vmatprep.subr.bf16.mxu0 0
        %8094 = vmatpush2.bf16.msra.mxu0 0
        %8095 = vmatprep.subr.bf16.mxu0 0
        %8096 = vmatpush2.bf16.msra.mxu0 0
        %8097 = vmatprep.mubr.bf16.mxu0 0
        %8098 = vmatmul.mubr.bf16.gmra.mxu0 %v8063
        %v8099 = vpop.f32.mrf.mxu0
        %v8100 = vadd.f32 %v7744, %v8099
        %v8101 = vpop.f32.mrf.mxu0
        %v8102 = vpop.f32.mrf.mxu0
        %v8103 = vpop.f32.mrf.mxu0
        %8104 = vdwg.mxu0
        %v8105 = vld [vmem:[#allocation3] sm:$0xe]
        %v8106 = vld [vmem:[#allocation3 + $0x8] sm:$0xe]
        %v8107 = vld [vmem:[#allocation3 + $0x10] sm:$0xe]
        %v8108 = vld [vmem:[#allocation3 + $0x18] sm:$0xe]
        %v8109 = vld [vmem:[#allocation3 + $0x20] sm:$0xe]
        %v8110 = vld [vmem:[#allocation3 + $0x28] sm:$0xe]
        %v8111 = vld [vmem:[#allocation3 + $0x30] sm:$0xe]
        %v8112 = vld [vmem:[#allocation3 + $0x38] sm:$0xe]
        %s8113 = scalar_lea.vmem %s8, 32
        %v8114 = vld [vmem:[%s8113] sm:$0xf]
        %v8115 = vld [vmem:[%s8113 + $0x4] sm:$0xf]
        %v8116 = vld [vmem:[%s8113 + $0x8] sm:$0xf]
        %v8117 = vld [vmem:[%s8113 + $0xc] sm:$0xf]
        %v8119 = vunpack.c.l.b16 %v8105
        %v8120 = vpack.c.b16 %v7299, %v8119
        %v8121 = vrot.slane %v8120, 1
        %v8126 = vunpack.c.l.b16 %v8114
        %v8127 = vunpack.c.l.b16 %v8115
        %v8128 = vunpack.c.l.b16 %v8116
        %v8129 = vunpack.c.l.b16 %v8117
        %v8130 = vpack.c.b16 %v8127, %v8126
        %v8131 = vpack.c.b16 %v8129, %v8128
        %v8135 = vsel %vm7320, %v8121, 0
        %8137 = vmatprep.subr.bf16.mxu0 0
        %8138 = vmatpush1.bf16.msra.mxu0 0
        %8139 = vmatprep.subr.bf16.mxu0 0
        %8140 = vmatpush1.bf16.msra.mxu0 0
        %8141 = vmatprep.subr.bf16.mxu0 0
        %8142 = vmatpush1.bf16.msra.mxu0 0
        %8143 = vmatprep.subr.bf16.mxu0 0
        %8144 = vmatpush1.bf16.msra.mxu0 0
        %8145 = vmatprep.subr.bf16.mxu0 0
        %8146 = vmatpush1.bf16.msra.mxu0 0
        %8147 = vmatprep.subr.bf16.mxu0 0
        %8148 = vmatpush1.bf16.msra.mxu0 0
        %8149 = vmatprep.subr.bf16.mxu0 0
        %8150 = vmatpush1.bf16.msra.mxu0 %v8131
        %8151 = vmatprep.subr.bf16.mxu0 0
        %8152 = vmatpush1.bf16.msra.mxu0 %v8130
        %8153 = vmatprep.subr.bf16.mxu0 0
        %8154 = vmatpush2.bf16.msra.mxu0 0
        %8155 = vmatprep.subr.bf16.mxu0 0
        %8156 = vmatpush2.bf16.msra.mxu0 0
        %8157 = vmatprep.subr.bf16.mxu0 0
        %8158 = vmatpush2.bf16.msra.mxu0 0
        %8159 = vmatprep.subr.bf16.mxu0 0
        %8160 = vmatpush2.bf16.msra.mxu0 0
        %8161 = vmatprep.subr.bf16.mxu0 0
        %8162 = vmatpush2.bf16.msra.mxu0 0
        %8163 = vmatprep.subr.bf16.mxu0 0
        %8164 = vmatpush2.bf16.msra.mxu0 0
        %8165 = vmatprep.subr.bf16.mxu0 0
        %8166 = vmatpush2.bf16.msra.mxu0 0
        %8167 = vmatprep.subr.bf16.mxu0 0
        %8168 = vmatpush2.bf16.msra.mxu0 0
        %8169 = vmatprep.mubr.bf16.mxu0 0
        %8170 = vmatmul.mubr.bf16.gmra.mxu0 %v8135
        %v8171 = vpop.f32.mrf.mxu0
        %v8172 = vadd.f32 0.0, %v8171
        %v8173 = vpop.f32.mrf.mxu0
        %v8174 = vpop.f32.mrf.mxu0
        %v8175 = vpop.f32.mrf.mxu0
        %8176 = vdwg.mxu0
        %v8178 = vunpack.c.l.b16 %v8106
        %v8179 = vpack.c.b16 %v7367, %v8178
        %v8180 = vrot.slane %v8179, 1
        %v8182 = vsel %vm7320, %v8180, 0
        %8184 = vmatprep.subr.bf16.mxu0 0
        %8185 = vmatpush1.bf16.msra.mxu0 0
        %8186 = vmatprep.subr.bf16.mxu0 0
        %8187 = vmatpush1.bf16.msra.mxu0 0
        %8188 = vmatprep.subr.bf16.mxu0 0
        %8189 = vmatpush1.bf16.msra.mxu0 0
        %8190 = vmatprep.subr.bf16.mxu0 0
        %8191 = vmatpush1.bf16.msra.mxu0 0
        %8192 = vmatprep.subr.bf16.mxu0 0
        %8193 = vmatpush1.bf16.msra.mxu0 0
        %8194 = vmatprep.subr.bf16.mxu0 0
        %8195 = vmatpush1.bf16.msra.mxu0 0
        %8196 = vmatprep.subr.bf16.mxu0 0
        %8197 = vmatpush1.bf16.msra.mxu0 %v8131
        %8198 = vmatprep.subr.bf16.mxu0 0
        %8199 = vmatpush1.bf16.msra.mxu0 %v8130
        %8200 = vmatprep.subr.bf16.mxu0 0
        %8201 = vmatpush2.bf16.msra.mxu0 0
        %8202 = vmatprep.subr.bf16.mxu0 0
        %8203 = vmatpush2.bf16.msra.mxu0 0
        %8204 = vmatprep.subr.bf16.mxu0 0
        %8205 = vmatpush2.bf16.msra.mxu0 0
        %8206 = vmatprep.subr.bf16.mxu0 0
        %8207 = vmatpush2.bf16.msra.mxu0 0
        %8208 = vmatprep.subr.bf16.mxu0 0
        %8209 = vmatpush2.bf16.msra.mxu0 0
        %8210 = vmatprep.subr.bf16.mxu0 0
        %8211 = vmatpush2.bf16.msra.mxu0 0
        %8212 = vmatprep.subr.bf16.mxu0 0
        %8213 = vmatpush2.bf16.msra.mxu0 0
        %8214 = vmatprep.subr.bf16.mxu0 0
        %8215 = vmatpush2.bf16.msra.mxu0 0
        %8216 = vmatprep.mubr.bf16.mxu0 0
        %8217 = vmatmul.mubr.bf16.gmra.mxu0 %v8182
        %v8218 = vpop.f32.mrf.mxu0
        %v8219 = vadd.f32 0.0, %v8218
        %v8220 = vpop.f32.mrf.mxu0
        %v8221 = vpop.f32.mrf.mxu0
        %v8222 = vpop.f32.mrf.mxu0
        %8223 = vdwg.mxu0
        %v8225 = vunpack.c.l.b16 %v8107
        %v8226 = vpack.c.b16 %v7422, %v8225
        %v8227 = vrot.slane %v8226, 1
        %v8229 = vsel %vm7320, %v8227, 0
        %8231 = vmatprep.subr.bf16.mxu0 0
        %8232 = vmatpush1.bf16.msra.mxu0 0
        %8233 = vmatprep.subr.bf16.mxu0 0
        %8234 = vmatpush1.bf16.msra.mxu0 0
        %8235 = vmatprep.subr.bf16.mxu0 0
        %8236 = vmatpush1.bf16.msra.mxu0 0
        %8237 = vmatprep.subr.bf16.mxu0 0
        %8238 = vmatpush1.bf16.msra.mxu0 0
        %8239 = vmatprep.subr.bf16.mxu0 0
        %8240 = vmatpush1.bf16.msra.mxu0 0
        %8241 = vmatprep.subr.bf16.mxu0 0
        %8242 = vmatpush1.bf16.msra.mxu0 0
        %8243 = vmatprep.subr.bf16.mxu0 0
        %8244 = vmatpush1.bf16.msra.mxu0 %v8131
        %8245 = vmatprep.subr.bf16.mxu0 0
        %8246 = vmatpush1.bf16.msra.mxu0 %v8130
        %8247 = vmatprep.subr.bf16.mxu0 0
        %8248 = vmatpush2.bf16.msra.mxu0 0
        %8249 = vmatprep.subr.bf16.mxu0 0
        %8250 = vmatpush2.bf16.msra.mxu0 0
        %8251 = vmatprep.subr.bf16.mxu0 0
        %8252 = vmatpush2.bf16.msra.mxu0 0
        %8253 = vmatprep.subr.bf16.mxu0 0
        %8254 = vmatpush2.bf16.msra.mxu0 0
        %8255 = vmatprep.subr.bf16.mxu0 0
        %8256 = vmatpush2.bf16.msra.mxu0 0
        %8257 = vmatprep.subr.bf16.mxu0 0
        %8258 = vmatpush2.bf16.msra.mxu0 0
        %8259 = vmatprep.subr.bf16.mxu0 0
        %8260 = vmatpush2.bf16.msra.mxu0 0
        %8261 = vmatprep.subr.bf16.mxu0 0
        %8262 = vmatpush2.bf16.msra.mxu0 0
        %8263 = vmatprep.mubr.bf16.mxu0 0
        %8264 = vmatmul.mubr.bf16.gmra.mxu0 %v8229
        %v8265 = vpop.f32.mrf.mxu0
        %v8266 = vadd.f32 0.0, %v8265
        %v8267 = vpop.f32.mrf.mxu0
        %v8268 = vpop.f32.mrf.mxu0
        %v8269 = vpop.f32.mrf.mxu0
        %8270 = vdwg.mxu0
        %v8272 = vunpack.c.l.b16 %v8108
        %v8273 = vpack.c.b16 %v7477, %v8272
        %v8274 = vrot.slane %v8273, 1
        %v8276 = vsel %vm7320, %v8274, 0
        %8278 = vmatprep.subr.bf16.mxu0 0
        %8279 = vmatpush1.bf16.msra.mxu0 0
        %8280 = vmatprep.subr.bf16.mxu0 0
        %8281 = vmatpush1.bf16.msra.mxu0 0
        %8282 = vmatprep.subr.bf16.mxu0 0
        %8283 = vmatpush1.bf16.msra.mxu0 0
        %8284 = vmatprep.subr.bf16.mxu0 0
        %8285 = vmatpush1.bf16.msra.mxu0 0
        %8286 = vmatprep.subr.bf16.mxu0 0
        %8287 = vmatpush1.bf16.msra.mxu0 0
        %8288 = vmatprep.subr.bf16.mxu0 0
        %8289 = vmatpush1.bf16.msra.mxu0 0
        %8290 = vmatprep.subr.bf16.mxu0 0
        %8291 = vmatpush1.bf16.msra.mxu0 %v8131
        %8292 = vmatprep.subr.bf16.mxu0 0
        %8293 = vmatpush1.bf16.msra.mxu0 %v8130
        %8294 = vmatprep.subr.bf16.mxu0 0
        %8295 = vmatpush2.bf16.msra.mxu0 0
        %8296 = vmatprep.subr.bf16.mxu0 0
        %8297 = vmatpush2.bf16.msra.mxu0 0
        %8298 = vmatprep.subr.bf16.mxu0 0
        %8299 = vmatpush2.bf16.msra.mxu0 0
        %8300 = vmatprep.subr.bf16.mxu0 0
        %8301 = vmatpush2.bf16.msra.mxu0 0
        %8302 = vmatprep.subr.bf16.mxu0 0
        %8303 = vmatpush2.bf16.msra.mxu0 0
        %8304 = vmatprep.subr.bf16.mxu0 0
        %8305 = vmatpush2.bf16.msra.mxu0 0
        %8306 = vmatprep.subr.bf16.mxu0 0
        %8307 = vmatpush2.bf16.msra.mxu0 0
        %8308 = vmatprep.subr.bf16.mxu0 0
        %8309 = vmatpush2.bf16.msra.mxu0 0
        %8310 = vmatprep.mubr.bf16.mxu0 0
        %8311 = vmatmul.mubr.bf16.gmra.mxu0 %v8276
        %v8312 = vpop.f32.mrf.mxu0
        %v8313 = vadd.f32 0.0, %v8312
        %v8314 = vpop.f32.mrf.mxu0
        %v8315 = vpop.f32.mrf.mxu0
        %v8316 = vpop.f32.mrf.mxu0
        %8317 = vdwg.mxu0
        %v8319 = vunpack.c.l.b16 %v8109
        %v8320 = vpack.c.b16 %v7532, %v8319
        %v8321 = vrot.slane %v8320, 1
        %v8323 = vsel %vm7320, %v8321, 0
        %8325 = vmatprep.subr.bf16.mxu0 0
        %8326 = vmatpush1.bf16.msra.mxu0 0
        %8327 = vmatprep.subr.bf16.mxu0 0
        %8328 = vmatpush1.bf16.msra.mxu0 0
        %8329 = vmatprep.subr.bf16.mxu0 0
        %8330 = vmatpush1.bf16.msra.mxu0 0
        %8331 = vmatprep.subr.bf16.mxu0 0
        %8332 = vmatpush1.bf16.msra.mxu0 0
        %8333 = vmatprep.subr.bf16.mxu0 0
        %8334 = vmatpush1.bf16.msra.mxu0 0
        %8335 = vmatprep.subr.bf16.mxu0 0
        %8336 = vmatpush1.bf16.msra.mxu0 0
        %8337 = vmatprep.subr.bf16.mxu0 0
        %8338 = vmatpush1.bf16.msra.mxu0 %v8131
        %8339 = vmatprep.subr.bf16.mxu0 0
        %8340 = vmatpush1.bf16.msra.mxu0 %v8130
        %8341 = vmatprep.subr.bf16.mxu0 0
        %8342 = vmatpush2.bf16.msra.mxu0 0
        %8343 = vmatprep.subr.bf16.mxu0 0
        %8344 = vmatpush2.bf16.msra.mxu0 0
        %8345 = vmatprep.subr.bf16.mxu0 0
        %8346 = vmatpush2.bf16.msra.mxu0 0
        %8347 = vmatprep.subr.bf16.mxu0 0
        %8348 = vmatpush2.bf16.msra.mxu0 0
        %8349 = vmatprep.subr.bf16.mxu0 0
        %8350 = vmatpush2.bf16.msra.mxu0 0
        %8351 = vmatprep.subr.bf16.mxu0 0
        %8352 = vmatpush2.bf16.msra.mxu0 0
        %8353 = vmatprep.subr.bf16.mxu0 0
        %8354 = vmatpush2.bf16.msra.mxu0 0
        %8355 = vmatprep.subr.bf16.mxu0 0
        %8356 = vmatpush2.bf16.msra.mxu0 0
        %8357 = vmatprep.mubr.bf16.mxu0 0
        %8358 = vmatmul.mubr.bf16.gmra.mxu0 %v8323
        %v8359 = vpop.f32.mrf.mxu0
        %v8360 = vadd.f32 0.0, %v8359
        %v8361 = vpop.f32.mrf.mxu0
        %v8362 = vpop.f32.mrf.mxu0
        %v8363 = vpop.f32.mrf.mxu0
        %8364 = vdwg.mxu0
        %v8366 = vunpack.c.l.b16 %v8110
        %v8367 = vpack.c.b16 %v7587, %v8366
        %v8368 = vrot.slane %v8367, 1
        %v8370 = vsel %vm7320, %v8368, 0
        %8372 = vmatprep.subr.bf16.mxu0 0
        %8373 = vmatpush1.bf16.msra.mxu0 0
        %8374 = vmatprep.subr.bf16.mxu0 0
        %8375 = vmatpush1.bf16.msra.mxu0 0
        %8376 = vmatprep.subr.bf16.mxu0 0
        %8377 = vmatpush1.bf16.msra.mxu0 0
        %8378 = vmatprep.subr.bf16.mxu0 0
        %8379 = vmatpush1.bf16.msra.mxu0 0
        %8380 = vmatprep.subr.bf16.mxu0 0
        %8381 = vmatpush1.bf16.msra.mxu0 0
        %8382 = vmatprep.subr.bf16.mxu0 0
        %8383 = vmatpush1.bf16.msra.mxu0 0
        %8384 = vmatprep.subr.bf16.mxu0 0
        %8385 = vmatpush1.bf16.msra.mxu0 %v8131
        %8386 = vmatprep.subr.bf16.mxu0 0
        %8387 = vmatpush1.bf16.msra.mxu0 %v8130
        %8388 = vmatprep.subr.bf16.mxu0 0
        %8389 = vmatpush2.bf16.msra.mxu0 0
        %8390 = vmatprep.subr.bf16.mxu0 0
        %8391 = vmatpush2.bf16.msra.mxu0 0
        %8392 = vmatprep.subr.bf16.mxu0 0
        %8393 = vmatpush2.bf16.msra.mxu0 0
        %8394 = vmatprep.subr.bf16.mxu0 0
        %8395 = vmatpush2.bf16.msra.mxu0 0
        %8396 = vmatprep.subr.bf16.mxu0 0
        %8397 = vmatpush2.bf16.msra.mxu0 0
        %8398 = vmatprep.subr.bf16.mxu0 0
        %8399 = vmatpush2.bf16.msra.mxu0 0
        %8400 = vmatprep.subr.bf16.mxu0 0
        %8401 = vmatpush2.bf16.msra.mxu0 0
        %8402 = vmatprep.subr.bf16.mxu0 0
        %8403 = vmatpush2.bf16.msra.mxu0 0
        %8404 = vmatprep.mubr.bf16.mxu0 0
        %8405 = vmatmul.mubr.bf16.gmra.mxu0 %v8370
        %v8406 = vpop.f32.mrf.mxu0
        %v8407 = vadd.f32 0.0, %v8406
        %v8408 = vpop.f32.mrf.mxu0
        %v8409 = vpop.f32.mrf.mxu0
        %v8410 = vpop.f32.mrf.mxu0
        %8411 = vdwg.mxu0
        %v8413 = vunpack.c.l.b16 %v8111
        %v8414 = vpack.c.b16 %v7642, %v8413
        %v8415 = vrot.slane %v8414, 1
        %v8417 = vsel %vm7320, %v8415, 0
        %8419 = vmatprep.subr.bf16.mxu0 0
        %8420 = vmatpush1.bf16.msra.mxu0 0
        %8421 = vmatprep.subr.bf16.mxu0 0
        %8422 = vmatpush1.bf16.msra.mxu0 0
        %8423 = vmatprep.subr.bf16.mxu0 0
        %8424 = vmatpush1.bf16.msra.mxu0 0
        %8425 = vmatprep.subr.bf16.mxu0 0
        %8426 = vmatpush1.bf16.msra.mxu0 0
        %8427 = vmatprep.subr.bf16.mxu0 0
        %8428 = vmatpush1.bf16.msra.mxu0 0
        %8429 = vmatprep.subr.bf16.mxu0 0
        %8430 = vmatpush1.bf16.msra.mxu0 0
        %8431 = vmatprep.subr.bf16.mxu0 0
        %8432 = vmatpush1.bf16.msra.mxu0 %v8131
        %8433 = vmatprep.subr.bf16.mxu0 0
        %8434 = vmatpush1.bf16.msra.mxu0 %v8130
        %8435 = vmatprep.subr.bf16.mxu0 0
        %8436 = vmatpush2.bf16.msra.mxu0 0
        %8437 = vmatprep.subr.bf16.mxu0 0
        %8438 = vmatpush2.bf16.msra.mxu0 0
        %8439 = vmatprep.subr.bf16.mxu0 0
        %8440 = vmatpush2.bf16.msra.mxu0 0
        %8441 = vmatprep.subr.bf16.mxu0 0
        %8442 = vmatpush2.bf16.msra.mxu0 0
        %8443 = vmatprep.subr.bf16.mxu0 0
        %8444 = vmatpush2.bf16.msra.mxu0 0
        %8445 = vmatprep.subr.bf16.mxu0 0
        %8446 = vmatpush2.bf16.msra.mxu0 0
        %8447 = vmatprep.subr.bf16.mxu0 0
        %8448 = vmatpush2.bf16.msra.mxu0 0
        %8449 = vmatprep.subr.bf16.mxu0 0
        %8450 = vmatpush2.bf16.msra.mxu0 0
        %8451 = vmatprep.mubr.bf16.mxu0 0
        %8452 = vmatmul.mubr.bf16.gmra.mxu0 %v8417
        %v8453 = vpop.f32.mrf.mxu0
        %v8454 = vadd.f32 0.0, %v8453
        %v8455 = vpop.f32.mrf.mxu0
        %v8456 = vpop.f32.mrf.mxu0
        %v8457 = vpop.f32.mrf.mxu0
        %8458 = vdwg.mxu0
        %v8460 = vunpack.c.l.b16 %v8112
        %v8461 = vpack.c.b16 %v7697, %v8460
        %v8462 = vrot.slane %v8461, 1
        %v8464 = vsel %vm7320, %v8462, 0
        %8466 = vmatprep.subr.bf16.mxu0 0
        %8467 = vmatpush1.bf16.msra.mxu0 0
        %8468 = vmatprep.subr.bf16.mxu0 0
        %8469 = vmatpush1.bf16.msra.mxu0 0
        %8470 = vmatprep.subr.bf16.mxu0 0
        %8471 = vmatpush1.bf16.msra.mxu0 0
        %8472 = vmatprep.subr.bf16.mxu0 0
        %8473 = vmatpush1.bf16.msra.mxu0 0
        %8474 = vmatprep.subr.bf16.mxu0 0
        %8475 = vmatpush1.bf16.msra.mxu0 0
        %8476 = vmatprep.subr.bf16.mxu0 0
        %8477 = vmatpush1.bf16.msra.mxu0 0
        %8478 = vmatprep.subr.bf16.mxu0 0
        %8479 = vmatpush1.bf16.msra.mxu0 %v8131
        %8480 = vmatprep.subr.bf16.mxu0 0
        %8481 = vmatpush1.bf16.msra.mxu0 %v8130
        %8482 = vmatprep.subr.bf16.mxu0 0
        %8483 = vmatpush2.bf16.msra.mxu0 0
        %8484 = vmatprep.subr.bf16.mxu0 0
        %8485 = vmatpush2.bf16.msra.mxu0 0
        %8486 = vmatprep.subr.bf16.mxu0 0
        %8487 = vmatpush2.bf16.msra.mxu0 0
        %8488 = vmatprep.subr.bf16.mxu0 0
        %8489 = vmatpush2.bf16.msra.mxu0 0
        %8490 = vmatprep.subr.bf16.mxu0 0
        %8491 = vmatpush2.bf16.msra.mxu0 0
        %8492 = vmatprep.subr.bf16.mxu0 0
        %8493 = vmatpush2.bf16.msra.mxu0 0
        %8494 = vmatprep.subr.bf16.mxu0 0
        %8495 = vmatpush2.bf16.msra.mxu0 0
        %8496 = vmatprep.subr.bf16.mxu0 0
        %8497 = vmatpush2.bf16.msra.mxu0 0
        %8498 = vmatprep.mubr.bf16.mxu0 0
        %8499 = vmatmul.mubr.bf16.gmra.mxu0 %v8464
        %v8500 = vpop.f32.mrf.mxu0
        %v8501 = vadd.f32 0.0, %v8500
        %v8502 = vpop.f32.mrf.mxu0
        %v8503 = vpop.f32.mrf.mxu0
        %v8504 = vpop.f32.mrf.mxu0
        %8505 = vdwg.mxu0
        %v8506 = vadd.f32 %v7799, %v8172
        %v8507 = vadd.f32 %v7842, %v8219
        %v8508 = vadd.f32 %v7885, %v8266
        %v8509 = vadd.f32 %v7928, %v8313
        %v8510 = vadd.f32 %v7971, %v8360
        %v8511 = vadd.f32 %v8014, %v8407
        %v8512 = vadd.f32 %v8057, %v8454
        %v8513 = vadd.f32 %v8100, %v8501
        %s8514 = scalar_lea.vmem [#allocation3], 8
        %v8515 = vld [vmem:[%s8514] sm:$0xf]
        %v8516 = vld [vmem:[%s8514 + $0x8] sm:$0xf]
        %v8517 = vld [vmem:[%s8514 + $0x10] sm:$0xf]
        %v8518 = vld [vmem:[%s8514 + $0x18] sm:$0xf]
        %v8519 = vld [vmem:[%s8514 + $0x20] sm:$0xf]
        %v8520 = vld [vmem:[%s8514 + $0x28] sm:$0xf]
        %v8521 = vld [vmem:[%s8514 + $0x30] sm:$0xf]
        %v8522 = vld [vmem:[%s8514 + $0x38] sm:$0xf]
        %s8523 = scalar_lea.vmem %s8, 48
        %v8524 = vld [vmem:[%s8523] sm:$0xf]
        %v8525 = vld [vmem:[%s8523 + $0x4] sm:$0xf]
        %v8526 = vld [vmem:[%s8523 + $0x8] sm:$0xf]
        %v8527 = vld [vmem:[%s8523 + $0xc] sm:$0xf]
        %v8532 = vunpack.c.l.b16 %v8524
        %v8533 = vunpack.c.l.b16 %v8525
        %v8534 = vunpack.c.l.b16 %v8526
        %v8535 = vunpack.c.l.b16 %v8527
        %v8536 = vpack.c.b16 %v8533, %v8532
        %v8537 = vpack.c.b16 %v8535, %v8534
        %v8541 = vsel %vm7320, %v8515, 0
        %8543 = vmatprep.subr.bf16.mxu0 0
        %8544 = vmatpush1.bf16.msra.mxu0 0
        %8545 = vmatprep.subr.bf16.mxu0 0
        %8546 = vmatpush1.bf16.msra.mxu0 0
        %8547 = vmatprep.subr.bf16.mxu0 0
        %8548 = vmatpush1.bf16.msra.mxu0 0
        %8549 = vmatprep.subr.bf16.mxu0 0
        %8550 = vmatpush1.bf16.msra.mxu0 0
        %8551 = vmatprep.subr.bf16.mxu0 0
        %8552 = vmatpush1.bf16.msra.mxu0 0
        %8553 = vmatprep.subr.bf16.mxu0 0
        %8554 = vmatpush1.bf16.msra.mxu0 0
        %8555 = vmatprep.subr.bf16.mxu0 0
        %8556 = vmatpush1.bf16.msra.mxu0 %v8537
        %8557 = vmatprep.subr.bf16.mxu0 0
        %8558 = vmatpush1.bf16.msra.mxu0 %v8536
        %8559 = vmatprep.subr.bf16.mxu0 0
        %8560 = vmatpush2.bf16.msra.mxu0 0
        %8561 = vmatprep.subr.bf16.mxu0 0
        %8562 = vmatpush2.bf16.msra.mxu0 0
        %8563 = vmatprep.subr.bf16.mxu0 0
        %8564 = vmatpush2.bf16.msra.mxu0 0
        %8565 = vmatprep.subr.bf16.mxu0 0
        %8566 = vmatpush2.bf16.msra.mxu0 0
        %8567 = vmatprep.subr.bf16.mxu0 0
        %8568 = vmatpush2.bf16.msra.mxu0 0
        %8569 = vmatprep.subr.bf16.mxu0 0
        %8570 = vmatpush2.bf16.msra.mxu0 0
        %8571 = vmatprep.subr.bf16.mxu0 0
        %8572 = vmatpush2.bf16.msra.mxu0 0
        %8573 = vmatprep.subr.bf16.mxu0 0
        %8574 = vmatpush2.bf16.msra.mxu0 0
        %8575 = vmatprep.mubr.bf16.mxu0 0
        %8576 = vmatmul.mubr.bf16.gmra.mxu0 %v8541
        %v8577 = vpop.f32.mrf.mxu0
        %v8578 = vadd.f32 0.0, %v8577
        %v8579 = vpop.f32.mrf.mxu0
        %v8580 = vpop.f32.mrf.mxu0
        %v8581 = vpop.f32.mrf.mxu0
        %8582 = vdwg.mxu0
        %v8584 = vsel %vm7320, %v8516, 0
        %8586 = vmatprep.subr.bf16.mxu0 0
        %8587 = vmatpush1.bf16.msra.mxu0 0
        %8588 = vmatprep.subr.bf16.mxu0 0
        %8589 = vmatpush1.bf16.msra.mxu0 0
        %8590 = vmatprep.subr.bf16.mxu0 0
        %8591 = vmatpush1.bf16.msra.mxu0 0
        %8592 = vmatprep.subr.bf16.mxu0 0
        %8593 = vmatpush1.bf16.msra.mxu0 0
        %8594 = vmatprep.subr.bf16.mxu0 0
        %8595 = vmatpush1.bf16.msra.mxu0 0
        %8596 = vmatprep.subr.bf16.mxu0 0
        %8597 = vmatpush1.bf16.msra.mxu0 0
        %8598 = vmatprep.subr.bf16.mxu0 0
        %8599 = vmatpush1.bf16.msra.mxu0 %v8537
        %8600 = vmatprep.subr.bf16.mxu0 0
        %8601 = vmatpush1.bf16.msra.mxu0 %v8536
        %8602 = vmatprep.subr.bf16.mxu0 0
        %8603 = vmatpush2.bf16.msra.mxu0 0
        %8604 = vmatprep.subr.bf16.mxu0 0
        %8605 = vmatpush2.bf16.msra.mxu0 0
        %8606 = vmatprep.subr.bf16.mxu0 0
        %8607 = vmatpush2.bf16.msra.mxu0 0
        %8608 = vmatprep.subr.bf16.mxu0 0
        %8609 = vmatpush2.bf16.msra.mxu0 0
        %8610 = vmatprep.subr.bf16.mxu0 0
        %8611 = vmatpush2.bf16.msra.mxu0 0
        %8612 = vmatprep.subr.bf16.mxu0 0
        %8613 = vmatpush2.bf16.msra.mxu0 0
        %8614 = vmatprep.subr.bf16.mxu0 0
        %8615 = vmatpush2.bf16.msra.mxu0 0
        %8616 = vmatprep.subr.bf16.mxu0 0
        %8617 = vmatpush2.bf16.msra.mxu0 0
        %8618 = vmatprep.mubr.bf16.mxu0 0
        %8619 = vmatmul.mubr.bf16.gmra.mxu0 %v8584
        %v8620 = vpop.f32.mrf.mxu0
        %v8621 = vadd.f32 0.0, %v8620
        %v8622 = vpop.f32.mrf.mxu0
        %v8623 = vpop.f32.mrf.mxu0
        %v8624 = vpop.f32.mrf.mxu0
        %8625 = vdwg.mxu0
        %v8627 = vsel %vm7320, %v8517, 0
        %8629 = vmatprep.subr.bf16.mxu0 0
        %8630 = vmatpush1.bf16.msra.mxu0 0
        %8631 = vmatprep.subr.bf16.mxu0 0
        %8632 = vmatpush1.bf16.msra.mxu0 0
        %8633 = vmatprep.subr.bf16.mxu0 0
        %8634 = vmatpush1.bf16.msra.mxu0 0
        %8635 = vmatprep.subr.bf16.mxu0 0
        %8636 = vmatpush1.bf16.msra.mxu0 0
        %8637 = vmatprep.subr.bf16.mxu0 0
        %8638 = vmatpush1.bf16.msra.mxu0 0
        %8639 = vmatprep.subr.bf16.mxu0 0
        %8640 = vmatpush1.bf16.msra.mxu0 0
        %8641 = vmatprep.subr.bf16.mxu0 0
        %8642 = vmatpush1.bf16.msra.mxu0 %v8537
        %8643 = vmatprep.subr.bf16.mxu0 0
        %8644 = vmatpush1.bf16.msra.mxu0 %v8536
        %8645 = vmatprep.subr.bf16.mxu0 0
        %8646 = vmatpush2.bf16.msra.mxu0 0
        %8647 = vmatprep.subr.bf16.mxu0 0
        %8648 = vmatpush2.bf16.msra.mxu0 0
        %8649 = vmatprep.subr.bf16.mxu0 0
        %8650 = vmatpush2.bf16.msra.mxu0 0
        %8651 = vmatprep.subr.bf16.mxu0 0
        %8652 = vmatpush2.bf16.msra.mxu0 0
        %8653 = vmatprep.subr.bf16.mxu0 0
        %8654 = vmatpush2.bf16.msra.mxu0 0
        %8655 = vmatprep.subr.bf16.mxu0 0
        %8656 = vmatpush2.bf16.msra.mxu0 0
        %8657 = vmatprep.subr.bf16.mxu0 0
        %8658 = vmatpush2.bf16.msra.mxu0 0
        %8659 = vmatprep.subr.bf16.mxu0 0
        %8660 = vmatpush2.bf16.msra.mxu0 0
        %8661 = vmatprep.mubr.bf16.mxu0 0
        %8662 = vmatmul.mubr.bf16.gmra.mxu0 %v8627
        %v8663 = vpop.f32.mrf.mxu0
        %v8664 = vadd.f32 0.0, %v8663
        %v8665 = vpop.f32.mrf.mxu0
        %v8666 = vpop.f32.mrf.mxu0
        %v8667 = vpop.f32.mrf.mxu0
        %8668 = vdwg.mxu0
        %v8670 = vsel %vm7320, %v8518, 0
        %8672 = vmatprep.subr.bf16.mxu0 0
        %8673 = vmatpush1.bf16.msra.mxu0 0
        %8674 = vmatprep.subr.bf16.mxu0 0
        %8675 = vmatpush1.bf16.msra.mxu0 0
        %8676 = vmatprep.subr.bf16.mxu0 0
        %8677 = vmatpush1.bf16.msra.mxu0 0
        %8678 = vmatprep.subr.bf16.mxu0 0
        %8679 = vmatpush1.bf16.msra.mxu0 0
        %8680 = vmatprep.subr.bf16.mxu0 0
        %8681 = vmatpush1.bf16.msra.mxu0 0
        %8682 = vmatprep.subr.bf16.mxu0 0
        %8683 = vmatpush1.bf16.msra.mxu0 0
        %8684 = vmatprep.subr.bf16.mxu0 0
        %8685 = vmatpush1.bf16.msra.mxu0 %v8537
        %8686 = vmatprep.subr.bf16.mxu0 0
        %8687 = vmatpush1.bf16.msra.mxu0 %v8536
        %8688 = vmatprep.subr.bf16.mxu0 0
        %8689 = vmatpush2.bf16.msra.mxu0 0
        %8690 = vmatprep.subr.bf16.mxu0 0
        %8691 = vmatpush2.bf16.msra.mxu0 0
        %8692 = vmatprep.subr.bf16.mxu0 0
        %8693 = vmatpush2.bf16.msra.mxu0 0
        %8694 = vmatprep.subr.bf16.mxu0 0
        %8695 = vmatpush2.bf16.msra.mxu0 0
        %8696 = vmatprep.subr.bf16.mxu0 0
        %8697 = vmatpush2.bf16.msra.mxu0 0
        %8698 = vmatprep.subr.bf16.mxu0 0
        %8699 = vmatpush2.bf16.msra.mxu0 0
        %8700 = vmatprep.subr.bf16.mxu0 0
        %8701 = vmatpush2.bf16.msra.mxu0 0
        %8702 = vmatprep.subr.bf16.mxu0 0
        %8703 = vmatpush2.bf16.msra.mxu0 0
        %8704 = vmatprep.mubr.bf16.mxu0 0
        %8705 = vmatmul.mubr.bf16.gmra.mxu0 %v8670
        %v8706 = vpop.f32.mrf.mxu0
        %v8707 = vadd.f32 0.0, %v8706
        %v8708 = vpop.f32.mrf.mxu0
        %v8709 = vpop.f32.mrf.mxu0
        %v8710 = vpop.f32.mrf.mxu0
        %8711 = vdwg.mxu0
        %v8713 = vsel %vm7320, %v8519, 0
        %8715 = vmatprep.subr.bf16.mxu0 0
        %8716 = vmatpush1.bf16.msra.mxu0 0
        %8717 = vmatprep.subr.bf16.mxu0 0
        %8718 = vmatpush1.bf16.msra.mxu0 0
        %8719 = vmatprep.subr.bf16.mxu0 0
        %8720 = vmatpush1.bf16.msra.mxu0 0
        %8721 = vmatprep.subr.bf16.mxu0 0
        %8722 = vmatpush1.bf16.msra.mxu0 0
        %8723 = vmatprep.subr.bf16.mxu0 0
        %8724 = vmatpush1.bf16.msra.mxu0 0
        %8725 = vmatprep.subr.bf16.mxu0 0
        %8726 = vmatpush1.bf16.msra.mxu0 0
        %8727 = vmatprep.subr.bf16.mxu0 0
        %8728 = vmatpush1.bf16.msra.mxu0 %v8537
        %8729 = vmatprep.subr.bf16.mxu0 0
        %8730 = vmatpush1.bf16.msra.mxu0 %v8536
        %8731 = vmatprep.subr.bf16.mxu0 0
        %8732 = vmatpush2.bf16.msra.mxu0 0
        %8733 = vmatprep.subr.bf16.mxu0 0
        %8734 = vmatpush2.bf16.msra.mxu0 0
        %8735 = vmatprep.subr.bf16.mxu0 0
        %8736 = vmatpush2.bf16.msra.mxu0 0
        %8737 = vmatprep.subr.bf16.mxu0 0
        %8738 = vmatpush2.bf16.msra.mxu0 0
        %8739 = vmatprep.subr.bf16.mxu0 0
        %8740 = vmatpush2.bf16.msra.mxu0 0
        %8741 = vmatprep.subr.bf16.mxu0 0
        %8742 = vmatpush2.bf16.msra.mxu0 0
        %8743 = vmatprep.subr.bf16.mxu0 0
        %8744 = vmatpush2.bf16.msra.mxu0 0
        %8745 = vmatprep.subr.bf16.mxu0 0
        %8746 = vmatpush2.bf16.msra.mxu0 0
        %8747 = vmatprep.mubr.bf16.mxu0 0
        %8748 = vmatmul.mubr.bf16.gmra.mxu0 %v8713
        %v8749 = vpop.f32.mrf.mxu0
        %v8750 = vadd.f32 0.0, %v8749
        %v8751 = vpop.f32.mrf.mxu0
        %v8752 = vpop.f32.mrf.mxu0
        %v8753 = vpop.f32.mrf.mxu0
        %8754 = vdwg.mxu0
        %v8756 = vsel %vm7320, %v8520, 0
        %8758 = vmatprep.subr.bf16.mxu0 0
        %8759 = vmatpush1.bf16.msra.mxu0 0
        %8760 = vmatprep.subr.bf16.mxu0 0
        %8761 = vmatpush1.bf16.msra.mxu0 0
        %8762 = vmatprep.subr.bf16.mxu0 0
        %8763 = vmatpush1.bf16.msra.mxu0 0
        %8764 = vmatprep.subr.bf16.mxu0 0
        %8765 = vmatpush1.bf16.msra.mxu0 0
        %8766 = vmatprep.subr.bf16.mxu0 0
        %8767 = vmatpush1.bf16.msra.mxu0 0
        %8768 = vmatprep.subr.bf16.mxu0 0
        %8769 = vmatpush1.bf16.msra.mxu0 0
        %8770 = vmatprep.subr.bf16.mxu0 0
        %8771 = vmatpush1.bf16.msra.mxu0 %v8537
        %8772 = vmatprep.subr.bf16.mxu0 0
        %8773 = vmatpush1.bf16.msra.mxu0 %v8536
        %8774 = vmatprep.subr.bf16.mxu0 0
        %8775 = vmatpush2.bf16.msra.mxu0 0
        %8776 = vmatprep.subr.bf16.mxu0 0
        %8777 = vmatpush2.bf16.msra.mxu0 0
        %8778 = vmatprep.subr.bf16.mxu0 0
        %8779 = vmatpush2.bf16.msra.mxu0 0
        %8780 = vmatprep.subr.bf16.mxu0 0
        %8781 = vmatpush2.bf16.msra.mxu0 0
        %8782 = vmatprep.subr.bf16.mxu0 0
        %8783 = vmatpush2.bf16.msra.mxu0 0
        %8784 = vmatprep.subr.bf16.mxu0 0
        %8785 = vmatpush2.bf16.msra.mxu0 0
        %8786 = vmatprep.subr.bf16.mxu0 0
        %8787 = vmatpush2.bf16.msra.mxu0 0
        %8788 = vmatprep.subr.bf16.mxu0 0
        %8789 = vmatpush2.bf16.msra.mxu0 0
        %8790 = vmatprep.mubr.bf16.mxu0 0
        %8791 = vmatmul.mubr.bf16.gmra.mxu0 %v8756
        %v8792 = vpop.f32.mrf.mxu0
        %v8793 = vadd.f32 0.0, %v8792
        %v8794 = vpop.f32.mrf.mxu0
        %v8795 = vpop.f32.mrf.mxu0
        %v8796 = vpop.f32.mrf.mxu0
        %8797 = vdwg.mxu0
        %v8799 = vsel %vm7320, %v8521, 0
        %8801 = vmatprep.subr.bf16.mxu0 0
        %8802 = vmatpush1.bf16.msra.mxu0 0
        %8803 = vmatprep.subr.bf16.mxu0 0
        %8804 = vmatpush1.bf16.msra.mxu0 0
        %8805 = vmatprep.subr.bf16.mxu0 0
        %8806 = vmatpush1.bf16.msra.mxu0 0
        %8807 = vmatprep.subr.bf16.mxu0 0
        %8808 = vmatpush1.bf16.msra.mxu0 0
        %8809 = vmatprep.subr.bf16.mxu0 0
        %8810 = vmatpush1.bf16.msra.mxu0 0
        %8811 = vmatprep.subr.bf16.mxu0 0
        %8812 = vmatpush1.bf16.msra.mxu0 0
        %8813 = vmatprep.subr.bf16.mxu0 0
        %8814 = vmatpush1.bf16.msra.mxu0 %v8537
        %8815 = vmatprep.subr.bf16.mxu0 0
        %8816 = vmatpush1.bf16.msra.mxu0 %v8536
        %8817 = vmatprep.subr.bf16.mxu0 0
        %8818 = vmatpush2.bf16.msra.mxu0 0
        %8819 = vmatprep.subr.bf16.mxu0 0
        %8820 = vmatpush2.bf16.msra.mxu0 0
        %8821 = vmatprep.subr.bf16.mxu0 0
        %8822 = vmatpush2.bf16.msra.mxu0 0
        %8823 = vmatprep.subr.bf16.mxu0 0
        %8824 = vmatpush2.bf16.msra.mxu0 0
        %8825 = vmatprep.subr.bf16.mxu0 0
        %8826 = vmatpush2.bf16.msra.mxu0 0
        %8827 = vmatprep.subr.bf16.mxu0 0
        %8828 = vmatpush2.bf16.msra.mxu0 0
        %8829 = vmatprep.subr.bf16.mxu0 0
        %8830 = vmatpush2.bf16.msra.mxu0 0
        %8831 = vmatprep.subr.bf16.mxu0 0
        %8832 = vmatpush2.bf16.msra.mxu0 0
        %8833 = vmatprep.mubr.bf16.mxu0 0
        %8834 = vmatmul.mubr.bf16.gmra.mxu0 %v8799
        %v8835 = vpop.f32.mrf.mxu0
        %v8836 = vadd.f32 0.0, %v8835
        %v8837 = vpop.f32.mrf.mxu0
        %v8838 = vpop.f32.mrf.mxu0
        %v8839 = vpop.f32.mrf.mxu0
        %8840 = vdwg.mxu0
        %v8842 = vsel %vm7320, %v8522, 0
        %8844 = vmatprep.subr.bf16.mxu0 0
        %8845 = vmatpush1.bf16.msra.mxu0 0
        %8846 = vmatprep.subr.bf16.mxu0 0
        %8847 = vmatpush1.bf16.msra.mxu0 0
        %8848 = vmatprep.subr.bf16.mxu0 0
        %8849 = vmatpush1.bf16.msra.mxu0 0
        %8850 = vmatprep.subr.bf16.mxu0 0
        %8851 = vmatpush1.bf16.msra.mxu0 0
        %8852 = vmatprep.subr.bf16.mxu0 0
        %8853 = vmatpush1.bf16.msra.mxu0 0
        %8854 = vmatprep.subr.bf16.mxu0 0
        %8855 = vmatpush1.bf16.msra.mxu0 0
        %8856 = vmatprep.subr.bf16.mxu0 0
        %8857 = vmatpush1.bf16.msra.mxu0 %v8537
        %8858 = vmatprep.subr.bf16.mxu0 0
        %8859 = vmatpush1.bf16.msra.mxu0 %v8536
        %8860 = vmatprep.subr.bf16.mxu0 0
        %8861 = vmatpush2.bf16.msra.mxu0 0
        %8862 = vmatprep.subr.bf16.mxu0 0
        %8863 = vmatpush2.bf16.msra.mxu0 0
        %8864 = vmatprep.subr.bf16.mxu0 0
        %8865 = vmatpush2.bf16.msra.mxu0 0
        %8866 = vmatprep.subr.bf16.mxu0 0
        %8867 = vmatpush2.bf16.msra.mxu0 0
        %8868 = vmatprep.subr.bf16.mxu0 0
        %8869 = vmatpush2.bf16.msra.mxu0 0
        %8870 = vmatprep.subr.bf16.mxu0 0
        %8871 = vmatpush2.bf16.msra.mxu0 0
        %8872 = vmatprep.subr.bf16.mxu0 0
        %8873 = vmatpush2.bf16.msra.mxu0 0
        %8874 = vmatprep.subr.bf16.mxu0 0
        %8875 = vmatpush2.bf16.msra.mxu0 0
        %8876 = vmatprep.mubr.bf16.mxu0 0
        %8877 = vmatmul.mubr.bf16.gmra.mxu0 %v8842
        %v8878 = vpop.f32.mrf.mxu0
        %v8879 = vadd.f32 0.0, %v8878
        %v8880 = vpop.f32.mrf.mxu0
        %v8881 = vpop.f32.mrf.mxu0
        %v8882 = vpop.f32.mrf.mxu0
        %8883 = vdwg.mxu0
        %v8884 = vadd.f32 %v8506, %v8578
        %v8885 = vadd.f32 %v8507, %v8621
        %v8886 = vadd.f32 %v8508, %v8664
        %v8887 = vadd.f32 %v8509, %v8707
        %v8888 = vadd.f32 %v8510, %v8750
        %v8889 = vadd.f32 %v8511, %v8793
        %v8890 = vadd.f32 %v8512, %v8836
        %v8891 = vadd.f32 %v8513, %v8879
        %v8892 = vld [vmem:[%s8514] sm:$0xf]
        %v8893 = vld [vmem:[%s8514 + $0x4] sm:$0x1]
        %v8894 = vld [vmem:[%s8514 + $0x8] sm:$0xf]
        %v8895 = vld [vmem:[%s8514 + $0xc] sm:$0x1]
        %v8896 = vld [vmem:[%s8514 + $0x10] sm:$0xf]
        %v8897 = vld [vmem:[%s8514 + $0x14] sm:$0x1]
        %v8898 = vld [vmem:[%s8514 + $0x18] sm:$0xf]
        %v8899 = vld [vmem:[%s8514 + $0x1c] sm:$0x1]
        %v8900 = vld [vmem:[%s8514 + $0x20] sm:$0xf]
        %v8901 = vld [vmem:[%s8514 + $0x24] sm:$0x1]
        %v8902 = vld [vmem:[%s8514 + $0x28] sm:$0xf]
        %v8903 = vld [vmem:[%s8514 + $0x2c] sm:$0x1]
        %v8904 = vld [vmem:[%s8514 + $0x30] sm:$0xf]
        %v8905 = vld [vmem:[%s8514 + $0x34] sm:$0x1]
        %v8906 = vld [vmem:[%s8514 + $0x38] sm:$0xf]
        %v8907 = vld [vmem:[%s8514 + $0x3c] sm:$0x1]
        %s8908 = scalar_lea.vmem %s8, 64
        %v8909 = vld [vmem:[%s8908] sm:$0xf]
        %v8910 = vld [vmem:[%s8908 + $0x4] sm:$0xf]
        %v8911 = vld [vmem:[%s8908 + $0x8] sm:$0xf]
        %v8912 = vld [vmem:[%s8908 + $0xc] sm:$0xf]
        %v8915 = vunpack.c.l.b16 %v8892
        %v8916 = vunpack.c.l.b16 %v8893
        %v8917 = vpack.c.b16 %v8916, %v8915
        %v8919 = vshrl.u32 %v8917, 16
        %v8921 = vshll.u32 %v8917, 16
        %v8923 = vrot.slane %v8921, 1
        %v8924 = vor.u32 %v8919, %v8923
        %v8929 = vunpack.c.l.b16 %v8909
        %v8930 = vunpack.c.l.b16 %v8910
        %v8931 = vunpack.c.l.b16 %v8911
        %v8932 = vunpack.c.l.b16 %v8912
        %v8933 = vpack.c.b16 %v8930, %v8929
        %v8934 = vpack.c.b16 %v8932, %v8931
        %v8938 = vsel %vm7320, %v8924, 0
        %8940 = vmatprep.subr.bf16.mxu0 0
        %8941 = vmatpush1.bf16.msra.mxu0 0
        %8942 = vmatprep.subr.bf16.mxu0 0
        %8943 = vmatpush1.bf16.msra.mxu0 0
        %8944 = vmatprep.subr.bf16.mxu0 0
        %8945 = vmatpush1.bf16.msra.mxu0 0
        %8946 = vmatprep.subr.bf16.mxu0 0
        %8947 = vmatpush1.bf16.msra.mxu0 0
        %8948 = vmatprep.subr.bf16.mxu0 0
        %8949 = vmatpush1.bf16.msra.mxu0 0
        %8950 = vmatprep.subr.bf16.mxu0 0
        %8951 = vmatpush1.bf16.msra.mxu0 0
        %8952 = vmatprep.subr.bf16.mxu0 0
        %8953 = vmatpush1.bf16.msra.mxu0 %v8934
        %8954 = vmatprep.subr.bf16.mxu0 0
        %8955 = vmatpush1.bf16.msra.mxu0 %v8933
        %8956 = vmatprep.subr.bf16.mxu0 0
        %8957 = vmatpush2.bf16.msra.mxu0 0
        %8958 = vmatprep.subr.bf16.mxu0 0
        %8959 = vmatpush2.bf16.msra.mxu0 0
        %8960 = vmatprep.subr.bf16.mxu0 0
        %8961 = vmatpush2.bf16.msra.mxu0 0
        %8962 = vmatprep.subr.bf16.mxu0 0
        %8963 = vmatpush2.bf16.msra.mxu0 0
        %8964 = vmatprep.subr.bf16.mxu0 0
        %8965 = vmatpush2.bf16.msra.mxu0 0
        %8966 = vmatprep.subr.bf16.mxu0 0
        %8967 = vmatpush2.bf16.msra.mxu0 0
        %8968 = vmatprep.subr.bf16.mxu0 0
        %8969 = vmatpush2.bf16.msra.mxu0 0
        %8970 = vmatprep.subr.bf16.mxu0 0
        %8971 = vmatpush2.bf16.msra.mxu0 0
        %8972 = vmatprep.mubr.bf16.mxu0 0
        %8973 = vmatmul.mubr.bf16.gmra.mxu0 %v8938
        %v8974 = vpop.f32.mrf.mxu0
        %v8975 = vadd.f32 0.0, %v8974
        %v8976 = vpop.f32.mrf.mxu0
        %v8977 = vpop.f32.mrf.mxu0
        %v8978 = vpop.f32.mrf.mxu0
        %8979 = vdwg.mxu0
        %v8982 = vunpack.c.l.b16 %v8894
        %v8983 = vunpack.c.l.b16 %v8895
        %v8984 = vpack.c.b16 %v8983, %v8982
        %v8986 = vshrl.u32 %v8984, 16
        %v8988 = vshll.u32 %v8984, 16
        %v8990 = vrot.slane %v8988, 1
        %v8991 = vor.u32 %v8986, %v8990
        %v8993 = vsel %vm7320, %v8991, 0
        %8995 = vmatprep.subr.bf16.mxu0 0
        %8996 = vmatpush1.bf16.msra.mxu0 0
        %8997 = vmatprep.subr.bf16.mxu0 0
        %8998 = vmatpush1.bf16.msra.mxu0 0
        %8999 = vmatprep.subr.bf16.mxu0 0
        %9000 = vmatpush1.bf16.msra.mxu0 0
        %9001 = vmatprep.subr.bf16.mxu0 0
        %9002 = vmatpush1.bf16.msra.mxu0 0
        %9003 = vmatprep.subr.bf16.mxu0 0
        %9004 = vmatpush1.bf16.msra.mxu0 0
        %9005 = vmatprep.subr.bf16.mxu0 0
        %9006 = vmatpush1.bf16.msra.mxu0 0
        %9007 = vmatprep.subr.bf16.mxu0 0
        %9008 = vmatpush1.bf16.msra.mxu0 %v8934
        %9009 = vmatprep.subr.bf16.mxu0 0
        %9010 = vmatpush1.bf16.msra.mxu0 %v8933
        %9011 = vmatprep.subr.bf16.mxu0 0
        %9012 = vmatpush2.bf16.msra.mxu0 0
        %9013 = vmatprep.subr.bf16.mxu0 0
        %9014 = vmatpush2.bf16.msra.mxu0 0
        %9015 = vmatprep.subr.bf16.mxu0 0
        %9016 = vmatpush2.bf16.msra.mxu0 0
        %9017 = vmatprep.subr.bf16.mxu0 0
        %9018 = vmatpush2.bf16.msra.mxu0 0
        %9019 = vmatprep.subr.bf16.mxu0 0
        %9020 = vmatpush2.bf16.msra.mxu0 0
        %9021 = vmatprep.subr.bf16.mxu0 0
        %9022 = vmatpush2.bf16.msra.mxu0 0
        %9023 = vmatprep.subr.bf16.mxu0 0
        %9024 = vmatpush2.bf16.msra.mxu0 0
        %9025 = vmatprep.subr.bf16.mxu0 0
        %9026 = vmatpush2.bf16.msra.mxu0 0
        %9027 = vmatprep.mubr.bf16.mxu0 0
        %9028 = vmatmul.mubr.bf16.gmra.mxu0 %v8993
        %v9029 = vpop.f32.mrf.mxu0
        %v9030 = vadd.f32 0.0, %v9029
        %v9031 = vpop.f32.mrf.mxu0
        %v9032 = vpop.f32.mrf.mxu0
        %v9033 = vpop.f32.mrf.mxu0
        %9034 = vdwg.mxu0
        %v9037 = vunpack.c.l.b16 %v8896
        %v9038 = vunpack.c.l.b16 %v8897
        %v9039 = vpack.c.b16 %v9038, %v9037
        %v9041 = vshrl.u32 %v9039, 16
        %v9043 = vshll.u32 %v9039, 16
        %v9045 = vrot.slane %v9043, 1
        %v9046 = vor.u32 %v9041, %v9045
        %v9048 = vsel %vm7320, %v9046, 0
        %9050 = vmatprep.subr.bf16.mxu0 0
        %9051 = vmatpush1.bf16.msra.mxu0 0
        %9052 = vmatprep.subr.bf16.mxu0 0
        %9053 = vmatpush1.bf16.msra.mxu0 0
        %9054 = vmatprep.subr.bf16.mxu0 0
        %9055 = vmatpush1.bf16.msra.mxu0 0
        %9056 = vmatprep.subr.bf16.mxu0 0
        %9057 = vmatpush1.bf16.msra.mxu0 0
        %9058 = vmatprep.subr.bf16.mxu0 0
        %9059 = vmatpush1.bf16.msra.mxu0 0
        %9060 = vmatprep.subr.bf16.mxu0 0
        %9061 = vmatpush1.bf16.msra.mxu0 0
        %9062 = vmatprep.subr.bf16.mxu0 0
        %9063 = vmatpush1.bf16.msra.mxu0 %v8934
        %9064 = vmatprep.subr.bf16.mxu0 0
        %9065 = vmatpush1.bf16.msra.mxu0 %v8933
        %9066 = vmatprep.subr.bf16.mxu0 0
        %9067 = vmatpush2.bf16.msra.mxu0 0
        %9068 = vmatprep.subr.bf16.mxu0 0
        %9069 = vmatpush2.bf16.msra.mxu0 0
        %9070 = vmatprep.subr.bf16.mxu0 0
        %9071 = vmatpush2.bf16.msra.mxu0 0
        %9072 = vmatprep.subr.bf16.mxu0 0
        %9073 = vmatpush2.bf16.msra.mxu0 0
        %9074 = vmatprep.subr.bf16.mxu0 0
        %9075 = vmatpush2.bf16.msra.mxu0 0
        %9076 = vmatprep.subr.bf16.mxu0 0
        %9077 = vmatpush2.bf16.msra.mxu0 0
        %9078 = vmatprep.subr.bf16.mxu0 0
        %9079 = vmatpush2.bf16.msra.mxu0 0
        %9080 = vmatprep.subr.bf16.mxu0 0
        %9081 = vmatpush2.bf16.msra.mxu0 0
        %9082 = vmatprep.mubr.bf16.mxu0 0
        %9083 = vmatmul.mubr.bf16.gmra.mxu0 %v9048
        %v9084 = vpop.f32.mrf.mxu0
        %v9085 = vadd.f32 0.0, %v9084
        %v9086 = vpop.f32.mrf.mxu0
        %v9087 = vpop.f32.mrf.mxu0
        %v9088 = vpop.f32.mrf.mxu0
        %9089 = vdwg.mxu0
        %v9092 = vunpack.c.l.b16 %v8898
        %v9093 = vunpack.c.l.b16 %v8899
        %v9094 = vpack.c.b16 %v9093, %v9092
        %v9096 = vshrl.u32 %v9094, 16
        %v9098 = vshll.u32 %v9094, 16
        %v9100 = vrot.slane %v9098, 1
        %v9101 = vor.u32 %v9096, %v9100
        %v9103 = vsel %vm7320, %v9101, 0
        %9105 = vmatprep.subr.bf16.mxu0 0
        %9106 = vmatpush1.bf16.msra.mxu0 0
        %9107 = vmatprep.subr.bf16.mxu0 0
        %9108 = vmatpush1.bf16.msra.mxu0 0
        %9109 = vmatprep.subr.bf16.mxu0 0
        %9110 = vmatpush1.bf16.msra.mxu0 0
        %9111 = vmatprep.subr.bf16.mxu0 0
        %9112 = vmatpush1.bf16.msra.mxu0 0
        %9113 = vmatprep.subr.bf16.mxu0 0
        %9114 = vmatpush1.bf16.msra.mxu0 0
        %9115 = vmatprep.subr.bf16.mxu0 0
        %9116 = vmatpush1.bf16.msra.mxu0 0
        %9117 = vmatprep.subr.bf16.mxu0 0
        %9118 = vmatpush1.bf16.msra.mxu0 %v8934
        %9119 = vmatprep.subr.bf16.mxu0 0
        %9120 = vmatpush1.bf16.msra.mxu0 %v8933
        %9121 = vmatprep.subr.bf16.mxu0 0
        %9122 = vmatpush2.bf16.msra.mxu0 0
        %9123 = vmatprep.subr.bf16.mxu0 0
        %9124 = vmatpush2.bf16.msra.mxu0 0
        %9125 = vmatprep.subr.bf16.mxu0 0
        %9126 = vmatpush2.bf16.msra.mxu0 0
        %9127 = vmatprep.subr.bf16.mxu0 0
        %9128 = vmatpush2.bf16.msra.mxu0 0
        %9129 = vmatprep.subr.bf16.mxu0 0
        %9130 = vmatpush2.bf16.msra.mxu0 0
        %9131 = vmatprep.subr.bf16.mxu0 0
        %9132 = vmatpush2.bf16.msra.mxu0 0
        %9133 = vmatprep.subr.bf16.mxu0 0
        %9134 = vmatpush2.bf16.msra.mxu0 0
        %9135 = vmatprep.subr.bf16.mxu0 0
        %9136 = vmatpush2.bf16.msra.mxu0 0
        %9137 = vmatprep.mubr.bf16.mxu0 0
        %9138 = vmatmul.mubr.bf16.gmra.mxu0 %v9103
        %v9139 = vpop.f32.mrf.mxu0
        %v9140 = vadd.f32 0.0, %v9139
        %v9141 = vpop.f32.mrf.mxu0
        %v9142 = vpop.f32.mrf.mxu0
        %v9143 = vpop.f32.mrf.mxu0
        %9144 = vdwg.mxu0
        %v9147 = vunpack.c.l.b16 %v8900
        %v9148 = vunpack.c.l.b16 %v8901
        %v9149 = vpack.c.b16 %v9148, %v9147
        %v9151 = vshrl.u32 %v9149, 16
        %v9153 = vshll.u32 %v9149, 16
        %v9155 = vrot.slane %v9153, 1
        %v9156 = vor.u32 %v9151, %v9155
        %v9158 = vsel %vm7320, %v9156, 0
        %9160 = vmatprep.subr.bf16.mxu0 0
        %9161 = vmatpush1.bf16.msra.mxu0 0
        %9162 = vmatprep.subr.bf16.mxu0 0
        %9163 = vmatpush1.bf16.msra.mxu0 0
        %9164 = vmatprep.subr.bf16.mxu0 0
        %9165 = vmatpush1.bf16.msra.mxu0 0
        %9166 = vmatprep.subr.bf16.mxu0 0
        %9167 = vmatpush1.bf16.msra.mxu0 0
        %9168 = vmatprep.subr.bf16.mxu0 0
        %9169 = vmatpush1.bf16.msra.mxu0 0
        %9170 = vmatprep.subr.bf16.mxu0 0
        %9171 = vmatpush1.bf16.msra.mxu0 0
        %9172 = vmatprep.subr.bf16.mxu0 0
        %9173 = vmatpush1.bf16.msra.mxu0 %v8934
        %9174 = vmatprep.subr.bf16.mxu0 0
        %9175 = vmatpush1.bf16.msra.mxu0 %v8933
        %9176 = vmatprep.subr.bf16.mxu0 0
        %9177 = vmatpush2.bf16.msra.mxu0 0
        %9178 = vmatprep.subr.bf16.mxu0 0
        %9179 = vmatpush2.bf16.msra.mxu0 0
        %9180 = vmatprep.subr.bf16.mxu0 0
        %9181 = vmatpush2.bf16.msra.mxu0 0
        %9182 = vmatprep.subr.bf16.mxu0 0
        %9183 = vmatpush2.bf16.msra.mxu0 0
        %9184 = vmatprep.subr.bf16.mxu0 0
        %9185 = vmatpush2.bf16.msra.mxu0 0
        %9186 = vmatprep.subr.bf16.mxu0 0
        %9187 = vmatpush2.bf16.msra.mxu0 0
        %9188 = vmatprep.subr.bf16.mxu0 0
        %9189 = vmatpush2.bf16.msra.mxu0 0
        %9190 = vmatprep.subr.bf16.mxu0 0
        %9191 = vmatpush2.bf16.msra.mxu0 0
        %9192 = vmatprep.mubr.bf16.mxu0 0
        %9193 = vmatmul.mubr.bf16.gmra.mxu0 %v9158
        %v9194 = vpop.f32.mrf.mxu0
        %v9195 = vadd.f32 0.0, %v9194
        %v9196 = vpop.f32.mrf.mxu0
        %v9197 = vpop.f32.mrf.mxu0
        %v9198 = vpop.f32.mrf.mxu0
        %9199 = vdwg.mxu0
        %v9202 = vunpack.c.l.b16 %v8902
        %v9203 = vunpack.c.l.b16 %v8903
        %v9204 = vpack.c.b16 %v9203, %v9202
        %v9206 = vshrl.u32 %v9204, 16
        %v9208 = vshll.u32 %v9204, 16
        %v9210 = vrot.slane %v9208, 1
        %v9211 = vor.u32 %v9206, %v9210
        %v9213 = vsel %vm7320, %v9211, 0
        %9215 = vmatprep.subr.bf16.mxu0 0
        %9216 = vmatpush1.bf16.msra.mxu0 0
        %9217 = vmatprep.subr.bf16.mxu0 0
        %9218 = vmatpush1.bf16.msra.mxu0 0
        %9219 = vmatprep.subr.bf16.mxu0 0
        %9220 = vmatpush1.bf16.msra.mxu0 0
        %9221 = vmatprep.subr.bf16.mxu0 0
        %9222 = vmatpush1.bf16.msra.mxu0 0
        %9223 = vmatprep.subr.bf16.mxu0 0
        %9224 = vmatpush1.bf16.msra.mxu0 0
        %9225 = vmatprep.subr.bf16.mxu0 0
        %9226 = vmatpush1.bf16.msra.mxu0 0
        %9227 = vmatprep.subr.bf16.mxu0 0
        %9228 = vmatpush1.bf16.msra.mxu0 %v8934
        %9229 = vmatprep.subr.bf16.mxu0 0
        %9230 = vmatpush1.bf16.msra.mxu0 %v8933
        %9231 = vmatprep.subr.bf16.mxu0 0
        %9232 = vmatpush2.bf16.msra.mxu0 0
        %9233 = vmatprep.subr.bf16.mxu0 0
        %9234 = vmatpush2.bf16.msra.mxu0 0
        %9235 = vmatprep.subr.bf16.mxu0 0
        %9236 = vmatpush2.bf16.msra.mxu0 0
        %9237 = vmatprep.subr.bf16.mxu0 0
        %9238 = vmatpush2.bf16.msra.mxu0 0
        %9239 = vmatprep.subr.bf16.mxu0 0
        %9240 = vmatpush2.bf16.msra.mxu0 0
        %9241 = vmatprep.subr.bf16.mxu0 0
        %9242 = vmatpush2.bf16.msra.mxu0 0
        %9243 = vmatprep.subr.bf16.mxu0 0
        %9244 = vmatpush2.bf16.msra.mxu0 0
        %9245 = vmatprep.subr.bf16.mxu0 0
        %9246 = vmatpush2.bf16.msra.mxu0 0
        %9247 = vmatprep.mubr.bf16.mxu0 0
        %9248 = vmatmul.mubr.bf16.gmra.mxu0 %v9213
        %v9249 = vpop.f32.mrf.mxu0
        %v9250 = vadd.f32 0.0, %v9249
        %v9251 = vpop.f32.mrf.mxu0
        %v9252 = vpop.f32.mrf.mxu0
        %v9253 = vpop.f32.mrf.mxu0
        %9254 = vdwg.mxu0
        %v9257 = vunpack.c.l.b16 %v8904
        %v9258 = vunpack.c.l.b16 %v8905
        %v9259 = vpack.c.b16 %v9258, %v9257
        %v9261 = vshrl.u32 %v9259, 16
        %v9263 = vshll.u32 %v9259, 16
        %v9265 = vrot.slane %v9263, 1
        %v9266 = vor.u32 %v9261, %v9265
        %v9268 = vsel %vm7320, %v9266, 0
        %9270 = vmatprep.subr.bf16.mxu0 0
        %9271 = vmatpush1.bf16.msra.mxu0 0
        %9272 = vmatprep.subr.bf16.mxu0 0
        %9273 = vmatpush1.bf16.msra.mxu0 0
        %9274 = vmatprep.subr.bf16.mxu0 0
        %9275 = vmatpush1.bf16.msra.mxu0 0
        %9276 = vmatprep.subr.bf16.mxu0 0
        %9277 = vmatpush1.bf16.msra.mxu0 0
        %9278 = vmatprep.subr.bf16.mxu0 0
        %9279 = vmatpush1.bf16.msra.mxu0 0
        %9280 = vmatprep.subr.bf16.mxu0 0
        %9281 = vmatpush1.bf16.msra.mxu0 0
        %9282 = vmatprep.subr.bf16.mxu0 0
        %9283 = vmatpush1.bf16.msra.mxu0 %v8934
        %9284 = vmatprep.subr.bf16.mxu0 0
        %9285 = vmatpush1.bf16.msra.mxu0 %v8933
        %9286 = vmatprep.subr.bf16.mxu0 0
        %9287 = vmatpush2.bf16.msra.mxu0 0
        %9288 = vmatprep.subr.bf16.mxu0 0
        %9289 = vmatpush2.bf16.msra.mxu0 0
        %9290 = vmatprep.subr.bf16.mxu0 0
        %9291 = vmatpush2.bf16.msra.mxu0 0
        %9292 = vmatprep.subr.bf16.mxu0 0
        %9293 = vmatpush2.bf16.msra.mxu0 0
        %9294 = vmatprep.subr.bf16.mxu0 0
        %9295 = vmatpush2.bf16.msra.mxu0 0
        %9296 = vmatprep.subr.bf16.mxu0 0
        %9297 = vmatpush2.bf16.msra.mxu0 0
        %9298 = vmatprep.subr.bf16.mxu0 0
        %9299 = vmatpush2.bf16.msra.mxu0 0
        %9300 = vmatprep.subr.bf16.mxu0 0
        %9301 = vmatpush2.bf16.msra.mxu0 0
        %9302 = vmatprep.mubr.bf16.mxu0 0
        %9303 = vmatmul.mubr.bf16.gmra.mxu0 %v9268
        %v9304 = vpop.f32.mrf.mxu0
        %v9305 = vadd.f32 0.0, %v9304
        %v9306 = vpop.f32.mrf.mxu0
        %v9307 = vpop.f32.mrf.mxu0
        %v9308 = vpop.f32.mrf.mxu0
        %9309 = vdwg.mxu0
        %v9312 = vunpack.c.l.b16 %v8906
        %v9313 = vunpack.c.l.b16 %v8907
        %v9314 = vpack.c.b16 %v9313, %v9312
        %v9316 = vshrl.u32 %v9314, 16
        %v9318 = vshll.u32 %v9314, 16
        %v9320 = vrot.slane %v9318, 1
        %v9321 = vor.u32 %v9316, %v9320
        %v9323 = vsel %vm7320, %v9321, 0
        %9325 = vmatprep.subr.bf16.mxu0 0
        %9326 = vmatpush1.bf16.msra.mxu0 0
        %9327 = vmatprep.subr.bf16.mxu0 0
        %9328 = vmatpush1.bf16.msra.mxu0 0
        %9329 = vmatprep.subr.bf16.mxu0 0
        %9330 = vmatpush1.bf16.msra.mxu0 0
        %9331 = vmatprep.subr.bf16.mxu0 0
        %9332 = vmatpush1.bf16.msra.mxu0 0
        %9333 = vmatprep.subr.bf16.mxu0 0
        %9334 = vmatpush1.bf16.msra.mxu0 0
        %9335 = vmatprep.subr.bf16.mxu0 0
        %9336 = vmatpush1.bf16.msra.mxu0 0
        %9337 = vmatprep.subr.bf16.mxu0 0
        %9338 = vmatpush1.bf16.msra.mxu0 %v8934
        %9339 = vmatprep.subr.bf16.mxu0 0
        %9340 = vmatpush1.bf16.msra.mxu0 %v8933
        %9341 = vmatprep.subr.bf16.mxu0 0
        %9342 = vmatpush2.bf16.msra.mxu0 0
        %9343 = vmatprep.subr.bf16.mxu0 0
        %9344 = vmatpush2.bf16.msra.mxu0 0
        %9345 = vmatprep.subr.bf16.mxu0 0
        %9346 = vmatpush2.bf16.msra.mxu0 0
        %9347 = vmatprep.subr.bf16.mxu0 0
        %9348 = vmatpush2.bf16.msra.mxu0 0
        %9349 = vmatprep.subr.bf16.mxu0 0
        %9350 = vmatpush2.bf16.msra.mxu0 0
        %9351 = vmatprep.subr.bf16.mxu0 0
        %9352 = vmatpush2.bf16.msra.mxu0 0
        %9353 = vmatprep.subr.bf16.mxu0 0
        %9354 = vmatpush2.bf16.msra.mxu0 0
        %9355 = vmatprep.subr.bf16.mxu0 0
        %9356 = vmatpush2.bf16.msra.mxu0 0
        %9357 = vmatprep.mubr.bf16.mxu0 0
        %9358 = vmatmul.mubr.bf16.gmra.mxu0 %v9323
        %v9359 = vpop.f32.mrf.mxu0
        %v9360 = vadd.f32 0.0, %v9359
        %v9361 = vpop.f32.mrf.mxu0
        %v9362 = vpop.f32.mrf.mxu0
        %v9363 = vpop.f32.mrf.mxu0
        %9364 = vdwg.mxu0
        %v9365 = vadd.f32 %v8884, %v8975
        %v9366 = vadd.f32 %v8885, %v9030
        %v9367 = vadd.f32 %v8886, %v9085
        %v9368 = vadd.f32 %v8887, %v9140
        %v9369 = vadd.f32 %v8888, %v9195
        %v9370 = vadd.f32 %v8889, %v9250
        %v9371 = vadd.f32 %v8890, %v9305
        %v9372 = vadd.f32 %v8891, %v9360
        %v9373 = vld [vmem:[%s8514] sm:$0xe]
        %v9374 = vld [vmem:[%s8514 + $0x8] sm:$0xe]
        %v9375 = vld [vmem:[%s8514 + $0x10] sm:$0xe]
        %v9376 = vld [vmem:[%s8514 + $0x18] sm:$0xe]
        %v9377 = vld [vmem:[%s8514 + $0x20] sm:$0xe]
        %v9378 = vld [vmem:[%s8514 + $0x28] sm:$0xe]
        %v9379 = vld [vmem:[%s8514 + $0x30] sm:$0xe]
        %v9380 = vld [vmem:[%s8514 + $0x38] sm:$0xe]
        %s9381 = scalar_lea.vmem %s8, 80
        %v9382 = vld [vmem:[%s9381] sm:$0xf]
        %v9383 = vld [vmem:[%s9381 + $0x4] sm:$0xf]
        %v9384 = vld [vmem:[%s9381 + $0x8] sm:$0xf]
        %v9385 = vld [vmem:[%s9381 + $0xc] sm:$0xf]
        %v9387 = vunpack.c.l.b16 %v9373
        %v9388 = vpack.c.b16 %v8916, %v9387
        %v9389 = vrot.slane %v9388, 1
        %v9394 = vunpack.c.l.b16 %v9382
        %v9395 = vunpack.c.l.b16 %v9383
        %v9396 = vunpack.c.l.b16 %v9384
        %v9397 = vunpack.c.l.b16 %v9385
        %v9398 = vpack.c.b16 %v9395, %v9394
        %v9399 = vpack.c.b16 %v9397, %v9396
        %v9403 = vsel %vm7320, %v9389, 0
        %9405 = vmatprep.subr.bf16.mxu0 0
        %9406 = vmatpush1.bf16.msra.mxu0 0
        %9407 = vmatprep.subr.bf16.mxu0 0
        %9408 = vmatpush1.bf16.msra.mxu0 0
        %9409 = vmatprep.subr.bf16.mxu0 0
        %9410 = vmatpush1.bf16.msra.mxu0 0
        %9411 = vmatprep.subr.bf16.mxu0 0
        %9412 = vmatpush1.bf16.msra.mxu0 0
        %9413 = vmatprep.subr.bf16.mxu0 0
        %9414 = vmatpush1.bf16.msra.mxu0 0
        %9415 = vmatprep.subr.bf16.mxu0 0
        %9416 = vmatpush1.bf16.msra.mxu0 0
        %9417 = vmatprep.subr.bf16.mxu0 0
        %9418 = vmatpush1.bf16.msra.mxu0 %v9399
        %9419 = vmatprep.subr.bf16.mxu0 0
        %9420 = vmatpush1.bf16.msra.mxu0 %v9398
        %9421 = vmatprep.subr.bf16.mxu0 0
        %9422 = vmatpush2.bf16.msra.mxu0 0
        %9423 = vmatprep.subr.bf16.mxu0 0
        %9424 = vmatpush2.bf16.msra.mxu0 0
        %9425 = vmatprep.subr.bf16.mxu0 0
        %9426 = vmatpush2.bf16.msra.mxu0 0
        %9427 = vmatprep.subr.bf16.mxu0 0
        %9428 = vmatpush2.bf16.msra.mxu0 0
        %9429 = vmatprep.subr.bf16.mxu0 0
        %9430 = vmatpush2.bf16.msra.mxu0 0
        %9431 = vmatprep.subr.bf16.mxu0 0
        %9432 = vmatpush2.bf16.msra.mxu0 0
        %9433 = vmatprep.subr.bf16.mxu0 0
        %9434 = vmatpush2.bf16.msra.mxu0 0
        %9435 = vmatprep.subr.bf16.mxu0 0
        %9436 = vmatpush2.bf16.msra.mxu0 0
        %9437 = vmatprep.mubr.bf16.mxu0 0
        %9438 = vmatmul.mubr.bf16.gmra.mxu0 %v9403
        %v9439 = vpop.f32.mrf.mxu0
        %v9440 = vadd.f32 0.0, %v9439
        %v9441 = vpop.f32.mrf.mxu0
        %v9442 = vpop.f32.mrf.mxu0
        %v9443 = vpop.f32.mrf.mxu0
        %9444 = vdwg.mxu0
        %v9446 = vunpack.c.l.b16 %v9374
        %v9447 = vpack.c.b16 %v8983, %v9446
        %v9448 = vrot.slane %v9447, 1
        %v9450 = vsel %vm7320, %v9448, 0
        %9452 = vmatprep.subr.bf16.mxu0 0
        %9453 = vmatpush1.bf16.msra.mxu0 0
        %9454 = vmatprep.subr.bf16.mxu0 0
        %9455 = vmatpush1.bf16.msra.mxu0 0
        %9456 = vmatprep.subr.bf16.mxu0 0
        %9457 = vmatpush1.bf16.msra.mxu0 0
        %9458 = vmatprep.subr.bf16.mxu0 0
        %9459 = vmatpush1.bf16.msra.mxu0 0
        %9460 = vmatprep.subr.bf16.mxu0 0
        %9461 = vmatpush1.bf16.msra.mxu0 0
        %9462 = vmatprep.subr.bf16.mxu0 0
        %9463 = vmatpush1.bf16.msra.mxu0 0
        %9464 = vmatprep.subr.bf16.mxu0 0
        %9465 = vmatpush1.bf16.msra.mxu0 %v9399
        %9466 = vmatprep.subr.bf16.mxu0 0
        %9467 = vmatpush1.bf16.msra.mxu0 %v9398
        %9468 = vmatprep.subr.bf16.mxu0 0
        %9469 = vmatpush2.bf16.msra.mxu0 0
        %9470 = vmatprep.subr.bf16.mxu0 0
        %9471 = vmatpush2.bf16.msra.mxu0 0
        %9472 = vmatprep.subr.bf16.mxu0 0
        %9473 = vmatpush2.bf16.msra.mxu0 0
        %9474 = vmatprep.subr.bf16.mxu0 0
        %9475 = vmatpush2.bf16.msra.mxu0 0
        %9476 = vmatprep.subr.bf16.mxu0 0
        %9477 = vmatpush2.bf16.msra.mxu0 0
        %9478 = vmatprep.subr.bf16.mxu0 0
        %9479 = vmatpush2.bf16.msra.mxu0 0
        %9480 = vmatprep.subr.bf16.mxu0 0
        %9481 = vmatpush2.bf16.msra.mxu0 0
        %9482 = vmatprep.subr.bf16.mxu0 0
        %9483 = vmatpush2.bf16.msra.mxu0 0
        %9484 = vmatprep.mubr.bf16.mxu0 0
        %9485 = vmatmul.mubr.bf16.gmra.mxu0 %v9450
        %v9486 = vpop.f32.mrf.mxu0
        %v9487 = vadd.f32 0.0, %v9486
        %v9488 = vpop.f32.mrf.mxu0
        %v9489 = vpop.f32.mrf.mxu0
        %v9490 = vpop.f32.mrf.mxu0
        %9491 = vdwg.mxu0
        %v9493 = vunpack.c.l.b16 %v9375
        %v9494 = vpack.c.b16 %v9038, %v9493
        %v9495 = vrot.slane %v9494, 1
        %v9497 = vsel %vm7320, %v9495, 0
        %9499 = vmatprep.subr.bf16.mxu0 0
        %9500 = vmatpush1.bf16.msra.mxu0 0
        %9501 = vmatprep.subr.bf16.mxu0 0
        %9502 = vmatpush1.bf16.msra.mxu0 0
        %9503 = vmatprep.subr.bf16.mxu0 0
        %9504 = vmatpush1.bf16.msra.mxu0 0
        %9505 = vmatprep.subr.bf16.mxu0 0
        %9506 = vmatpush1.bf16.msra.mxu0 0
        %9507 = vmatprep.subr.bf16.mxu0 0
        %9508 = vmatpush1.bf16.msra.mxu0 0
        %9509 = vmatprep.subr.bf16.mxu0 0
        %9510 = vmatpush1.bf16.msra.mxu0 0
        %9511 = vmatprep.subr.bf16.mxu0 0
        %9512 = vmatpush1.bf16.msra.mxu0 %v9399
        %9513 = vmatprep.subr.bf16.mxu0 0
        %9514 = vmatpush1.bf16.msra.mxu0 %v9398
        %9515 = vmatprep.subr.bf16.mxu0 0
        %9516 = vmatpush2.bf16.msra.mxu0 0
        %9517 = vmatprep.subr.bf16.mxu0 0
        %9518 = vmatpush2.bf16.msra.mxu0 0
        %9519 = vmatprep.subr.bf16.mxu0 0
        %9520 = vmatpush2.bf16.msra.mxu0 0
        %9521 = vmatprep.subr.bf16.mxu0 0
        %9522 = vmatpush2.bf16.msra.mxu0 0
        %9523 = vmatprep.subr.bf16.mxu0 0
        %9524 = vmatpush2.bf16.msra.mxu0 0
        %9525 = vmatprep.subr.bf16.mxu0 0
        %9526 = vmatpush2.bf16.msra.mxu0 0
        %9527 = vmatprep.subr.bf16.mxu0 0
        %9528 = vmatpush2.bf16.msra.mxu0 0
        %9529 = vmatprep.subr.bf16.mxu0 0
        %9530 = vmatpush2.bf16.msra.mxu0 0
        %9531 = vmatprep.mubr.bf16.mxu0 0
        %9532 = vmatmul.mubr.bf16.gmra.mxu0 %v9497
        %v9533 = vpop.f32.mrf.mxu0
        %v9534 = vadd.f32 0.0, %v9533
        %v9535 = vpop.f32.mrf.mxu0
        %v9536 = vpop.f32.mrf.mxu0
        %v9537 = vpop.f32.mrf.mxu0
        %9538 = vdwg.mxu0
        %v9540 = vunpack.c.l.b16 %v9376
        %v9541 = vpack.c.b16 %v9093, %v9540
        %v9542 = vrot.slane %v9541, 1
        %v9544 = vsel %vm7320, %v9542, 0
        %9546 = vmatprep.subr.bf16.mxu0 0
        %9547 = vmatpush1.bf16.msra.mxu0 0
        %9548 = vmatprep.subr.bf16.mxu0 0
        %9549 = vmatpush1.bf16.msra.mxu0 0
        %9550 = vmatprep.subr.bf16.mxu0 0
        %9551 = vmatpush1.bf16.msra.mxu0 0
        %9552 = vmatprep.subr.bf16.mxu0 0
        %9553 = vmatpush1.bf16.msra.mxu0 0
        %9554 = vmatprep.subr.bf16.mxu0 0
        %9555 = vmatpush1.bf16.msra.mxu0 0
        %9556 = vmatprep.subr.bf16.mxu0 0
        %9557 = vmatpush1.bf16.msra.mxu0 0
        %9558 = vmatprep.subr.bf16.mxu0 0
        %9559 = vmatpush1.bf16.msra.mxu0 %v9399
        %9560 = vmatprep.subr.bf16.mxu0 0
        %9561 = vmatpush1.bf16.msra.mxu0 %v9398
        %9562 = vmatprep.subr.bf16.mxu0 0
        %9563 = vmatpush2.bf16.msra.mxu0 0
        %9564 = vmatprep.subr.bf16.mxu0 0
        %9565 = vmatpush2.bf16.msra.mxu0 0
        %9566 = vmatprep.subr.bf16.mxu0 0
        %9567 = vmatpush2.bf16.msra.mxu0 0
        %9568 = vmatprep.subr.bf16.mxu0 0
        %9569 = vmatpush2.bf16.msra.mxu0 0
        %9570 = vmatprep.subr.bf16.mxu0 0
        %9571 = vmatpush2.bf16.msra.mxu0 0
        %9572 = vmatprep.subr.bf16.mxu0 0
        %9573 = vmatpush2.bf16.msra.mxu0 0
        %9574 = vmatprep.subr.bf16.mxu0 0
        %9575 = vmatpush2.bf16.msra.mxu0 0
        %9576 = vmatprep.subr.bf16.mxu0 0
        %9577 = vmatpush2.bf16.msra.mxu0 0
        %9578 = vmatprep.mubr.bf16.mxu0 0
        %9579 = vmatmul.mubr.bf16.gmra.mxu0 %v9544
        %v9580 = vpop.f32.mrf.mxu0
        %v9581 = vadd.f32 0.0, %v9580
        %v9582 = vpop.f32.mrf.mxu0
        %v9583 = vpop.f32.mrf.mxu0
        %v9584 = vpop.f32.mrf.mxu0
        %9585 = vdwg.mxu0
        %v9587 = vunpack.c.l.b16 %v9377
        %v9588 = vpack.c.b16 %v9148, %v9587
        %v9589 = vrot.slane %v9588, 1
        %v9591 = vsel %vm7320, %v9589, 0
        %9593 = vmatprep.subr.bf16.mxu0 0
        %9594 = vmatpush1.bf16.msra.mxu0 0
        %9595 = vmatprep.subr.bf16.mxu0 0
        %9596 = vmatpush1.bf16.msra.mxu0 0
        %9597 = vmatprep.subr.bf16.mxu0 0
        %9598 = vmatpush1.bf16.msra.mxu0 0
        %9599 = vmatprep.subr.bf16.mxu0 0
        %9600 = vmatpush1.bf16.msra.mxu0 0
        %9601 = vmatprep.subr.bf16.mxu0 0
        %9602 = vmatpush1.bf16.msra.mxu0 0
        %9603 = vmatprep.subr.bf16.mxu0 0
        %9604 = vmatpush1.bf16.msra.mxu0 0
        %9605 = vmatprep.subr.bf16.mxu0 0
        %9606 = vmatpush1.bf16.msra.mxu0 %v9399
        %9607 = vmatprep.subr.bf16.mxu0 0
        %9608 = vmatpush1.bf16.msra.mxu0 %v9398
        %9609 = vmatprep.subr.bf16.mxu0 0
        %9610 = vmatpush2.bf16.msra.mxu0 0
        %9611 = vmatprep.subr.bf16.mxu0 0
        %9612 = vmatpush2.bf16.msra.mxu0 0
        %9613 = vmatprep.subr.bf16.mxu0 0
        %9614 = vmatpush2.bf16.msra.mxu0 0
        %9615 = vmatprep.subr.bf16.mxu0 0
        %9616 = vmatpush2.bf16.msra.mxu0 0
        %9617 = vmatprep.subr.bf16.mxu0 0
        %9618 = vmatpush2.bf16.msra.mxu0 0
        %9619 = vmatprep.subr.bf16.mxu0 0
        %9620 = vmatpush2.bf16.msra.mxu0 0
        %9621 = vmatprep.subr.bf16.mxu0 0
        %9622 = vmatpush2.bf16.msra.mxu0 0
        %9623 = vmatprep.subr.bf16.mxu0 0
        %9624 = vmatpush2.bf16.msra.mxu0 0
        %9625 = vmatprep.mubr.bf16.mxu0 0
        %9626 = vmatmul.mubr.bf16.gmra.mxu0 %v9591
        %v9627 = vpop.f32.mrf.mxu0
        %v9628 = vadd.f32 0.0, %v9627
        %v9629 = vpop.f32.mrf.mxu0
        %v9630 = vpop.f32.mrf.mxu0
        %v9631 = vpop.f32.mrf.mxu0
        %9632 = vdwg.mxu0
        %v9634 = vunpack.c.l.b16 %v9378
        %v9635 = vpack.c.b16 %v9203, %v9634
        %v9636 = vrot.slane %v9635, 1
        %v9638 = vsel %vm7320, %v9636, 0
        %9640 = vmatprep.subr.bf16.mxu0 0
        %9641 = vmatpush1.bf16.msra.mxu0 0
        %9642 = vmatprep.subr.bf16.mxu0 0
        %9643 = vmatpush1.bf16.msra.mxu0 0
        %9644 = vmatprep.subr.bf16.mxu0 0
        %9645 = vmatpush1.bf16.msra.mxu0 0
        %9646 = vmatprep.subr.bf16.mxu0 0
        %9647 = vmatpush1.bf16.msra.mxu0 0
        %9648 = vmatprep.subr.bf16.mxu0 0
        %9649 = vmatpush1.bf16.msra.mxu0 0
        %9650 = vmatprep.subr.bf16.mxu0 0
        %9651 = vmatpush1.bf16.msra.mxu0 0
        %9652 = vmatprep.subr.bf16.mxu0 0
        %9653 = vmatpush1.bf16.msra.mxu0 %v9399
        %9654 = vmatprep.subr.bf16.mxu0 0
        %9655 = vmatpush1.bf16.msra.mxu0 %v9398
        %9656 = vmatprep.subr.bf16.mxu0 0
        %9657 = vmatpush2.bf16.msra.mxu0 0
        %9658 = vmatprep.subr.bf16.mxu0 0
        %9659 = vmatpush2.bf16.msra.mxu0 0
        %9660 = vmatprep.subr.bf16.mxu0 0
        %9661 = vmatpush2.bf16.msra.mxu0 0
        %9662 = vmatprep.subr.bf16.mxu0 0
        %9663 = vmatpush2.bf16.msra.mxu0 0
        %9664 = vmatprep.subr.bf16.mxu0 0
        %9665 = vmatpush2.bf16.msra.mxu0 0
        %9666 = vmatprep.subr.bf16.mxu0 0
        %9667 = vmatpush2.bf16.msra.mxu0 0
        %9668 = vmatprep.subr.bf16.mxu0 0
        %9669 = vmatpush2.bf16.msra.mxu0 0
        %9670 = vmatprep.subr.bf16.mxu0 0
        %9671 = vmatpush2.bf16.msra.mxu0 0
        %9672 = vmatprep.mubr.bf16.mxu0 0
        %9673 = vmatmul.mubr.bf16.gmra.mxu0 %v9638
        %v9674 = vpop.f32.mrf.mxu0
        %v9675 = vadd.f32 0.0, %v9674
        %v9676 = vpop.f32.mrf.mxu0
        %v9677 = vpop.f32.mrf.mxu0
        %v9678 = vpop.f32.mrf.mxu0
        %9679 = vdwg.mxu0
        %v9681 = vunpack.c.l.b16 %v9379
        %v9682 = vpack.c.b16 %v9258, %v9681
        %v9683 = vrot.slane %v9682, 1
        %v9685 = vsel %vm7320, %v9683, 0
        %9687 = vmatprep.subr.bf16.mxu0 0
        %9688 = vmatpush1.bf16.msra.mxu0 0
        %9689 = vmatprep.subr.bf16.mxu0 0
        %9690 = vmatpush1.bf16.msra.mxu0 0
        %9691 = vmatprep.subr.bf16.mxu0 0
        %9692 = vmatpush1.bf16.msra.mxu0 0
        %9693 = vmatprep.subr.bf16.mxu0 0
        %9694 = vmatpush1.bf16.msra.mxu0 0
        %9695 = vmatprep.subr.bf16.mxu0 0
        %9696 = vmatpush1.bf16.msra.mxu0 0
        %9697 = vmatprep.subr.bf16.mxu0 0
        %9698 = vmatpush1.bf16.msra.mxu0 0
        %9699 = vmatprep.subr.bf16.mxu0 0
        %9700 = vmatpush1.bf16.msra.mxu0 %v9399
        %9701 = vmatprep.subr.bf16.mxu0 0
        %9702 = vmatpush1.bf16.msra.mxu0 %v9398
        %9703 = vmatprep.subr.bf16.mxu0 0
        %9704 = vmatpush2.bf16.msra.mxu0 0
        %9705 = vmatprep.subr.bf16.mxu0 0
        %9706 = vmatpush2.bf16.msra.mxu0 0
        %9707 = vmatprep.subr.bf16.mxu0 0
        %9708 = vmatpush2.bf16.msra.mxu0 0
        %9709 = vmatprep.subr.bf16.mxu0 0
        %9710 = vmatpush2.bf16.msra.mxu0 0
        %9711 = vmatprep.subr.bf16.mxu0 0
        %9712 = vmatpush2.bf16.msra.mxu0 0
        %9713 = vmatprep.subr.bf16.mxu0 0
        %9714 = vmatpush2.bf16.msra.mxu0 0
        %9715 = vmatprep.subr.bf16.mxu0 0
        %9716 = vmatpush2.bf16.msra.mxu0 0
        %9717 = vmatprep.subr.bf16.mxu0 0
        %9718 = vmatpush2.bf16.msra.mxu0 0
        %9719 = vmatprep.mubr.bf16.mxu0 0
        %9720 = vmatmul.mubr.bf16.gmra.mxu0 %v9685
        %v9721 = vpop.f32.mrf.mxu0
        %v9722 = vadd.f32 0.0, %v9721
        %v9723 = vpop.f32.mrf.mxu0
        %v9724 = vpop.f32.mrf.mxu0
        %v9725 = vpop.f32.mrf.mxu0
        %9726 = vdwg.mxu0
        %v9728 = vunpack.c.l.b16 %v9380
        %v9729 = vpack.c.b16 %v9313, %v9728
        %v9730 = vrot.slane %v9729, 1
        %v9732 = vsel %vm7320, %v9730, 0
        %9734 = vmatprep.subr.bf16.mxu0 0
        %9735 = vmatpush1.bf16.msra.mxu0 0
        %9736 = vmatprep.subr.bf16.mxu0 0
        %9737 = vmatpush1.bf16.msra.mxu0 0
        %9738 = vmatprep.subr.bf16.mxu0 0
        %9739 = vmatpush1.bf16.msra.mxu0 0
        %9740 = vmatprep.subr.bf16.mxu0 0
        %9741 = vmatpush1.bf16.msra.mxu0 0
        %9742 = vmatprep.subr.bf16.mxu0 0
        %9743 = vmatpush1.bf16.msra.mxu0 0
        %9744 = vmatprep.subr.bf16.mxu0 0
        %9745 = vmatpush1.bf16.msra.mxu0 0
        %9746 = vmatprep.subr.bf16.mxu0 0
        %9747 = vmatpush1.bf16.msra.mxu0 %v9399
        %9748 = vmatprep.subr.bf16.mxu0 0
        %9749 = vmatpush1.bf16.msra.mxu0 %v9398
        %9750 = vmatprep.subr.bf16.mxu0 0
        %9751 = vmatpush2.bf16.msra.mxu0 0
        %9752 = vmatprep.subr.bf16.mxu0 0
        %9753 = vmatpush2.bf16.msra.mxu0 0
        %9754 = vmatprep.subr.bf16.mxu0 0
        %9755 = vmatpush2.bf16.msra.mxu0 0
        %9756 = vmatprep.subr.bf16.mxu0 0
        %9757 = vmatpush2.bf16.msra.mxu0 0
        %9758 = vmatprep.subr.bf16.mxu0 0
        %9759 = vmatpush2.bf16.msra.mxu0 0
        %9760 = vmatprep.subr.bf16.mxu0 0
        %9761 = vmatpush2.bf16.msra.mxu0 0
        %9762 = vmatprep.subr.bf16.mxu0 0
        %9763 = vmatpush2.bf16.msra.mxu0 0
        %9764 = vmatprep.subr.bf16.mxu0 0
        %9765 = vmatpush2.bf16.msra.mxu0 0
        %9766 = vmatprep.mubr.bf16.mxu0 0
        %9767 = vmatmul.mubr.bf16.gmra.mxu0 %v9732
        %v9768 = vpop.f32.mrf.mxu0
        %v9769 = vadd.f32 0.0, %v9768
        %v9770 = vpop.f32.mrf.mxu0
        %v9771 = vpop.f32.mrf.mxu0
        %v9772 = vpop.f32.mrf.mxu0
        %9773 = vdwg.mxu0
        %v9774 = vadd.f32 %v9365, %v9440
        %v9775 = vadd.f32 %v9366, %v9487
        %v9776 = vadd.f32 %v9367, %v9534
        %v9777 = vadd.f32 %v9368, %v9581
        %v9778 = vadd.f32 %v9369, %v9628
        %v9779 = vadd.f32 %v9370, %v9675
        %v9780 = vadd.f32 %v9371, %v9722
        %v9781 = vadd.f32 %v9372, %v9769
        %s9782 = scalar_lea.vmem [#allocation3], 16
        %v9783 = vld [vmem:[%s9782] sm:$0xf]
        %v9784 = vld [vmem:[%s9782 + $0x8] sm:$0xf]
        %v9785 = vld [vmem:[%s9782 + $0x10] sm:$0xf]
        %v9786 = vld [vmem:[%s9782 + $0x18] sm:$0xf]
        %v9787 = vld [vmem:[%s9782 + $0x20] sm:$0xf]
        %v9788 = vld [vmem:[%s9782 + $0x28] sm:$0xf]
        %v9789 = vld [vmem:[%s9782 + $0x30] sm:$0xf]
        %v9790 = vld [vmem:[%s9782 + $0x38] sm:$0xf]
        %s9791 = scalar_lea.vmem %s8, 96
        %v9792 = vld [vmem:[%s9791] sm:$0xf]
        %v9793 = vld [vmem:[%s9791 + $0x4] sm:$0xf]
        %v9794 = vld [vmem:[%s9791 + $0x8] sm:$0xf]
        %v9795 = vld [vmem:[%s9791 + $0xc] sm:$0xf]
        %v9800 = vunpack.c.l.b16 %v9792
        %v9801 = vunpack.c.l.b16 %v9793
        %v9802 = vunpack.c.l.b16 %v9794
        %v9803 = vunpack.c.l.b16 %v9795
        %v9804 = vpack.c.b16 %v9801, %v9800
        %v9805 = vpack.c.b16 %v9803, %v9802
        %v9809 = vsel %vm7320, %v9783, 0
        %9811 = vmatprep.subr.bf16.mxu0 0
        %9812 = vmatpush1.bf16.msra.mxu0 0
        %9813 = vmatprep.subr.bf16.mxu0 0
        %9814 = vmatpush1.bf16.msra.mxu0 0
        %9815 = vmatprep.subr.bf16.mxu0 0
        %9816 = vmatpush1.bf16.msra.mxu0 0
        %9817 = vmatprep.subr.bf16.mxu0 0
        %9818 = vmatpush1.bf16.msra.mxu0 0
        %9819 = vmatprep.subr.bf16.mxu0 0
        %9820 = vmatpush1.bf16.msra.mxu0 0
        %9821 = vmatprep.subr.bf16.mxu0 0
        %9822 = vmatpush1.bf16.msra.mxu0 0
        %9823 = vmatprep.subr.bf16.mxu0 0
        %9824 = vmatpush1.bf16.msra.mxu0 %v9805
        %9825 = vmatprep.subr.bf16.mxu0 0
        %9826 = vmatpush1.bf16.msra.mxu0 %v9804
        %9827 = vmatprep.subr.bf16.mxu0 0
        %9828 = vmatpush2.bf16.msra.mxu0 0
        %9829 = vmatprep.subr.bf16.mxu0 0
        %9830 = vmatpush2.bf16.msra.mxu0 0
        %9831 = vmatprep.subr.bf16.mxu0 0
        %9832 = vmatpush2.bf16.msra.mxu0 0
        %9833 = vmatprep.subr.bf16.mxu0 0
        %9834 = vmatpush2.bf16.msra.mxu0 0
        %9835 = vmatprep.subr.bf16.mxu0 0
        %9836 = vmatpush2.bf16.msra.mxu0 0
        %9837 = vmatprep.subr.bf16.mxu0 0
        %9838 = vmatpush2.bf16.msra.mxu0 0
        %9839 = vmatprep.subr.bf16.mxu0 0
        %9840 = vmatpush2.bf16.msra.mxu0 0
        %9841 = vmatprep.subr.bf16.mxu0 0
        %9842 = vmatpush2.bf16.msra.mxu0 0
        %9843 = vmatprep.mubr.bf16.mxu0 0
        %9844 = vmatmul.mubr.bf16.gmra.mxu0 %v9809
        %v9845 = vpop.f32.mrf.mxu0
        %v9846 = vadd.f32 0.0, %v9845
        %v9847 = vpop.f32.mrf.mxu0
        %v9848 = vpop.f32.mrf.mxu0
        %v9849 = vpop.f32.mrf.mxu0
        %9850 = vdwg.mxu0
        %v9852 = vsel %vm7320, %v9784, 0
        %9854 = vmatprep.subr.bf16.mxu0 0
        %9855 = vmatpush1.bf16.msra.mxu0 0
        %9856 = vmatprep.subr.bf16.mxu0 0
        %9857 = vmatpush1.bf16.msra.mxu0 0
        %9858 = vmatprep.subr.bf16.mxu0 0
        %9859 = vmatpush1.bf16.msra.mxu0 0
        %9860 = vmatprep.subr.bf16.mxu0 0
        %9861 = vmatpush1.bf16.msra.mxu0 0
        %9862 = vmatprep.subr.bf16.mxu0 0
        %9863 = vmatpush1.bf16.msra.mxu0 0
        %9864 = vmatprep.subr.bf16.mxu0 0
        %9865 = vmatpush1.bf16.msra.mxu0 0
        %9866 = vmatprep.subr.bf16.mxu0 0
        %9867 = vmatpush1.bf16.msra.mxu0 %v9805
        %9868 = vmatprep.subr.bf16.mxu0 0
        %9869 = vmatpush1.bf16.msra.mxu0 %v9804
        %9870 = vmatprep.subr.bf16.mxu0 0
        %9871 = vmatpush2.bf16.msra.mxu0 0
        %9872 = vmatprep.subr.bf16.mxu0 0
        %9873 = vmatpush2.bf16.msra.mxu0 0
        %9874 = vmatprep.subr.bf16.mxu0 0
        %9875 = vmatpush2.bf16.msra.mxu0 0
        %9876 = vmatprep.subr.bf16.mxu0 0
        %9877 = vmatpush2.bf16.msra.mxu0 0
        %9878 = vmatprep.subr.bf16.mxu0 0
        %9879 = vmatpush2.bf16.msra.mxu0 0
        %9880 = vmatprep.subr.bf16.mxu0 0
        %9881 = vmatpush2.bf16.msra.mxu0 0
        %9882 = vmatprep.subr.bf16.mxu0 0
        %9883 = vmatpush2.bf16.msra.mxu0 0
        %9884 = vmatprep.subr.bf16.mxu0 0
        %9885 = vmatpush2.bf16.msra.mxu0 0
        %9886 = vmatprep.mubr.bf16.mxu0 0
        %9887 = vmatmul.mubr.bf16.gmra.mxu0 %v9852
        %v9888 = vpop.f32.mrf.mxu0
        %v9889 = vadd.f32 0.0, %v9888
        %v9890 = vpop.f32.mrf.mxu0
        %v9891 = vpop.f32.mrf.mxu0
        %v9892 = vpop.f32.mrf.mxu0
        %9893 = vdwg.mxu0
        %v9895 = vsel %vm7320, %v9785, 0
        %9897 = vmatprep.subr.bf16.mxu0 0
        %9898 = vmatpush1.bf16.msra.mxu0 0
        %9899 = vmatprep.subr.bf16.mxu0 0
        %9900 = vmatpush1.bf16.msra.mxu0 0
        %9901 = vmatprep.subr.bf16.mxu0 0
        %9902 = vmatpush1.bf16.msra.mxu0 0
        %9903 = vmatprep.subr.bf16.mxu0 0
        %9904 = vmatpush1.bf16.msra.mxu0 0
        %9905 = vmatprep.subr.bf16.mxu0 0
        %9906 = vmatpush1.bf16.msra.mxu0 0
        %9907 = vmatprep.subr.bf16.mxu0 0
        %9908 = vmatpush1.bf16.msra.mxu0 0
        %9909 = vmatprep.subr.bf16.mxu0 0
        %9910 = vmatpush1.bf16.msra.mxu0 %v9805
        %9911 = vmatprep.subr.bf16.mxu0 0
        %9912 = vmatpush1.bf16.msra.mxu0 %v9804
        %9913 = vmatprep.subr.bf16.mxu0 0
        %9914 = vmatpush2.bf16.msra.mxu0 0
        %9915 = vmatprep.subr.bf16.mxu0 0
        %9916 = vmatpush2.bf16.msra.mxu0 0
        %9917 = vmatprep.subr.bf16.mxu0 0
        %9918 = vmatpush2.bf16.msra.mxu0 0
        %9919 = vmatprep.subr.bf16.mxu0 0
        %9920 = vmatpush2.bf16.msra.mxu0 0
        %9921 = vmatprep.subr.bf16.mxu0 0
        %9922 = vmatpush2.bf16.msra.mxu0 0
        %9923 = vmatprep.subr.bf16.mxu0 0
        %9924 = vmatpush2.bf16.msra.mxu0 0
        %9925 = vmatprep.subr.bf16.mxu0 0
        %9926 = vmatpush2.bf16.msra.mxu0 0
        %9927 = vmatprep.subr.bf16.mxu0 0
        %9928 = vmatpush2.bf16.msra.mxu0 0
        %9929 = vmatprep.mubr.bf16.mxu0 0
        %9930 = vmatmul.mubr.bf16.gmra.mxu0 %v9895
        %v9931 = vpop.f32.mrf.mxu0
        %v9932 = vadd.f32 0.0, %v9931
        %v9933 = vpop.f32.mrf.mxu0
        %v9934 = vpop.f32.mrf.mxu0
        %v9935 = vpop.f32.mrf.mxu0
        %9936 = vdwg.mxu0
        %v9938 = vsel %vm7320, %v9786, 0
        %9940 = vmatprep.subr.bf16.mxu0 0
        %9941 = vmatpush1.bf16.msra.mxu0 0
        %9942 = vmatprep.subr.bf16.mxu0 0
        %9943 = vmatpush1.bf16.msra.mxu0 0
        %9944 = vmatprep.subr.bf16.mxu0 0
        %9945 = vmatpush1.bf16.msra.mxu0 0
        %9946 = vmatprep.subr.bf16.mxu0 0
        %9947 = vmatpush1.bf16.msra.mxu0 0
        %9948 = vmatprep.subr.bf16.mxu0 0
        %9949 = vmatpush1.bf16.msra.mxu0 0
        %9950 = vmatprep.subr.bf16.mxu0 0
        %9951 = vmatpush1.bf16.msra.mxu0 0
        %9952 = vmatprep.subr.bf16.mxu0 0
        %9953 = vmatpush1.bf16.msra.mxu0 %v9805
        %9954 = vmatprep.subr.bf16.mxu0 0
        %9955 = vmatpush1.bf16.msra.mxu0 %v9804
        %9956 = vmatprep.subr.bf16.mxu0 0
        %9957 = vmatpush2.bf16.msra.mxu0 0
        %9958 = vmatprep.subr.bf16.mxu0 0
        %9959 = vmatpush2.bf16.msra.mxu0 0
        %9960 = vmatprep.subr.bf16.mxu0 0
        %9961 = vmatpush2.bf16.msra.mxu0 0
        %9962 = vmatprep.subr.bf16.mxu0 0
        %9963 = vmatpush2.bf16.msra.mxu0 0
        %9964 = vmatprep.subr.bf16.mxu0 0
        %9965 = vmatpush2.bf16.msra.mxu0 0
        %9966 = vmatprep.subr.bf16.mxu0 0
        %9967 = vmatpush2.bf16.msra.mxu0 0
        %9968 = vmatprep.subr.bf16.mxu0 0
        %9969 = vmatpush2.bf16.msra.mxu0 0
        %9970 = vmatprep.subr.bf16.mxu0 0
        %9971 = vmatpush2.bf16.msra.mxu0 0
        %9972 = vmatprep.mubr.bf16.mxu0 0
        %9973 = vmatmul.mubr.bf16.gmra.mxu0 %v9938
        %v9974 = vpop.f32.mrf.mxu0
        %v9975 = vadd.f32 0.0, %v9974
        %v9976 = vpop.f32.mrf.mxu0
        %v9977 = vpop.f32.mrf.mxu0
        %v9978 = vpop.f32.mrf.mxu0
        %9979 = vdwg.mxu0
        %v9981 = vsel %vm7320, %v9787, 0
        %9983 = vmatprep.subr.bf16.mxu0 0
        %9984 = vmatpush1.bf16.msra.mxu0 0
        %9985 = vmatprep.subr.bf16.mxu0 0
        %9986 = vmatpush1.bf16.msra.mxu0 0
        %9987 = vmatprep.subr.bf16.mxu0 0
        %9988 = vmatpush1.bf16.msra.mxu0 0
        %9989 = vmatprep.subr.bf16.mxu0 0
        %9990 = vmatpush1.bf16.msra.mxu0 0
        %9991 = vmatprep.subr.bf16.mxu0 0
        %9992 = vmatpush1.bf16.msra.mxu0 0
        %9993 = vmatprep.subr.bf16.mxu0 0
        %9994 = vmatpush1.bf16.msra.mxu0 0
        %9995 = vmatprep.subr.bf16.mxu0 0
        %9996 = vmatpush1.bf16.msra.mxu0 %v9805
        %9997 = vmatprep.subr.bf16.mxu0 0
        %9998 = vmatpush1.bf16.msra.mxu0 %v9804
        %9999 = vmatprep.subr.bf16.mxu0 0
        %10000 = vmatpush2.bf16.msra.mxu0 0
        %10001 = vmatprep.subr.bf16.mxu0 0
        %10002 = vmatpush2.bf16.msra.mxu0 0
        %10003 = vmatprep.subr.bf16.mxu0 0
        %10004 = vmatpush2.bf16.msra.mxu0 0
        %10005 = vmatprep.subr.bf16.mxu0 0
        %10006 = vmatpush2.bf16.msra.mxu0 0
        %10007 = vmatprep.subr.bf16.mxu0 0
        %10008 = vmatpush2.bf16.msra.mxu0 0
        %10009 = vmatprep.subr.bf16.mxu0 0
        %10010 = vmatpush2.bf16.msra.mxu0 0
        %10011 = vmatprep.subr.bf16.mxu0 0
        %10012 = vmatpush2.bf16.msra.mxu0 0
        %10013 = vmatprep.subr.bf16.mxu0 0
        %10014 = vmatpush2.bf16.msra.mxu0 0
        %10015 = vmatprep.mubr.bf16.mxu0 0
        %10016 = vmatmul.mubr.bf16.gmra.mxu0 %v9981
        %v10017 = vpop.f32.mrf.mxu0
        %v10018 = vadd.f32 0.0, %v10017
        %v10019 = vpop.f32.mrf.mxu0
        %v10020 = vpop.f32.mrf.mxu0
        %v10021 = vpop.f32.mrf.mxu0
        %10022 = vdwg.mxu0
        %v10024 = vsel %vm7320, %v9788, 0
        %10026 = vmatprep.subr.bf16.mxu0 0
        %10027 = vmatpush1.bf16.msra.mxu0 0
        %10028 = vmatprep.subr.bf16.mxu0 0
        %10029 = vmatpush1.bf16.msra.mxu0 0
        %10030 = vmatprep.subr.bf16.mxu0 0
        %10031 = vmatpush1.bf16.msra.mxu0 0
        %10032 = vmatprep.subr.bf16.mxu0 0
        %10033 = vmatpush1.bf16.msra.mxu0 0
        %10034 = vmatprep.subr.bf16.mxu0 0
        %10035 = vmatpush1.bf16.msra.mxu0 0
        %10036 = vmatprep.subr.bf16.mxu0 0
        %10037 = vmatpush1.bf16.msra.mxu0 0
        %10038 = vmatprep.subr.bf16.mxu0 0
        %10039 = vmatpush1.bf16.msra.mxu0 %v9805
        %10040 = vmatprep.subr.bf16.mxu0 0
        %10041 = vmatpush1.bf16.msra.mxu0 %v9804
        %10042 = vmatprep.subr.bf16.mxu0 0
        %10043 = vmatpush2.bf16.msra.mxu0 0
        %10044 = vmatprep.subr.bf16.mxu0 0
        %10045 = vmatpush2.bf16.msra.mxu0 0
        %10046 = vmatprep.subr.bf16.mxu0 0
        %10047 = vmatpush2.bf16.msra.mxu0 0
        %10048 = vmatprep.subr.bf16.mxu0 0
        %10049 = vmatpush2.bf16.msra.mxu0 0
        %10050 = vmatprep.subr.bf16.mxu0 0
        %10051 = vmatpush2.bf16.msra.mxu0 0
        %10052 = vmatprep.subr.bf16.mxu0 0
        %10053 = vmatpush2.bf16.msra.mxu0 0
        %10054 = vmatprep.subr.bf16.mxu0 0
        %10055 = vmatpush2.bf16.msra.mxu0 0
        %10056 = vmatprep.subr.bf16.mxu0 0
        %10057 = vmatpush2.bf16.msra.mxu0 0
        %10058 = vmatprep.mubr.bf16.mxu0 0
        %10059 = vmatmul.mubr.bf16.gmra.mxu0 %v10024
        %v10060 = vpop.f32.mrf.mxu0
        %v10061 = vadd.f32 0.0, %v10060
        %v10062 = vpop.f32.mrf.mxu0
        %v10063 = vpop.f32.mrf.mxu0
        %v10064 = vpop.f32.mrf.mxu0
        %10065 = vdwg.mxu0
        %v10067 = vsel %vm7320, %v9789, 0
        %10069 = vmatprep.subr.bf16.mxu0 0
        %10070 = vmatpush1.bf16.msra.mxu0 0
        %10071 = vmatprep.subr.bf16.mxu0 0
        %10072 = vmatpush1.bf16.msra.mxu0 0
        %10073 = vmatprep.subr.bf16.mxu0 0
        %10074 = vmatpush1.bf16.msra.mxu0 0
        %10075 = vmatprep.subr.bf16.mxu0 0
        %10076 = vmatpush1.bf16.msra.mxu0 0
        %10077 = vmatprep.subr.bf16.mxu0 0
        %10078 = vmatpush1.bf16.msra.mxu0 0
        %10079 = vmatprep.subr.bf16.mxu0 0
        %10080 = vmatpush1.bf16.msra.mxu0 0
        %10081 = vmatprep.subr.bf16.mxu0 0
        %10082 = vmatpush1.bf16.msra.mxu0 %v9805
        %10083 = vmatprep.subr.bf16.mxu0 0
        %10084 = vmatpush1.bf16.msra.mxu0 %v9804
        %10085 = vmatprep.subr.bf16.mxu0 0
        %10086 = vmatpush2.bf16.msra.mxu0 0
        %10087 = vmatprep.subr.bf16.mxu0 0
        %10088 = vmatpush2.bf16.msra.mxu0 0
        %10089 = vmatprep.subr.bf16.mxu0 0
        %10090 = vmatpush2.bf16.msra.mxu0 0
        %10091 = vmatprep.subr.bf16.mxu0 0
        %10092 = vmatpush2.bf16.msra.mxu0 0
        %10093 = vmatprep.subr.bf16.mxu0 0
        %10094 = vmatpush2.bf16.msra.mxu0 0
        %10095 = vmatprep.subr.bf16.mxu0 0
        %10096 = vmatpush2.bf16.msra.mxu0 0
        %10097 = vmatprep.subr.bf16.mxu0 0
        %10098 = vmatpush2.bf16.msra.mxu0 0
        %10099 = vmatprep.subr.bf16.mxu0 0
        %10100 = vmatpush2.bf16.msra.mxu0 0
        %10101 = vmatprep.mubr.bf16.mxu0 0
        %10102 = vmatmul.mubr.bf16.gmra.mxu0 %v10067
        %v10103 = vpop.f32.mrf.mxu0
        %v10104 = vadd.f32 0.0, %v10103
        %v10105 = vpop.f32.mrf.mxu0
        %v10106 = vpop.f32.mrf.mxu0
        %v10107 = vpop.f32.mrf.mxu0
        %10108 = vdwg.mxu0
        %v10110 = vsel %vm7320, %v9790, 0
        %10112 = vmatprep.subr.bf16.mxu0 0
        %10113 = vmatpush1.bf16.msra.mxu0 0
        %10114 = vmatprep.subr.bf16.mxu0 0
        %10115 = vmatpush1.bf16.msra.mxu0 0
        %10116 = vmatprep.subr.bf16.mxu0 0
        %10117 = vmatpush1.bf16.msra.mxu0 0
        %10118 = vmatprep.subr.bf16.mxu0 0
        %10119 = vmatpush1.bf16.msra.mxu0 0
        %10120 = vmatprep.subr.bf16.mxu0 0
        %10121 = vmatpush1.bf16.msra.mxu0 0
        %10122 = vmatprep.subr.bf16.mxu0 0
        %10123 = vmatpush1.bf16.msra.mxu0 0
        %10124 = vmatprep.subr.bf16.mxu0 0
        %10125 = vmatpush1.bf16.msra.mxu0 %v9805
        %10126 = vmatprep.subr.bf16.mxu0 0
        %10127 = vmatpush1.bf16.msra.mxu0 %v9804
        %10128 = vmatprep.subr.bf16.mxu0 0
        %10129 = vmatpush2.bf16.msra.mxu0 0
        %10130 = vmatprep.subr.bf16.mxu0 0
        %10131 = vmatpush2.bf16.msra.mxu0 0
        %10132 = vmatprep.subr.bf16.mxu0 0
        %10133 = vmatpush2.bf16.msra.mxu0 0
        %10134 = vmatprep.subr.bf16.mxu0 0
        %10135 = vmatpush2.bf16.msra.mxu0 0
        %10136 = vmatprep.subr.bf16.mxu0 0
        %10137 = vmatpush2.bf16.msra.mxu0 0
        %10138 = vmatprep.subr.bf16.mxu0 0
        %10139 = vmatpush2.bf16.msra.mxu0 0
        %10140 = vmatprep.subr.bf16.mxu0 0
        %10141 = vmatpush2.bf16.msra.mxu0 0
        %10142 = vmatprep.subr.bf16.mxu0 0
        %10143 = vmatpush2.bf16.msra.mxu0 0
        %10144 = vmatprep.mubr.bf16.mxu0 0
        %10145 = vmatmul.mubr.bf16.gmra.mxu0 %v10110
        %v10146 = vpop.f32.mrf.mxu0
        %v10147 = vadd.f32 0.0, %v10146
        %v10148 = vpop.f32.mrf.mxu0
        %v10149 = vpop.f32.mrf.mxu0
        %v10150 = vpop.f32.mrf.mxu0
        %10151 = vdwg.mxu0
        %v10152 = vadd.f32 %v9774, %v9846
        %v10153 = vadd.f32 %v9775, %v9889
        %v10154 = vadd.f32 %v9776, %v9932
        %v10155 = vadd.f32 %v9777, %v9975
        %v10156 = vadd.f32 %v9778, %v10018
        %v10157 = vadd.f32 %v9779, %v10061
        %v10158 = vadd.f32 %v9780, %v10104
        %v10159 = vadd.f32 %v9781, %v10147
        %v10160 = vld [vmem:[%s9782] sm:$0xf]
        %v10161 = vld [vmem:[%s9782 + $0x4] sm:$0x1]
        %v10162 = vld [vmem:[%s9782 + $0x8] sm:$0xf]
        %v10163 = vld [vmem:[%s9782 + $0xc] sm:$0x1]
        %v10164 = vld [vmem:[%s9782 + $0x10] sm:$0xf]
        %v10165 = vld [vmem:[%s9782 + $0x14] sm:$0x1]
        %v10166 = vld [vmem:[%s9782 + $0x18] sm:$0xf]
        %v10167 = vld [vmem:[%s9782 + $0x1c] sm:$0x1]
        %v10168 = vld [vmem:[%s9782 + $0x20] sm:$0xf]
        %v10169 = vld [vmem:[%s9782 + $0x24] sm:$0x1]
        %v10170 = vld [vmem:[%s9782 + $0x28] sm:$0xf]
        %v10171 = vld [vmem:[%s9782 + $0x2c] sm:$0x1]
        %v10172 = vld [vmem:[%s9782 + $0x30] sm:$0xf]
        %v10173 = vld [vmem:[%s9782 + $0x34] sm:$0x1]
        %v10174 = vld [vmem:[%s9782 + $0x38] sm:$0xf]
        %v10175 = vld [vmem:[%s9782 + $0x3c] sm:$0x1]
        %s10176 = scalar_lea.vmem %s8, 112
        %v10177 = vld [vmem:[%s10176] sm:$0xf]
        %v10178 = vld [vmem:[%s10176 + $0x4] sm:$0xf]
        %v10179 = vld [vmem:[%s10176 + $0x8] sm:$0xf]
        %v10180 = vld [vmem:[%s10176 + $0xc] sm:$0xf]
        %v10183 = vunpack.c.l.b16 %v10160
        %v10184 = vunpack.c.l.b16 %v10161
        %v10185 = vpack.c.b16 %v10184, %v10183
        %v10187 = vshrl.u32 %v10185, 16
        %v10189 = vshll.u32 %v10185, 16
        %v10191 = vrot.slane %v10189, 1
        %v10192 = vor.u32 %v10187, %v10191
        %v10197 = vunpack.c.l.b16 %v10177
        %v10198 = vunpack.c.l.b16 %v10178
        %v10199 = vunpack.c.l.b16 %v10179
        %v10200 = vunpack.c.l.b16 %v10180
        %v10201 = vpack.c.b16 %v10198, %v10197
        %v10202 = vpack.c.b16 %v10200, %v10199
        %v10206 = vsel %vm7320, %v10192, 0
        %10208 = vmatprep.subr.bf16.mxu0 0
        %10209 = vmatpush1.bf16.msra.mxu0 0
        %10210 = vmatprep.subr.bf16.mxu0 0
        %10211 = vmatpush1.bf16.msra.mxu0 0
        %10212 = vmatprep.subr.bf16.mxu0 0
        %10213 = vmatpush1.bf16.msra.mxu0 0
        %10214 = vmatprep.subr.bf16.mxu0 0
        %10215 = vmatpush1.bf16.msra.mxu0 0
        %10216 = vmatprep.subr.bf16.mxu0 0
        %10217 = vmatpush1.bf16.msra.mxu0 0
        %10218 = vmatprep.subr.bf16.mxu0 0
        %10219 = vmatpush1.bf16.msra.mxu0 0
        %10220 = vmatprep.subr.bf16.mxu0 0
        %10221 = vmatpush1.bf16.msra.mxu0 %v10202
        %10222 = vmatprep.subr.bf16.mxu0 0
        %10223 = vmatpush1.bf16.msra.mxu0 %v10201
        %10224 = vmatprep.subr.bf16.mxu0 0
        %10225 = vmatpush2.bf16.msra.mxu0 0
        %10226 = vmatprep.subr.bf16.mxu0 0
        %10227 = vmatpush2.bf16.msra.mxu0 0
        %10228 = vmatprep.subr.bf16.mxu0 0
        %10229 = vmatpush2.bf16.msra.mxu0 0
        %10230 = vmatprep.subr.bf16.mxu0 0
        %10231 = vmatpush2.bf16.msra.mxu0 0
        %10232 = vmatprep.subr.bf16.mxu0 0
        %10233 = vmatpush2.bf16.msra.mxu0 0
        %10234 = vmatprep.subr.bf16.mxu0 0
        %10235 = vmatpush2.bf16.msra.mxu0 0
        %10236 = vmatprep.subr.bf16.mxu0 0
        %10237 = vmatpush2.bf16.msra.mxu0 0
        %10238 = vmatprep.subr.bf16.mxu0 0
        %10239 = vmatpush2.bf16.msra.mxu0 0
        %10240 = vmatprep.mubr.bf16.mxu0 0
        %10241 = vmatmul.mubr.bf16.gmra.mxu0 %v10206
        %v10242 = vpop.f32.mrf.mxu0
        %v10243 = vadd.f32 0.0, %v10242
        %v10244 = vpop.f32.mrf.mxu0
        %v10245 = vpop.f32.mrf.mxu0
        %v10246 = vpop.f32.mrf.mxu0
        %10247 = vdwg.mxu0
        %v10250 = vunpack.c.l.b16 %v10162
        %v10251 = vunpack.c.l.b16 %v10163
        %v10252 = vpack.c.b16 %v10251, %v10250
        %v10254 = vshrl.u32 %v10252, 16
        %v10256 = vshll.u32 %v10252, 16
        %v10258 = vrot.slane %v10256, 1
        %v10259 = vor.u32 %v10254, %v10258
        %v10261 = vsel %vm7320, %v10259, 0
        %10263 = vmatprep.subr.bf16.mxu0 0
        %10264 = vmatpush1.bf16.msra.mxu0 0
        %10265 = vmatprep.subr.bf16.mxu0 0
        %10266 = vmatpush1.bf16.msra.mxu0 0
        %10267 = vmatprep.subr.bf16.mxu0 0
        %10268 = vmatpush1.bf16.msra.mxu0 0
        %10269 = vmatprep.subr.bf16.mxu0 0
        %10270 = vmatpush1.bf16.msra.mxu0 0
        %10271 = vmatprep.subr.bf16.mxu0 0
        %10272 = vmatpush1.bf16.msra.mxu0 0
        %10273 = vmatprep.subr.bf16.mxu0 0
        %10274 = vmatpush1.bf16.msra.mxu0 0
        %10275 = vmatprep.subr.bf16.mxu0 0
        %10276 = vmatpush1.bf16.msra.mxu0 %v10202
        %10277 = vmatprep.subr.bf16.mxu0 0
        %10278 = vmatpush1.bf16.msra.mxu0 %v10201
        %10279 = vmatprep.subr.bf16.mxu0 0
        %10280 = vmatpush2.bf16.msra.mxu0 0
        %10281 = vmatprep.subr.bf16.mxu0 0
        %10282 = vmatpush2.bf16.msra.mxu0 0
        %10283 = vmatprep.subr.bf16.mxu0 0
        %10284 = vmatpush2.bf16.msra.mxu0 0
        %10285 = vmatprep.subr.bf16.mxu0 0
        %10286 = vmatpush2.bf16.msra.mxu0 0
        %10287 = vmatprep.subr.bf16.mxu0 0
        %10288 = vmatpush2.bf16.msra.mxu0 0
        %10289 = vmatprep.subr.bf16.mxu0 0
        %10290 = vmatpush2.bf16.msra.mxu0 0
        %10291 = vmatprep.subr.bf16.mxu0 0
        %10292 = vmatpush2.bf16.msra.mxu0 0
        %10293 = vmatprep.subr.bf16.mxu0 0
        %10294 = vmatpush2.bf16.msra.mxu0 0
        %10295 = vmatprep.mubr.bf16.mxu0 0
        %10296 = vmatmul.mubr.bf16.gmra.mxu0 %v10261
        %v10297 = vpop.f32.mrf.mxu0
        %v10298 = vadd.f32 0.0, %v10297
        %v10299 = vpop.f32.mrf.mxu0
        %v10300 = vpop.f32.mrf.mxu0
        %v10301 = vpop.f32.mrf.mxu0
        %10302 = vdwg.mxu0
        %v10305 = vunpack.c.l.b16 %v10164
        %v10306 = vunpack.c.l.b16 %v10165
        %v10307 = vpack.c.b16 %v10306, %v10305
        %v10309 = vshrl.u32 %v10307, 16
        %v10311 = vshll.u32 %v10307, 16
        %v10313 = vrot.slane %v10311, 1
        %v10314 = vor.u32 %v10309, %v10313
        %v10316 = vsel %vm7320, %v10314, 0
        %10318 = vmatprep.subr.bf16.mxu0 0
        %10319 = vmatpush1.bf16.msra.mxu0 0
        %10320 = vmatprep.subr.bf16.mxu0 0
        %10321 = vmatpush1.bf16.msra.mxu0 0
        %10322 = vmatprep.subr.bf16.mxu0 0
        %10323 = vmatpush1.bf16.msra.mxu0 0
        %10324 = vmatprep.subr.bf16.mxu0 0
        %10325 = vmatpush1.bf16.msra.mxu0 0
        %10326 = vmatprep.subr.bf16.mxu0 0
        %10327 = vmatpush1.bf16.msra.mxu0 0
        %10328 = vmatprep.subr.bf16.mxu0 0
        %10329 = vmatpush1.bf16.msra.mxu0 0
        %10330 = vmatprep.subr.bf16.mxu0 0
        %10331 = vmatpush1.bf16.msra.mxu0 %v10202
        %10332 = vmatprep.subr.bf16.mxu0 0
        %10333 = vmatpush1.bf16.msra.mxu0 %v10201
        %10334 = vmatprep.subr.bf16.mxu0 0
        %10335 = vmatpush2.bf16.msra.mxu0 0
        %10336 = vmatprep.subr.bf16.mxu0 0
        %10337 = vmatpush2.bf16.msra.mxu0 0
        %10338 = vmatprep.subr.bf16.mxu0 0
        %10339 = vmatpush2.bf16.msra.mxu0 0
        %10340 = vmatprep.subr.bf16.mxu0 0
        %10341 = vmatpush2.bf16.msra.mxu0 0
        %10342 = vmatprep.subr.bf16.mxu0 0
        %10343 = vmatpush2.bf16.msra.mxu0 0
        %10344 = vmatprep.subr.bf16.mxu0 0
        %10345 = vmatpush2.bf16.msra.mxu0 0
        %10346 = vmatprep.subr.bf16.mxu0 0
        %10347 = vmatpush2.bf16.msra.mxu0 0
        %10348 = vmatprep.subr.bf16.mxu0 0
        %10349 = vmatpush2.bf16.msra.mxu0 0
        %10350 = vmatprep.mubr.bf16.mxu0 0
        %10351 = vmatmul.mubr.bf16.gmra.mxu0 %v10316
        %v10352 = vpop.f32.mrf.mxu0
        %v10353 = vadd.f32 0.0, %v10352
        %v10354 = vpop.f32.mrf.mxu0
        %v10355 = vpop.f32.mrf.mxu0
        %v10356 = vpop.f32.mrf.mxu0
        %10357 = vdwg.mxu0
        %v10360 = vunpack.c.l.b16 %v10166
        %v10361 = vunpack.c.l.b16 %v10167
        %v10362 = vpack.c.b16 %v10361, %v10360
        %v10364 = vshrl.u32 %v10362, 16
        %v10366 = vshll.u32 %v10362, 16
        %v10368 = vrot.slane %v10366, 1
        %v10369 = vor.u32 %v10364, %v10368
        %v10371 = vsel %vm7320, %v10369, 0
        %10373 = vmatprep.subr.bf16.mxu0 0
        %10374 = vmatpush1.bf16.msra.mxu0 0
        %10375 = vmatprep.subr.bf16.mxu0 0
        %10376 = vmatpush1.bf16.msra.mxu0 0
        %10377 = vmatprep.subr.bf16.mxu0 0
        %10378 = vmatpush1.bf16.msra.mxu0 0
        %10379 = vmatprep.subr.bf16.mxu0 0
        %10380 = vmatpush1.bf16.msra.mxu0 0
        %10381 = vmatprep.subr.bf16.mxu0 0
        %10382 = vmatpush1.bf16.msra.mxu0 0
        %10383 = vmatprep.subr.bf16.mxu0 0
        %10384 = vmatpush1.bf16.msra.mxu0 0
        %10385 = vmatprep.subr.bf16.mxu0 0
        %10386 = vmatpush1.bf16.msra.mxu0 %v10202
        %10387 = vmatprep.subr.bf16.mxu0 0
        %10388 = vmatpush1.bf16.msra.mxu0 %v10201
        %10389 = vmatprep.subr.bf16.mxu0 0
        %10390 = vmatpush2.bf16.msra.mxu0 0
        %10391 = vmatprep.subr.bf16.mxu0 0
        %10392 = vmatpush2.bf16.msra.mxu0 0
        %10393 = vmatprep.subr.bf16.mxu0 0
        %10394 = vmatpush2.bf16.msra.mxu0 0
        %10395 = vmatprep.subr.bf16.mxu0 0
        %10396 = vmatpush2.bf16.msra.mxu0 0
        %10397 = vmatprep.subr.bf16.mxu0 0
        %10398 = vmatpush2.bf16.msra.mxu0 0
        %10399 = vmatprep.subr.bf16.mxu0 0
        %10400 = vmatpush2.bf16.msra.mxu0 0
        %10401 = vmatprep.subr.bf16.mxu0 0
        %10402 = vmatpush2.bf16.msra.mxu0 0
        %10403 = vmatprep.subr.bf16.mxu0 0
        %10404 = vmatpush2.bf16.msra.mxu0 0
        %10405 = vmatprep.mubr.bf16.mxu0 0
        %10406 = vmatmul.mubr.bf16.gmra.mxu0 %v10371
        %v10407 = vpop.f32.mrf.mxu0
        %v10408 = vadd.f32 0.0, %v10407
        %v10409 = vpop.f32.mrf.mxu0
        %v10410 = vpop.f32.mrf.mxu0
        %v10411 = vpop.f32.mrf.mxu0
        %10412 = vdwg.mxu0
        %v10415 = vunpack.c.l.b16 %v10168
        %v10416 = vunpack.c.l.b16 %v10169
        %v10417 = vpack.c.b16 %v10416, %v10415
        %v10419 = vshrl.u32 %v10417, 16
        %v10421 = vshll.u32 %v10417, 16
        %v10423 = vrot.slane %v10421, 1
        %v10424 = vor.u32 %v10419, %v10423
        %v10426 = vsel %vm7320, %v10424, 0
        %10428 = vmatprep.subr.bf16.mxu0 0
        %10429 = vmatpush1.bf16.msra.mxu0 0
        %10430 = vmatprep.subr.bf16.mxu0 0
        %10431 = vmatpush1.bf16.msra.mxu0 0
        %10432 = vmatprep.subr.bf16.mxu0 0
        %10433 = vmatpush1.bf16.msra.mxu0 0
        %10434 = vmatprep.subr.bf16.mxu0 0
        %10435 = vmatpush1.bf16.msra.mxu0 0
        %10436 = vmatprep.subr.bf16.mxu0 0
        %10437 = vmatpush1.bf16.msra.mxu0 0
        %10438 = vmatprep.subr.bf16.mxu0 0
        %10439 = vmatpush1.bf16.msra.mxu0 0
        %10440 = vmatprep.subr.bf16.mxu0 0
        %10441 = vmatpush1.bf16.msra.mxu0 %v10202
        %10442 = vmatprep.subr.bf16.mxu0 0
        %10443 = vmatpush1.bf16.msra.mxu0 %v10201
        %10444 = vmatprep.subr.bf16.mxu0 0
        %10445 = vmatpush2.bf16.msra.mxu0 0
        %10446 = vmatprep.subr.bf16.mxu0 0
        %10447 = vmatpush2.bf16.msra.mxu0 0
        %10448 = vmatprep.subr.bf16.mxu0 0
        %10449 = vmatpush2.bf16.msra.mxu0 0
        %10450 = vmatprep.subr.bf16.mxu0 0
        %10451 = vmatpush2.bf16.msra.mxu0 0
        %10452 = vmatprep.subr.bf16.mxu0 0
        %10453 = vmatpush2.bf16.msra.mxu0 0
        %10454 = vmatprep.subr.bf16.mxu0 0
        %10455 = vmatpush2.bf16.msra.mxu0 0
        %10456 = vmatprep.subr.bf16.mxu0 0
        %10457 = vmatpush2.bf16.msra.mxu0 0
        %10458 = vmatprep.subr.bf16.mxu0 0
        %10459 = vmatpush2.bf16.msra.mxu0 0
        %10460 = vmatprep.mubr.bf16.mxu0 0
        %10461 = vmatmul.mubr.bf16.gmra.mxu0 %v10426
        %v10462 = vpop.f32.mrf.mxu0
        %v10463 = vadd.f32 0.0, %v10462
        %v10464 = vpop.f32.mrf.mxu0
        %v10465 = vpop.f32.mrf.mxu0
        %v10466 = vpop.f32.mrf.mxu0
        %10467 = vdwg.mxu0
        %v10470 = vunpack.c.l.b16 %v10170
        %v10471 = vunpack.c.l.b16 %v10171
        %v10472 = vpack.c.b16 %v10471, %v10470
        %v10474 = vshrl.u32 %v10472, 16
        %v10476 = vshll.u32 %v10472, 16
        %v10478 = vrot.slane %v10476, 1
        %v10479 = vor.u32 %v10474, %v10478
        %v10481 = vsel %vm7320, %v10479, 0
        %10483 = vmatprep.subr.bf16.mxu0 0
        %10484 = vmatpush1.bf16.msra.mxu0 0
        %10485 = vmatprep.subr.bf16.mxu0 0
        %10486 = vmatpush1.bf16.msra.mxu0 0
        %10487 = vmatprep.subr.bf16.mxu0 0
        %10488 = vmatpush1.bf16.msra.mxu0 0
        %10489 = vmatprep.subr.bf16.mxu0 0
        %10490 = vmatpush1.bf16.msra.mxu0 0
        %10491 = vmatprep.subr.bf16.mxu0 0
        %10492 = vmatpush1.bf16.msra.mxu0 0
        %10493 = vmatprep.subr.bf16.mxu0 0
        %10494 = vmatpush1.bf16.msra.mxu0 0
        %10495 = vmatprep.subr.bf16.mxu0 0
        %10496 = vmatpush1.bf16.msra.mxu0 %v10202
        %10497 = vmatprep.subr.bf16.mxu0 0
        %10498 = vmatpush1.bf16.msra.mxu0 %v10201
        %10499 = vmatprep.subr.bf16.mxu0 0
        %10500 = vmatpush2.bf16.msra.mxu0 0
        %10501 = vmatprep.subr.bf16.mxu0 0
        %10502 = vmatpush2.bf16.msra.mxu0 0
        %10503 = vmatprep.subr.bf16.mxu0 0
        %10504 = vmatpush2.bf16.msra.mxu0 0
        %10505 = vmatprep.subr.bf16.mxu0 0
        %10506 = vmatpush2.bf16.msra.mxu0 0
        %10507 = vmatprep.subr.bf16.mxu0 0
        %10508 = vmatpush2.bf16.msra.mxu0 0
        %10509 = vmatprep.subr.bf16.mxu0 0
        %10510 = vmatpush2.bf16.msra.mxu0 0
        %10511 = vmatprep.subr.bf16.mxu0 0
        %10512 = vmatpush2.bf16.msra.mxu0 0
        %10513 = vmatprep.subr.bf16.mxu0 0
        %10514 = vmatpush2.bf16.msra.mxu0 0
        %10515 = vmatprep.mubr.bf16.mxu0 0
        %10516 = vmatmul.mubr.bf16.gmra.mxu0 %v10481
        %v10517 = vpop.f32.mrf.mxu0
        %v10518 = vadd.f32 0.0, %v10517
        %v10519 = vpop.f32.mrf.mxu0
        %v10520 = vpop.f32.mrf.mxu0
        %v10521 = vpop.f32.mrf.mxu0
        %10522 = vdwg.mxu0
        %v10525 = vunpack.c.l.b16 %v10172
        %v10526 = vunpack.c.l.b16 %v10173
        %v10527 = vpack.c.b16 %v10526, %v10525
        %v10529 = vshrl.u32 %v10527, 16
        %v10531 = vshll.u32 %v10527, 16
        %v10533 = vrot.slane %v10531, 1
        %v10534 = vor.u32 %v10529, %v10533
        %v10536 = vsel %vm7320, %v10534, 0
        %10538 = vmatprep.subr.bf16.mxu0 0
        %10539 = vmatpush1.bf16.msra.mxu0 0
        %10540 = vmatprep.subr.bf16.mxu0 0
        %10541 = vmatpush1.bf16.msra.mxu0 0
        %10542 = vmatprep.subr.bf16.mxu0 0
        %10543 = vmatpush1.bf16.msra.mxu0 0
        %10544 = vmatprep.subr.bf16.mxu0 0
        %10545 = vmatpush1.bf16.msra.mxu0 0
        %10546 = vmatprep.subr.bf16.mxu0 0
        %10547 = vmatpush1.bf16.msra.mxu0 0
        %10548 = vmatprep.subr.bf16.mxu0 0
        %10549 = vmatpush1.bf16.msra.mxu0 0
        %10550 = vmatprep.subr.bf16.mxu0 0
        %10551 = vmatpush1.bf16.msra.mxu0 %v10202
        %10552 = vmatprep.subr.bf16.mxu0 0
        %10553 = vmatpush1.bf16.msra.mxu0 %v10201
        %10554 = vmatprep.subr.bf16.mxu0 0
        %10555 = vmatpush2.bf16.msra.mxu0 0
        %10556 = vmatprep.subr.bf16.mxu0 0
        %10557 = vmatpush2.bf16.msra.mxu0 0
        %10558 = vmatprep.subr.bf16.mxu0 0
        %10559 = vmatpush2.bf16.msra.mxu0 0
        %10560 = vmatprep.subr.bf16.mxu0 0
        %10561 = vmatpush2.bf16.msra.mxu0 0
        %10562 = vmatprep.subr.bf16.mxu0 0
        %10563 = vmatpush2.bf16.msra.mxu0 0
        %10564 = vmatprep.subr.bf16.mxu0 0
        %10565 = vmatpush2.bf16.msra.mxu0 0
        %10566 = vmatprep.subr.bf16.mxu0 0
        %10567 = vmatpush2.bf16.msra.mxu0 0
        %10568 = vmatprep.subr.bf16.mxu0 0
        %10569 = vmatpush2.bf16.msra.mxu0 0
        %10570 = vmatprep.mubr.bf16.mxu0 0
        %10571 = vmatmul.mubr.bf16.gmra.mxu0 %v10536
        %v10572 = vpop.f32.mrf.mxu0
        %v10573 = vadd.f32 0.0, %v10572
        %v10574 = vpop.f32.mrf.mxu0
        %v10575 = vpop.f32.mrf.mxu0
        %v10576 = vpop.f32.mrf.mxu0
        %10577 = vdwg.mxu0
        %v10580 = vunpack.c.l.b16 %v10174
        %v10581 = vunpack.c.l.b16 %v10175
        %v10582 = vpack.c.b16 %v10581, %v10580
        %v10584 = vshrl.u32 %v10582, 16
        %v10586 = vshll.u32 %v10582, 16
        %v10588 = vrot.slane %v10586, 1
        %v10589 = vor.u32 %v10584, %v10588
        %v10591 = vsel %vm7320, %v10589, 0
        %10593 = vmatprep.subr.bf16.mxu0 0
        %10594 = vmatpush1.bf16.msra.mxu0 0
        %10595 = vmatprep.subr.bf16.mxu0 0
        %10596 = vmatpush1.bf16.msra.mxu0 0
        %10597 = vmatprep.subr.bf16.mxu0 0
        %10598 = vmatpush1.bf16.msra.mxu0 0
        %10599 = vmatprep.subr.bf16.mxu0 0
        %10600 = vmatpush1.bf16.msra.mxu0 0
        %10601 = vmatprep.subr.bf16.mxu0 0
        %10602 = vmatpush1.bf16.msra.mxu0 0
        %10603 = vmatprep.subr.bf16.mxu0 0
        %10604 = vmatpush1.bf16.msra.mxu0 0
        %10605 = vmatprep.subr.bf16.mxu0 0
        %10606 = vmatpush1.bf16.msra.mxu0 %v10202
        %10607 = vmatprep.subr.bf16.mxu0 0
        %10608 = vmatpush1.bf16.msra.mxu0 %v10201
        %10609 = vmatprep.subr.bf16.mxu0 0
        %10610 = vmatpush2.bf16.msra.mxu0 0
        %10611 = vmatprep.subr.bf16.mxu0 0
        %10612 = vmatpush2.bf16.msra.mxu0 0
        %10613 = vmatprep.subr.bf16.mxu0 0
        %10614 = vmatpush2.bf16.msra.mxu0 0
        %10615 = vmatprep.subr.bf16.mxu0 0
        %10616 = vmatpush2.bf16.msra.mxu0 0
        %10617 = vmatprep.subr.bf16.mxu0 0
        %10618 = vmatpush2.bf16.msra.mxu0 0
        %10619 = vmatprep.subr.bf16.mxu0 0
        %10620 = vmatpush2.bf16.msra.mxu0 0
        %10621 = vmatprep.subr.bf16.mxu0 0
        %10622 = vmatpush2.bf16.msra.mxu0 0
        %10623 = vmatprep.subr.bf16.mxu0 0
        %10624 = vmatpush2.bf16.msra.mxu0 0
        %10625 = vmatprep.mubr.bf16.mxu0 0
        %10626 = vmatmul.mubr.bf16.gmra.mxu0 %v10591
        %v10627 = vpop.f32.mrf.mxu0
        %v10628 = vadd.f32 0.0, %v10627
        %v10629 = vpop.f32.mrf.mxu0
        %v10630 = vpop.f32.mrf.mxu0
        %v10631 = vpop.f32.mrf.mxu0
        %10632 = vdwg.mxu0
        %v10633 = vadd.f32 %v10152, %v10243
        %v10634 = vadd.f32 %v10153, %v10298
        %v10635 = vadd.f32 %v10154, %v10353
        %v10636 = vadd.f32 %v10155, %v10408
        %v10637 = vadd.f32 %v10156, %v10463
        %v10638 = vadd.f32 %v10157, %v10518
        %v10639 = vadd.f32 %v10158, %v10573
        %v10640 = vadd.f32 %v10159, %v10628
        %v10641 = vld [vmem:[%s9782] sm:$0xe]
        %v10642 = vld [vmem:[%s9782 + $0x8] sm:$0xe]
        %v10643 = vld [vmem:[%s9782 + $0x10] sm:$0xe]
        %v10644 = vld [vmem:[%s9782 + $0x18] sm:$0xe]
        %v10645 = vld [vmem:[%s9782 + $0x20] sm:$0xe]
        %v10646 = vld [vmem:[%s9782 + $0x28] sm:$0xe]
        %v10647 = vld [vmem:[%s9782 + $0x30] sm:$0xe]
        %v10648 = vld [vmem:[%s9782 + $0x38] sm:$0xe]
        %s10649 = scalar_lea.vmem %s8, 128
        %v10650 = vld [vmem:[%s10649] sm:$0xf]
        %v10651 = vld [vmem:[%s10649 + $0x4] sm:$0xf]
        %v10652 = vld [vmem:[%s10649 + $0x8] sm:$0xf]
        %v10653 = vld [vmem:[%s10649 + $0xc] sm:$0xf]
        %v10655 = vunpack.c.l.b16 %v10641
        %v10656 = vpack.c.b16 %v10184, %v10655
        %v10657 = vrot.slane %v10656, 1
        %v10662 = vunpack.c.l.b16 %v10650
        %v10663 = vunpack.c.l.b16 %v10651
        %v10664 = vunpack.c.l.b16 %v10652
        %v10665 = vunpack.c.l.b16 %v10653
        %v10666 = vpack.c.b16 %v10663, %v10662
        %v10667 = vpack.c.b16 %v10665, %v10664
        %v10671 = vsel %vm7320, %v10657, 0
        %10673 = vmatprep.subr.bf16.mxu0 0
        %10674 = vmatpush1.bf16.msra.mxu0 0
        %10675 = vmatprep.subr.bf16.mxu0 0
        %10676 = vmatpush1.bf16.msra.mxu0 0
        %10677 = vmatprep.subr.bf16.mxu0 0
        %10678 = vmatpush1.bf16.msra.mxu0 0
        %10679 = vmatprep.subr.bf16.mxu0 0
        %10680 = vmatpush1.bf16.msra.mxu0 0
        %10681 = vmatprep.subr.bf16.mxu0 0
        %10682 = vmatpush1.bf16.msra.mxu0 0
        %10683 = vmatprep.subr.bf16.mxu0 0
        %10684 = vmatpush1.bf16.msra.mxu0 0
        %10685 = vmatprep.subr.bf16.mxu0 0
        %10686 = vmatpush1.bf16.msra.mxu0 %v10667
        %10687 = vmatprep.subr.bf16.mxu0 0
        %10688 = vmatpush1.bf16.msra.mxu0 %v10666
        %10689 = vmatprep.subr.bf16.mxu0 0
        %10690 = vmatpush2.bf16.msra.mxu0 0
        %10691 = vmatprep.subr.bf16.mxu0 0
        %10692 = vmatpush2.bf16.msra.mxu0 0
        %10693 = vmatprep.subr.bf16.mxu0 0
        %10694 = vmatpush2.bf16.msra.mxu0 0
        %10695 = vmatprep.subr.bf16.mxu0 0
        %10696 = vmatpush2.bf16.msra.mxu0 0
        %10697 = vmatprep.subr.bf16.mxu0 0
        %10698 = vmatpush2.bf16.msra.mxu0 0
        %10699 = vmatprep.subr.bf16.mxu0 0
        %10700 = vmatpush2.bf16.msra.mxu0 0
        %10701 = vmatprep.subr.bf16.mxu0 0
        %10702 = vmatpush2.bf16.msra.mxu0 0
        %10703 = vmatprep.subr.bf16.mxu0 0
        %10704 = vmatpush2.bf16.msra.mxu0 0
        %10705 = vmatprep.mubr.bf16.mxu0 0
        %10706 = vmatmul.mubr.bf16.gmra.mxu0 %v10671
        %v10707 = vpop.f32.mrf.mxu0
        %v10708 = vadd.f32 0.0, %v10707
        %v10709 = vpop.f32.mrf.mxu0
        %v10710 = vpop.f32.mrf.mxu0
        %v10711 = vpop.f32.mrf.mxu0
        %10712 = vdwg.mxu0
        %v10714 = vunpack.c.l.b16 %v10642
        %v10715 = vpack.c.b16 %v10251, %v10714
        %v10716 = vrot.slane %v10715, 1
        %v10718 = vsel %vm7320, %v10716, 0
        %10720 = vmatprep.subr.bf16.mxu0 0
        %10721 = vmatpush1.bf16.msra.mxu0 0
        %10722 = vmatprep.subr.bf16.mxu0 0
        %10723 = vmatpush1.bf16.msra.mxu0 0
        %10724 = vmatprep.subr.bf16.mxu0 0
        %10725 = vmatpush1.bf16.msra.mxu0 0
        %10726 = vmatprep.subr.bf16.mxu0 0
        %10727 = vmatpush1.bf16.msra.mxu0 0
        %10728 = vmatprep.subr.bf16.mxu0 0
        %10729 = vmatpush1.bf16.msra.mxu0 0
        %10730 = vmatprep.subr.bf16.mxu0 0
        %10731 = vmatpush1.bf16.msra.mxu0 0
        %10732 = vmatprep.subr.bf16.mxu0 0
        %10733 = vmatpush1.bf16.msra.mxu0 %v10667
        %10734 = vmatprep.subr.bf16.mxu0 0
        %10735 = vmatpush1.bf16.msra.mxu0 %v10666
        %10736 = vmatprep.subr.bf16.mxu0 0
        %10737 = vmatpush2.bf16.msra.mxu0 0
        %10738 = vmatprep.subr.bf16.mxu0 0
        %10739 = vmatpush2.bf16.msra.mxu0 0
        %10740 = vmatprep.subr.bf16.mxu0 0
        %10741 = vmatpush2.bf16.msra.mxu0 0
        %10742 = vmatprep.subr.bf16.mxu0 0
        %10743 = vmatpush2.bf16.msra.mxu0 0
        %10744 = vmatprep.subr.bf16.mxu0 0
        %10745 = vmatpush2.bf16.msra.mxu0 0
        %10746 = vmatprep.subr.bf16.mxu0 0
        %10747 = vmatpush2.bf16.msra.mxu0 0
        %10748 = vmatprep.subr.bf16.mxu0 0
        %10749 = vmatpush2.bf16.msra.mxu0 0
        %10750 = vmatprep.subr.bf16.mxu0 0
        %10751 = vmatpush2.bf16.msra.mxu0 0
        %10752 = vmatprep.mubr.bf16.mxu0 0
        %10753 = vmatmul.mubr.bf16.gmra.mxu0 %v10718
        %v10754 = vpop.f32.mrf.mxu0
        %v10755 = vadd.f32 0.0, %v10754
        %v10756 = vpop.f32.mrf.mxu0
        %v10757 = vpop.f32.mrf.mxu0
        %v10758 = vpop.f32.mrf.mxu0
        %10759 = vdwg.mxu0
        %v10761 = vunpack.c.l.b16 %v10643
        %v10762 = vpack.c.b16 %v10306, %v10761
        %v10763 = vrot.slane %v10762, 1
        %v10765 = vsel %vm7320, %v10763, 0
        %10767 = vmatprep.subr.bf16.mxu0 0
        %10768 = vmatpush1.bf16.msra.mxu0 0
        %10769 = vmatprep.subr.bf16.mxu0 0
        %10770 = vmatpush1.bf16.msra.mxu0 0
        %10771 = vmatprep.subr.bf16.mxu0 0
        %10772 = vmatpush1.bf16.msra.mxu0 0
        %10773 = vmatprep.subr.bf16.mxu0 0
        %10774 = vmatpush1.bf16.msra.mxu0 0
        %10775 = vmatprep.subr.bf16.mxu0 0
        %10776 = vmatpush1.bf16.msra.mxu0 0
        %10777 = vmatprep.subr.bf16.mxu0 0
        %10778 = vmatpush1.bf16.msra.mxu0 0
        %10779 = vmatprep.subr.bf16.mxu0 0
        %10780 = vmatpush1.bf16.msra.mxu0 %v10667
        %10781 = vmatprep.subr.bf16.mxu0 0
        %10782 = vmatpush1.bf16.msra.mxu0 %v10666
        %10783 = vmatprep.subr.bf16.mxu0 0
        %10784 = vmatpush2.bf16.msra.mxu0 0
        %10785 = vmatprep.subr.bf16.mxu0 0
        %10786 = vmatpush2.bf16.msra.mxu0 0
        %10787 = vmatprep.subr.bf16.mxu0 0
        %10788 = vmatpush2.bf16.msra.mxu0 0
        %10789 = vmatprep.subr.bf16.mxu0 0
        %10790 = vmatpush2.bf16.msra.mxu0 0
        %10791 = vmatprep.subr.bf16.mxu0 0
        %10792 = vmatpush2.bf16.msra.mxu0 0
        %10793 = vmatprep.subr.bf16.mxu0 0
        %10794 = vmatpush2.bf16.msra.mxu0 0
        %10795 = vmatprep.subr.bf16.mxu0 0
        %10796 = vmatpush2.bf16.msra.mxu0 0
        %10797 = vmatprep.subr.bf16.mxu0 0
        %10798 = vmatpush2.bf16.msra.mxu0 0
        %10799 = vmatprep.mubr.bf16.mxu0 0
        %10800 = vmatmul.mubr.bf16.gmra.mxu0 %v10765
        %v10801 = vpop.f32.mrf.mxu0
        %v10802 = vadd.f32 0.0, %v10801
        %v10803 = vpop.f32.mrf.mxu0
        %v10804 = vpop.f32.mrf.mxu0
        %v10805 = vpop.f32.mrf.mxu0
        %10806 = vdwg.mxu0
        %v10808 = vunpack.c.l.b16 %v10644
        %v10809 = vpack.c.b16 %v10361, %v10808
        %v10810 = vrot.slane %v10809, 1
        %v10812 = vsel %vm7320, %v10810, 0
        %10814 = vmatprep.subr.bf16.mxu0 0
        %10815 = vmatpush1.bf16.msra.mxu0 0
        %10816 = vmatprep.subr.bf16.mxu0 0
        %10817 = vmatpush1.bf16.msra.mxu0 0
        %10818 = vmatprep.subr.bf16.mxu0 0
        %10819 = vmatpush1.bf16.msra.mxu0 0
        %10820 = vmatprep.subr.bf16.mxu0 0
        %10821 = vmatpush1.bf16.msra.mxu0 0
        %10822 = vmatprep.subr.bf16.mxu0 0
        %10823 = vmatpush1.bf16.msra.mxu0 0
        %10824 = vmatprep.subr.bf16.mxu0 0
        %10825 = vmatpush1.bf16.msra.mxu0 0
        %10826 = vmatprep.subr.bf16.mxu0 0
        %10827 = vmatpush1.bf16.msra.mxu0 %v10667
        %10828 = vmatprep.subr.bf16.mxu0 0
        %10829 = vmatpush1.bf16.msra.mxu0 %v10666
        %10830 = vmatprep.subr.bf16.mxu0 0
        %10831 = vmatpush2.bf16.msra.mxu0 0
        %10832 = vmatprep.subr.bf16.mxu0 0
        %10833 = vmatpush2.bf16.msra.mxu0 0
        %10834 = vmatprep.subr.bf16.mxu0 0
        %10835 = vmatpush2.bf16.msra.mxu0 0
        %10836 = vmatprep.subr.bf16.mxu0 0
        %10837 = vmatpush2.bf16.msra.mxu0 0
        %10838 = vmatprep.subr.bf16.mxu0 0
        %10839 = vmatpush2.bf16.msra.mxu0 0
        %10840 = vmatprep.subr.bf16.mxu0 0
        %10841 = vmatpush2.bf16.msra.mxu0 0
        %10842 = vmatprep.subr.bf16.mxu0 0
        %10843 = vmatpush2.bf16.msra.mxu0 0
        %10844 = vmatprep.subr.bf16.mxu0 0
        %10845 = vmatpush2.bf16.msra.mxu0 0
        %10846 = vmatprep.mubr.bf16.mxu0 0
        %10847 = vmatmul.mubr.bf16.gmra.mxu0 %v10812
        %v10848 = vpop.f32.mrf.mxu0
        %v10849 = vadd.f32 0.0, %v10848
        %v10850 = vpop.f32.mrf.mxu0
        %v10851 = vpop.f32.mrf.mxu0
        %v10852 = vpop.f32.mrf.mxu0
        %10853 = vdwg.mxu0
        %v10855 = vunpack.c.l.b16 %v10645
        %v10856 = vpack.c.b16 %v10416, %v10855
        %v10857 = vrot.slane %v10856, 1
        %v10859 = vsel %vm7320, %v10857, 0
        %10861 = vmatprep.subr.bf16.mxu0 0
        %10862 = vmatpush1.bf16.msra.mxu0 0
        %10863 = vmatprep.subr.bf16.mxu0 0
        %10864 = vmatpush1.bf16.msra.mxu0 0
        %10865 = vmatprep.subr.bf16.mxu0 0
        %10866 = vmatpush1.bf16.msra.mxu0 0
        %10867 = vmatprep.subr.bf16.mxu0 0
        %10868 = vmatpush1.bf16.msra.mxu0 0
        %10869 = vmatprep.subr.bf16.mxu0 0
        %10870 = vmatpush1.bf16.msra.mxu0 0
        %10871 = vmatprep.subr.bf16.mxu0 0
        %10872 = vmatpush1.bf16.msra.mxu0 0
        %10873 = vmatprep.subr.bf16.mxu0 0
        %10874 = vmatpush1.bf16.msra.mxu0 %v10667
        %10875 = vmatprep.subr.bf16.mxu0 0
        %10876 = vmatpush1.bf16.msra.mxu0 %v10666
        %10877 = vmatprep.subr.bf16.mxu0 0
        %10878 = vmatpush2.bf16.msra.mxu0 0
        %10879 = vmatprep.subr.bf16.mxu0 0
        %10880 = vmatpush2.bf16.msra.mxu0 0
        %10881 = vmatprep.subr.bf16.mxu0 0
        %10882 = vmatpush2.bf16.msra.mxu0 0
        %10883 = vmatprep.subr.bf16.mxu0 0
        %10884 = vmatpush2.bf16.msra.mxu0 0
        %10885 = vmatprep.subr.bf16.mxu0 0
        %10886 = vmatpush2.bf16.msra.mxu0 0
        %10887 = vmatprep.subr.bf16.mxu0 0
        %10888 = vmatpush2.bf16.msra.mxu0 0
        %10889 = vmatprep.subr.bf16.mxu0 0
        %10890 = vmatpush2.bf16.msra.mxu0 0
        %10891 = vmatprep.subr.bf16.mxu0 0
        %10892 = vmatpush2.bf16.msra.mxu0 0
        %10893 = vmatprep.mubr.bf16.mxu0 0
        %10894 = vmatmul.mubr.bf16.gmra.mxu0 %v10859
        %v10895 = vpop.f32.mrf.mxu0
        %v10896 = vadd.f32 0.0, %v10895
        %v10897 = vpop.f32.mrf.mxu0
        %v10898 = vpop.f32.mrf.mxu0
        %v10899 = vpop.f32.mrf.mxu0
        %10900 = vdwg.mxu0
        %v10902 = vunpack.c.l.b16 %v10646
        %v10903 = vpack.c.b16 %v10471, %v10902
        %v10904 = vrot.slane %v10903, 1
        %v10906 = vsel %vm7320, %v10904, 0
        %10908 = vmatprep.subr.bf16.mxu0 0
        %10909 = vmatpush1.bf16.msra.mxu0 0
        %10910 = vmatprep.subr.bf16.mxu0 0
        %10911 = vmatpush1.bf16.msra.mxu0 0
        %10912 = vmatprep.subr.bf16.mxu0 0
        %10913 = vmatpush1.bf16.msra.mxu0 0
        %10914 = vmatprep.subr.bf16.mxu0 0
        %10915 = vmatpush1.bf16.msra.mxu0 0
        %10916 = vmatprep.subr.bf16.mxu0 0
        %10917 = vmatpush1.bf16.msra.mxu0 0
        %10918 = vmatprep.subr.bf16.mxu0 0
        %10919 = vmatpush1.bf16.msra.mxu0 0
        %10920 = vmatprep.subr.bf16.mxu0 0
        %10921 = vmatpush1.bf16.msra.mxu0 %v10667
        %10922 = vmatprep.subr.bf16.mxu0 0
        %10923 = vmatpush1.bf16.msra.mxu0 %v10666
        %10924 = vmatprep.subr.bf16.mxu0 0
        %10925 = vmatpush2.bf16.msra.mxu0 0
        %10926 = vmatprep.subr.bf16.mxu0 0
        %10927 = vmatpush2.bf16.msra.mxu0 0
        %10928 = vmatprep.subr.bf16.mxu0 0
        %10929 = vmatpush2.bf16.msra.mxu0 0
        %10930 = vmatprep.subr.bf16.mxu0 0
        %10931 = vmatpush2.bf16.msra.mxu0 0
        %10932 = vmatprep.subr.bf16.mxu0 0
        %10933 = vmatpush2.bf16.msra.mxu0 0
        %10934 = vmatprep.subr.bf16.mxu0 0
        %10935 = vmatpush2.bf16.msra.mxu0 0
        %10936 = vmatprep.subr.bf16.mxu0 0
        %10937 = vmatpush2.bf16.msra.mxu0 0
        %10938 = vmatprep.subr.bf16.mxu0 0
        %10939 = vmatpush2.bf16.msra.mxu0 0
        %10940 = vmatprep.mubr.bf16.mxu0 0
        %10941 = vmatmul.mubr.bf16.gmra.mxu0 %v10906
        %v10942 = vpop.f32.mrf.mxu0
        %v10943 = vadd.f32 0.0, %v10942
        %v10944 = vpop.f32.mrf.mxu0
        %v10945 = vpop.f32.mrf.mxu0
        %v10946 = vpop.f32.mrf.mxu0
        %10947 = vdwg.mxu0
        %v10949 = vunpack.c.l.b16 %v10647
        %v10950 = vpack.c.b16 %v10526, %v10949
        %v10951 = vrot.slane %v10950, 1
        %v10953 = vsel %vm7320, %v10951, 0
        %10955 = vmatprep.subr.bf16.mxu0 0
        %10956 = vmatpush1.bf16.msra.mxu0 0
        %10957 = vmatprep.subr.bf16.mxu0 0
        %10958 = vmatpush1.bf16.msra.mxu0 0
        %10959 = vmatprep.subr.bf16.mxu0 0
        %10960 = vmatpush1.bf16.msra.mxu0 0
        %10961 = vmatprep.subr.bf16.mxu0 0
        %10962 = vmatpush1.bf16.msra.mxu0 0
        %10963 = vmatprep.subr.bf16.mxu0 0
        %10964 = vmatpush1.bf16.msra.mxu0 0
        %10965 = vmatprep.subr.bf16.mxu0 0
        %10966 = vmatpush1.bf16.msra.mxu0 0
        %10967 = vmatprep.subr.bf16.mxu0 0
        %10968 = vmatpush1.bf16.msra.mxu0 %v10667
        %10969 = vmatprep.subr.bf16.mxu0 0
        %10970 = vmatpush1.bf16.msra.mxu0 %v10666
        %10971 = vmatprep.subr.bf16.mxu0 0
        %10972 = vmatpush2.bf16.msra.mxu0 0
        %10973 = vmatprep.subr.bf16.mxu0 0
        %10974 = vmatpush2.bf16.msra.mxu0 0
        %10975 = vmatprep.subr.bf16.mxu0 0
        %10976 = vmatpush2.bf16.msra.mxu0 0
        %10977 = vmatprep.subr.bf16.mxu0 0
        %10978 = vmatpush2.bf16.msra.mxu0 0
        %10979 = vmatprep.subr.bf16.mxu0 0
        %10980 = vmatpush2.bf16.msra.mxu0 0
        %10981 = vmatprep.subr.bf16.mxu0 0
        %10982 = vmatpush2.bf16.msra.mxu0 0
        %10983 = vmatprep.subr.bf16.mxu0 0
        %10984 = vmatpush2.bf16.msra.mxu0 0
        %10985 = vmatprep.subr.bf16.mxu0 0
        %10986 = vmatpush2.bf16.msra.mxu0 0
        %10987 = vmatprep.mubr.bf16.mxu0 0
        %10988 = vmatmul.mubr.bf16.gmra.mxu0 %v10953
        %v10989 = vpop.f32.mrf.mxu0
        %v10990 = vadd.f32 0.0, %v10989
        %v10991 = vpop.f32.mrf.mxu0
        %v10992 = vpop.f32.mrf.mxu0
        %v10993 = vpop.f32.mrf.mxu0
        %10994 = vdwg.mxu0
        %v10996 = vunpack.c.l.b16 %v10648
        %v10997 = vpack.c.b16 %v10581, %v10996
        %v10998 = vrot.slane %v10997, 1
        %v11000 = vsel %vm7320, %v10998, 0
        %11002 = vmatprep.subr.bf16.mxu0 0
        %11003 = vmatpush1.bf16.msra.mxu0 0
        %11004 = vmatprep.subr.bf16.mxu0 0
        %11005 = vmatpush1.bf16.msra.mxu0 0
        %11006 = vmatprep.subr.bf16.mxu0 0
        %11007 = vmatpush1.bf16.msra.mxu0 0
        %11008 = vmatprep.subr.bf16.mxu0 0
        %11009 = vmatpush1.bf16.msra.mxu0 0
        %11010 = vmatprep.subr.bf16.mxu0 0
        %11011 = vmatpush1.bf16.msra.mxu0 0
        %11012 = vmatprep.subr.bf16.mxu0 0
        %11013 = vmatpush1.bf16.msra.mxu0 0
        %11014 = vmatprep.subr.bf16.mxu0 0
        %11015 = vmatpush1.bf16.msra.mxu0 %v10667
        %11016 = vmatprep.subr.bf16.mxu0 0
        %11017 = vmatpush1.bf16.msra.mxu0 %v10666
        %11018 = vmatprep.subr.bf16.mxu0 0
        %11019 = vmatpush2.bf16.msra.mxu0 0
        %11020 = vmatprep.subr.bf16.mxu0 0
        %11021 = vmatpush2.bf16.msra.mxu0 0
        %11022 = vmatprep.subr.bf16.mxu0 0
        %11023 = vmatpush2.bf16.msra.mxu0 0
        %11024 = vmatprep.subr.bf16.mxu0 0
        %11025 = vmatpush2.bf16.msra.mxu0 0
        %11026 = vmatprep.subr.bf16.mxu0 0
        %11027 = vmatpush2.bf16.msra.mxu0 0
        %11028 = vmatprep.subr.bf16.mxu0 0
        %11029 = vmatpush2.bf16.msra.mxu0 0
        %11030 = vmatprep.subr.bf16.mxu0 0
        %11031 = vmatpush2.bf16.msra.mxu0 0
        %11032 = vmatprep.subr.bf16.mxu0 0
        %11033 = vmatpush2.bf16.msra.mxu0 0
        %11034 = vmatprep.mubr.bf16.mxu0 0
        %11035 = vmatmul.mubr.bf16.gmra.mxu0 %v11000
        %v11036 = vpop.f32.mrf.mxu0
        %v11037 = vadd.f32 0.0, %v11036
        %v11038 = vpop.f32.mrf.mxu0
        %v11039 = vpop.f32.mrf.mxu0
        %v11040 = vpop.f32.mrf.mxu0
        %11041 = vdwg.mxu0
        %v11042 = vadd.f32 %v10633, %v10708
        %v11043 = vadd.f32 %v10634, %v10755
        %v11044 = vadd.f32 %v10635, %v10802
        %v11045 = vadd.f32 %v10636, %v10849
        %v11046 = vadd.f32 %v10637, %v10896
        %v11047 = vadd.f32 %v10638, %v10943
        %v11048 = vadd.f32 %v10639, %v10990
        %v11049 = vadd.f32 %v10640, %v11037
        %v11050 = vld [vmem:[%s409] sm:$0xf]
        %v11051 = vld [vmem:[%s409 + $0x4] sm:$0xf]
        %v11052 = vld [vmem:[%s409 + $0x8] sm:$0xf]
        %v11053 = vld [vmem:[%s409 + $0xc] sm:$0xf]
        %v11054 = vld [vmem:[%s409 + $0x10] sm:$0xf]
        %v11055 = vld [vmem:[%s409 + $0x14] sm:$0xf]
        %v11056 = vld [vmem:[%s409 + $0x18] sm:$0xf]
        %v11057 = vld [vmem:[%s409 + $0x1c] sm:$0xf]
        %v11058 = vunpack.c.l.bf16 %v11050
        %v11059 = vunpack.c.l.bf16 %v11051
        %v11060 = vunpack.c.l.bf16 %v11052
        %v11061 = vunpack.c.l.bf16 %v11053
        %v11062 = vunpack.c.l.bf16 %v11054
        %v11063 = vunpack.c.l.bf16 %v11055
        %v11064 = vunpack.c.l.bf16 %v11056
        %v11065 = vunpack.c.l.bf16 %v11057
        %v11066 = vmul.f32 %v11058, %v463
        %v11067 = vmul.f32 %v11059, %v463
        %v11068 = vmul.f32 %v11060, %v463
        %v11069 = vmul.f32 %v11061, %v463
        %v11070 = vmul.f32 %v11062, %v463
        %v11071 = vmul.f32 %v11063, %v463
        %v11072 = vmul.f32 %v11064, %v463
        %v11073 = vmul.f32 %v11065, %v463
        %v11074 = vadd.f32 %v11066, %v491
        %v11075 = vadd.f32 %v11067, %v491
        %v11076 = vadd.f32 %v11068, %v491
        %v11077 = vadd.f32 %v11069, %v491
        %v11078 = vadd.f32 %v11070, %v491
        %v11079 = vadd.f32 %v11071, %v491
        %v11080 = vadd.f32 %v11072, %v491
        %v11081 = vadd.f32 %v11073, %v491
        %v11082 = vmax.f32 %v11074, 0.0
        %v11083 = vmax.f32 %v11075, 0.0
        %v11084 = vmax.f32 %v11076, 0.0
        %v11085 = vmax.f32 %v11077, 0.0
        %v11086 = vmax.f32 %v11078, 0.0
        %v11087 = vmax.f32 %v11079, 0.0
        %v11088 = vmax.f32 %v11080, 0.0
        %v11089 = vmax.f32 %v11081, 0.0
        %v11090 = vpack.c.bf16 %v11082, %v11082
        %v11091 = vpack.c.bf16 %v11083, %v11083
        %v11092 = vpack.c.bf16 %v11084, %v11084
        %v11093 = vpack.c.bf16 %v11085, %v11085
        %v11094 = vpack.c.bf16 %v11086, %v11086
        %v11095 = vpack.c.bf16 %v11087, %v11087
        %v11096 = vpack.c.bf16 %v11088, %v11088
        %v11097 = vpack.c.bf16 %v11089, %v11089
        %v11098 = vld [vmem:[%s10] sm:$0xf]
        %v11099 = vld [vmem:[%s10 + $0x4] sm:$0xf]
        %v11102 = vunpack.c.l.b16 %v11098
        %v11103 = vunpack.c.l.b16 %v11099
        %v11104 = vpack.c.b16 %v11103, %v11102
        %v11107 = vsel %vm2080, %v11090, 0
        %11109 = vmatprep.subr.bf16.mxu0 0
        %11110 = vmatpush1.bf16.msra.mxu0 0
        %11111 = vmatprep.subr.bf16.mxu0 0
        %11112 = vmatpush1.bf16.msra.mxu0 0
        %11113 = vmatprep.subr.bf16.mxu0 0
        %11114 = vmatpush1.bf16.msra.mxu0 0
        %11115 = vmatprep.subr.bf16.mxu0 0
        %11116 = vmatpush1.bf16.msra.mxu0 0
        %11117 = vmatprep.subr.bf16.mxu0 0
        %11118 = vmatpush1.bf16.msra.mxu0 0
        %11119 = vmatprep.subr.bf16.mxu0 0
        %11120 = vmatpush1.bf16.msra.mxu0 0
        %11121 = vmatprep.subr.bf16.mxu0 0
        %11122 = vmatpush1.bf16.msra.mxu0 0
        %11123 = vmatprep.subr.bf16.mxu0 0
        %11124 = vmatpush1.bf16.msra.mxu0 %v11104
        %11125 = vmatprep.subr.bf16.mxu0 0
        %11126 = vmatpush2.bf16.msra.mxu0 0
        %11127 = vmatprep.subr.bf16.mxu0 0
        %11128 = vmatpush2.bf16.msra.mxu0 0
        %11129 = vmatprep.subr.bf16.mxu0 0
        %11130 = vmatpush2.bf16.msra.mxu0 0
        %11131 = vmatprep.subr.bf16.mxu0 0
        %11132 = vmatpush2.bf16.msra.mxu0 0
        %11133 = vmatprep.subr.bf16.mxu0 0
        %11134 = vmatpush2.bf16.msra.mxu0 0
        %11135 = vmatprep.subr.bf16.mxu0 0
        %11136 = vmatpush2.bf16.msra.mxu0 0
        %11137 = vmatprep.subr.bf16.mxu0 0
        %11138 = vmatpush2.bf16.msra.mxu0 0
        %11139 = vmatprep.subr.bf16.mxu0 0
        %11140 = vmatpush2.bf16.msra.mxu0 0
        %11141 = vmatprep.mubr.bf16.mxu0 0
        %11142 = vmatmul.mubr.bf16.gmra.mxu0 %v11107
        %v11143 = vpop.f32.mrf.mxu0
        %v11144 = vadd.f32 0.0, %v11143
        %v11145 = vpop.f32.mrf.mxu0
        %v11146 = vpop.f32.mrf.mxu0
        %v11147 = vpop.f32.mrf.mxu0
        %11148 = vdwg.mxu0
        %v11150 = vsel %vm2080, %v11091, 0
        %11152 = vmatprep.subr.bf16.mxu0 0
        %11153 = vmatpush1.bf16.msra.mxu0 0
        %11154 = vmatprep.subr.bf16.mxu0 0
        %11155 = vmatpush1.bf16.msra.mxu0 0
        %11156 = vmatprep.subr.bf16.mxu0 0
        %11157 = vmatpush1.bf16.msra.mxu0 0
        %11158 = vmatprep.subr.bf16.mxu0 0
        %11159 = vmatpush1.bf16.msra.mxu0 0
        %11160 = vmatprep.subr.bf16.mxu0 0
        %11161 = vmatpush1.bf16.msra.mxu0 0
        %11162 = vmatprep.subr.bf16.mxu0 0
        %11163 = vmatpush1.bf16.msra.mxu0 0
        %11164 = vmatprep.subr.bf16.mxu0 0
        %11165 = vmatpush1.bf16.msra.mxu0 0
        %11166 = vmatprep.subr.bf16.mxu0 0
        %11167 = vmatpush1.bf16.msra.mxu0 %v11104
        %11168 = vmatprep.subr.bf16.mxu0 0
        %11169 = vmatpush2.bf16.msra.mxu0 0
        %11170 = vmatprep.subr.bf16.mxu0 0
        %11171 = vmatpush2.bf16.msra.mxu0 0
        %11172 = vmatprep.subr.bf16.mxu0 0
        %11173 = vmatpush2.bf16.msra.mxu0 0
        %11174 = vmatprep.subr.bf16.mxu0 0
        %11175 = vmatpush2.bf16.msra.mxu0 0
        %11176 = vmatprep.subr.bf16.mxu0 0
        %11177 = vmatpush2.bf16.msra.mxu0 0
        %11178 = vmatprep.subr.bf16.mxu0 0
        %11179 = vmatpush2.bf16.msra.mxu0 0
        %11180 = vmatprep.subr.bf16.mxu0 0
        %11181 = vmatpush2.bf16.msra.mxu0 0
        %11182 = vmatprep.subr.bf16.mxu0 0
        %11183 = vmatpush2.bf16.msra.mxu0 0
        %11184 = vmatprep.mubr.bf16.mxu0 0
        %11185 = vmatmul.mubr.bf16.gmra.mxu0 %v11150
        %v11186 = vpop.f32.mrf.mxu0
        %v11187 = vadd.f32 0.0, %v11186
        %v11188 = vpop.f32.mrf.mxu0
        %v11189 = vpop.f32.mrf.mxu0
        %v11190 = vpop.f32.mrf.mxu0
        %11191 = vdwg.mxu0
        %v11193 = vsel %vm2080, %v11092, 0
        %11195 = vmatprep.subr.bf16.mxu0 0
        %11196 = vmatpush1.bf16.msra.mxu0 0
        %11197 = vmatprep.subr.bf16.mxu0 0
        %11198 = vmatpush1.bf16.msra.mxu0 0
        %11199 = vmatprep.subr.bf16.mxu0 0
        %11200 = vmatpush1.bf16.msra.mxu0 0
        %11201 = vmatprep.subr.bf16.mxu0 0
        %11202 = vmatpush1.bf16.msra.mxu0 0
        %11203 = vmatprep.subr.bf16.mxu0 0
        %11204 = vmatpush1.bf16.msra.mxu0 0
        %11205 = vmatprep.subr.bf16.mxu0 0
        %11206 = vmatpush1.bf16.msra.mxu0 0
        %11207 = vmatprep.subr.bf16.mxu0 0
        %11208 = vmatpush1.bf16.msra.mxu0 0
        %11209 = vmatprep.subr.bf16.mxu0 0
        %11210 = vmatpush1.bf16.msra.mxu0 %v11104
        %11211 = vmatprep.subr.bf16.mxu0 0
        %11212 = vmatpush2.bf16.msra.mxu0 0
        %11213 = vmatprep.subr.bf16.mxu0 0
        %11214 = vmatpush2.bf16.msra.mxu0 0
        %11215 = vmatprep.subr.bf16.mxu0 0
        %11216 = vmatpush2.bf16.msra.mxu0 0
        %11217 = vmatprep.subr.bf16.mxu0 0
        %11218 = vmatpush2.bf16.msra.mxu0 0
        %11219 = vmatprep.subr.bf16.mxu0 0
        %11220 = vmatpush2.bf16.msra.mxu0 0
        %11221 = vmatprep.subr.bf16.mxu0 0
        %11222 = vmatpush2.bf16.msra.mxu0 0
        %11223 = vmatprep.subr.bf16.mxu0 0
        %11224 = vmatpush2.bf16.msra.mxu0 0
        %11225 = vmatprep.subr.bf16.mxu0 0
        %11226 = vmatpush2.bf16.msra.mxu0 0
        %11227 = vmatprep.mubr.bf16.mxu0 0
        %11228 = vmatmul.mubr.bf16.gmra.mxu0 %v11193
        %v11229 = vpop.f32.mrf.mxu0
        %v11230 = vadd.f32 0.0, %v11229
        %v11231 = vpop.f32.mrf.mxu0
        %v11232 = vpop.f32.mrf.mxu0
        %v11233 = vpop.f32.mrf.mxu0
        %11234 = vdwg.mxu0
        %v11236 = vsel %vm2080, %v11093, 0
        %11238 = vmatprep.subr.bf16.mxu0 0
        %11239 = vmatpush1.bf16.msra.mxu0 0
        %11240 = vmatprep.subr.bf16.mxu0 0
        %11241 = vmatpush1.bf16.msra.mxu0 0
        %11242 = vmatprep.subr.bf16.mxu0 0
        %11243 = vmatpush1.bf16.msra.mxu0 0
        %11244 = vmatprep.subr.bf16.mxu0 0
        %11245 = vmatpush1.bf16.msra.mxu0 0
        %11246 = vmatprep.subr.bf16.mxu0 0
        %11247 = vmatpush1.bf16.msra.mxu0 0
        %11248 = vmatprep.subr.bf16.mxu0 0
        %11249 = vmatpush1.bf16.msra.mxu0 0
        %11250 = vmatprep.subr.bf16.mxu0 0
        %11251 = vmatpush1.bf16.msra.mxu0 0
        %11252 = vmatprep.subr.bf16.mxu0 0
        %11253 = vmatpush1.bf16.msra.mxu0 %v11104
        %11254 = vmatprep.subr.bf16.mxu0 0
        %11255 = vmatpush2.bf16.msra.mxu0 0
        %11256 = vmatprep.subr.bf16.mxu0 0
        %11257 = vmatpush2.bf16.msra.mxu0 0
        %11258 = vmatprep.subr.bf16.mxu0 0
        %11259 = vmatpush2.bf16.msra.mxu0 0
        %11260 = vmatprep.subr.bf16.mxu0 0
        %11261 = vmatpush2.bf16.msra.mxu0 0
        %11262 = vmatprep.subr.bf16.mxu0 0
        %11263 = vmatpush2.bf16.msra.mxu0 0
        %11264 = vmatprep.subr.bf16.mxu0 0
        %11265 = vmatpush2.bf16.msra.mxu0 0
        %11266 = vmatprep.subr.bf16.mxu0 0
        %11267 = vmatpush2.bf16.msra.mxu0 0
        %11268 = vmatprep.subr.bf16.mxu0 0
        %11269 = vmatpush2.bf16.msra.mxu0 0
        %11270 = vmatprep.mubr.bf16.mxu0 0
        %11271 = vmatmul.mubr.bf16.gmra.mxu0 %v11236
        %v11272 = vpop.f32.mrf.mxu0
        %v11273 = vadd.f32 0.0, %v11272
        %v11274 = vpop.f32.mrf.mxu0
        %v11275 = vpop.f32.mrf.mxu0
        %v11276 = vpop.f32.mrf.mxu0
        %11277 = vdwg.mxu0
        %v11279 = vsel %vm2080, %v11094, 0
        %11281 = vmatprep.subr.bf16.mxu0 0
        %11282 = vmatpush1.bf16.msra.mxu0 0
        %11283 = vmatprep.subr.bf16.mxu0 0
        %11284 = vmatpush1.bf16.msra.mxu0 0
        %11285 = vmatprep.subr.bf16.mxu0 0
        %11286 = vmatpush1.bf16.msra.mxu0 0
        %11287 = vmatprep.subr.bf16.mxu0 0
        %11288 = vmatpush1.bf16.msra.mxu0 0
        %11289 = vmatprep.subr.bf16.mxu0 0
        %11290 = vmatpush1.bf16.msra.mxu0 0
        %11291 = vmatprep.subr.bf16.mxu0 0
        %11292 = vmatpush1.bf16.msra.mxu0 0
        %11293 = vmatprep.subr.bf16.mxu0 0
        %11294 = vmatpush1.bf16.msra.mxu0 0
        %11295 = vmatprep.subr.bf16.mxu0 0
        %11296 = vmatpush1.bf16.msra.mxu0 %v11104
        %11297 = vmatprep.subr.bf16.mxu0 0
        %11298 = vmatpush2.bf16.msra.mxu0 0
        %11299 = vmatprep.subr.bf16.mxu0 0
        %11300 = vmatpush2.bf16.msra.mxu0 0
        %11301 = vmatprep.subr.bf16.mxu0 0
        %11302 = vmatpush2.bf16.msra.mxu0 0
        %11303 = vmatprep.subr.bf16.mxu0 0
        %11304 = vmatpush2.bf16.msra.mxu0 0
        %11305 = vmatprep.subr.bf16.mxu0 0
        %11306 = vmatpush2.bf16.msra.mxu0 0
        %11307 = vmatprep.subr.bf16.mxu0 0
        %11308 = vmatpush2.bf16.msra.mxu0 0
        %11309 = vmatprep.subr.bf16.mxu0 0
        %11310 = vmatpush2.bf16.msra.mxu0 0
        %11311 = vmatprep.subr.bf16.mxu0 0
        %11312 = vmatpush2.bf16.msra.mxu0 0
        %11313 = vmatprep.mubr.bf16.mxu0 0
        %11314 = vmatmul.mubr.bf16.gmra.mxu0 %v11279
        %v11315 = vpop.f32.mrf.mxu0
        %v11316 = vadd.f32 0.0, %v11315
        %v11317 = vpop.f32.mrf.mxu0
        %v11318 = vpop.f32.mrf.mxu0
        %v11319 = vpop.f32.mrf.mxu0
        %11320 = vdwg.mxu0
        %v11322 = vsel %vm2080, %v11095, 0
        %11324 = vmatprep.subr.bf16.mxu0 0
        %11325 = vmatpush1.bf16.msra.mxu0 0
        %11326 = vmatprep.subr.bf16.mxu0 0
        %11327 = vmatpush1.bf16.msra.mxu0 0
        %11328 = vmatprep.subr.bf16.mxu0 0
        %11329 = vmatpush1.bf16.msra.mxu0 0
        %11330 = vmatprep.subr.bf16.mxu0 0
        %11331 = vmatpush1.bf16.msra.mxu0 0
        %11332 = vmatprep.subr.bf16.mxu0 0
        %11333 = vmatpush1.bf16.msra.mxu0 0
        %11334 = vmatprep.subr.bf16.mxu0 0
        %11335 = vmatpush1.bf16.msra.mxu0 0
        %11336 = vmatprep.subr.bf16.mxu0 0
        %11337 = vmatpush1.bf16.msra.mxu0 0
        %11338 = vmatprep.subr.bf16.mxu0 0
        %11339 = vmatpush1.bf16.msra.mxu0 %v11104
        %11340 = vmatprep.subr.bf16.mxu0 0
        %11341 = vmatpush2.bf16.msra.mxu0 0
        %11342 = vmatprep.subr.bf16.mxu0 0
        %11343 = vmatpush2.bf16.msra.mxu0 0
        %11344 = vmatprep.subr.bf16.mxu0 0
        %11345 = vmatpush2.bf16.msra.mxu0 0
        %11346 = vmatprep.subr.bf16.mxu0 0
        %11347 = vmatpush2.bf16.msra.mxu0 0
        %11348 = vmatprep.subr.bf16.mxu0 0
        %11349 = vmatpush2.bf16.msra.mxu0 0
        %11350 = vmatprep.subr.bf16.mxu0 0
        %11351 = vmatpush2.bf16.msra.mxu0 0
        %11352 = vmatprep.subr.bf16.mxu0 0
        %11353 = vmatpush2.bf16.msra.mxu0 0
        %11354 = vmatprep.subr.bf16.mxu0 0
        %11355 = vmatpush2.bf16.msra.mxu0 0
        %11356 = vmatprep.mubr.bf16.mxu0 0
        %11357 = vmatmul.mubr.bf16.gmra.mxu0 %v11322
        %v11358 = vpop.f32.mrf.mxu0
        %v11359 = vadd.f32 0.0, %v11358
        %v11360 = vpop.f32.mrf.mxu0
        %v11361 = vpop.f32.mrf.mxu0
        %v11362 = vpop.f32.mrf.mxu0
        %11363 = vdwg.mxu0
        %v11365 = vsel %vm2080, %v11096, 0
        %11367 = vmatprep.subr.bf16.mxu0 0
        %11368 = vmatpush1.bf16.msra.mxu0 0
        %11369 = vmatprep.subr.bf16.mxu0 0
        %11370 = vmatpush1.bf16.msra.mxu0 0
        %11371 = vmatprep.subr.bf16.mxu0 0
        %11372 = vmatpush1.bf16.msra.mxu0 0
        %11373 = vmatprep.subr.bf16.mxu0 0
        %11374 = vmatpush1.bf16.msra.mxu0 0
        %11375 = vmatprep.subr.bf16.mxu0 0
        %11376 = vmatpush1.bf16.msra.mxu0 0
        %11377 = vmatprep.subr.bf16.mxu0 0
        %11378 = vmatpush1.bf16.msra.mxu0 0
        %11379 = vmatprep.subr.bf16.mxu0 0
        %11380 = vmatpush1.bf16.msra.mxu0 0
        %11381 = vmatprep.subr.bf16.mxu0 0
        %11382 = vmatpush1.bf16.msra.mxu0 %v11104
        %11383 = vmatprep.subr.bf16.mxu0 0
        %11384 = vmatpush2.bf16.msra.mxu0 0
        %11385 = vmatprep.subr.bf16.mxu0 0
        %11386 = vmatpush2.bf16.msra.mxu0 0
        %11387 = vmatprep.subr.bf16.mxu0 0
        %11388 = vmatpush2.bf16.msra.mxu0 0
        %11389 = vmatprep.subr.bf16.mxu0 0
        %11390 = vmatpush2.bf16.msra.mxu0 0
        %11391 = vmatprep.subr.bf16.mxu0 0
        %11392 = vmatpush2.bf16.msra.mxu0 0
        %11393 = vmatprep.subr.bf16.mxu0 0
        %11394 = vmatpush2.bf16.msra.mxu0 0
        %11395 = vmatprep.subr.bf16.mxu0 0
        %11396 = vmatpush2.bf16.msra.mxu0 0
        %11397 = vmatprep.subr.bf16.mxu0 0
        %11398 = vmatpush2.bf16.msra.mxu0 0
        %11399 = vmatprep.mubr.bf16.mxu0 0
        %11400 = vmatmul.mubr.bf16.gmra.mxu0 %v11365
        %v11401 = vpop.f32.mrf.mxu0
        %v11402 = vadd.f32 0.0, %v11401
        %v11403 = vpop.f32.mrf.mxu0
        %v11404 = vpop.f32.mrf.mxu0
        %v11405 = vpop.f32.mrf.mxu0
        %11406 = vdwg.mxu0
        %v11408 = vsel %vm2080, %v11097, 0
        %11410 = vmatprep.subr.bf16.mxu0 0
        %11411 = vmatpush1.bf16.msra.mxu0 0
        %11412 = vmatprep.subr.bf16.mxu0 0
        %11413 = vmatpush1.bf16.msra.mxu0 0
        %11414 = vmatprep.subr.bf16.mxu0 0
        %11415 = vmatpush1.bf16.msra.mxu0 0
        %11416 = vmatprep.subr.bf16.mxu0 0
        %11417 = vmatpush1.bf16.msra.mxu0 0
        %11418 = vmatprep.subr.bf16.mxu0 0
        %11419 = vmatpush1.bf16.msra.mxu0 0
        %11420 = vmatprep.subr.bf16.mxu0 0
        %11421 = vmatpush1.bf16.msra.mxu0 0
        %11422 = vmatprep.subr.bf16.mxu0 0
        %11423 = vmatpush1.bf16.msra.mxu0 0
        %11424 = vmatprep.subr.bf16.mxu0 0
        %11425 = vmatpush1.bf16.msra.mxu0 %v11104
        %11426 = vmatprep.subr.bf16.mxu0 0
        %11427 = vmatpush2.bf16.msra.mxu0 0
        %11428 = vmatprep.subr.bf16.mxu0 0
        %11429 = vmatpush2.bf16.msra.mxu0 0
        %11430 = vmatprep.subr.bf16.mxu0 0
        %11431 = vmatpush2.bf16.msra.mxu0 0
        %11432 = vmatprep.subr.bf16.mxu0 0
        %11433 = vmatpush2.bf16.msra.mxu0 0
        %11434 = vmatprep.subr.bf16.mxu0 0
        %11435 = vmatpush2.bf16.msra.mxu0 0
        %11436 = vmatprep.subr.bf16.mxu0 0
        %11437 = vmatpush2.bf16.msra.mxu0 0
        %11438 = vmatprep.subr.bf16.mxu0 0
        %11439 = vmatpush2.bf16.msra.mxu0 0
        %11440 = vmatprep.subr.bf16.mxu0 0
        %11441 = vmatpush2.bf16.msra.mxu0 0
        %11442 = vmatprep.mubr.bf16.mxu0 0
        %11443 = vmatmul.mubr.bf16.gmra.mxu0 %v11408
        %v11444 = vpop.f32.mrf.mxu0
        %v11445 = vadd.f32 0.0, %v11444
        %v11446 = vpop.f32.mrf.mxu0
        %v11447 = vpop.f32.mrf.mxu0
        %v11448 = vpop.f32.mrf.mxu0
        %11449 = vdwg.mxu0
        %v11450 = vadd.f32 %v11042, %v11144
        %v11451 = vadd.f32 %v11043, %v11187
        %v11452 = vadd.f32 %v11044, %v11230
        %v11453 = vadd.f32 %v11045, %v11273
        %v11454 = vadd.f32 %v11046, %v11316
        %v11455 = vadd.f32 %v11047, %v11359
        %v11456 = vadd.f32 %v11048, %v11402
        %v11457 = vadd.f32 %v11049, %v11445
        %11458 = vst.msk [vmem:[%s397] sm:$0xff] %vm7320, %v11450
        %11459 = vst.msk [vmem:[%s397 + $0x8] sm:$0xff] %vm7320, %v11451
        %11460 = vst.msk [vmem:[%s397 + $0x10] sm:$0xff] %vm7320, %v11452
        %11461 = vst.msk [vmem:[%s397 + $0x18] sm:$0xff] %vm7320, %v11453
        %11462 = vst.msk [vmem:[%s397 + $0x20] sm:$0xff] %vm7320, %v11454
        %11463 = vst.msk [vmem:[%s397 + $0x28] sm:$0xff] %vm7320, %v11455
        %11464 = vst.msk [vmem:[%s397 + $0x30] sm:$0xff] %vm7320, %v11456
        %11465 = vst.msk [vmem:[%s397 + $0x38] sm:$0xff] %vm7320, %v11457
        %s11466 = sand.u32 %s274, 1
        %s11467 = scalar_lea.sflag [#allocation5], %s11466
        %s11468 = sand.u32 %s274, 1
        %s11469 = smul.addr %s11468, 64
        %s11470 = scalar_lea.vmem [#allocation4], %s11469
        // Predicated region
        $region65: #{basic_block.1} parent=63 // pred_check
          %p11471 = pneg %p284
        $region66: #{basic_block.1} parent=63 // pred_check_branch
          %11473 = sbr.rel (%p11471) target = $region68
        $region67: #{basic_block.1} parent=63 // pred_region
          %s11475 = ssub.s32 1024, 1024
          %11476 = vsyncadd %s11467, %s11475
          %s11477 = smul.addr %s25, 8
          %s11478 = smul.addr %s11477, 128
          %s11479 = scalar_lea.hbm %s11, %s11478
          %s11480 = sshll.u32 %s11470, 4
          %s11481 = int_to_ptr.vmem [resolvable:$true] %s11480
          %11486 = dma.vmem_to_hbm [thread:$0]  %s11481, 1024, %s11479, %s11467, 128, 128, 8
        $region68: #{basic_block.1} parent=63 // pred_fallthru
          _
      $region64: #{basic_block.1} parent=5 // pred_fallthru
        _
      %p11487 = scmp.le.s32.totalorder 2, %s20
      // Predicated region
      $region69: #{basic_block.1} parent=5 // pred_check
        %p11488 = pneg %p11487
      $region70: #{basic_block.1} parent=5 // pred_check_branch
        %11490 = sbr.rel (%p11488) target = $region72
      $region71: #{basic_block.1} parent=5 // pred_region
        %s11491 = ssub.s32 %s20, 2
        // Predicated region
        $region73: #{basic_block.1} parent=71 // pred_check
          %p11492 = pneg %p290
        $region74: #{basic_block.1} parent=71 // pred_check_branch
          %11494 = sbr.rel (%p11492) target = $region76
        $region75: #{basic_block.1} parent=71 // pred_region
          %s11495 = sand.u32 %s275, 1
          %s11496 = scalar_lea.sflag [#allocation5], %s11495
          %s11497 = sand.u32 %s275, 1
          %s11498 = smul.addr %s11497, 64
          %s11499 = scalar_lea.vmem [#allocation4], %s11498
          %11500 = dma.done %s11496, 1024
        $region76: #{basic_block.1} parent=71 // pred_fallthru
          _
      $region72: #{basic_block.1} parent=5 // pred_fallthru
        _
    $region6: #{basic_block.1} parent=1 // loop_footer
      %s24 = sadd.s32 1, %s20
    $region7: #{basic_block.1} parent=1 // loop_footer_branch
      %19 = sbr.rel target = $region3
    $region8: #{basic_block.1} parent=1 // loop_exit
      _
    %11501 = vsyncpa [#allocation5], 1
    %s11502 = scalar_lea.sflag [#allocation5], 1
    %11503 = vsyncpa %s11502, 1

</llo_original>
